<compile_context>
chip_gen: v6e
topology: v6e:2x2x1
jax: 0.10.0
libtpu: 0.0.40
codegen_flags: <defaults>
</compile_context>

<pallas_src>
import functools

import jax
import jax.numpy as jnp
from jax.experimental import pallas as pl
from jax.experimental.pallas import tpu as pltpu


# ----------------------------------------------------------------------------
# helpers shared by the kernels (operate on traced in-VMEM values)
# ----------------------------------------------------------------------------
def _edge_graph_conv(feat, adj_cat, w_cols, bias, n_edge):
    """One EdgeGraphConv as two wide matmuls.

    feat:    (N, Fin)
    adj_cat: (N, E*N)       -- [adj[0] | adj[1] | ...]
    w_cols:  (Fin, E*Fout)  -- [W[0] | W[1] | ...], pre-scaled by 1/E
    bias:    (1, Fout)
    """
    fout = w_cols.shape[1] // n_edge
    sup = jnp.dot(feat, w_cols, preferred_element_type=jnp.float32)        # (N, E*Fout)
    sup_stack = jnp.concatenate(
        [sup[:, e * fout:(e + 1) * fout] for e in range(n_edge)], axis=0)  # (E*N, Fout)
    out = jnp.dot(adj_cat, sup_stack, preferred_element_type=jnp.float32) + bias
    return jnp.maximum(out, 0.0)


def _im2col(x_flat, height, width):
    """(HW, C) -> (HW, 9*C) zero-padded 3x3 patches; tap index = dy*3 + dx.

    The W-axis zero pad is 8 wide so all concatenations stay sublane-aligned;
    the 3x3 windows then read at offsets 7/8/9 into that pad.
    """
    hw, c = x_flat.shape
    x = x_flat.reshape(height, width, c)
    zrow = jnp.zeros((1, width, c), x_flat.dtype)
    xp = jnp.concatenate([zrow, x, zrow], axis=0)            # (H+2, W, C)
    zcol = jnp.zeros((height + 2, 8, c), x_flat.dtype)
    xp = jnp.concatenate([zcol, xp, zcol], axis=1)           # (H+2, W+16, C)
    taps = [xp[dy:dy + height, 7 + dx:7 + dx + width, :].reshape(hw, c)
            for dy in range(3) for dx in range(3)]
    return jnp.concatenate(taps, axis=-1)                    # (HW, 9*C)


# ----------------------------------------------------------------------------
# kernel 1: batch-invariant egconv1 + egconv2 (grid-less, runs once)
# ----------------------------------------------------------------------------
def _eg12_kernel(adjcat_ref, w1rows_ref, b1_ref, w2cols_ref, b2_ref, out_ref,
                 *, n_edge):
    adj_cat = adjcat_ref[...]
    # egconv1 input is eye(N), so support[e] == W1[e]: a single matmul with the
    # row-stacked (and 1/E-scaled) eg1 weights suffices.
    h = jnp.dot(adj_cat, w1rows_ref[...],
                preferred_element_type=jnp.float32) + b1_ref[...]
    h = jnp.maximum(h, 0.0)                                  # (N, EG)
    out_ref[...] = _edge_graph_conv(h, adj_cat, w2cols_ref[...], b2_ref[...],
                                    n_edge)                  # (N, EG)


# ----------------------------------------------------------------------------
# kernel 2: fused per-sample forward (broadcast -> convs -> pooling -> heads)
# ----------------------------------------------------------------------------
def _fused_kernel(obj_t_ref, obj_ref, kg12_ref, adjcat_ref,
                  eg3w_ref, eg3b_ref, eg4w_ref, eg4b_ref,
                  k1w_ref, k1b_ref, k2w_ref, k2b_ref,
                  poolw_ref,
                  k3w_ref, k3b_ref, k4w_ref, k4b_ref,
                  pw1_ref, pb1_ref, pw2_ref, pb2_ref,
                  vw1_ref, vb1_ref, vw2_ref, vb2_ref,
                  pol_ref, val_ref, *, height, width, n_edge):
    f32 = jnp.float32
    obj_t = obj_t_ref[0]                                     # (HW, N)
    obj = obj_ref[0]                                         # (N, HW)
    adj_cat = adjcat_ref[...]                                # (N, E*N)

    # --- broadcast the (batch-invariant) graph features onto the map ---------
    state1 = jnp.dot(obj_t, kg12_ref[...], preferred_element_type=f32)      # (HW, KG)

    # --- conv block 1: relu(conv3x3(state1) + conv1x1(state1)) ---------------
    cols1 = _im2col(state1, height, width)                                   # (HW, 9*KG)
    skip = jnp.dot(cols1, k1w_ref[...], preferred_element_type=f32)
    skip = skip + jnp.dot(state1, k2w_ref[...], preferred_element_type=f32)
    skip = jnp.maximum(skip + k1b_ref[...] + k2b_ref[...], 0.0)              # (HW, KG)

    # --- graph pooling --------------------------------------------------------
    raw = jnp.dot(obj, skip, preferred_element_type=f32)                     # (N, KG)
    feat = jnp.dot(raw, poolw_ref[...], preferred_element_type=f32)          # (N, KG)
    n_occ = jnp.sum(obj, axis=1, keepdims=True)                              # (N, 1)
    n_occ = jnp.where(n_occ == 0.0, 1.0, n_occ)
    kg = feat / n_occ

    # --- egconv3 + egconv4 ----------------------------------------------------
    kg = _edge_graph_conv(kg, adj_cat, eg3w_ref[...], eg3b_ref[...], n_edge)
    kg = _edge_graph_conv(kg, adj_cat, eg4w_ref[...], eg4b_ref[...], n_edge)

    # --- broadcast again + conv block 2 ---------------------------------------
    state2 = jnp.dot(obj_t, kg, preferred_element_type=f32)                  # (HW, KG)
    cols2 = _im2col(skip, height, width)                                     # (HW, 9*KG)
    state = jnp.dot(cols2, k3w_ref[...], preferred_element_type=f32)
    state = state + jnp.dot(state2, k4w_ref[...], preferred_element_type=f32)
    state = jnp.maximum(state + k3b_ref[...] + k4b_ref[...], 0.0)            # (HW, DC)

    # --- global max pool + policy / value heads (fused epilogue) --------------
    pooled = jnp.max(state, axis=0, keepdims=True)                           # (1, DC)
    hp = jnp.maximum(
        jnp.dot(pooled, pw1_ref[...], preferred_element_type=f32) + pb1_ref[...], 0.0)
    pol_ref[0] = jnp.dot(hp, pw2_ref[...], preferred_element_type=f32) + pb2_ref[...]
    hv = jnp.maximum(
        jnp.dot(pooled, vw1_ref[...], preferred_element_type=f32) + vb1_ref[...], 0.0)
    val_ref[0] = jnp.dot(hv, vw2_ref[...], preferred_element_type=f32) + vb2_ref[...]


# ----------------------------------------------------------------------------
# Full GraphA2C forward: two Pallas calls total
# ----------------------------------------------------------------------------
@jax.jit
def graph_a2c_forward(objmap, adj, p):
    B, N, H, W = objmap.shape
    HW = H * W
    E = adj.shape[0]
    EG = p["eg1_w"].shape[2]
    KG = p["kg2_w"].shape[0]
    DC = p["kg4_w"].shape[1]
    DS = p["pw1"].shape[1]
    A = p["pw2"].shape[1]
    inv_e = jnp.float32(1.0 / E)

    # ---- wrapper-side weight packing (pure layout work, traced once) --------
    adj_cat = jnp.concatenate([adj[e] for e in range(E)], axis=1)            # (N, E*N)
    eg1_rows = (p["eg1_w"] * inv_e).reshape(E * N, EG)                       # (E*N, EG)

    def cat_cols(w):  # (E, Fin, Fout) -> (Fin, E*Fout), 1/E folded in
        return jnp.concatenate([w[e] * inv_e for e in range(E)], axis=1)

    eg2_cols, eg3_cols, eg4_cols = (cat_cols(p["eg2_w"]), cat_cols(p["eg3_w"]),
                                    cat_cols(p["eg4_w"]))
    k1w = p["kg1_w"].reshape(9 * KG, KG)        # HWIO -> (9*KG, KG), tap-major rows
    k3w = p["kg3_w"].reshape(9 * KG, DC)

    obj_flat = objmap.reshape(B, N, HW)                                      # (B, N, HW)
    obj_t = obj_flat.transpose(0, 2, 1)                                      # (B, HW, N)

    # ---- batch-invariant egconv1 + egconv2 (single tiny grid-less kernel) ---
    kg12 = pl.pallas_call(
        functools.partial(_eg12_kernel, n_edge=E),
        out_shape=jax.ShapeDtypeStruct((N, EG), jnp.float32),
    )(adj_cat, eg1_rows, p["eg1_b"], eg2_cols, p["eg2_b"])

    # ---- one fused kernel over the batch -------------------------------------
    def full(shape):
        return pl.BlockSpec(shape, lambda b, _nd=len(shape): (0,) * _nd)

    pol, val = pl.pallas_call(
        functools.partial(_fused_kernel, height=H, width=W, n_edge=E),
        out_shape=(jax.ShapeDtypeStruct((B, 1, A), jnp.float32),
                   jax.ShapeDtypeStruct((B, 1, 1), jnp.float32)),
        grid=(B,),
        in_specs=[
            pl.BlockSpec((1, HW, N), lambda b: (b, 0, 0)),    # obj_t
            pl.BlockSpec((1, N, HW), lambda b: (b, 0, 0)),    # obj
            full((N, EG)),                                    # kg12
            full((N, E * N)),                                 # adj_cat
            full((EG, E * EG)), full((1, EG)),                # egconv3 w,b
            full((EG, E * EG)), full((1, EG)),                # egconv4 w,b
            full((9 * KG, KG)), full((1, KG)),                # kgconv1 (3x3)
            full((KG, KG)), full((1, KG)),                    # kgconv2 (1x1)
            full((KG, KG)),                                   # pool_weight
            full((9 * KG, DC)), full((1, DC)),                # kgconv3 (3x3)
            full((KG, DC)), full((1, DC)),                    # kgconv4 (1x1)
            full((DC, DS)), full((1, DS)),                    # policy fc1
            full((DS, A)), full((1, A)),                      # policy fc2
            full((DC, DS)), full((1, DS)),                    # value fc1
            full((DS, 1)), full((1, 1)),                      # value fc2
        ],
        out_specs=(pl.BlockSpec((1, 1, A), lambda b: (b, 0, 0)),
                   pl.BlockSpec((1, 1, 1), lambda b: (b, 0, 0))),
        compiler_params=pltpu.CompilerParams(dimension_semantics=("parallel",)),
    )(obj_t, obj_flat, kg12, adj_cat,
      eg3_cols, p["eg3_b"], eg4_cols, p["eg4_b"],
      k1w, p["kg1_b"], p["kg2_w"], p["kg2_b"],
      p["pool_w"],
      k3w, p["kg3_b"], p["kg4_w"], p["kg4_b"],
      p["pw1"], p["pb1"], p["pw2"], p["pb2"],
      p["vw1"], p["vb1"], p["vw2"], p["vb2"])

    return pol.reshape(B, A), val.reshape(B, 1)


# ----------------------------------------------------------------------------
# Pure-JAX reference (mirrors the PyTorch forward) for a sanity check
# ----------------------------------------------------------------------------
def reference_forward(objmap, adj, p):
    B, N, H, W = objmap.shape
    hi = jax.lax.Precision.HIGHEST

    def egconv(feat, w, b):
        sup = jnp.einsum('bnf,efg->beng', feat, w, precision=hi)
        out = jnp.einsum('enm,bemg->beng', adj, sup, precision=hi)
        out = out.mean(axis=1) + b.reshape(1, 1, -1)
        return jnp.maximum(out, 0.0)

    def bcast(feat):
        return jnp.einsum('bnhw,bnf->bhwf', objmap, feat, precision=hi)

    def conv3(x, w, b):
        y = jax.lax.conv_general_dilated(x, w, (1, 1), 'SAME',
                                         dimension_numbers=('NHWC', 'HWIO', 'NHWC'),
                                         precision=hi)
        return y + b.reshape(1, 1, 1, -1)

    def conv1(x, w, b):
        return jnp.einsum('bhwc,co->bhwo', x, w, precision=hi) + b.reshape(1, 1, 1, -1)

    def pooling(state_nhwc):
        raw = jnp.einsum('bnhw,bhwf->bnf', objmap, state_nhwc, precision=hi)
        feat = jnp.einsum('bnf,fo->bno', raw, p["pool_w"], precision=hi)
        nocc = objmap.sum((-2, -1))
        nocc = jnp.where(nocc == 0.0, 1.0, nocc)
        return feat / nocc[..., None]

    kg = jnp.broadcast_to(jnp.eye(N, dtype=jnp.float32), (B, N, N))
    kg = egconv(kg, p["eg1_w"], p["eg1_b"])
    kg = egconv(kg, p["eg2_w"], p["eg2_b"])
    st1 = bcast(kg)
    skip = jnp.maximum(conv3(st1, p["kg1_w"], p["kg1_b"]) +
                       conv1(st1, p["kg2_w"], p["kg2_b"]), 0.0)
    kg = pooling(skip)
    kg = egconv(kg, p["eg3_w"], p["eg3_b"])
    kg = egconv(kg, p["eg4_w"], p["eg4_b"])
    st2 = bcast(kg)
    state = jnp.maximum(conv3(skip, p["kg3_w"], p["kg3_b"]) +
                        conv1(st2, p["kg4_w"], p["kg4_b"]), 0.0)
    pooled = state.max(axis=(1, 2))                          # == MaxPool2d(mapsize)
    hp = jnp.maximum(pooled @ p["pw1"] + p["pb1"], 0.0)
    policy = hp @ p["pw2"] + p["pb2"]
    hv = jnp.maximum(pooled @ p["vw1"] + p["vb1"], 0.0)
    value = hv @ p["vw2"] + p["vb2"]
    return policy, value


if __name__ == "__main__":
    # Small shapes consistent with the module:
    B, E, N = 2, 3, 8          # batch, n_edge, n_node
    H = W = 16                 # mapsize
    EG = KG = 32               # eg_size == kg_size (required by the module's dataflow)
    DC = 16                    # dense_in_channel
    DS = 32                    # dense_size
    A = 5                      # n_act

    key = jax.random.PRNGKey(0)
    ks = jax.random.split(key, 32)

    def u(k, shape, lo=0.0, hi=1.0):
        return jax.random.uniform(k, shape, jnp.float32, lo, hi)

    # inputs
    adj = u(ks[0], (E, N, N))                                       # adjacency (E,N,N)
    labels = jax.random.randint(ks[1], (B, H, W), 0, N)
    objmap = jax.nn.one_hot(labels, N, axis=1, dtype=jnp.float32)   # (B, N, H, W)

    s = 0.05
    params = dict(
        # EdgeGraphConv weights: torch.rand-style U[0,1), zero biases
        eg1_w=u(ks[2], (E, N, EG)),  eg1_b=jnp.zeros((1, EG), jnp.float32),
        eg2_w=u(ks[3], (E, EG, EG)), eg2_b=jnp.zeros((1, EG), jnp.float32),
        eg3_w=u(ks[4], (E, EG, EG)), eg3_b=jnp.zeros((1, EG), jnp.float32),
        eg4_w=u(ks[5], (E, EG, EG)), eg4_b=jnp.zeros((1, EG), jnp.float32),
        # Conv2d weights (stored HWIO for 3x3, (Cin,Cout) for 1x1)
        kg1_w=u(ks[6], (3, 3, KG, KG), -s, s), kg1_b=u(ks[7], (1, KG), -s, s),
        kg2_w=u(ks[8], (KG, KG), -s, s),       kg2_b=u(ks[9], (1, KG), -s, s),
        kg3_w=u(ks[10], (3, 3, KG, DC), -s, s), kg3_b=u(ks[11], (1, DC), -s, s),
        kg4_w=u(ks[12], (KG, DC), -s, s),       kg4_b=u(ks[13], (1, DC), -s, s),
        pool_w=u(ks[14], (KG, KG)),
        # policy / value heads
        pw1=u(ks[15], (DC, DS), -s, s), pb1=u(ks[16], (1, DS), -s, s),
        pw2=u(ks[17], (DS, A), -s, s),  pb2=u(ks[18], (1, A), -s, s),
        vw1=u(ks[19], (DC, DS), -s, s), vb1=u(ks[20], (1, DS), -s, s),
        vw2=u(ks[21], (DS, 1), -s, s),  vb2=u(ks[22], (1, 1), -s, s),
    )

    # TODO(synk): torch.nn.InstanceNorm2d is constructed in __init__ but never used in
    # forward(), so it is intentionally not implemented.

    policy, value = graph_a2c_forward(objmap, adj, params)
    policy = jax.block_until_ready(policy)
    value = jax.block_until_ready(value)

    ref_policy, ref_value = reference_forward(objmap, adj, params)
    err_p = jnp.linalg.norm(policy - ref_policy) / (jnp.linalg.norm(ref_policy) + 1.0)
    err_v = jnp.linalg.norm(value - ref_value) / (jnp.linalg.norm(ref_value) + 1.0)
    assert policy.shape == (B, A) and value.shape == (B, 1)
    assert float(err_p) < 5e-3 and float(err_v) < 5e-3, (float(err_p), float(err_v))
    print("KERNEL_OK")
</pallas_src>

<mosaic_0001>
module attributes {stable_mosaic.version = 11 : i64} {
  func.func @_eg12_kernel(%arg0: memref<8x24xf32, #tpu.memory_space<vmem>>, %arg1: memref<24x32xf32, #tpu.memory_space<vmem>>, %arg2: memref<1x32xf32, #tpu.memory_space<vmem>>, %arg3: memref<32x96xf32, #tpu.memory_space<vmem>>, %arg4: memref<1x32xf32, #tpu.memory_space<vmem>>, %arg5: memref<8x32xf32, #tpu.memory_space<vmem>>) attributes {dimension_semantics = [], scalar_prefetch = 0 : i64, scratch_operands = 0 : i64, tpu.core_type = #tpu.core_type<tc>} {
    %c0 = arith.constant 0 : index
    %c0_0 = arith.constant 0 : index
    %0 = vector.load %arg0[%c0, %c0_0] : memref<8x24xf32, #tpu.memory_space<vmem>>, vector<8x24xf32>
    %c0_1 = arith.constant 0 : index
    %c0_2 = arith.constant 0 : index
    %1 = vector.load %arg1[%c0_1, %c0_2] : memref<24x32xf32, #tpu.memory_space<vmem>>, vector<24x32xf32>
    %cst = arith.constant dense<0.000000e+00> : vector<8x32xf32>
    %2 = tpu.matmul %0, %1, %cst {dimension_numbers = #tpu.dot_dimension_numbers<[1], [0], [0], [1], [0, 0, 1, 1], [], []>} : vector<8x24xf32>, vector<24x32xf32>, vector<8x32xf32> -> vector<8x32xf32>
    %c0_3 = arith.constant 0 : index
    %c0_4 = arith.constant 0 : index
    %3 = vector.load %arg2[%c0_3, %c0_4] : memref<1x32xf32, #tpu.memory_space<vmem>>, vector<1x32xf32>
    %4 = vector.broadcast %3 : vector<1x32xf32> to vector<8x32xf32>
    %5 = arith.addf %2, %4 : vector<8x32xf32>
    %cst_5 = arith.constant 0.000000e+00 : f32
    %6 = vector.broadcast %cst_5 : f32 to vector<8x32xf32>
    %7 = arith.maximumf %5, %6 : vector<8x32xf32>
    %c0_6 = arith.constant 0 : index
    %c0_7 = arith.constant 0 : index
    %8 = vector.load %arg3[%c0_6, %c0_7] : memref<32x96xf32, #tpu.memory_space<vmem>>, vector<32x96xf32>
    %c0_8 = arith.constant 0 : index
    %c0_9 = arith.constant 0 : index
    %9 = vector.load %arg4[%c0_8, %c0_9] : memref<1x32xf32, #tpu.memory_space<vmem>>, vector<1x32xf32>
    %cst_10 = arith.constant dense<0.000000e+00> : vector<8x96xf32>
    %10 = tpu.matmul %7, %8, %cst_10 {dimension_numbers = #tpu.dot_dimension_numbers<[1], [0], [0], [1], [0, 0, 1, 1], [], []>} : vector<8x32xf32>, vector<32x96xf32>, vector<8x96xf32> -> vector<8x96xf32>
    %11 = vector.extract_strided_slice %10 {offsets = [0, 0], sizes = [8, 32], strides = [1, 1]} : vector<8x96xf32> to vector<8x32xf32>
    %12 = vector.extract_strided_slice %10 {offsets = [0, 32], sizes = [8, 32], strides = [1, 1]} : vector<8x96xf32> to vector<8x32xf32>
    %13 = vector.extract_strided_slice %10 {offsets = [0, 64], sizes = [8, 32], strides = [1, 1]} : vector<8x96xf32> to vector<8x32xf32>
    %14 = tpu.concatenate %11, %12, %13 in 0 : vector<8x32xf32>, vector<8x32xf32>, vector<8x32xf32> -> vector<24x32xf32>
    %cst_11 = arith.constant dense<0.000000e+00> : vector<8x32xf32>
    %15 = tpu.matmul %0, %14, %cst_11 {dimension_numbers = #tpu.dot_dimension_numbers<[1], [0], [0], [1], [0, 0, 1, 1], [], []>} : vector<8x24xf32>, vector<24x32xf32>, vector<8x32xf32> -> vector<8x32xf32>
    %16 = vector.broadcast %9 : vector<1x32xf32> to vector<8x32xf32>
    %17 = arith.addf %15, %16 : vector<8x32xf32>
    %cst_12 = arith.constant 0.000000e+00 : f32
    %18 = vector.broadcast %cst_12 : f32 to vector<8x32xf32>
    %19 = arith.maximumf %17, %18 : vector<8x32xf32>
    %c0_13 = arith.constant 0 : index
    %c0_14 = arith.constant 0 : index
    %20 = vector.load %arg5[%c0_13, %c0_14] : memref<8x32xf32, #tpu.memory_space<vmem>>, vector<8x32xf32>
    tpu.vector_store %arg5[%c0_13, %c0_14], %19 {strides = array<i32>} : memref<8x32xf32, #tpu.memory_space<vmem>>, vector<8x32xf32>,
    return
  }
}

module attributes {stable_mosaic.version = 11 : i64} {
  func.func @_fused_kernel(%arg0: i32, %arg1: memref<1x256x8xf32, #tpu.memory_space<vmem>>, %arg2: memref<1x8x256xf32, #tpu.memory_space<vmem>>, %arg3: memref<8x32xf32, #tpu.memory_space<vmem>>, %arg4: memref<8x24xf32, #tpu.memory_space<vmem>>, %arg5: memref<32x96xf32, #tpu.memory_space<vmem>>, %arg6: memref<1x32xf32, #tpu.memory_space<vmem>>, %arg7: memref<32x96xf32, #tpu.memory_space<vmem>>, %arg8: memref<1x32xf32, #tpu.memory_space<vmem>>, %arg9: memref<288x32xf32, #tpu.memory_space<vmem>>, %arg10: memref<1x32xf32, #tpu.memory_space<vmem>>, %arg11: memref<32x32xf32, #tpu.memory_space<vmem>>, %arg12: memref<1x32xf32, #tpu.memory_space<vmem>>, %arg13: memref<32x32xf32, #tpu.memory_space<vmem>>, %arg14: memref<288x16xf32, #tpu.memory_space<vmem>>, %arg15: memref<1x16xf32, #tpu.memory_space<vmem>>, %arg16: memref<32x16xf32, #tpu.memory_space<vmem>>, %arg17: memref<1x16xf32, #tpu.memory_space<vmem>>, %arg18: memref<16x32xf32, #tpu.memory_space<vmem>>, %arg19: memref<1x32xf32, #tpu.memory_space<vmem>>, %arg20: memref<32x5xf32, #tpu.memory_space<vmem>>, %arg21: memref<1x5xf32, #tpu.memory_space<vmem>>, %arg22: memref<16x32xf32, #tpu.memory_space<vmem>>, %arg23: memref<1x32xf32, #tpu.memory_space<vmem>>, %arg24: memref<32x1xf32, #tpu.memory_space<vmem>>, %arg25: memref<1x1xf32, #tpu.memory_space<vmem>>, %arg26: memref<1x1x5xf32, #tpu.memory_space<vmem>>, %arg27: memref<1x1x1xf32, #tpu.memory_space<vmem>>) attributes {dimension_semantics = [#tpu.dimension_semantics<parallel>], iteration_bounds = array<i64: 2>, scalar_prefetch = 0 : i64, scratch_operands = 0 : i64, tpu.core_type = #tpu.core_type<tc>, window_params = [{transform_indices = @transform_0, window_bounds = array<i64: 1, 256, 8>}, {transform_indices = @transform_1, window_bounds = array<i64: 1, 8, 256>}, {pipeline_mode = #tpu.pipeline_mode<synchronous>, transform_indices = @transform_2, window_bounds = array<i64: 8, 32>}, {pipeline_mode = #tpu.pipeline_mode<synchronous>, transform_indices = @transform_3, window_bounds = array<i64: 8, 24>}, {pipeline_mode = #tpu.pipeline_mode<synchronous>, transform_indices = @transform_4, window_bounds = array<i64: 32, 96>}, {pipeline_mode = #tpu.pipeline_mode<synchronous>, transform_indices = @transform_5, window_bounds = array<i64: 1, 32>}, {pipeline_mode = #tpu.pipeline_mode<synchronous>, transform_indices = @transform_6, window_bounds = array<i64: 32, 96>}, {pipeline_mode = #tpu.pipeline_mode<synchronous>, transform_indices = @transform_7, window_bounds = array<i64: 1, 32>}, {pipeline_mode = #tpu.pipeline_mode<synchronous>, transform_indices = @transform_8, window_bounds = array<i64: 288, 32>}, {pipeline_mode = #tpu.pipeline_mode<synchronous>, transform_indices = @transform_9, window_bounds = array<i64: 1, 32>}, {pipeline_mode = #tpu.pipeline_mode<synchronous>, transform_indices = @transform_10, window_bounds = array<i64: 32, 32>}, {pipeline_mode = #tpu.pipeline_mode<synchronous>, transform_indices = @transform_11, window_bounds = array<i64: 1, 32>}, {pipeline_mode = #tpu.pipeline_mode<synchronous>, transform_indices = @transform_12, window_bounds = array<i64: 32, 32>}, {pipeline_mode = #tpu.pipeline_mode<synchronous>, transform_indices = @transform_13, window_bounds = array<i64: 288, 16>}, {pipeline_mode = #tpu.pipeline_mode<synchronous>, transform_indices = @transform_14, window_bounds = array<i64: 1, 16>}, {pipeline_mode = #tpu.pipeline_mode<synchronous>, transform_indices = @transform_15, window_bounds = array<i64: 32, 16>}, {pipeline_mode = #tpu.pipeline_mode<synchronous>, transform_indices = @transform_16, window_bounds = array<i64: 1, 16>}, {pipeline_mode = #tpu.pipeline_mode<synchronous>, transform_indices = @transform_17, window_bounds = array<i64: 16, 32>}, {pipeline_mode = #tpu.pipeline_mode<synchronous>, transform_indices = @transform_18, window_bounds = array<i64: 1, 32>}, {pipeline_mode = #tpu.pipeline_mode<synchronous>, transform_indices = @transform_19, window_bounds = array<i64: 32, 5>}, {pipeline_mode = #tpu.pipeline_mode<synchronous>, transform_indices = @transform_20, window_bounds = array<i64: 1, 5>}, {pipeline_mode = #tpu.pipeline_mode<synchronous>, transform_indices = @transform_21, window_bounds = array<i64: 16, 32>}, {pipeline_mode = #tpu.pipeline_mode<synchronous>, transform_indices = @transform_22, window_bounds = array<i64: 1, 32>}, {pipeline_mode = #tpu.pipeline_mode<synchronous>, transform_indices = @transform_23, window_bounds = array<i64: 32, 1>}, {pipeline_mode = #tpu.pipeline_mode<synchronous>, transform_indices = @transform_24, window_bounds = array<i64: 1, 1>}, {transform_indices = @transform_25, window_bounds = array<i64: 1, 1, 5>}, {transform_indices = @transform_26, window_bounds = array<i64: 1, 1, 1>}]} {
    %c0 = arith.constant 0 : index
    %c0_0 = arith.constant 0 : index
    %c0_1 = arith.constant 0 : index
    %0 = vector.load %arg1[%c0, %c0_0, %c0_1] : memref<1x256x8xf32, #tpu.memory_space<vmem>>, vector<1x256x8xf32>
    %1 = vector.shape_cast %0 : vector<1x256x8xf32> to vector<256x8xf32>
    %c0_2 = arith.constant 0 : index
    %c0_3 = arith.constant 0 : index
    %c0_4 = arith.constant 0 : index
    %2 = vector.load %arg2[%c0_2, %c0_3, %c0_4] : memref<1x8x256xf32, #tpu.memory_space<vmem>>, vector<1x8x256xf32>
    %3 = vector.shape_cast %2 : vector<1x8x256xf32> to vector<8x256xf32>
    %c0_5 = arith.constant 0 : index
    %c0_6 = arith.constant 0 : index
    %4 = vector.load %arg4[%c0_5, %c0_6] : memref<8x24xf32, #tpu.memory_space<vmem>>, vector<8x24xf32>
    %c0_7 = arith.constant 0 : index
    %c0_8 = arith.constant 0 : index
    %5 = vector.load %arg3[%c0_7, %c0_8] : memref<8x32xf32, #tpu.memory_space<vmem>>, vector<8x32xf32>
    %cst = arith.constant dense<0.000000e+00> : vector<256x32xf32>
    %6 = tpu.matmul %1, %5, %cst {dimension_numbers = #tpu.dot_dimension_numbers<[1], [0], [0], [1], [0, 0, 1, 1], [], []>} : vector<256x8xf32>, vector<8x32xf32>, vector<256x32xf32> -> vector<256x32xf32>
    %7 = vector.shape_cast %6 : vector<256x32xf32> to vector<16x16x32xf32>
    %cst_9 = arith.constant 0.000000e+00 : f32
    %8 = vector.broadcast %cst_9 : f32 to vector<1x16x32xf32>
    %9 = tpu.concatenate %8, %7, %8 in 0 : vector<1x16x32xf32>, vector<16x16x32xf32>, vector<1x16x32xf32> -> vector<18x16x32xf32>
    %cst_10 = arith.constant 0.000000e+00 : f32
    %10 = vector.broadcast %cst_10 : f32 to vector<18x8x32xf32>
    %11 = tpu.concatenate %10, %9, %10 in 1 : vector<18x8x32xf32>, vector<18x16x32xf32>, vector<18x8x32xf32> -> vector<18x32x32xf32>
    %12 = vector.extract_strided_slice %11 {offsets = [0, 7, 0], sizes = [16, 16, 32], strides = [1, 1, 1]} : vector<18x32x32xf32> to vector<16x16x32xf32>
    %13 = vector.shape_cast %12 : vector<16x16x32xf32> to vector<256x32xf32>
    %14 = vector.extract_strided_slice %11 {offsets = [0, 8, 0], sizes = [16, 16, 32], strides = [1, 1, 1]} : vector<18x32x32xf32> to vector<16x16x32xf32>
    %15 = vector.shape_cast %14 : vector<16x16x32xf32> to vector<256x32xf32>
    %16 = vector.extract_strided_slice %11 {offsets = [0, 9, 0], sizes = [16, 16, 32], strides = [1, 1, 1]} : vector<18x32x32xf32> to vector<16x16x32xf32>
    %17 = vector.shape_cast %16 : vector<16x16x32xf32> to vector<256x32xf32>
    %18 = vector.extract_strided_slice %11 {offsets = [1, 7, 0], sizes = [16, 16, 32], strides = [1, 1, 1]} : vector<18x32x32xf32> to vector<16x16x32xf32>
    %19 = vector.shape_cast %18 : vector<16x16x32xf32> to vector<256x32xf32>
    %20 = vector.extract_strided_slice %11 {offsets = [1, 8, 0], sizes = [16, 16, 32], strides = [1, 1, 1]} : vector<18x32x32xf32> to vector<16x16x32xf32>
    %21 = vector.shape_cast %20 : vector<16x16x32xf32> to vector<256x32xf32>
    %22 = vector.extract_strided_slice %11 {offsets = [1, 9, 0], sizes = [16, 16, 32], strides = [1, 1, 1]} : vector<18x32x32xf32> to vector<16x16x32xf32>
    %23 = vector.shape_cast %22 : vector<16x16x32xf32> to vector<256x32xf32>
    %24 = vector.extract_strided_slice %11 {offsets = [2, 7, 0], sizes = [16, 16, 32], strides = [1, 1, 1]} : vector<18x32x32xf32> to vector<16x16x32xf32>
    %25 = vector.shape_cast %24 : vector<16x16x32xf32> to vector<256x32xf32>
    %26 = vector.extract_strided_slice %11 {offsets = [2, 8, 0], sizes = [16, 16, 32], strides = [1, 1, 1]} : vector<18x32x32xf32> to vector<16x16x32xf32>
    %27 = vector.shape_cast %26 : vector<16x16x32xf32> to vector<256x32xf32>
    %28 = vector.extract_strided_slice %11 {offsets = [2, 9, 0], sizes = [16, 16, 32], strides = [1, 1, 1]} : vector<18x32x32xf32> to vector<16x16x32xf32>
    %29 = vector.shape_cast %28 : vector<16x16x32xf32> to vector<256x32xf32>
    %30 = tpu.concatenate %13, %15, %17, %19, %21, %23, %25, %27, %29 in 1 : vector<256x32xf32>, vector<256x32xf32>, vector<256x32xf32>, vector<256x32xf32>, vector<256x32xf32>, vector<256x32xf32>, vector<256x32xf32>, vector<256x32xf32>, vector<256x32xf32> -> vector<256x288xf32>
    %c0_11 = arith.constant 0 : index
    %c0_12 = arith.constant 0 : index
    %31 = vector.load %arg9[%c0_11, %c0_12] : memref<288x32xf32, #tpu.memory_space<vmem>>, vector<288x32xf32>
    %cst_13 = arith.constant dense<0.000000e+00> : vector<256x32xf32>
    %32 = tpu.matmul %30, %31, %cst_13 {dimension_numbers = #tpu.dot_dimension_numbers<[1], [0], [0], [1], [0, 0, 1, 1], [], []>} : vector<256x288xf32>, vector<288x32xf32>, vector<256x32xf32> -> vector<256x32xf32>
    %c0_14 = arith.constant 0 : index
    %c0_15 = arith.constant 0 : index
    %33 = vector.load %arg11[%c0_14, %c0_15] : memref<32x32xf32, #tpu.memory_space<vmem>>, vector<32x32xf32>
    %cst_16 = arith.constant dense<0.000000e+00> : vector<256x32xf32>
    %34 = tpu.matmul %6, %33, %cst_16 {dimension_numbers = #tpu.dot_dimension_numbers<[1], [0], [0], [1], [0, 0, 1, 1], [], []>} : vector<256x32xf32>, vector<32x32xf32>, vector<256x32xf32> -> vector<256x32xf32>
    %35 = arith.addf %32, %34 : vector<256x32xf32>
    %c0_17 = arith.constant 0 : index
    %c0_18 = arith.constant 0 : index
    %36 = vector.load %arg10[%c0_17, %c0_18] : memref<1x32xf32, #tpu.memory_space<vmem>>, vector<1x32xf32>
    %37 = vector.broadcast %36 : vector<1x32xf32> to vector<256x32xf32>
    %38 = arith.addf %35, %37 : vector<256x32xf32>
    %c0_19 = arith.constant 0 : index
    %c0_20 = arith.constant 0 : index
    %39 = vector.load %arg12[%c0_19, %c0_20] : memref<1x32xf32, #tpu.memory_space<vmem>>, vector<1x32xf32>
    %40 = vector.broadcast %39 : vector<1x32xf32> to vector<256x32xf32>
    %41 = arith.addf %38, %40 : vector<256x32xf32>
    %cst_21 = arith.constant 0.000000e+00 : f32
    %42 = vector.broadcast %cst_21 : f32 to vector<256x32xf32>
    %43 = arith.maximumf %41, %42 : vector<256x32xf32>
    %cst_22 = arith.constant dense<0.000000e+00> : vector<8x32xf32>
    %44 = tpu.matmul %3, %43, %cst_22 {dimension_numbers = #tpu.dot_dimension_numbers<[1], [0], [0], [1], [0, 0, 1, 1], [], []>} : vector<8x256xf32>, vector<256x32xf32>, vector<8x32xf32> -> vector<8x32xf32>
    %c0_23 = arith.constant 0 : index
    %c0_24 = arith.constant 0 : index
    %45 = vector.load %arg13[%c0_23, %c0_24] : memref<32x32xf32, #tpu.memory_space<vmem>>, vector<32x32xf32>
    %cst_25 = arith.constant dense<0.000000e+00> : vector<8x32xf32>
    %46 = tpu.matmul %44, %45, %cst_25 {dimension_numbers = #tpu.dot_dimension_numbers<[1], [0], [0], [1], [0, 0, 1, 1], [], []>} : vector<8x32xf32>, vector<32x32xf32>, vector<8x32xf32> -> vector<8x32xf32>
    %cst_26 = arith.constant dense<0.000000e+00> : vector<8xf32>
    %47 = vector.multi_reduction <add>, %3, %cst_26 [1] : vector<8x256xf32> to vector<8xf32>
    %48 = vector.shape_cast %47 : vector<8xf32> to vector<8x1xf32>
    %cst_27 = arith.constant 0.000000e+00 : f32
    %49 = vector.broadcast %cst_27 : f32 to vector<8x1xf32>
    %50 = arith.cmpf oeq, %48, %49 : vector<8x1xf32>
    %cst_28 = arith.constant 1.000000e+00 : f32
    %51 = vector.broadcast %cst_28 : f32 to vector<8x1xf32>
    %52 = arith.select %50, %51, %48 : vector<8x1xi1>, vector<8x1xf32>
    %53 = vector.broadcast %52 : vector<8x1xf32> to vector<8x32xf32>
    %54 = arith.divf %46, %53 : vector<8x32xf32>
    %c0_29 = arith.constant 0 : index
    %c0_30 = arith.constant 0 : index
    %55 = vector.load %arg5[%c0_29, %c0_30] : memref<32x96xf32, #tpu.memory_space<vmem>>, vector<32x96xf32>
    %c0_31 = arith.constant 0 : index
    %c0_32 = arith.constant 0 : index
    %56 = vector.load %arg6[%c0_31, %c0_32] : memref<1x32xf32, #tpu.memory_space<vmem>>, vector<1x32xf32>
    %cst_33 = arith.constant dense<0.000000e+00> : vector<8x96xf32>
    %57 = tpu.matmul %54, %55, %cst_33 {dimension_numbers = #tpu.dot_dimension_numbers<[1], [0], [0], [1], [0, 0, 1, 1], [], []>} : vector<8x32xf32>, vector<32x96xf32>, vector<8x96xf32> -> vector<8x96xf32>
    %58 = vector.extract_strided_slice %57 {offsets = [0, 0], sizes = [8, 32], strides = [1, 1]} : vector<8x96xf32> to vector<8x32xf32>
    %59 = vector.extract_strided_slice %57 {offsets = [0, 32], sizes = [8, 32], strides = [1, 1]} : vector<8x96xf32> to vector<8x32xf32>
    %60 = vector.extract_strided_slice %57 {offsets = [0, 64], sizes = [8, 32], strides = [1, 1]} : vector<8x96xf32> to vector<8x32xf32>
    %61 = tpu.concatenate %58, %59, %60 in 0 : vector<8x32xf32>, vector<8x32xf32>, vector<8x32xf32> -> vector<24x32xf32>
    %cst_34 = arith.constant dense<0.000000e+00> : vector<8x32xf32>
    %62 = tpu.matmul %4, %61, %cst_34 {dimension_numbers = #tpu.dot_dimension_numbers<[1], [0], [0], [1], [0, 0, 1, 1], [], []>} : vector<8x24xf32>, vector<24x32xf32>, vector<8x32xf32> -> vector<8x32xf32>
    %63 = vector.broadcast %56 : vector<1x32xf32> to vector<8x32xf32>
    %64 = arith.addf %62, %63 : vector<8x32xf32>
    %cst_35 = arith.constant 0.000000e+00 : f32
    %65 = vector.broadcast %cst_35 : f32 to vector<8x32xf32>
    %66 = arith.maximumf %64, %65 : vector<8x32xf32>
    %c0_36 = arith.constant 0 : index
    %c0_37 = arith.constant 0 : index
    %67 = vector.load %arg7[%c0_36, %c0_37] : memref<32x96xf32, #tpu.memory_space<vmem>>, vector<32x96xf32>
    %c0_38 = arith.constant 0 : index
    %c0_39 = arith.constant 0 : index
    %68 = vector.load %arg8[%c0_38, %c0_39] : memref<1x32xf32, #tpu.memory_space<vmem>>, vector<1x32xf32>
    %cst_40 = arith.constant dense<0.000000e+00> : vector<8x96xf32>
    %69 = tpu.matmul %66, %67, %cst_40 {dimension_numbers = #tpu.dot_dimension_numbers<[1], [0], [0], [1], [0, 0, 1, 1], [], []>} : vector<8x32xf32>, vector<32x96xf32>, vector<8x96xf32> -> vector<8x96xf32>
    %70 = vector.extract_strided_slice %69 {offsets = [0, 0], sizes = [8, 32], strides = [1, 1]} : vector<8x96xf32> to vector<8x32xf32>
    %71 = vector.extract_strided_slice %69 {offsets = [0, 32], sizes = [8, 32], strides = [1, 1]} : vector<8x96xf32> to vector<8x32xf32>
    %72 = vector.extract_strided_slice %69 {offsets = [0, 64], sizes = [8, 32], strides = [1, 1]} : vector<8x96xf32> to vector<8x32xf32>
    %73 = tpu.concatenate %70, %71, %72 in 0 : vector<8x32xf32>, vector<8x32xf32>, vector<8x32xf32> -> vector<24x32xf32>
    %cst_41 = arith.constant dense<0.000000e+00> : vector<8x32xf32>
    %74 = tpu.matmul %4, %73, %cst_41 {dimension_numbers = #tpu.dot_dimension_numbers<[1], [0], [0], [1], [0, 0, 1, 1], [], []>} : vector<8x24xf32>, vector<24x32xf32>, vector<8x32xf32> -> vector<8x32xf32>
    %75 = vector.broadcast %68 : vector<1x32xf32> to vector<8x32xf32>
    %76 = arith.addf %74, %75 : vector<8x32xf32>
    %cst_42 = arith.constant 0.000000e+00 : f32
    %77 = vector.broadcast %cst_42 : f32 to vector<8x32xf32>
    %78 = arith.maximumf %76, %77 : vector<8x32xf32>
    %cst_43 = arith.constant dense<0.000000e+00> : vector<256x32xf32>
    %79 = tpu.matmul %1, %78, %cst_43 {dimension_numbers = #tpu.dot_dimension_numbers<[1], [0], [0], [1], [0, 0, 1, 1], [], []>} : vector<256x8xf32>, vector<8x32xf32>, vector<256x32xf32> -> vector<256x32xf32>
    %80 = vector.shape_cast %43 : vector<256x32xf32> to vector<16x16x32xf32>
    %cst_44 = arith.constant 0.000000e+00 : f32
    %81 = vector.broadcast %cst_44 : f32 to vector<1x16x32xf32>
    %82 = tpu.concatenate %81, %80, %81 in 0 : vector<1x16x32xf32>, vector<16x16x32xf32>, vector<1x16x32xf32> -> vector<18x16x32xf32>
    %cst_45 = arith.constant 0.000000e+00 : f32
    %83 = vector.broadcast %cst_45 : f32 to vector<18x8x32xf32>
    %84 = tpu.concatenate %83, %82, %83 in 1 : vector<18x8x32xf32>, vector<18x16x32xf32>, vector<18x8x32xf32> -> vector<18x32x32xf32>
    %85 = vector.extract_strided_slice %84 {offsets = [0, 7, 0], sizes = [16, 16, 32], strides = [1, 1, 1]} : vector<18x32x32xf32> to vector<16x16x32xf32>
    %86 = vector.shape_cast %85 : vector<16x16x32xf32> to vector<256x32xf32>
    %87 = vector.extract_strided_slice %84 {offsets = [0, 8, 0], sizes = [16, 16, 32], strides = [1, 1, 1]} : vector<18x32x32xf32> to vector<16x16x32xf32>
    %88 = vector.shape_cast %87 : vector<16x16x32xf32> to vector<256x32xf32>
    %89 = vector.extract_strided_slice %84 {offsets = [0, 9, 0], sizes = [16, 16, 32], strides = [1, 1, 1]} : vector<18x32x32xf32> to vector<16x16x32xf32>
    %90 = vector.shape_cast %89 : vector<16x16x32xf32> to vector<256x32xf32>
    %91 = vector.extract_strided_slice %84 {offsets = [1, 7, 0], sizes = [16, 16, 32], strides = [1, 1, 1]} : vector<18x32x32xf32> to vector<16x16x32xf32>
    %92 = vector.shape_cast %91 : vector<16x16x32xf32> to vector<256x32xf32>
    %93 = vector.extract_strided_slice %84 {offsets = [1, 8, 0], sizes = [16, 16, 32], strides = [1, 1, 1]} : vector<18x32x32xf32> to vector<16x16x32xf32>
    %94 = vector.shape_cast %93 : vector<16x16x32xf32> to vector<256x32xf32>
    %95 = vector.extract_strided_slice %84 {offsets = [1, 9, 0], sizes = [16, 16, 32], strides = [1, 1, 1]} : vector<18x32x32xf32> to vector<16x16x32xf32>
    %96 = vector.shape_cast %95 : vector<16x16x32xf32> to vector<256x32xf32>
    %97 = vector.extract_strided_slice %84 {offsets = [2, 7, 0], sizes = [16, 16, 32], strides = [1, 1, 1]} : vector<18x32x32xf32> to vector<16x16x32xf32>
    %98 = vector.shape_cast %97 : vector<16x16x32xf32> to vector<256x32xf32>
    %99 = vector.extract_strided_slice %84 {offsets = [2, 8, 0], sizes = [16, 16, 32], strides = [1, 1, 1]} : vector<18x32x32xf32> to vector<16x16x32xf32>
    %100 = vector.shape_cast %99 : vector<16x16x32xf32> to vector<256x32xf32>
    %101 = vector.extract_strided_slice %84 {offsets = [2, 9, 0], sizes = [16, 16, 32], strides = [1, 1, 1]} : vector<18x32x32xf32> to vector<16x16x32xf32>
    %102 = vector.shape_cast %101 : vector<16x16x32xf32> to vector<256x32xf32>
    %103 = tpu.concatenate %86, %88, %90, %92, %94, %96, %98, %100, %102 in 1 : vector<256x32xf32>, vector<256x32xf32>, vector<256x32xf32>, vector<256x32xf32>, vector<256x32xf32>, vector<256x32xf32>, vector<256x32xf32>, vector<256x32xf32>, vector<256x32xf32> -> vector<256x288xf32>
    %c0_46 = arith.constant 0 : index
    %c0_47 = arith.constant 0 : index
    %104 = vector.load %arg14[%c0_46, %c0_47] : memref<288x16xf32, #tpu.memory_space<vmem>>, vector<288x16xf32>
    %cst_48 = arith.constant dense<0.000000e+00> : vector<256x16xf32>
    %105 = tpu.matmul %103, %104, %cst_48 {dimension_numbers = #tpu.dot_dimension_numbers<[1], [0], [0], [1], [0, 0, 1, 1], [], []>} : vector<256x288xf32>, vector<288x16xf32>, vector<256x16xf32> -> vector<256x16xf32>
    %c0_49 = arith.constant 0 : index
    %c0_50 = arith.constant 0 : index
    %106 = vector.load %arg16[%c0_49, %c0_50] : memref<32x16xf32, #tpu.memory_space<vmem>>, vector<32x16xf32>
    %cst_51 = arith.constant dense<0.000000e+00> : vector<256x16xf32>
    %107 = tpu.matmul %79, %106, %cst_51 {dimension_numbers = #tpu.dot_dimension_numbers<[1], [0], [0], [1], [0, 0, 1, 1], [], []>} : vector<256x32xf32>, vector<32x16xf32>, vector<256x16xf32> -> vector<256x16xf32>
    %108 = arith.addf %105, %107 : vector<256x16xf32>
    %c0_52 = arith.constant 0 : index
    %c0_53 = arith.constant 0 : index
    %109 = vector.load %arg15[%c0_52, %c0_53] : memref<1x16xf32, #tpu.memory_space<vmem>>, vector<1x16xf32>
    %110 = vector.broadcast %109 : vector<1x16xf32> to vector<256x16xf32>
    %111 = arith.addf %108, %110 : vector<256x16xf32>
    %c0_54 = arith.constant 0 : index
    %c0_55 = arith.constant 0 : index
    %112 = vector.load %arg17[%c0_54, %c0_55] : memref<1x16xf32, #tpu.memory_space<vmem>>, vector<1x16xf32>
    %113 = vector.broadcast %112 : vector<1x16xf32> to vector<256x16xf32>
    %114 = arith.addf %111, %113 : vector<256x16xf32>
    %cst_56 = arith.constant 0.000000e+00 : f32
    %115 = vector.broadcast %cst_56 : f32 to vector<256x16xf32>
    %116 = arith.maximumf %114, %115 : vector<256x16xf32>
    %cst_57 = arith.constant dense<0xFF800000> : vector<16xf32>
    %117 = vector.multi_reduction <maximumf>, %116, %cst_57 [0] : vector<256x16xf32> to vector<16xf32>
    %118 = vector.shape_cast %117 : vector<16xf32> to vector<1x16xf32>
    %c0_58 = arith.constant 0 : index
    %c0_59 = arith.constant 0 : index
    %119 = vector.load %arg18[%c0_58, %c0_59] : memref<16x32xf32, #tpu.memory_space<vmem>>, vector<16x32xf32>
    %cst_60 = arith.constant dense<0.000000e+00> : vector<1x32xf32>
    %120 = tpu.matmul %118, %119, %cst_60 {dimension_numbers = #tpu.dot_dimension_numbers<[1], [0], [0], [1], [0, 0, 1, 1], [], []>} : vector<1x16xf32>, vector<16x32xf32>, vector<1x32xf32> -> vector<1x32xf32>
    %c0_61 = arith.constant 0 : index
    %c0_62 = arith.constant 0 : index
    %121 = vector.load %arg19[%c0_61, %c0_62] : memref<1x32xf32, #tpu.memory_space<vmem>>, vector<1x32xf32>
    %122 = arith.addf %120, %121 : vector<1x32xf32>
    %cst_63 = arith.constant 0.000000e+00 : f32
    %123 = vector.broadcast %cst_63 : f32 to vector<1x32xf32>
    %124 = arith.maximumf %122, %123 : vector<1x32xf32>
    %c0_64 = arith.constant 0 : index
    %c0_65 = arith.constant 0 : index
    %125 = vector.load %arg20[%c0_64, %c0_65] : memref<32x5xf32, #tpu.memory_space<vmem>>, vector<32x5xf32>
    %cst_66 = arith.constant dense<0.000000e+00> : vector<1x5xf32>
    %126 = tpu.matmul %124, %125, %cst_66 {dimension_numbers = #tpu.dot_dimension_numbers<[1], [0], [0], [1], [0, 0, 1, 1], [], []>} : vector<1x32xf32>, vector<32x5xf32>, vector<1x5xf32> -> vector<1x5xf32>
    %c0_67 = arith.constant 0 : index
    %c0_68 = arith.constant 0 : index
    %127 = vector.load %arg21[%c0_67, %c0_68] : memref<1x5xf32, #tpu.memory_space<vmem>>, vector<1x5xf32>
    %128 = arith.addf %126, %127 : vector<1x5xf32>
    %c0_69 = arith.constant 0 : index
    %c0_70 = arith.constant 0 : index
    %c0_71 = arith.constant 0 : index
    %129 = vector.load %arg26[%c0_69, %c0_70, %c0_71] : memref<1x1x5xf32, #tpu.memory_space<vmem>>, vector<1x1x5xf32>
    %130 = vector.shape_cast %129 : vector<1x1x5xf32> to vector<1x5xf32>
    %131 = vector.shape_cast %128 : vector<1x5xf32> to vector<1x1x5xf32>
    tpu.vector_store %arg26[%c0_69, %c0_70, %c0_71], %131 {strides = array<i32>} : memref<1x1x5xf32, #tpu.memory_space<vmem>>, vector<1x1x5xf32>,
    %c0_72 = arith.constant 0 : index
    %c0_73 = arith.constant 0 : index
    %132 = vector.load %arg22[%c0_72, %c0_73] : memref<16x32xf32, #tpu.memory_space<vmem>>, vector<16x32xf32>
    %cst_74 = arith.constant dense<0.000000e+00> : vector<1x32xf32>
    %133 = tpu.matmul %118, %132, %cst_74 {dimension_numbers = #tpu.dot_dimension_numbers<[1], [0], [0], [1], [0, 0, 1, 1], [], []>} : vector<1x16xf32>, vector<16x32xf32>, vector<1x32xf32> -> vector<1x32xf32>
    %c0_75 = arith.constant 0 : index
    %c0_76 = arith.constant 0 : index
    %134 = vector.load %arg23[%c0_75, %c0_76] : memref<1x32xf32, #tpu.memory_space<vmem>>, vector<1x32xf32>
    %135 = arith.addf %133, %134 : vector<1x32xf32>
    %cst_77 = arith.constant 0.000000e+00 : f32
    %136 = vector.broadcast %cst_77 : f32 to vector<1x32xf32>
    %137 = arith.maximumf %135, %136 : vector<1x32xf32>
    %c0_78 = arith.constant 0 : index
    %c0_79 = arith.constant 0 : index
    %138 = vector.load %arg24[%c0_78, %c0_79] : memref<32x1xf32, #tpu.memory_space<vmem>>, vector<32x1xf32>
    %cst_80 = arith.constant dense<0.000000e+00> : vector<1x1xf32>
    %139 = tpu.matmul %137, %138, %cst_80 {dimension_numbers = #tpu.dot_dimension_numbers<[1], [0], [0], [1], [0, 0, 1, 1], [], []>} : vector<1x32xf32>, vector<32x1xf32>, vector<1x1xf32> -> vector<1x1xf32>
    %c0_81 = arith.constant 0 : index
    %c0_82 = arith.constant 0 : index
    %140 = vector.load %arg25[%c0_81, %c0_82] : memref<1x1xf32, #tpu.memory_space<vmem>>, vector<1x1xf32>
    %141 = arith.addf %139, %140 : vector<1x1xf32>
    %c0_83 = arith.constant 0 : index
    %c0_84 = arith.constant 0 : index
    %c0_85 = arith.constant 0 : index
    %142 = vector.load %arg27[%c0_83, %c0_84, %c0_85] : memref<1x1x1xf32, #tpu.memory_space<vmem>>, vector<1x1x1xf32>
    %143 = vector.shape_cast %142 : vector<1x1x1xf32> to vector<1x1xf32>
    %144 = vector.shape_cast %141 : vector<1x1xf32> to vector<1x1x1xf32>
    tpu.vector_store %arg27[%c0_83, %c0_84, %c0_85], %144 {strides = array<i32>} : memref<1x1x1xf32, #tpu.memory_space<vmem>>, vector<1x1x1xf32>,
    return
  }
  func.func @transform_0(%arg0: i32) -> (i32, i32, i32) {
    %c0_i32 = arith.constant 0 : i32
    %c0_i32_0 = arith.constant 0 : i32
    %c0_i32_1 = arith.constant 0 : i32
    return %arg0, %c0_i32, %c0_i32_0 : i32, i32, i32
  }
  func.func @transform_1(%arg0: i32) -> (i32, i32, i32) {
    %c0_i32 = arith.constant 0 : i32
    %c0_i32_0 = arith.constant 0 : i32
    %c0_i32_1 = arith.constant 0 : i32
    return %arg0, %c0_i32, %c0_i32_0 : i32, i32, i32
  }
  func.func @transform_2(%arg0: i32) -> (i32, i32) {
    %c0_i32 = arith.constant 0 : i32
    %c0_i32_0 = arith.constant 0 : i32
    %c0_i32_1 = arith.constant 0 : i32
    return %c0_i32, %c0_i32_0 : i32, i32
  }
  func.func @transform_3(%arg0: i32) -> (i32, i32) {
    %c0_i32 = arith.constant 0 : i32
    %c0_i32_0 = arith.constant 0 : i32
    %c0_i32_1 = arith.constant 0 : i32
    return %c0_i32, %c0_i32_0 : i32, i32
  }
  func.func @transform_4(%arg0: i32) -> (i32, i32) {
    %c0_i32 = arith.constant 0 : i32
    %c0_i32_0 = arith.constant 0 : i32
    %c0_i32_1 = arith.constant 0 : i32
    return %c0_i32, %c0_i32_0 : i32, i32
  }
  func.func @transform_5(%arg0: i32) -> (i32, i32) {
    %c0_i32 = arith.constant 0 : i32
    %c0_i32_0 = arith.constant 0 : i32
    %c0_i32_1 = arith.constant 0 : i32
    return %c0_i32, %c0_i32_0 : i32, i32
  }
  func.func @transform_6(%arg0: i32) -> (i32, i32) {
    %c0_i32 = arith.constant 0 : i32
    %c0_i32_0 = arith.constant 0 : i32
    %c0_i32_1 = arith.constant 0 : i32
    return %c0_i32, %c0_i32_0 : i32, i32
  }
  func.func @transform_7(%arg0: i32) -> (i32, i32) {
    %c0_i32 = arith.constant 0 : i32
    %c0_i32_0 = arith.constant 0 : i32
    %c0_i32_1 = arith.constant 0 : i32
    return %c0_i32, %c0_i32_0 : i32, i32
  }
  func.func @transform_8(%arg0: i32) -> (i32, i32) {
    %c0_i32 = arith.constant 0 : i32
    %c0_i32_0 = arith.constant 0 : i32
    %c0_i32_1 = arith.constant 0 : i32
    return %c0_i32, %c0_i32_0 : i32, i32
  }
  func.func @transform_9(%arg0: i32) -> (i32, i32) {
    %c0_i32 = arith.constant 0 : i32
    %c0_i32_0 = arith.constant 0 : i32
    %c0_i32_1 = arith.constant 0 : i32
    return %c0_i32, %c0_i32_0 : i32, i32
  }
  func.func @transform_10(%arg0: i32) -> (i32, i32) {
    %c0_i32 = arith.constant 0 : i32
    %c0_i32_0 = arith.constant 0 : i32
    %c0_i32_1 = arith.constant 0 : i32
    return %c0_i32, %c0_i32_0 : i32, i32
  }
  func.func @transform_11(%arg0: i32) -> (i32, i32) {
    %c0_i32 = arith.constant 0 : i32
    %c0_i32_0 = arith.constant 0 : i32
    %c0_i32_1 = arith.constant 0 : i32
    return %c0_i32, %c0_i32_0 : i32, i32
  }
  func.func @transform_12(%arg0: i32) -> (i32, i32) {
    %c0_i32 = arith.constant 0 : i32
    %c0_i32_0 = arith.constant 0 : i32
    %c0_i32_1 = arith.constant 0 : i32
    return %c0_i32, %c0_i32_0 : i32, i32
  }
  func.func @transform_13(%arg0: i32) -> (i32, i32) {
    %c0_i32 = arith.constant 0 : i32
    %c0_i32_0 = arith.constant 0 : i32
    %c0_i32_1 = arith.constant 0 : i32
    return %c0_i32, %c0_i32_0 : i32, i32
  }
  func.func @transform_14(%arg0: i32) -> (i32, i32) {
    %c0_i32 = arith.constant 0 : i32
    %c0_i32_0 = arith.constant 0 : i32
    %c0_i32_1 = arith.constant 0 : i32
    return %c0_i32, %c0_i32_0 : i32, i32
  }
  func.func @transform_15(%arg0: i32) -> (i32, i32) {
    %c0_i32 = arith.constant 0 : i32
    %c0_i32_0 = arith.constant 0 : i32
    %c0_i32_1 = arith.constant 0 : i32
    return %c0_i32, %c0_i32_0 : i32, i32
  }
  func.func @transform_16(%arg0: i32) -> (i32, i32) {
    %c0_i32 = arith.constant 0 : i32
    %c0_i32_0 = arith.constant 0 : i32
    %c0_i32_1 = arith.constant 0 : i32
    return %c0_i32, %c0_i32_0 : i32, i32
  }
  func.func @transform_17(%arg0: i32) -> (i32, i32) {
    %c0_i32 = arith.constant 0 : i32
    %c0_i32_0 = arith.constant 0 : i32
    %c0_i32_1 = arith.constant 0 : i32
    return %c0_i32, %c0_i32_0 : i32, i32
  }
  func.func @transform_18(%arg0: i32) -> (i32, i32) {
    %c0_i32 = arith.constant 0 : i32
    %c0_i32_0 = arith.constant 0 : i32
    %c0_i32_1 = arith.constant 0 : i32
    return %c0_i32, %c0_i32_0 : i32, i32
  }
  func.func @transform_19(%arg0: i32) -> (i32, i32) {
    %c0_i32 = arith.constant 0 : i32
    %c0_i32_0 = arith.constant 0 : i32
    %c0_i32_1 = arith.constant 0 : i32
    return %c0_i32, %c0_i32_0 : i32, i32
  }
  func.func @transform_20(%arg0: i32) -> (i32, i32) {
    %c0_i32 = arith.constant 0 : i32
    %c0_i32_0 = arith.constant 0 : i32
    %c0_i32_1 = arith.constant 0 : i32
    return %c0_i32, %c0_i32_0 : i32, i32
  }
  func.func @transform_21(%arg0: i32) -> (i32, i32) {
    %c0_i32 = arith.constant 0 : i32
    %c0_i32_0 = arith.constant 0 : i32
    %c0_i32_1 = arith.constant 0 : i32
    return %c0_i32, %c0_i32_0 : i32, i32
  }
  func.func @transform_22(%arg0: i32) -> (i32, i32) {
    %c0_i32 = arith.constant 0 : i32
    %c0_i32_0 = arith.constant 0 : i32
    %c0_i32_1 = arith.constant 0 : i32
    return %c0_i32, %c0_i32_0 : i32, i32
  }
  func.func @transform_23(%arg0: i32) -> (i32, i32) {
    %c0_i32 = arith.constant 0 : i32
    %c0_i32_0 = arith.constant 0 : i32
    %c0_i32_1 = arith.constant 0 : i32
    return %c0_i32, %c0_i32_0 : i32, i32
  }
  func.func @transform_24(%arg0: i32) -> (i32, i32) {
    %c0_i32 = arith.constant 0 : i32
    %c0_i32_0 = arith.constant 0 : i32
    %c0_i32_1 = arith.constant 0 : i32
    return %c0_i32, %c0_i32_0 : i32, i32
  }
  func.func @transform_25(%arg0: i32) -> (i32, i32, i32) {
    %c0_i32 = arith.constant 0 : i32
    %c0_i32_0 = arith.constant 0 : i32
    %c0_i32_1 = arith.constant 0 : i32
    return %arg0, %c0_i32, %c0_i32_0 : i32, i32, i32
  }
  func.func @transform_26(%arg0: i32) -> (i32, i32, i32) {
    %c0_i32 = arith.constant 0 : i32
    %c0_i32_0 = arith.constant 0 : i32
    %c0_i32_1 = arith.constant 0 : i32
    return %arg0, %c0_i32, %c0_i32_0 : i32, i32, i32
  }
}

</mosaic_0001>

<llo_original>
// kernel: graph_a2c_forward.2
$region0: #{graph_a2c_forward.2}
  #allocation0 [shape = 'u32[]', space=smem, size = 0x4, offset = 0x4, fixed_abs, tag = 'smem constant byte address 0x4 - core index']
  #allocation1 [shape = 'u32[144,128]{1,0:T(1,128)}', space=vmem, size = 0x12000, scoped, tag = 'internal scratch']
  %s0 = inlined_call_operand.vmem [shape: f32[8,24], index: 0, kind: input, shape index: {}]
  %s1 = inlined_call_operand.vmem [shape: f32[24,32], index: 1, kind: input, shape index: {}]
  %s2 = inlined_call_operand.vmem [shape: f32[1,32], index: 2, kind: input, shape index: {}]
  %s3 = inlined_call_operand.vmem [shape: f32[32,96], index: 3, kind: input, shape index: {}]
  %s4 = inlined_call_operand.vmem [shape: f32[1,32], index: 4, kind: input, shape index: {}]
  %s5 = inlined_call_operand.vmem [shape: f32[8,32], index: 5, kind: output, shape index: {}]
  %s6 = sld [smem:[#allocation0]]
  $region30: #{graph_a2c_forward.2} parent=0
    _
  %s8 = ssub.s32 1, %s6
  %s9 = scalar_select 0, %s8, %s6
  // Predicated region
  $region2: #{graph_a2c_forward.2} parent=0 // pred_check
    _
  $region3: #{graph_a2c_forward.2} parent=0 // pred_check_branch
    %11 = sbr.rel (0) target = $region5
  $region4: #{graph_a2c_forward.2} parent=0 // pred_region
    _
  $region5: #{graph_a2c_forward.2} parent=0 // pred_fallthru
    _
  // Predicated region
  $region6: #{graph_a2c_forward.2} parent=0 // pred_check
    _
  $region7: #{graph_a2c_forward.2} parent=0 // pred_check_branch
    %13 = sbr.rel (0) target = $region9
  $region8: #{graph_a2c_forward.2} parent=0 // pred_region
    _
  $region9: #{graph_a2c_forward.2} parent=0 // pred_fallthru
    _
  // Predicated region
  $region10: #{graph_a2c_forward.2} parent=0 // pred_check
    _
  $region11: #{graph_a2c_forward.2} parent=0 // pred_check_branch
    %15 = sbr.rel (0) target = $region13
  $region12: #{graph_a2c_forward.2} parent=0 // pred_region
    _
  $region13: #{graph_a2c_forward.2} parent=0 // pred_fallthru
    _
  // Predicated region
  $region14: #{graph_a2c_forward.2} parent=0 // pred_check
    _
  $region15: #{graph_a2c_forward.2} parent=0 // pred_check_branch
    %17 = sbr.rel (0) target = $region17
  $region16: #{graph_a2c_forward.2} parent=0 // pred_region
    _
  $region17: #{graph_a2c_forward.2} parent=0 // pred_fallthru
    _
  // Predicated region
  $region18: #{graph_a2c_forward.2} parent=0 // pred_check
    _
  $region19: #{graph_a2c_forward.2} parent=0 // pred_check_branch
    %19 = sbr.rel (0) target = $region21
  $region20: #{graph_a2c_forward.2} parent=0 // pred_region
    _
  $region21: #{graph_a2c_forward.2} parent=0 // pred_fallthru
    _
  %v20 = vld [vmem:[%s0] sm:$0xff]
  %v21 = vld [vmem:[%s1] sm:$0xff]
  %v22 = vld [vmem:[%s1 + $0x8] sm:$0xff]
  %v23 = vld [vmem:[%s1 + $0x10] sm:$0xff]
  %v24 = vld [vmem:[%s2] sm:$0x1]
  %v26 = vlaneseq
  %v27 = vshrl.u32 %v26, 7
  %v28 = vsub.s32 0, %v27
  %v29 = vrot.slane %v24, %v28
  %vm31 = vcmask 195584
  %v33 = vsel %vm31, %v20, 0
  %35 = vmatprep.subr.mxu0 0.0
  %36 = vmatpush1.msra.mxu0 0.0
  %37 = vmatprep.subr.mxu0 0.0
  %38 = vmatpush1.msra.mxu0 0.0
  %39 = vmatprep.subr.mxu0 0.0
  %40 = vmatpush1.msra.mxu0 0.0
  %41 = vmatprep.subr.mxu0 0.0
  %42 = vmatpush1.msra.mxu0 0.0
  %43 = vmatprep.subr.mxu0 0.0
  %44 = vmatpush1.msra.mxu0 0.0
  %45 = vmatprep.subr.mxu0 0.0
  %46 = vmatpush1.msra.mxu0 0.0
  %47 = vmatprep.subr.mxu0 0.0
  %48 = vmatpush1.msra.mxu0 0.0
  %49 = vmatprep.subr.mxu0 0.0
  %50 = vmatpush1.msra.mxu0 0.0
  %51 = vmatprep.subr.mxu0 0.0
  %52 = vmatpush1.msra.mxu0 0.0
  %53 = vmatprep.subr.mxu0 0.0
  %54 = vmatpush1.msra.mxu0 0.0
  %55 = vmatprep.subr.mxu0 0.0
  %56 = vmatpush1.msra.mxu0 0.0
  %57 = vmatprep.subr.mxu0 0.0
  %58 = vmatpush1.msra.mxu0 0.0
  %59 = vmatprep.subr.mxu0 0.0
  %60 = vmatpush1.msra.mxu0 0.0
  %61 = vmatprep.subr.mxu0 0.0
  %62 = vmatpush1.msra.mxu0 %v23
  %63 = vmatprep.subr.mxu0 0.0
  %64 = vmatpush1.msra.mxu0 %v22
  %65 = vmatprep.subr.mxu0 0.0
  %66 = vmatpush1.msra.mxu0 %v21
  %67 = vmatprep.subr.mxu0 0.0
  %68 = vmatpush2.msra.mxu0 0.0
  %69 = vmatprep.subr.mxu0 0.0
  %70 = vmatpush2.msra.mxu0 0.0
  %71 = vmatprep.subr.mxu0 0.0
  %72 = vmatpush2.msra.mxu0 0.0
  %73 = vmatprep.subr.mxu0 0.0
  %74 = vmatpush2.msra.mxu0 0.0
  %75 = vmatprep.subr.mxu0 0.0
  %76 = vmatpush2.msra.mxu0 0.0
  %77 = vmatprep.subr.mxu0 0.0
  %78 = vmatpush2.msra.mxu0 0.0
  %79 = vmatprep.subr.mxu0 0.0
  %80 = vmatpush2.msra.mxu0 0.0
  %81 = vmatprep.subr.mxu0 0.0
  %82 = vmatpush2.msra.mxu0 0.0
  %83 = vmatprep.subr.mxu0 0.0
  %84 = vmatpush2.msra.mxu0 0.0
  %85 = vmatprep.subr.mxu0 0.0
  %86 = vmatpush2.msra.mxu0 0.0
  %87 = vmatprep.subr.mxu0 0.0
  %88 = vmatpush2.msra.mxu0 0.0
  %89 = vmatprep.subr.mxu0 0.0
  %90 = vmatpush2.msra.mxu0 0.0
  %91 = vmatprep.subr.mxu0 0.0
  %92 = vmatpush2.msra.mxu0 0.0
  %93 = vmatprep.subr.mxu0 0.0
  %94 = vmatpush2.msra.mxu0 0.0
  %95 = vmatprep.subr.mxu0 0.0
  %96 = vmatpush2.msra.mxu0 0.0
  %97 = vmatprep.subr.mxu0 0.0
  %98 = vmatpush2.msra.mxu0 0.0
  %99 = vmatprep.mubr.f32.mxu0 0.0
  %100 = vmatmul.mubr.f32.gmra.mxu0 %v33
  %v101 = vpop.f32.mrf.mxu0
  %v102 = vadd.f32 %v29, %v101
  %v103 = vpop.f32.mrf.mxu0
  %104 = vdwg.mxu0
  %v105 = vmax.f32 %v102, 0.0
  %v106 = vld [vmem:[%s3] sm:$0xff]
  %v107 = vld [vmem:[%s3 + $0x8] sm:$0xff]
  %v108 = vld [vmem:[%s3 + $0x10] sm:$0xff]
  %v109 = vld [vmem:[%s3 + $0x18] sm:$0xff]
  %v110 = vld [vmem:[%s4] sm:$0x1]
  %vm111 = vcmask 261120
  %v113 = vsel %vm111, %v105, 0
  %115 = vmatprep.subr.mxu0 0.0
  %116 = vmatpush1.msra.mxu0 0.0
  %117 = vmatprep.subr.mxu0 0.0
  %118 = vmatpush1.msra.mxu0 0.0
  %119 = vmatprep.subr.mxu0 0.0
  %120 = vmatpush1.msra.mxu0 0.0
  %121 = vmatprep.subr.mxu0 0.0
  %122 = vmatpush1.msra.mxu0 0.0
  %123 = vmatprep.subr.mxu0 0.0
  %124 = vmatpush1.msra.mxu0 0.0
  %125 = vmatprep.subr.mxu0 0.0
  %126 = vmatpush1.msra.mxu0 0.0
  %127 = vmatprep.subr.mxu0 0.0
  %128 = vmatpush1.msra.mxu0 0.0
  %129 = vmatprep.subr.mxu0 0.0
  %130 = vmatpush1.msra.mxu0 0.0
  %131 = vmatprep.subr.mxu0 0.0
  %132 = vmatpush1.msra.mxu0 0.0
  %133 = vmatprep.subr.mxu0 0.0
  %134 = vmatpush1.msra.mxu0 0.0
  %135 = vmatprep.subr.mxu0 0.0
  %136 = vmatpush1.msra.mxu0 0.0
  %137 = vmatprep.subr.mxu0 0.0
  %138 = vmatpush1.msra.mxu0 0.0
  %139 = vmatprep.subr.mxu0 0.0
  %140 = vmatpush1.msra.mxu0 %v109
  %141 = vmatprep.subr.mxu0 0.0
  %142 = vmatpush1.msra.mxu0 %v108
  %143 = vmatprep.subr.mxu0 0.0
  %144 = vmatpush1.msra.mxu0 %v107
  %145 = vmatprep.subr.mxu0 0.0
  %146 = vmatpush1.msra.mxu0 %v106
  %147 = vmatprep.subr.mxu0 0.0
  %148 = vmatpush2.msra.mxu0 0.0
  %149 = vmatprep.subr.mxu0 0.0
  %150 = vmatpush2.msra.mxu0 0.0
  %151 = vmatprep.subr.mxu0 0.0
  %152 = vmatpush2.msra.mxu0 0.0
  %153 = vmatprep.subr.mxu0 0.0
  %154 = vmatpush2.msra.mxu0 0.0
  %155 = vmatprep.subr.mxu0 0.0
  %156 = vmatpush2.msra.mxu0 0.0
  %157 = vmatprep.subr.mxu0 0.0
  %158 = vmatpush2.msra.mxu0 0.0
  %159 = vmatprep.subr.mxu0 0.0
  %160 = vmatpush2.msra.mxu0 0.0
  %161 = vmatprep.subr.mxu0 0.0
  %162 = vmatpush2.msra.mxu0 0.0
  %163 = vmatprep.subr.mxu0 0.0
  %164 = vmatpush2.msra.mxu0 0.0
  %165 = vmatprep.subr.mxu0 0.0
  %166 = vmatpush2.msra.mxu0 0.0
  %167 = vmatprep.subr.mxu0 0.0
  %168 = vmatpush2.msra.mxu0 0.0
  %169 = vmatprep.subr.mxu0 0.0
  %170 = vmatpush2.msra.mxu0 0.0
  %171 = vmatprep.subr.mxu0 0.0
  %172 = vmatpush2.msra.mxu0 0.0
  %173 = vmatprep.subr.mxu0 0.0
  %174 = vmatpush2.msra.mxu0 0.0
  %175 = vmatprep.subr.mxu0 0.0
  %176 = vmatpush2.msra.mxu0 0.0
  %177 = vmatprep.subr.mxu0 0.0
  %178 = vmatpush2.msra.mxu0 0.0
  %179 = vmatprep.mubr.f32.mxu0 0.0
  %180 = vmatmul.mubr.f32.gmra.mxu0 %v113
  %v181 = vpop.f32.mrf.mxu0
  %v182 = vadd.f32 0.0, %v181
  %v183 = vpop.f32.mrf.mxu0
  %184 = vdwg.mxu0
  %186 = vrot.lane.b32.xlu0 %v182, 96
  %v187 = vpop.permute.xlu0 %186
  %189 = vrot.lane.b32.xlu0 %v182, 64
  %v190 = vpop.permute.xlu0 %189
  %v193 = vlaneseq
  %v194 = vshrl.u32 %v193, 7
  %v195 = vsub.s32 0, %v194
  %v196 = vrot.slane %v110, %v195
  %198 = vmatprep.subr.mxu0 0.0
  %199 = vmatpush1.msra.mxu0 0.0
  %200 = vmatprep.subr.mxu0 0.0
  %201 = vmatpush1.msra.mxu0 0.0
  %202 = vmatprep.subr.mxu0 0.0
  %203 = vmatpush1.msra.mxu0 0.0
  %204 = vmatprep.subr.mxu0 0.0
  %205 = vmatpush1.msra.mxu0 0.0
  %206 = vmatprep.subr.mxu0 0.0
  %207 = vmatpush1.msra.mxu0 0.0
  %208 = vmatprep.subr.mxu0 0.0
  %209 = vmatpush1.msra.mxu0 0.0
  %210 = vmatprep.subr.mxu0 0.0
  %211 = vmatpush1.msra.mxu0 0.0
  %212 = vmatprep.subr.mxu0 0.0
  %213 = vmatpush1.msra.mxu0 0.0
  %214 = vmatprep.subr.mxu0 0.0
  %215 = vmatpush1.msra.mxu0 0.0
  %216 = vmatprep.subr.mxu0 0.0
  %217 = vmatpush1.msra.mxu0 0.0
  %218 = vmatprep.subr.mxu0 0.0
  %219 = vmatpush1.msra.mxu0 0.0
  %220 = vmatprep.subr.mxu0 0.0
  %221 = vmatpush1.msra.mxu0 0.0
  %222 = vmatprep.subr.mxu0 0.0
  %223 = vmatpush1.msra.mxu0 0.0
  %224 = vmatprep.subr.mxu0 0.0
  %225 = vmatpush1.msra.mxu0 %v190
  %226 = vmatprep.subr.mxu0 0.0
  %227 = vmatpush1.msra.mxu0 %v187
  %228 = vmatprep.subr.mxu0 0.0
  %229 = vmatpush1.msra.mxu0 %v182
  %230 = vmatprep.subr.mxu0 0.0
  %231 = vmatpush2.msra.mxu0 0.0
  %232 = vmatprep.subr.mxu0 0.0
  %233 = vmatpush2.msra.mxu0 0.0
  %234 = vmatprep.subr.mxu0 0.0
  %235 = vmatpush2.msra.mxu0 0.0
  %236 = vmatprep.subr.mxu0 0.0
  %237 = vmatpush2.msra.mxu0 0.0
  %238 = vmatprep.subr.mxu0 0.0
  %239 = vmatpush2.msra.mxu0 0.0
  %240 = vmatprep.subr.mxu0 0.0
  %241 = vmatpush2.msra.mxu0 0.0
  %242 = vmatprep.subr.mxu0 0.0
  %243 = vmatpush2.msra.mxu0 0.0
  %244 = vmatprep.subr.mxu0 0.0
  %245 = vmatpush2.msra.mxu0 0.0
  %246 = vmatprep.subr.mxu0 0.0
  %247 = vmatpush2.msra.mxu0 0.0
  %248 = vmatprep.subr.mxu0 0.0
  %249 = vmatpush2.msra.mxu0 0.0
  %250 = vmatprep.subr.mxu0 0.0
  %251 = vmatpush2.msra.mxu0 0.0
  %252 = vmatprep.subr.mxu0 0.0
  %253 = vmatpush2.msra.mxu0 0.0
  %254 = vmatprep.subr.mxu0 0.0
  %255 = vmatpush2.msra.mxu0 0.0
  %256 = vmatprep.subr.mxu0 0.0
  %257 = vmatpush2.msra.mxu0 0.0
  %258 = vmatprep.subr.mxu0 0.0
  %259 = vmatpush2.msra.mxu0 0.0
  %260 = vmatprep.subr.mxu0 0.0
  %261 = vmatpush2.msra.mxu0 0.0
  %262 = vmatprep.mubr.f32.mxu0 0.0
  %263 = vmatmul.mubr.f32.gmra.mxu0 %v33
  %v264 = vpop.f32.mrf.mxu0
  %v265 = vadd.f32 %v196, %v264
  %v266 = vpop.f32.mrf.mxu0
  %267 = vdwg.mxu0
  %v268 = vmax.f32 %v265, 0.0
  %269 = vst.msk [vmem:[%s5] sm:$0xff] %vm111, %v268
  // Predicated region
  $region22: #{graph_a2c_forward.2} parent=0 // pred_check
    _
  $region23: #{graph_a2c_forward.2} parent=0 // pred_check_branch
    %271 = sbr.rel (0) target = $region25
  $region24: #{graph_a2c_forward.2} parent=0 // pred_region
    _
  $region25: #{graph_a2c_forward.2} parent=0 // pred_fallthru
    _
  // Predicated region
  $region26: #{graph_a2c_forward.2} parent=0 // pred_check
    _
  $region27: #{graph_a2c_forward.2} parent=0 // pred_check_branch
    %273 = sbr.rel (0) target = $region29
  $region28: #{graph_a2c_forward.2} parent=0 // pred_region
    _
  $region29: #{graph_a2c_forward.2} parent=0 // pred_fallthru
    _

// kernel: graph_a2c_forward.3
$region0: #{graph_a2c_forward.3}
  #allocation0 [shape = 'u32[]', space=smem, size = 0x4, offset = 0x4, fixed_abs, tag = 'smem constant byte address 0x4 - core index']
  #allocation1 [shape = 'u32[144,128]{1,0:T(1,128)}', space=vmem, size = 0x12000, scoped, tag = 'internal scratch']
  #allocation2 [shape = 'f32[1,1]{1,0:T(1,128)S(1)}', space=vmem, size = 0x200, scoped, tag = 'scoped memory for graph_a2c_forward.3']
  %s0 = inlined_call_operand.vmem [shape: f32[2,256,8], index: 0, kind: input, shape index: {}]
  %s1 = inlined_call_operand.vmem [shape: f32[2,8,256], index: 1, kind: input, shape index: {}]
  %s2 = inlined_call_operand.vmem [shape: f32[8,32], index: 2, kind: input, shape index: {}]
  %s3 = inlined_call_operand.vmem [shape: f32[8,24], index: 3, kind: input, shape index: {}]
  %s4 = inlined_call_operand.vmem [shape: f32[32,96], index: 4, kind: input, shape index: {}]
  %s5 = inlined_call_operand.vmem [shape: f32[1,32], index: 5, kind: input, shape index: {}]
  %s6 = inlined_call_operand.vmem [shape: f32[32,96], index: 6, kind: input, shape index: {}]
  %s7 = inlined_call_operand.vmem [shape: f32[1,32], index: 7, kind: input, shape index: {}]
  %s8 = inlined_call_operand.vmem [shape: f32[288,32], index: 8, kind: input, shape index: {}]
  %s9 = inlined_call_operand.vmem [shape: f32[1,32], index: 9, kind: input, shape index: {}]
  %s10 = inlined_call_operand.vmem [shape: f32[32,32], index: 10, kind: input, shape index: {}]
  %s11 = inlined_call_operand.vmem [shape: f32[1,32], index: 11, kind: input, shape index: {}]
  %s12 = inlined_call_operand.vmem [shape: f32[32,32], index: 12, kind: input, shape index: {}]
  %s13 = inlined_call_operand.vmem [shape: f32[288,16], index: 13, kind: input, shape index: {}]
  %s14 = inlined_call_operand.vmem [shape: f32[1,16], index: 14, kind: input, shape index: {}]
  %s15 = inlined_call_operand.vmem [shape: f32[32,16], index: 15, kind: input, shape index: {}]
  %s16 = inlined_call_operand.vmem [shape: f32[1,16], index: 16, kind: input, shape index: {}]
  %s17 = inlined_call_operand.vmem [shape: f32[16,32], index: 17, kind: input, shape index: {}]
  %s18 = inlined_call_operand.vmem [shape: f32[1,32], index: 18, kind: input, shape index: {}]
  %s19 = inlined_call_operand.vmem [shape: f32[32,5], index: 19, kind: input, shape index: {}]
  %s20 = inlined_call_operand.vmem [shape: f32[1,5], index: 20, kind: input, shape index: {}]
  %s21 = inlined_call_operand.vmem [shape: f32[16,32], index: 21, kind: input, shape index: {}]
  %s22 = inlined_call_operand.vmem [shape: f32[1,32], index: 22, kind: input, shape index: {}]
  %s23 = inlined_call_operand.vmem [shape: f32[32,1], index: 23, kind: input, shape index: {}]
  %s24 = inlined_call_operand.<no memory space> [shape: f32[1,1], index: 24, kind: input, shape index: {}]
  %s25 = inlined_call_operand.hbm [shape: f32[2,1,5], index: 25, kind: output, shape index: {0}]
  %s26 = inlined_call_operand.vmem [shape: f32[2,1,1], index: 26, kind: output, shape index: {1}]
  %27 = xla_tuple %s25, %s26
  %s28 = sld [smem:[#allocation0]]
  $region141: #{graph_a2c_forward.3} parent=0
    _
  %s30 = ssub.s32 1, %s28
  %s31 = scalar_select 0, %s30, %s28
  %v32 = vstv %s24
  %33 = vst [vmem:[#allocation2] sm:$0x1] %v32
  $region1: #{graph_a2c_forward.3} parent=0
    #allocation3 [shape = 'u8[1024]{0}', space=vmem, size = 0x400, scoped, tag = 'output window, operand 0']
    #allocation4 [shape = 's32[2]{0}', space=sflag, size = 0x8, scoped, tag = 'scoped memory for graph_a2c_forward.3']
    %34 = vsyncpa [#allocation4], 0
    %s35 = scalar_lea.sflag [#allocation4], 1
    %36 = vsyncpa %s35, 0
    loop: start=0, step=1, limit=4
    $region2: #{graph_a2c_forward.3} parent=1 // loop_pre_header
      _
    $region3: #{graph_a2c_forward.3} parent=1 // loop_header
      %s38 = sphi 0, %s42
      %p39 = scmp.ge.s32.totalorder %s38, 4
      %s48 = sphi 0, %s50
      %s51 = sphi 0, %s48
      %s52 = sphi 0, %s51
      %s68 = sphi 0, %s52
      %s74 = sphi 0, %s76
      %s77 = sphi 0, %s74
      %s78 = sphi 0, %s77
      %s94 = sphi 0, %s78
      %s98 = sphi 0, %s98
      %s100 = sphi 0, %s98
      %s101 = sphi 0, %s100
      %s115 = sphi 0, %s101
      %s119 = sphi 0, %s119
      %s121 = sphi 0, %s119
      %s122 = sphi 0, %s121
      %s136 = sphi 0, %s122
      %s140 = sphi 0, %s140
      %s142 = sphi 0, %s140
      %s143 = sphi 0, %s142
      %s157 = sphi 0, %s143
      %s161 = sphi 0, %s161
      %s163 = sphi 0, %s161
      %s164 = sphi 0, %s163
      %s178 = sphi 0, %s164
      %s182 = sphi 0, %s182
      %s184 = sphi 0, %s182
      %s185 = sphi 0, %s184
      %s199 = sphi 0, %s185
      %s203 = sphi 0, %s203
      %s205 = sphi 0, %s203
      %s206 = sphi 0, %s205
      %s220 = sphi 0, %s206
      %s224 = sphi 0, %s224
      %s226 = sphi 0, %s224
      %s227 = sphi 0, %s226
      %s241 = sphi 0, %s227
      %s245 = sphi 0, %s245
      %s247 = sphi 0, %s245
      %s248 = sphi 0, %s247
      %s262 = sphi 0, %s248
      %s266 = sphi 0, %s266
      %s268 = sphi 0, %s266
      %s269 = sphi 0, %s268
      %s283 = sphi 0, %s269
      %s287 = sphi 0, %s287
      %s289 = sphi 0, %s287
      %s290 = sphi 0, %s289
      %s304 = sphi 0, %s290
      %s308 = sphi 0, %s308
      %s310 = sphi 0, %s308
      %s311 = sphi 0, %s310
      %s325 = sphi 0, %s311
      %s329 = sphi 0, %s329
      %s331 = sphi 0, %s329
      %s332 = sphi 0, %s331
      %s346 = sphi 0, %s332
      %s350 = sphi 0, %s350
      %s352 = sphi 0, %s350
      %s353 = sphi 0, %s352
      %s367 = sphi 0, %s353
      %s371 = sphi 0, %s371
      %s373 = sphi 0, %s371
      %s374 = sphi 0, %s373
      %s388 = sphi 0, %s374
      %s392 = sphi 0, %s392
      %s394 = sphi 0, %s392
      %s395 = sphi 0, %s394
      %s409 = sphi 0, %s395
      %s413 = sphi 0, %s413
      %s415 = sphi 0, %s413
      %s416 = sphi 0, %s415
      %s430 = sphi 0, %s416
      %s434 = sphi 0, %s434
      %s436 = sphi 0, %s434
      %s437 = sphi 0, %s436
      %s451 = sphi 0, %s437
      %s455 = sphi 0, %s455
      %s457 = sphi 0, %s455
      %s458 = sphi 0, %s457
      %s472 = sphi 0, %s458
      %s476 = sphi 0, %s476
      %s478 = sphi 0, %s476
      %s479 = sphi 0, %s478
      %s493 = sphi 0, %s479
      %s497 = sphi 0, %s497
      %s499 = sphi 0, %s497
      %s500 = sphi 0, %s499
      %s514 = sphi 0, %s500
      %s518 = sphi 0, %s518
      %s520 = sphi 0, %s518
      %s521 = sphi 0, %s520
      %s535 = sphi 0, %s521
      %s539 = sphi 0, %s539
      %s541 = sphi 0, %s539
      %s542 = sphi 0, %s541
      %s556 = sphi 0, %s542
      %s560 = sphi 0, %s560
      %s562 = sphi 0, %s560
      %s563 = sphi 0, %s562
      %s577 = sphi 0, %s563
      %s583 = sphi 0, %s585
      %s586 = sphi 0, %s583
      %s587 = sphi 0, %s586
      %s603 = sphi 0, %s587
      %s609 = sphi 0, %s611
      %s612 = sphi 0, %s609
      %s613 = sphi 0, %s612
      %s629 = sphi 0, %s613
    $region4: #{graph_a2c_forward.3} parent=1 // loop_header_branch
      %41 = sbr.rel (%p39) target = $region8
    $region5: #{graph_a2c_forward.3} parent=1 // loop_body
      %s43 = ssub.s32 %s38, 1
      %s44 = ssub.s32 %s38, 2
      %s45 = sadd.s32 %s38, 1
      %s46 = ssub.s32 %s38, %s45
      %p47 = scmp.eq.s32.totalorder %s46, 0
      %s49 = sadd.s32 %s48, 1
      %s50 = scalar_select %p47, %s48, %s49
      %p53 = pneg %p47
      %p54 = scmp.eq.s32.totalorder %s38, 1
      %p55 = por %p53, %p54
      %p56 = scmp.ne.s32.totalorder %s48, %s51
      %p57 = scmp.eq.s32.totalorder %s38, 0
      %p58 = por %p56, %p57
      %p59 = scmp.ne.s32.totalorder %s48, %s51
      %p60 = scmp.eq.s32.totalorder %s43, 1
      %p61 = por %p59, %p60
      %p62 = scmp.ne.s32.totalorder %s51, %s52
      %p63 = scmp.eq.s32.totalorder %s43, 0
      %p64 = por %p62, %p63
      %p65 = scmp.ne.s32.totalorder %s51, %s52
      %p66 = scmp.eq.s32.totalorder %s44, 1
      %p67 = por %p65, %p66
      %p69 = scmp.ne.s32.totalorder %s52, %s68
      %p70 = scmp.eq.s32.totalorder %s44, 0
      %p71 = por %p69, %p70
      %s72 = ssub.s32 %s38, %s45
      %p73 = scmp.eq.s32.totalorder %s72, 0
      %s75 = sadd.s32 %s74, 1
      %s76 = scalar_select %p73, %s74, %s75
      %p79 = pneg %p73
      %p80 = scmp.eq.s32.totalorder %s38, 1
      %p81 = por %p79, %p80
      %p82 = scmp.ne.s32.totalorder %s74, %s77
      %p83 = scmp.eq.s32.totalorder %s38, 0
      %p84 = por %p82, %p83
      %p85 = scmp.ne.s32.totalorder %s74, %s77
      %p86 = scmp.eq.s32.totalorder %s43, 1
      %p87 = por %p85, %p86
      %p88 = scmp.ne.s32.totalorder %s77, %s78
      %p89 = scmp.eq.s32.totalorder %s43, 0
      %p90 = por %p88, %p89
      %p91 = scmp.ne.s32.totalorder %s77, %s78
      %p92 = scmp.eq.s32.totalorder %s44, 1
      %p93 = por %p91, %p92
      %p95 = scmp.ne.s32.totalorder %s78, %s94
      %p96 = scmp.eq.s32.totalorder %s44, 0
      %p97 = por %p95, %p96
      %s99 = sadd.s32 %s98, 1
      %p102 = scmp.eq.s32.totalorder %s38, 1
      %p103 = scmp.ne.s32.totalorder %s98, %s100
      %p104 = scmp.eq.s32.totalorder %s38, 0
      %p105 = por %p103, %p104
      %p106 = scmp.ne.s32.totalorder %s98, %s100
      %p107 = scmp.eq.s32.totalorder %s43, 1
      %p108 = por %p106, %p107
      %p109 = scmp.ne.s32.totalorder %s100, %s101
      %p110 = scmp.eq.s32.totalorder %s43, 0
      %p111 = por %p109, %p110
      %p112 = scmp.ne.s32.totalorder %s100, %s101
      %p113 = scmp.eq.s32.totalorder %s44, 1
      %p114 = por %p112, %p113
      %p116 = scmp.ne.s32.totalorder %s101, %s115
      %p117 = scmp.eq.s32.totalorder %s44, 0
      %p118 = por %p116, %p117
      %s120 = sadd.s32 %s119, 1
      %p123 = scmp.eq.s32.totalorder %s38, 1
      %p124 = scmp.ne.s32.totalorder %s119, %s121
      %p125 = scmp.eq.s32.totalorder %s38, 0
      %p126 = por %p124, %p125
      %p127 = scmp.ne.s32.totalorder %s119, %s121
      %p128 = scmp.eq.s32.totalorder %s43, 1
      %p129 = por %p127, %p128
      %p130 = scmp.ne.s32.totalorder %s121, %s122
      %p131 = scmp.eq.s32.totalorder %s43, 0
      %p132 = por %p130, %p131
      %p133 = scmp.ne.s32.totalorder %s121, %s122
      %p134 = scmp.eq.s32.totalorder %s44, 1
      %p135 = por %p133, %p134
      %p137 = scmp.ne.s32.totalorder %s122, %s136
      %p138 = scmp.eq.s32.totalorder %s44, 0
      %p139 = por %p137, %p138
      %s141 = sadd.s32 %s140, 1
      %p144 = scmp.eq.s32.totalorder %s38, 1
      %p145 = scmp.ne.s32.totalorder %s140, %s142
      %p146 = scmp.eq.s32.totalorder %s38, 0
      %p147 = por %p145, %p146
      %p148 = scmp.ne.s32.totalorder %s140, %s142
      %p149 = scmp.eq.s32.totalorder %s43, 1
      %p150 = por %p148, %p149
      %p151 = scmp.ne.s32.totalorder %s142, %s143
      %p152 = scmp.eq.s32.totalorder %s43, 0
      %p153 = por %p151, %p152
      %p154 = scmp.ne.s32.totalorder %s142, %s143
      %p155 = scmp.eq.s32.totalorder %s44, 1
      %p156 = por %p154, %p155
      %p158 = scmp.ne.s32.totalorder %s143, %s157
      %p159 = scmp.eq.s32.totalorder %s44, 0
      %p160 = por %p158, %p159
      %s162 = sadd.s32 %s161, 1
      %p165 = scmp.eq.s32.totalorder %s38, 1
      %p166 = scmp.ne.s32.totalorder %s161, %s163
      %p167 = scmp.eq.s32.totalorder %s38, 0
      %p168 = por %p166, %p167
      %p169 = scmp.ne.s32.totalorder %s161, %s163
      %p170 = scmp.eq.s32.totalorder %s43, 1
      %p171 = por %p169, %p170
      %p172 = scmp.ne.s32.totalorder %s163, %s164
      %p173 = scmp.eq.s32.totalorder %s43, 0
      %p174 = por %p172, %p173
      %p175 = scmp.ne.s32.totalorder %s163, %s164
      %p176 = scmp.eq.s32.totalorder %s44, 1
      %p177 = por %p175, %p176
      %p179 = scmp.ne.s32.totalorder %s164, %s178
      %p180 = scmp.eq.s32.totalorder %s44, 0
      %p181 = por %p179, %p180
      %s183 = sadd.s32 %s182, 1
      %p186 = scmp.eq.s32.totalorder %s38, 1
      %p187 = scmp.ne.s32.totalorder %s182, %s184
      %p188 = scmp.eq.s32.totalorder %s38, 0
      %p189 = por %p187, %p188
      %p190 = scmp.ne.s32.totalorder %s182, %s184
      %p191 = scmp.eq.s32.totalorder %s43, 1
      %p192 = por %p190, %p191
      %p193 = scmp.ne.s32.totalorder %s184, %s185
      %p194 = scmp.eq.s32.totalorder %s43, 0
      %p195 = por %p193, %p194
      %p196 = scmp.ne.s32.totalorder %s184, %s185
      %p197 = scmp.eq.s32.totalorder %s44, 1
      %p198 = por %p196, %p197
      %p200 = scmp.ne.s32.totalorder %s185, %s199
      %p201 = scmp.eq.s32.totalorder %s44, 0
      %p202 = por %p200, %p201
      %s204 = sadd.s32 %s203, 1
      %p207 = scmp.eq.s32.totalorder %s38, 1
      %p208 = scmp.ne.s32.totalorder %s203, %s205
      %p209 = scmp.eq.s32.totalorder %s38, 0
      %p210 = por %p208, %p209
      %p211 = scmp.ne.s32.totalorder %s203, %s205
      %p212 = scmp.eq.s32.totalorder %s43, 1
      %p213 = por %p211, %p212
      %p214 = scmp.ne.s32.totalorder %s205, %s206
      %p215 = scmp.eq.s32.totalorder %s43, 0
      %p216 = por %p214, %p215
      %p217 = scmp.ne.s32.totalorder %s205, %s206
      %p218 = scmp.eq.s32.totalorder %s44, 1
      %p219 = por %p217, %p218
      %p221 = scmp.ne.s32.totalorder %s206, %s220
      %p222 = scmp.eq.s32.totalorder %s44, 0
      %p223 = por %p221, %p222
      %s225 = sadd.s32 %s224, 1
      %p228 = scmp.eq.s32.totalorder %s38, 1
      %p229 = scmp.ne.s32.totalorder %s224, %s226
      %p230 = scmp.eq.s32.totalorder %s38, 0
      %p231 = por %p229, %p230
      %p232 = scmp.ne.s32.totalorder %s224, %s226
      %p233 = scmp.eq.s32.totalorder %s43, 1
      %p234 = por %p232, %p233
      %p235 = scmp.ne.s32.totalorder %s226, %s227
      %p236 = scmp.eq.s32.totalorder %s43, 0
      %p237 = por %p235, %p236
      %p238 = scmp.ne.s32.totalorder %s226, %s227
      %p239 = scmp.eq.s32.totalorder %s44, 1
      %p240 = por %p238, %p239
      %p242 = scmp.ne.s32.totalorder %s227, %s241
      %p243 = scmp.eq.s32.totalorder %s44, 0
      %p244 = por %p242, %p243
      %s246 = sadd.s32 %s245, 1
      %p249 = scmp.eq.s32.totalorder %s38, 1
      %p250 = scmp.ne.s32.totalorder %s245, %s247
      %p251 = scmp.eq.s32.totalorder %s38, 0
      %p252 = por %p250, %p251
      %p253 = scmp.ne.s32.totalorder %s245, %s247
      %p254 = scmp.eq.s32.totalorder %s43, 1
      %p255 = por %p253, %p254
      %p256 = scmp.ne.s32.totalorder %s247, %s248
      %p257 = scmp.eq.s32.totalorder %s43, 0
      %p258 = por %p256, %p257
      %p259 = scmp.ne.s32.totalorder %s247, %s248
      %p260 = scmp.eq.s32.totalorder %s44, 1
      %p261 = por %p259, %p260
      %p263 = scmp.ne.s32.totalorder %s248, %s262
      %p264 = scmp.eq.s32.totalorder %s44, 0
      %p265 = por %p263, %p264
      %s267 = sadd.s32 %s266, 1
      %p270 = scmp.eq.s32.totalorder %s38, 1
      %p271 = scmp.ne.s32.totalorder %s266, %s268
      %p272 = scmp.eq.s32.totalorder %s38, 0
      %p273 = por %p271, %p272
      %p274 = scmp.ne.s32.totalorder %s266, %s268
      %p275 = scmp.eq.s32.totalorder %s43, 1
      %p276 = por %p274, %p275
      %p277 = scmp.ne.s32.totalorder %s268, %s269
      %p278 = scmp.eq.s32.totalorder %s43, 0
      %p279 = por %p277, %p278
      %p280 = scmp.ne.s32.totalorder %s268, %s269
      %p281 = scmp.eq.s32.totalorder %s44, 1
      %p282 = por %p280, %p281
      %p284 = scmp.ne.s32.totalorder %s269, %s283
      %p285 = scmp.eq.s32.totalorder %s44, 0
      %p286 = por %p284, %p285
      %s288 = sadd.s32 %s287, 1
      %p291 = scmp.eq.s32.totalorder %s38, 1
      %p292 = scmp.ne.s32.totalorder %s287, %s289
      %p293 = scmp.eq.s32.totalorder %s38, 0
      %p294 = por %p292, %p293
      %p295 = scmp.ne.s32.totalorder %s287, %s289
      %p296 = scmp.eq.s32.totalorder %s43, 1
      %p297 = por %p295, %p296
      %p298 = scmp.ne.s32.totalorder %s289, %s290
      %p299 = scmp.eq.s32.totalorder %s43, 0
      %p300 = por %p298, %p299
      %p301 = scmp.ne.s32.totalorder %s289, %s290
      %p302 = scmp.eq.s32.totalorder %s44, 1
      %p303 = por %p301, %p302
      %p305 = scmp.ne.s32.totalorder %s290, %s304
      %p306 = scmp.eq.s32.totalorder %s44, 0
      %p307 = por %p305, %p306
      %s309 = sadd.s32 %s308, 1
      %p312 = scmp.eq.s32.totalorder %s38, 1
      %p313 = scmp.ne.s32.totalorder %s308, %s310
      %p314 = scmp.eq.s32.totalorder %s38, 0
      %p315 = por %p313, %p314
      %p316 = scmp.ne.s32.totalorder %s308, %s310
      %p317 = scmp.eq.s32.totalorder %s43, 1
      %p318 = por %p316, %p317
      %p319 = scmp.ne.s32.totalorder %s310, %s311
      %p320 = scmp.eq.s32.totalorder %s43, 0
      %p321 = por %p319, %p320
      %p322 = scmp.ne.s32.totalorder %s310, %s311
      %p323 = scmp.eq.s32.totalorder %s44, 1
      %p324 = por %p322, %p323
      %p326 = scmp.ne.s32.totalorder %s311, %s325
      %p327 = scmp.eq.s32.totalorder %s44, 0
      %p328 = por %p326, %p327
      %s330 = sadd.s32 %s329, 1
      %p333 = scmp.eq.s32.totalorder %s38, 1
      %p334 = scmp.ne.s32.totalorder %s329, %s331
      %p335 = scmp.eq.s32.totalorder %s38, 0
      %p336 = por %p334, %p335
      %p337 = scmp.ne.s32.totalorder %s329, %s331
      %p338 = scmp.eq.s32.totalorder %s43, 1
      %p339 = por %p337, %p338
      %p340 = scmp.ne.s32.totalorder %s331, %s332
      %p341 = scmp.eq.s32.totalorder %s43, 0
      %p342 = por %p340, %p341
      %p343 = scmp.ne.s32.totalorder %s331, %s332
      %p344 = scmp.eq.s32.totalorder %s44, 1
      %p345 = por %p343, %p344
      %p347 = scmp.ne.s32.totalorder %s332, %s346
      %p348 = scmp.eq.s32.totalorder %s44, 0
      %p349 = por %p347, %p348
      %s351 = sadd.s32 %s350, 1
      %p354 = scmp.eq.s32.totalorder %s38, 1
      %p355 = scmp.ne.s32.totalorder %s350, %s352
      %p356 = scmp.eq.s32.totalorder %s38, 0
      %p357 = por %p355, %p356
      %p358 = scmp.ne.s32.totalorder %s350, %s352
      %p359 = scmp.eq.s32.totalorder %s43, 1
      %p360 = por %p358, %p359
      %p361 = scmp.ne.s32.totalorder %s352, %s353
      %p362 = scmp.eq.s32.totalorder %s43, 0
      %p363 = por %p361, %p362
      %p364 = scmp.ne.s32.totalorder %s352, %s353
      %p365 = scmp.eq.s32.totalorder %s44, 1
      %p366 = por %p364, %p365
      %p368 = scmp.ne.s32.totalorder %s353, %s367
      %p369 = scmp.eq.s32.totalorder %s44, 0
      %p370 = por %p368, %p369
      %s372 = sadd.s32 %s371, 1
      %p375 = scmp.eq.s32.totalorder %s38, 1
      %p376 = scmp.ne.s32.totalorder %s371, %s373
      %p377 = scmp.eq.s32.totalorder %s38, 0
      %p378 = por %p376, %p377
      %p379 = scmp.ne.s32.totalorder %s371, %s373
      %p380 = scmp.eq.s32.totalorder %s43, 1
      %p381 = por %p379, %p380
      %p382 = scmp.ne.s32.totalorder %s373, %s374
      %p383 = scmp.eq.s32.totalorder %s43, 0
      %p384 = por %p382, %p383
      %p385 = scmp.ne.s32.totalorder %s373, %s374
      %p386 = scmp.eq.s32.totalorder %s44, 1
      %p387 = por %p385, %p386
      %p389 = scmp.ne.s32.totalorder %s374, %s388
      %p390 = scmp.eq.s32.totalorder %s44, 0
      %p391 = por %p389, %p390
      %s393 = sadd.s32 %s392, 1
      %p396 = scmp.eq.s32.totalorder %s38, 1
      %p397 = scmp.ne.s32.totalorder %s392, %s394
      %p398 = scmp.eq.s32.totalorder %s38, 0
      %p399 = por %p397, %p398
      %p400 = scmp.ne.s32.totalorder %s392, %s394
      %p401 = scmp.eq.s32.totalorder %s43, 1
      %p402 = por %p400, %p401
      %p403 = scmp.ne.s32.totalorder %s394, %s395
      %p404 = scmp.eq.s32.totalorder %s43, 0
      %p405 = por %p403, %p404
      %p406 = scmp.ne.s32.totalorder %s394, %s395
      %p407 = scmp.eq.s32.totalorder %s44, 1
      %p408 = por %p406, %p407
      %p410 = scmp.ne.s32.totalorder %s395, %s409
      %p411 = scmp.eq.s32.totalorder %s44, 0
      %p412 = por %p410, %p411
      %s414 = sadd.s32 %s413, 1
      %p417 = scmp.eq.s32.totalorder %s38, 1
      %p418 = scmp.ne.s32.totalorder %s413, %s415
      %p419 = scmp.eq.s32.totalorder %s38, 0
      %p420 = por %p418, %p419
      %p421 = scmp.ne.s32.totalorder %s413, %s415
      %p422 = scmp.eq.s32.totalorder %s43, 1
      %p423 = por %p421, %p422
      %p424 = scmp.ne.s32.totalorder %s415, %s416
      %p425 = scmp.eq.s32.totalorder %s43, 0
      %p426 = por %p424, %p425
      %p427 = scmp.ne.s32.totalorder %s415, %s416
      %p428 = scmp.eq.s32.totalorder %s44, 1
      %p429 = por %p427, %p428
      %p431 = scmp.ne.s32.totalorder %s416, %s430
      %p432 = scmp.eq.s32.totalorder %s44, 0
      %p433 = por %p431, %p432
      %s435 = sadd.s32 %s434, 1
      %p438 = scmp.eq.s32.totalorder %s38, 1
      %p439 = scmp.ne.s32.totalorder %s434, %s436
      %p440 = scmp.eq.s32.totalorder %s38, 0
      %p441 = por %p439, %p440
      %p442 = scmp.ne.s32.totalorder %s434, %s436
      %p443 = scmp.eq.s32.totalorder %s43, 1
      %p444 = por %p442, %p443
      %p445 = scmp.ne.s32.totalorder %s436, %s437
      %p446 = scmp.eq.s32.totalorder %s43, 0
      %p447 = por %p445, %p446
      %p448 = scmp.ne.s32.totalorder %s436, %s437
      %p449 = scmp.eq.s32.totalorder %s44, 1
      %p450 = por %p448, %p449
      %p452 = scmp.ne.s32.totalorder %s437, %s451
      %p453 = scmp.eq.s32.totalorder %s44, 0
      %p454 = por %p452, %p453
      %s456 = sadd.s32 %s455, 1
      %p459 = scmp.eq.s32.totalorder %s38, 1
      %p460 = scmp.ne.s32.totalorder %s455, %s457
      %p461 = scmp.eq.s32.totalorder %s38, 0
      %p462 = por %p460, %p461
      %p463 = scmp.ne.s32.totalorder %s455, %s457
      %p464 = scmp.eq.s32.totalorder %s43, 1
      %p465 = por %p463, %p464
      %p466 = scmp.ne.s32.totalorder %s457, %s458
      %p467 = scmp.eq.s32.totalorder %s43, 0
      %p468 = por %p466, %p467
      %p469 = scmp.ne.s32.totalorder %s457, %s458
      %p470 = scmp.eq.s32.totalorder %s44, 1
      %p471 = por %p469, %p470
      %p473 = scmp.ne.s32.totalorder %s458, %s472
      %p474 = scmp.eq.s32.totalorder %s44, 0
      %p475 = por %p473, %p474
      %s477 = sadd.s32 %s476, 1
      %p480 = scmp.eq.s32.totalorder %s38, 1
      %p481 = scmp.ne.s32.totalorder %s476, %s478
      %p482 = scmp.eq.s32.totalorder %s38, 0
      %p483 = por %p481, %p482
      %p484 = scmp.ne.s32.totalorder %s476, %s478
      %p485 = scmp.eq.s32.totalorder %s43, 1
      %p486 = por %p484, %p485
      %p487 = scmp.ne.s32.totalorder %s478, %s479
      %p488 = scmp.eq.s32.totalorder %s43, 0
      %p489 = por %p487, %p488
      %p490 = scmp.ne.s32.totalorder %s478, %s479
      %p491 = scmp.eq.s32.totalorder %s44, 1
      %p492 = por %p490, %p491
      %p494 = scmp.ne.s32.totalorder %s479, %s493
      %p495 = scmp.eq.s32.totalorder %s44, 0
      %p496 = por %p494, %p495
      %s498 = sadd.s32 %s497, 1
      %p501 = scmp.eq.s32.totalorder %s38, 1
      %p502 = scmp.ne.s32.totalorder %s497, %s499
      %p503 = scmp.eq.s32.totalorder %s38, 0
      %p504 = por %p502, %p503
      %p505 = scmp.ne.s32.totalorder %s497, %s499
      %p506 = scmp.eq.s32.totalorder %s43, 1
      %p507 = por %p505, %p506
      %p508 = scmp.ne.s32.totalorder %s499, %s500
      %p509 = scmp.eq.s32.totalorder %s43, 0
      %p510 = por %p508, %p509
      %p511 = scmp.ne.s32.totalorder %s499, %s500
      %p512 = scmp.eq.s32.totalorder %s44, 1
      %p513 = por %p511, %p512
      %p515 = scmp.ne.s32.totalorder %s500, %s514
      %p516 = scmp.eq.s32.totalorder %s44, 0
      %p517 = por %p515, %p516
      %s519 = sadd.s32 %s518, 1
      %p522 = scmp.eq.s32.totalorder %s38, 1
      %p523 = scmp.ne.s32.totalorder %s518, %s520
      %p524 = scmp.eq.s32.totalorder %s38, 0
      %p525 = por %p523, %p524
      %p526 = scmp.ne.s32.totalorder %s518, %s520
      %p527 = scmp.eq.s32.totalorder %s43, 1
      %p528 = por %p526, %p527
      %p529 = scmp.ne.s32.totalorder %s520, %s521
      %p530 = scmp.eq.s32.totalorder %s43, 0
      %p531 = por %p529, %p530
      %p532 = scmp.ne.s32.totalorder %s520, %s521
      %p533 = scmp.eq.s32.totalorder %s44, 1
      %p534 = por %p532, %p533
      %p536 = scmp.ne.s32.totalorder %s521, %s535
      %p537 = scmp.eq.s32.totalorder %s44, 0
      %p538 = por %p536, %p537
      %s540 = sadd.s32 %s539, 1
      %p543 = scmp.eq.s32.totalorder %s38, 1
      %p544 = scmp.ne.s32.totalorder %s539, %s541
      %p545 = scmp.eq.s32.totalorder %s38, 0
      %p546 = por %p544, %p545
      %p547 = scmp.ne.s32.totalorder %s539, %s541
      %p548 = scmp.eq.s32.totalorder %s43, 1
      %p549 = por %p547, %p548
      %p550 = scmp.ne.s32.totalorder %s541, %s542
      %p551 = scmp.eq.s32.totalorder %s43, 0
      %p552 = por %p550, %p551
      %p553 = scmp.ne.s32.totalorder %s541, %s542
      %p554 = scmp.eq.s32.totalorder %s44, 1
      %p555 = por %p553, %p554
      %p557 = scmp.ne.s32.totalorder %s542, %s556
      %p558 = scmp.eq.s32.totalorder %s44, 0
      %p559 = por %p557, %p558
      %s561 = sadd.s32 %s560, 1
      %p564 = scmp.eq.s32.totalorder %s38, 1
      %p565 = scmp.ne.s32.totalorder %s560, %s562
      %p566 = scmp.eq.s32.totalorder %s38, 0
      %p567 = por %p565, %p566
      %p568 = scmp.ne.s32.totalorder %s560, %s562
      %p569 = scmp.eq.s32.totalorder %s43, 1
      %p570 = por %p568, %p569
      %p571 = scmp.ne.s32.totalorder %s562, %s563
      %p572 = scmp.eq.s32.totalorder %s43, 0
      %p573 = por %p571, %p572
      %p574 = scmp.ne.s32.totalorder %s562, %s563
      %p575 = scmp.eq.s32.totalorder %s44, 1
      %p576 = por %p574, %p575
      %p578 = scmp.ne.s32.totalorder %s563, %s577
      %p579 = scmp.eq.s32.totalorder %s44, 0
      %p580 = por %p578, %p579
      %s581 = ssub.s32 %s38, %s45
      %p582 = scmp.eq.s32.totalorder %s581, 0
      %s584 = sadd.s32 %s583, 1
      %s585 = scalar_select %p582, %s583, %s584
      %p588 = pneg %p582
      %p589 = scmp.eq.s32.totalorder %s38, 1
      %p590 = por %p588, %p589
      %p591 = scmp.ne.s32.totalorder %s583, %s586
      %p592 = scmp.eq.s32.totalorder %s38, 0
      %p593 = por %p591, %p592
      %p594 = scmp.ne.s32.totalorder %s583, %s586
      %p595 = scmp.eq.s32.totalorder %s43, 1
      %p596 = por %p594, %p595
      %p597 = scmp.ne.s32.totalorder %s586, %s587
      %p598 = scmp.eq.s32.totalorder %s43, 0
      %p599 = por %p597, %p598
      %p600 = scmp.ne.s32.totalorder %s586, %s587
      %p601 = scmp.eq.s32.totalorder %s44, 1
      %p602 = por %p600, %p601
      %p604 = scmp.ne.s32.totalorder %s587, %s603
      %p605 = scmp.eq.s32.totalorder %s44, 0
      %p606 = por %p604, %p605
      %s607 = ssub.s32 %s38, %s45
      %p608 = scmp.eq.s32.totalorder %s607, 0
      %s610 = sadd.s32 %s609, 1
      %s611 = scalar_select %p608, %s609, %s610
      %p614 = pneg %p608
      %p615 = scmp.eq.s32.totalorder %s38, 1
      %p616 = por %p614, %p615
      %p617 = scmp.ne.s32.totalorder %s609, %s612
      %p618 = scmp.eq.s32.totalorder %s38, 0
      %p619 = por %p617, %p618
      %p620 = scmp.ne.s32.totalorder %s609, %s612
      %p621 = scmp.eq.s32.totalorder %s43, 1
      %p622 = por %p620, %p621
      %p623 = scmp.ne.s32.totalorder %s612, %s613
      %p624 = scmp.eq.s32.totalorder %s43, 0
      %p625 = por %p623, %p624
      %p626 = scmp.ne.s32.totalorder %s612, %s613
      %p627 = scmp.eq.s32.totalorder %s44, 1
      %p628 = por %p626, %p627
      %p630 = scmp.ne.s32.totalorder %s613, %s629
      %p631 = scmp.eq.s32.totalorder %s44, 0
      %p632 = por %p630, %p631
      %p633 = scmp.le.s32.totalorder 1, %s38
      %p634 = scmp.lt.s32.totalorder %s38, 3
      %p635 = pnand %p633, %p634
      %p636 = pneg %p635
      // Predicated region
      $region9: #{graph_a2c_forward.3} parent=5 // pred_check
        _
      $region10: #{graph_a2c_forward.3} parent=5 // pred_check_branch
        %638 = sbr.rel (%p635) target = $region12
      $region11: #{graph_a2c_forward.3} parent=5 // pred_region
        %s639 = ssub.s32 %s38, 1
        // Predicated region
        $region13: #{graph_a2c_forward.3} parent=11 // pred_check
          %p640 = pneg %p111
        $region14: #{graph_a2c_forward.3} parent=11 // pred_check_branch
          %642 = sbr.rel (%p640) target = $region16
        $region15: #{graph_a2c_forward.3} parent=11 // pred_region
          _
        $region16: #{graph_a2c_forward.3} parent=11 // pred_fallthru
          _
        // Predicated region
        $region17: #{graph_a2c_forward.3} parent=11 // pred_check
          %p643 = pneg %p132
        $region18: #{graph_a2c_forward.3} parent=11 // pred_check_branch
          %645 = sbr.rel (%p643) target = $region20
        $region19: #{graph_a2c_forward.3} parent=11 // pred_region
          _
        $region20: #{graph_a2c_forward.3} parent=11 // pred_fallthru
          _
        // Predicated region
        $region21: #{graph_a2c_forward.3} parent=11 // pred_check
          %p646 = pneg %p153
        $region22: #{graph_a2c_forward.3} parent=11 // pred_check_branch
          %648 = sbr.rel (%p646) target = $region24
        $region23: #{graph_a2c_forward.3} parent=11 // pred_region
          _
        $region24: #{graph_a2c_forward.3} parent=11 // pred_fallthru
          _
        // Predicated region
        $region25: #{graph_a2c_forward.3} parent=11 // pred_check
          %p649 = pneg %p174
        $region26: #{graph_a2c_forward.3} parent=11 // pred_check_branch
          %651 = sbr.rel (%p649) target = $region28
        $region27: #{graph_a2c_forward.3} parent=11 // pred_region
          _
        $region28: #{graph_a2c_forward.3} parent=11 // pred_fallthru
          _
        // Predicated region
        $region29: #{graph_a2c_forward.3} parent=11 // pred_check
          %p652 = pneg %p195
        $region30: #{graph_a2c_forward.3} parent=11 // pred_check_branch
          %654 = sbr.rel (%p652) target = $region32
        $region31: #{graph_a2c_forward.3} parent=11 // pred_region
          _
        $region32: #{graph_a2c_forward.3} parent=11 // pred_fallthru
          _
        // Predicated region
        $region33: #{graph_a2c_forward.3} parent=11 // pred_check
          %p655 = pneg %p216
        $region34: #{graph_a2c_forward.3} parent=11 // pred_check_branch
          %657 = sbr.rel (%p655) target = $region36
        $region35: #{graph_a2c_forward.3} parent=11 // pred_region
          _
        $region36: #{graph_a2c_forward.3} parent=11 // pred_fallthru
          _
        // Predicated region
        $region37: #{graph_a2c_forward.3} parent=11 // pred_check
          %p658 = pneg %p237
        $region38: #{graph_a2c_forward.3} parent=11 // pred_check_branch
          %660 = sbr.rel (%p658) target = $region40
        $region39: #{graph_a2c_forward.3} parent=11 // pred_region
          _
        $region40: #{graph_a2c_forward.3} parent=11 // pred_fallthru
          _
        // Predicated region
        $region41: #{graph_a2c_forward.3} parent=11 // pred_check
          %p661 = pneg %p258
        $region42: #{graph_a2c_forward.3} parent=11 // pred_check_branch
          %663 = sbr.rel (%p661) target = $region44
        $region43: #{graph_a2c_forward.3} parent=11 // pred_region
          _
        $region44: #{graph_a2c_forward.3} parent=11 // pred_fallthru
          _
        // Predicated region
        $region45: #{graph_a2c_forward.3} parent=11 // pred_check
          %p664 = pneg %p279
        $region46: #{graph_a2c_forward.3} parent=11 // pred_check_branch
          %666 = sbr.rel (%p664) target = $region48
        $region47: #{graph_a2c_forward.3} parent=11 // pred_region
          _
        $region48: #{graph_a2c_forward.3} parent=11 // pred_fallthru
          _
        // Predicated region
        $region49: #{graph_a2c_forward.3} parent=11 // pred_check
          %p667 = pneg %p300
        $region50: #{graph_a2c_forward.3} parent=11 // pred_check_branch
          %669 = sbr.rel (%p667) target = $region52
        $region51: #{graph_a2c_forward.3} parent=11 // pred_region
          _
        $region52: #{graph_a2c_forward.3} parent=11 // pred_fallthru
          _
        // Predicated region
        $region53: #{graph_a2c_forward.3} parent=11 // pred_check
          %p670 = pneg %p321
        $region54: #{graph_a2c_forward.3} parent=11 // pred_check_branch
          %672 = sbr.rel (%p670) target = $region56
        $region55: #{graph_a2c_forward.3} parent=11 // pred_region
          _
        $region56: #{graph_a2c_forward.3} parent=11 // pred_fallthru
          _
        // Predicated region
        $region57: #{graph_a2c_forward.3} parent=11 // pred_check
          %p673 = pneg %p342
        $region58: #{graph_a2c_forward.3} parent=11 // pred_check_branch
          %675 = sbr.rel (%p673) target = $region60
        $region59: #{graph_a2c_forward.3} parent=11 // pred_region
          _
        $region60: #{graph_a2c_forward.3} parent=11 // pred_fallthru
          _
        // Predicated region
        $region61: #{graph_a2c_forward.3} parent=11 // pred_check
          %p676 = pneg %p363
        $region62: #{graph_a2c_forward.3} parent=11 // pred_check_branch
          %678 = sbr.rel (%p676) target = $region64
        $region63: #{graph_a2c_forward.3} parent=11 // pred_region
          _
        $region64: #{graph_a2c_forward.3} parent=11 // pred_fallthru
          _
        // Predicated region
        $region65: #{graph_a2c_forward.3} parent=11 // pred_check
          %p679 = pneg %p384
        $region66: #{graph_a2c_forward.3} parent=11 // pred_check_branch
          %681 = sbr.rel (%p679) target = $region68
        $region67: #{graph_a2c_forward.3} parent=11 // pred_region
          _
        $region68: #{graph_a2c_forward.3} parent=11 // pred_fallthru
          _
        // Predicated region
        $region69: #{graph_a2c_forward.3} parent=11 // pred_check
          %p682 = pneg %p405
        $region70: #{graph_a2c_forward.3} parent=11 // pred_check_branch
          %684 = sbr.rel (%p682) target = $region72
        $region71: #{graph_a2c_forward.3} parent=11 // pred_region
          _
        $region72: #{graph_a2c_forward.3} parent=11 // pred_fallthru
          _
        // Predicated region
        $region73: #{graph_a2c_forward.3} parent=11 // pred_check
          %p685 = pneg %p426
        $region74: #{graph_a2c_forward.3} parent=11 // pred_check_branch
          %687 = sbr.rel (%p685) target = $region76
        $region75: #{graph_a2c_forward.3} parent=11 // pred_region
          _
        $region76: #{graph_a2c_forward.3} parent=11 // pred_fallthru
          _
        // Predicated region
        $region77: #{graph_a2c_forward.3} parent=11 // pred_check
          %p688 = pneg %p447
        $region78: #{graph_a2c_forward.3} parent=11 // pred_check_branch
          %690 = sbr.rel (%p688) target = $region80
        $region79: #{graph_a2c_forward.3} parent=11 // pred_region
          _
        $region80: #{graph_a2c_forward.3} parent=11 // pred_fallthru
          _
        // Predicated region
        $region81: #{graph_a2c_forward.3} parent=11 // pred_check
          %p691 = pneg %p468
        $region82: #{graph_a2c_forward.3} parent=11 // pred_check_branch
          %693 = sbr.rel (%p691) target = $region84
        $region83: #{graph_a2c_forward.3} parent=11 // pred_region
          _
        $region84: #{graph_a2c_forward.3} parent=11 // pred_fallthru
          _
        // Predicated region
        $region85: #{graph_a2c_forward.3} parent=11 // pred_check
          %p694 = pneg %p489
        $region86: #{graph_a2c_forward.3} parent=11 // pred_check_branch
          %696 = sbr.rel (%p694) target = $region88
        $region87: #{graph_a2c_forward.3} parent=11 // pred_region
          _
        $region88: #{graph_a2c_forward.3} parent=11 // pred_fallthru
          _
        // Predicated region
        $region89: #{graph_a2c_forward.3} parent=11 // pred_check
          %p697 = pneg %p510
        $region90: #{graph_a2c_forward.3} parent=11 // pred_check_branch
          %699 = sbr.rel (%p697) target = $region92
        $region91: #{graph_a2c_forward.3} parent=11 // pred_region
          _
        $region92: #{graph_a2c_forward.3} parent=11 // pred_fallthru
          _
        // Predicated region
        $region93: #{graph_a2c_forward.3} parent=11 // pred_check
          %p700 = pneg %p531
        $region94: #{graph_a2c_forward.3} parent=11 // pred_check_branch
          %702 = sbr.rel (%p700) target = $region96
        $region95: #{graph_a2c_forward.3} parent=11 // pred_region
          _
        $region96: #{graph_a2c_forward.3} parent=11 // pred_fallthru
          _
        // Predicated region
        $region97: #{graph_a2c_forward.3} parent=11 // pred_check
          %p703 = pneg %p552
        $region98: #{graph_a2c_forward.3} parent=11 // pred_check_branch
          %705 = sbr.rel (%p703) target = $region100
        $region99: #{graph_a2c_forward.3} parent=11 // pred_region
          _
        $region100: #{graph_a2c_forward.3} parent=11 // pred_fallthru
          _
        // Predicated region
        $region101: #{graph_a2c_forward.3} parent=11 // pred_check
          %p706 = pneg %p573
        $region102: #{graph_a2c_forward.3} parent=11 // pred_check_branch
          %708 = sbr.rel (%p706) target = $region104
        $region103: #{graph_a2c_forward.3} parent=11 // pred_region
          _
        $region104: #{graph_a2c_forward.3} parent=11 // pred_fallthru
          _
      $region12: #{graph_a2c_forward.3} parent=5 // pred_fallthru
        _
      %p709 = scmp.lt.s32.totalorder %s38, 2
      // Predicated region
      $region105: #{graph_a2c_forward.3} parent=5 // pred_check
        %p710 = pneg %p709
      $region106: #{graph_a2c_forward.3} parent=5 // pred_check_branch
        %712 = sbr.rel (%p710) target = $region108
      $region107: #{graph_a2c_forward.3} parent=5 // pred_region
        // Predicated region
        $region109: #{graph_a2c_forward.3} parent=107 // pred_check
          %p713 = pneg %p58
        $region110: #{graph_a2c_forward.3} parent=107 // pred_check_branch
          %715 = sbr.rel (%p713) target = $region112
        $region111: #{graph_a2c_forward.3} parent=107 // pred_region
          %p716 = scmp.lt.s32.totalorder %s38, 1
          %s717 = scalar_select %p716, %s38, 1
          %s718 = smul.addr %s717, 32
          %s719 = smul.addr %s718, 8
          %s720 = scalar_lea.vmem %s0, %s719
        $region112: #{graph_a2c_forward.3} parent=107 // pred_fallthru
          _
        // Predicated region
        $region113: #{graph_a2c_forward.3} parent=107 // pred_check
          %p721 = pneg %p84
        $region114: #{graph_a2c_forward.3} parent=107 // pred_check_branch
          %723 = sbr.rel (%p721) target = $region116
        $region115: #{graph_a2c_forward.3} parent=107 // pred_region
          %p724 = scmp.lt.s32.totalorder %s38, 1
          %s725 = scalar_select %p724, %s38, 1
          %s726 = smul.addr %s725, 2
          %s727 = smul.addr %s726, 8
          %s728 = scalar_lea.vmem %s1, %s727
        $region116: #{graph_a2c_forward.3} parent=107 // pred_fallthru
          _
      $region108: #{graph_a2c_forward.3} parent=5 // pred_fallthru
        _
      %p729 = scmp.le.s32.totalorder 1, %s38
      %p730 = scmp.lt.s32.totalorder %s38, 3
      %p731 = pnand %p729, %p730
      %p732 = pneg %p731
      // Predicated region
      $region117: #{graph_a2c_forward.3} parent=5 // pred_check
        _
      $region118: #{graph_a2c_forward.3} parent=5 // pred_check_branch
        %734 = sbr.rel (%p731) target = $region120
      $region119: #{graph_a2c_forward.3} parent=5 // pred_region
        %s735 = ssub.s32 %s38, 1
        %p736 = scmp.lt.s32.totalorder %s43, 1
        %s737 = scalar_select %p736, %s43, 1
        %s738 = smul.addr %s737, 32
        %s739 = smul.addr %s738, 8
        %s740 = scalar_lea.vmem %s0, %s739
        %p741 = pneg %p64
        %p742 = pneg %p61
        %p743 = scmp.lt.s32.totalorder %s43, 1
        %s744 = scalar_select %p743, %s43, 1
        %s745 = smul.addr %s744, 2
        %s746 = smul.addr %s745, 8
        %s747 = scalar_lea.vmem %s1, %s746
        %p748 = pneg %p90
        %p749 = pneg %p87
        %p750 = pneg %p111
        %p751 = pneg %p108
        %p752 = pneg %p132
        %p753 = pneg %p129
        %p754 = pneg %p153
        %p755 = pneg %p150
        %p756 = pneg %p174
        %p757 = pneg %p171
        %p758 = pneg %p195
        %p759 = pneg %p192
        %p760 = pneg %p216
        %p761 = pneg %p213
        %p762 = pneg %p237
        %p763 = pneg %p234
        %p764 = pneg %p258
        %p765 = pneg %p255
        %p766 = pneg %p279
        %p767 = pneg %p276
        %p768 = pneg %p300
        %p769 = pneg %p297
        %p770 = pneg %p321
        %p771 = pneg %p318
        %p772 = pneg %p342
        %p773 = pneg %p339
        %p774 = pneg %p363
        %p775 = pneg %p360
        %p776 = pneg %p384
        %p777 = pneg %p381
        %p778 = pneg %p405
        %p779 = pneg %p402
        %p780 = pneg %p426
        %p781 = pneg %p423
        %p782 = pneg %p447
        %p783 = pneg %p444
        %p784 = pneg %p468
        %p785 = pneg %p465
        %p786 = pneg %p489
        %p787 = pneg %p486
        %p788 = pneg %p510
        %p789 = pneg %p507
        %p790 = pneg %p531
        %p791 = pneg %p528
        %p792 = pneg %p552
        %p793 = pneg %p549
        %p794 = pneg %p573
        %p795 = pneg %p570
        %p796 = pneg %p599
        %p797 = pneg %p596
        %s798 = sand.u32 %s586, 1
        %s799 = scalar_lea.sflag [#allocation4], %s798
        %s800 = sand.u32 %s586, 1
        %s801 = scalar_lea.vmem [#allocation3], %s800
        %p802 = pneg %p625
        %p803 = pneg %p622
        %p804 = scmp.lt.s32.totalorder %s43, 1
        %s805 = scalar_select %p804, %s43, 1
        %s806 = scalar_lea.vmem %s26, %s805
        %p807 = scmp.lt.s32.totalorder %s43, 1
        %s808 = scalar_select %p807, %s43, 1
        %s809 = smul.addr %s808, 32
        %s810 = smul.addr %s809, 8
        %s811 = scalar_lea.vmem %s0, %s810
        %p812 = scmp.lt.s32.totalorder %s43, 1
        %s813 = scalar_select %p812, %s43, 1
        %s814 = smul.addr %s813, 2
        %s815 = smul.addr %s814, 8
        %s816 = scalar_lea.vmem %s1, %s815
        %p817 = scmp.lt.s32.totalorder %s43, 1
        %s818 = scalar_select %p817, %s43, 1
        %s819 = scalar_lea.vmem %s26, %s818
        %v820 = vld [vmem:[%s811] sm:$0xff]
        %v821 = vld [vmem:[%s811 + $0x8] sm:$0xff]
        %v822 = vld [vmem:[%s811 + $0x10] sm:$0xff]
        %v823 = vld [vmem:[%s811 + $0x18] sm:$0xff]
        %v824 = vld [vmem:[%s811 + $0x20] sm:$0xff]
        %v825 = vld [vmem:[%s811 + $0x28] sm:$0xff]
        %v826 = vld [vmem:[%s811 + $0x30] sm:$0xff]
        %v827 = vld [vmem:[%s811 + $0x38] sm:$0xff]
        %v828 = vld [vmem:[%s811 + $0x40] sm:$0xff]
        %v829 = vld [vmem:[%s811 + $0x48] sm:$0xff]
        %v830 = vld [vmem:[%s811 + $0x50] sm:$0xff]
        %v831 = vld [vmem:[%s811 + $0x58] sm:$0xff]
        %v832 = vld [vmem:[%s811 + $0x60] sm:$0xff]
        %v833 = vld [vmem:[%s811 + $0x68] sm:$0xff]
        %v834 = vld [vmem:[%s811 + $0x70] sm:$0xff]
        %v835 = vld [vmem:[%s811 + $0x78] sm:$0xff]
        %v836 = vld [vmem:[%s811 + $0x80] sm:$0xff]
        %v837 = vld [vmem:[%s811 + $0x88] sm:$0xff]
        %v838 = vld [vmem:[%s811 + $0x90] sm:$0xff]
        %v839 = vld [vmem:[%s811 + $0x98] sm:$0xff]
        %v840 = vld [vmem:[%s811 + $0xa0] sm:$0xff]
        %v841 = vld [vmem:[%s811 + $0xa8] sm:$0xff]
        %v842 = vld [vmem:[%s811 + $0xb0] sm:$0xff]
        %v843 = vld [vmem:[%s811 + $0xb8] sm:$0xff]
        %v844 = vld [vmem:[%s811 + $0xc0] sm:$0xff]
        %v845 = vld [vmem:[%s811 + $0xc8] sm:$0xff]
        %v846 = vld [vmem:[%s811 + $0xd0] sm:$0xff]
        %v847 = vld [vmem:[%s811 + $0xd8] sm:$0xff]
        %v848 = vld [vmem:[%s811 + $0xe0] sm:$0xff]
        %v849 = vld [vmem:[%s811 + $0xe8] sm:$0xff]
        %v850 = vld [vmem:[%s811 + $0xf0] sm:$0xff]
        %v851 = vld [vmem:[%s811 + $0xf8] sm:$0xff]
        %v852 = vld [vmem:[%s816] sm:$0xff]
        %v853 = vld [vmem:[%s816 + $0x8] sm:$0xff]
        %v854 = vld [vmem:[%s3] sm:$0xff]
        %v855 = vld [vmem:[%s2] sm:$0xff]
        %vm856 = vcmask 64512
        %v858 = vsel %vm856, %v820, 0
        %v861 = vsel %vm856, %v821, 0
        %v864 = vsel %vm856, %v822, 0
        %v867 = vsel %vm856, %v823, 0
        %v870 = vsel %vm856, %v824, 0
        %v873 = vsel %vm856, %v825, 0
        %v876 = vsel %vm856, %v826, 0
        %v879 = vsel %vm856, %v827, 0
        %v882 = vsel %vm856, %v828, 0
        %v885 = vsel %vm856, %v829, 0
        %v888 = vsel %vm856, %v830, 0
        %v891 = vsel %vm856, %v831, 0
        %v894 = vsel %vm856, %v832, 0
        %v897 = vsel %vm856, %v833, 0
        %v900 = vsel %vm856, %v834, 0
        %v903 = vsel %vm856, %v835, 0
        %v906 = vsel %vm856, %v836, 0
        %v909 = vsel %vm856, %v837, 0
        %v912 = vsel %vm856, %v838, 0
        %v915 = vsel %vm856, %v839, 0
        %v918 = vsel %vm856, %v840, 0
        %v921 = vsel %vm856, %v841, 0
        %v924 = vsel %vm856, %v842, 0
        %v927 = vsel %vm856, %v843, 0
        %v930 = vsel %vm856, %v844, 0
        %v933 = vsel %vm856, %v845, 0
        %v936 = vsel %vm856, %v846, 0
        %v939 = vsel %vm856, %v847, 0
        %v942 = vsel %vm856, %v848, 0
        %v945 = vsel %vm856, %v849, 0
        %v948 = vsel %vm856, %v850, 0
        %v951 = vsel %vm856, %v851, 0
        %953 = vmatprep.subr.mxu0 0.0
        %954 = vmatpush1.msra.mxu0 0.0
        %955 = vmatprep.subr.mxu0 0.0
        %956 = vmatpush1.msra.mxu0 0.0
        %957 = vmatprep.subr.mxu0 0.0
        %958 = vmatpush1.msra.mxu0 0.0
        %959 = vmatprep.subr.mxu0 0.0
        %960 = vmatpush1.msra.mxu0 0.0
        %961 = vmatprep.subr.mxu0 0.0
        %962 = vmatpush1.msra.mxu0 0.0
        %963 = vmatprep.subr.mxu0 0.0
        %964 = vmatpush1.msra.mxu0 0.0
        %965 = vmatprep.subr.mxu0 0.0
        %966 = vmatpush1.msra.mxu0 0.0
        %967 = vmatprep.subr.mxu0 0.0
        %968 = vmatpush1.msra.mxu0 0.0
        %969 = vmatprep.subr.mxu0 0.0
        %970 = vmatpush1.msra.mxu0 0.0
        %971 = vmatprep.subr.mxu0 0.0
        %972 = vmatpush1.msra.mxu0 0.0
        %973 = vmatprep.subr.mxu0 0.0
        %974 = vmatpush1.msra.mxu0 0.0
        %975 = vmatprep.subr.mxu0 0.0
        %976 = vmatpush1.msra.mxu0 0.0
        %977 = vmatprep.subr.mxu0 0.0
        %978 = vmatpush1.msra.mxu0 0.0
        %979 = vmatprep.subr.mxu0 0.0
        %980 = vmatpush1.msra.mxu0 0.0
        %981 = vmatprep.subr.mxu0 0.0
        %982 = vmatpush1.msra.mxu0 0.0
        %983 = vmatprep.subr.mxu0 0.0
        %984 = vmatpush1.msra.mxu0 %v855
        %985 = vmatprep.subr.mxu0 0.0
        %986 = vmatpush2.msra.mxu0 0.0
        %987 = vmatprep.subr.mxu0 0.0
        %988 = vmatpush2.msra.mxu0 0.0
        %989 = vmatprep.subr.mxu0 0.0
        %990 = vmatpush2.msra.mxu0 0.0
        %991 = vmatprep.subr.mxu0 0.0
        %992 = vmatpush2.msra.mxu0 0.0
        %993 = vmatprep.subr.mxu0 0.0
        %994 = vmatpush2.msra.mxu0 0.0
        %995 = vmatprep.subr.mxu0 0.0
        %996 = vmatpush2.msra.mxu0 0.0
        %997 = vmatprep.subr.mxu0 0.0
        %998 = vmatpush2.msra.mxu0 0.0
        %999 = vmatprep.subr.mxu0 0.0
        %1000 = vmatpush2.msra.mxu0 0.0
        %1001 = vmatprep.subr.mxu0 0.0
        %1002 = vmatpush2.msra.mxu0 0.0
        %1003 = vmatprep.subr.mxu0 0.0
        %1004 = vmatpush2.msra.mxu0 0.0
        %1005 = vmatprep.subr.mxu0 0.0
        %1006 = vmatpush2.msra.mxu0 0.0
        %1007 = vmatprep.subr.mxu0 0.0
        %1008 = vmatpush2.msra.mxu0 0.0
        %1009 = vmatprep.subr.mxu0 0.0
        %1010 = vmatpush2.msra.mxu0 0.0
        %1011 = vmatprep.subr.mxu0 0.0
        %1012 = vmatpush2.msra.mxu0 0.0
        %1013 = vmatprep.subr.mxu0 0.0
        %1014 = vmatpush2.msra.mxu0 0.0
        %1015 = vmatprep.subr.mxu0 0.0
        %1016 = vmatpush2.msra.mxu0 0.0
        %1017 = vmatprep.mubr.f32.mxu0 0.0
        %1018 = vmatmul.mubr.f32.gmra.mxu0 %v858
        %v1019 = vpop.f32.mrf.mxu0
        %v1020 = vadd.f32 0.0, %v1019
        %v1021 = vpop.f32.mrf.mxu0
        %1022 = vmatprep.mubr.f32.mxu0 0.0
        %1023 = vmatmul.mubr.f32.gmra.mxu0 %v861
        %v1024 = vpop.f32.mrf.mxu0
        %v1025 = vadd.f32 0.0, %v1024
        %v1026 = vpop.f32.mrf.mxu0
        %1027 = vmatprep.mubr.f32.mxu0 0.0
        %1028 = vmatmul.mubr.f32.gmra.mxu0 %v864
        %v1029 = vpop.f32.mrf.mxu0
        %v1030 = vadd.f32 0.0, %v1029
        %v1031 = vpop.f32.mrf.mxu0
        %1032 = vmatprep.mubr.f32.mxu0 0.0
        %1033 = vmatmul.mubr.f32.gmra.mxu0 %v867
        %v1034 = vpop.f32.mrf.mxu0
        %v1035 = vadd.f32 0.0, %v1034
        %v1036 = vpop.f32.mrf.mxu0
        %1037 = vmatprep.mubr.f32.mxu0 0.0
        %1038 = vmatmul.mubr.f32.gmra.mxu0 %v870
        %v1039 = vpop.f32.mrf.mxu0
        %v1040 = vadd.f32 0.0, %v1039
        %v1041 = vpop.f32.mrf.mxu0
        %1042 = vmatprep.mubr.f32.mxu0 0.0
        %1043 = vmatmul.mubr.f32.gmra.mxu0 %v873
        %v1044 = vpop.f32.mrf.mxu0
        %v1045 = vadd.f32 0.0, %v1044
        %v1046 = vpop.f32.mrf.mxu0
        %1047 = vmatprep.mubr.f32.mxu0 0.0
        %1048 = vmatmul.mubr.f32.gmra.mxu0 %v876
        %v1049 = vpop.f32.mrf.mxu0
        %v1050 = vadd.f32 0.0, %v1049
        %v1051 = vpop.f32.mrf.mxu0
        %1052 = vmatprep.mubr.f32.mxu0 0.0
        %1053 = vmatmul.mubr.f32.gmra.mxu0 %v879
        %v1054 = vpop.f32.mrf.mxu0
        %v1055 = vadd.f32 0.0, %v1054
        %v1056 = vpop.f32.mrf.mxu0
        %1057 = vmatprep.mubr.f32.mxu0 0.0
        %1058 = vmatmul.mubr.f32.gmra.mxu0 %v882
        %v1059 = vpop.f32.mrf.mxu0
        %v1060 = vadd.f32 0.0, %v1059
        %v1061 = vpop.f32.mrf.mxu0
        %1062 = vmatprep.mubr.f32.mxu0 0.0
        %1063 = vmatmul.mubr.f32.gmra.mxu0 %v885
        %v1064 = vpop.f32.mrf.mxu0
        %v1065 = vadd.f32 0.0, %v1064
        %v1066 = vpop.f32.mrf.mxu0
        %1067 = vmatprep.mubr.f32.mxu0 0.0
        %1068 = vmatmul.mubr.f32.gmra.mxu0 %v888
        %v1069 = vpop.f32.mrf.mxu0
        %v1070 = vadd.f32 0.0, %v1069
        %v1071 = vpop.f32.mrf.mxu0
        %1072 = vmatprep.mubr.f32.mxu0 0.0
        %1073 = vmatmul.mubr.f32.gmra.mxu0 %v891
        %v1074 = vpop.f32.mrf.mxu0
        %v1075 = vadd.f32 0.0, %v1074
        %v1076 = vpop.f32.mrf.mxu0
        %1077 = vmatprep.mubr.f32.mxu0 0.0
        %1078 = vmatmul.mubr.f32.gmra.mxu0 %v894
        %v1079 = vpop.f32.mrf.mxu0
        %v1080 = vadd.f32 0.0, %v1079
        %v1081 = vpop.f32.mrf.mxu0
        %1082 = vmatprep.mubr.f32.mxu0 0.0
        %1083 = vmatmul.mubr.f32.gmra.mxu0 %v897
        %v1084 = vpop.f32.mrf.mxu0
        %v1085 = vadd.f32 0.0, %v1084
        %v1086 = vpop.f32.mrf.mxu0
        %1087 = vmatprep.mubr.f32.mxu0 0.0
        %1088 = vmatmul.mubr.f32.gmra.mxu0 %v900
        %v1089 = vpop.f32.mrf.mxu0
        %v1090 = vadd.f32 0.0, %v1089
        %v1091 = vpop.f32.mrf.mxu0
        %1092 = vmatprep.mubr.f32.mxu0 0.0
        %1093 = vmatmul.mubr.f32.gmra.mxu0 %v903
        %v1094 = vpop.f32.mrf.mxu0
        %v1095 = vadd.f32 0.0, %v1094
        %v1096 = vpop.f32.mrf.mxu0
        %1097 = vmatprep.mubr.f32.mxu0 0.0
        %1098 = vmatmul.mubr.f32.gmra.mxu0 %v906
        %v1099 = vpop.f32.mrf.mxu0
        %v1100 = vadd.f32 0.0, %v1099
        %v1101 = vpop.f32.mrf.mxu0
        %1102 = vmatprep.mubr.f32.mxu0 0.0
        %1103 = vmatmul.mubr.f32.gmra.mxu0 %v909
        %v1104 = vpop.f32.mrf.mxu0
        %v1105 = vadd.f32 0.0, %v1104
        %v1106 = vpop.f32.mrf.mxu0
        %1107 = vmatprep.mubr.f32.mxu0 0.0
        %1108 = vmatmul.mubr.f32.gmra.mxu0 %v912
        %v1109 = vpop.f32.mrf.mxu0
        %v1110 = vadd.f32 0.0, %v1109
        %v1111 = vpop.f32.mrf.mxu0
        %1112 = vmatprep.mubr.f32.mxu0 0.0
        %1113 = vmatmul.mubr.f32.gmra.mxu0 %v915
        %v1114 = vpop.f32.mrf.mxu0
        %v1115 = vadd.f32 0.0, %v1114
        %v1116 = vpop.f32.mrf.mxu0
        %1117 = vmatprep.mubr.f32.mxu0 0.0
        %1118 = vmatmul.mubr.f32.gmra.mxu0 %v918
        %v1119 = vpop.f32.mrf.mxu0
        %v1120 = vadd.f32 0.0, %v1119
        %v1121 = vpop.f32.mrf.mxu0
        %1122 = vmatprep.mubr.f32.mxu0 0.0
        %1123 = vmatmul.mubr.f32.gmra.mxu0 %v921
        %v1124 = vpop.f32.mrf.mxu0
        %v1125 = vadd.f32 0.0, %v1124
        %v1126 = vpop.f32.mrf.mxu0
        %1127 = vmatprep.mubr.f32.mxu0 0.0
        %1128 = vmatmul.mubr.f32.gmra.mxu0 %v924
        %v1129 = vpop.f32.mrf.mxu0
        %v1130 = vadd.f32 0.0, %v1129
        %v1131 = vpop.f32.mrf.mxu0
        %1132 = vmatprep.mubr.f32.mxu0 0.0
        %1133 = vmatmul.mubr.f32.gmra.mxu0 %v927
        %v1134 = vpop.f32.mrf.mxu0
        %v1135 = vadd.f32 0.0, %v1134
        %v1136 = vpop.f32.mrf.mxu0
        %1137 = vmatprep.mubr.f32.mxu0 0.0
        %1138 = vmatmul.mubr.f32.gmra.mxu0 %v930
        %v1139 = vpop.f32.mrf.mxu0
        %v1140 = vadd.f32 0.0, %v1139
        %v1141 = vpop.f32.mrf.mxu0
        %1142 = vmatprep.mubr.f32.mxu0 0.0
        %1143 = vmatmul.mubr.f32.gmra.mxu0 %v933
        %v1144 = vpop.f32.mrf.mxu0
        %v1145 = vadd.f32 0.0, %v1144
        %v1146 = vpop.f32.mrf.mxu0
        %1147 = vmatprep.mubr.f32.mxu0 0.0
        %1148 = vmatmul.mubr.f32.gmra.mxu0 %v936
        %v1149 = vpop.f32.mrf.mxu0
        %v1150 = vadd.f32 0.0, %v1149
        %v1151 = vpop.f32.mrf.mxu0
        %1152 = vmatprep.mubr.f32.mxu0 0.0
        %1153 = vmatmul.mubr.f32.gmra.mxu0 %v939
        %v1154 = vpop.f32.mrf.mxu0
        %v1155 = vadd.f32 0.0, %v1154
        %v1156 = vpop.f32.mrf.mxu0
        %1157 = vmatprep.mubr.f32.mxu0 0.0
        %1158 = vmatmul.mubr.f32.gmra.mxu0 %v942
        %v1159 = vpop.f32.mrf.mxu0
        %v1160 = vadd.f32 0.0, %v1159
        %v1161 = vpop.f32.mrf.mxu0
        %1162 = vmatprep.mubr.f32.mxu0 0.0
        %1163 = vmatmul.mubr.f32.gmra.mxu0 %v945
        %v1164 = vpop.f32.mrf.mxu0
        %v1165 = vadd.f32 0.0, %v1164
        %v1166 = vpop.f32.mrf.mxu0
        %1167 = vmatprep.mubr.f32.mxu0 0.0
        %1168 = vmatmul.mubr.f32.gmra.mxu0 %v948
        %v1169 = vpop.f32.mrf.mxu0
        %v1170 = vadd.f32 0.0, %v1169
        %v1171 = vpop.f32.mrf.mxu0
        %1172 = vmatprep.mubr.f32.mxu0 0.0
        %1173 = vmatmul.mubr.f32.gmra.mxu0 %v951
        %v1174 = vpop.f32.mrf.mxu0
        %v1175 = vadd.f32 0.0, %v1174
        %v1176 = vpop.f32.mrf.mxu0
        %1177 = vdwg.mxu0
        %vm1209 = vcmask 1040384
        %v1210 = vrot.slane 0.0, 7
        %v1211 = vsel %vm1209, %v1210, %v1210
        %v1212 = vrot.slane %v1020, 7
        %v1213 = vsel %vm1209, %v1210, %v1212
        %v1214 = vrot.slane %v1025, 7
        %v1215 = vsel %vm1209, %v1212, %v1214
        %v1216 = vrot.slane %v1030, 7
        %v1217 = vsel %vm1209, %v1210, %v1216
        %v1218 = vrot.slane %v1035, 7
        %v1219 = vsel %vm1209, %v1216, %v1218
        %v1220 = vrot.slane %v1040, 7
        %v1221 = vsel %vm1209, %v1210, %v1220
        %v1222 = vrot.slane %v1045, 7
        %v1223 = vsel %vm1209, %v1220, %v1222
        %v1224 = vrot.slane %v1050, 7
        %v1225 = vsel %vm1209, %v1210, %v1224
        %v1226 = vrot.slane %v1055, 7
        %v1227 = vsel %vm1209, %v1224, %v1226
        %v1228 = vrot.slane %v1060, 7
        %v1229 = vsel %vm1209, %v1210, %v1228
        %v1230 = vrot.slane %v1065, 7
        %v1231 = vsel %vm1209, %v1228, %v1230
        %v1232 = vrot.slane %v1070, 7
        %v1233 = vsel %vm1209, %v1210, %v1232
        %v1234 = vrot.slane %v1075, 7
        %v1235 = vsel %vm1209, %v1232, %v1234
        %v1236 = vrot.slane %v1080, 7
        %v1237 = vsel %vm1209, %v1210, %v1236
        %v1238 = vrot.slane %v1085, 7
        %v1239 = vsel %vm1209, %v1236, %v1238
        %v1240 = vrot.slane %v1090, 7
        %v1241 = vsel %vm1209, %v1210, %v1240
        %v1242 = vrot.slane %v1095, 7
        %v1243 = vsel %vm1209, %v1240, %v1242
        %v1244 = vrot.slane %v1100, 7
        %v1245 = vsel %vm1209, %v1210, %v1244
        %v1246 = vrot.slane %v1105, 7
        %v1247 = vsel %vm1209, %v1244, %v1246
        %v1248 = vrot.slane %v1110, 7
        %v1249 = vsel %vm1209, %v1210, %v1248
        %v1250 = vrot.slane %v1115, 7
        %v1251 = vsel %vm1209, %v1248, %v1250
        %v1252 = vrot.slane %v1120, 7
        %v1253 = vsel %vm1209, %v1210, %v1252
        %v1254 = vrot.slane %v1125, 7
        %v1255 = vsel %vm1209, %v1252, %v1254
        %v1256 = vrot.slane %v1130, 7
        %v1257 = vsel %vm1209, %v1210, %v1256
        %v1258 = vrot.slane %v1135, 7
        %v1259 = vsel %vm1209, %v1256, %v1258
        %v1260 = vrot.slane %v1140, 7
        %v1261 = vsel %vm1209, %v1210, %v1260
        %v1262 = vrot.slane %v1145, 7
        %v1263 = vsel %vm1209, %v1260, %v1262
        %v1264 = vrot.slane %v1150, 7
        %v1265 = vsel %vm1209, %v1210, %v1264
        %v1266 = vrot.slane %v1155, 7
        %v1267 = vsel %vm1209, %v1264, %v1266
        %v1268 = vrot.slane %v1160, 7
        %v1269 = vsel %vm1209, %v1210, %v1268
        %v1270 = vrot.slane %v1165, 7
        %v1271 = vsel %vm1209, %v1268, %v1270
        %vm1303 = vcmask 1046528
        %v1304 = vrot.slane 0.0, 1
        %v1305 = vsel %vm1303, %v1304, %v1304
        %v1306 = vrot.slane %v1020, 1
        %v1307 = vrot.slane %v1025, 1
        %v1308 = vsel %vm1303, %v1306, %v1307
        %v1309 = vsel %vm1303, %v1307, %v1304
        %v1310 = vrot.slane %v1030, 1
        %v1311 = vrot.slane %v1035, 1
        %v1312 = vsel %vm1303, %v1310, %v1311
        %v1313 = vsel %vm1303, %v1311, %v1304
        %v1314 = vrot.slane %v1040, 1
        %v1315 = vrot.slane %v1045, 1
        %v1316 = vsel %vm1303, %v1314, %v1315
        %v1317 = vsel %vm1303, %v1315, %v1304
        %v1318 = vrot.slane %v1050, 1
        %v1319 = vrot.slane %v1055, 1
        %v1320 = vsel %vm1303, %v1318, %v1319
        %v1321 = vsel %vm1303, %v1319, %v1304
        %v1322 = vrot.slane %v1060, 1
        %v1323 = vrot.slane %v1065, 1
        %v1324 = vsel %vm1303, %v1322, %v1323
        %v1325 = vsel %vm1303, %v1323, %v1304
        %v1326 = vrot.slane %v1070, 1
        %v1327 = vrot.slane %v1075, 1
        %v1328 = vsel %vm1303, %v1326, %v1327
        %v1329 = vsel %vm1303, %v1327, %v1304
        %v1330 = vrot.slane %v1080, 1
        %v1331 = vrot.slane %v1085, 1
        %v1332 = vsel %vm1303, %v1330, %v1331
        %v1333 = vsel %vm1303, %v1331, %v1304
        %v1334 = vrot.slane %v1090, 1
        %v1335 = vrot.slane %v1095, 1
        %v1336 = vsel %vm1303, %v1334, %v1335
        %v1337 = vsel %vm1303, %v1335, %v1304
        %v1338 = vrot.slane %v1100, 1
        %v1339 = vrot.slane %v1105, 1
        %v1340 = vsel %vm1303, %v1338, %v1339
        %v1341 = vsel %vm1303, %v1339, %v1304
        %v1342 = vrot.slane %v1110, 1
        %v1343 = vrot.slane %v1115, 1
        %v1344 = vsel %vm1303, %v1342, %v1343
        %v1345 = vsel %vm1303, %v1343, %v1304
        %v1346 = vrot.slane %v1120, 1
        %v1347 = vrot.slane %v1125, 1
        %v1348 = vsel %vm1303, %v1346, %v1347
        %v1349 = vsel %vm1303, %v1347, %v1304
        %v1350 = vrot.slane %v1130, 1
        %v1351 = vrot.slane %v1135, 1
        %v1352 = vsel %vm1303, %v1350, %v1351
        %v1353 = vsel %vm1303, %v1351, %v1304
        %v1354 = vrot.slane %v1140, 1
        %v1355 = vrot.slane %v1145, 1
        %v1356 = vsel %vm1303, %v1354, %v1355
        %v1357 = vsel %vm1303, %v1355, %v1304
        %v1358 = vrot.slane %v1150, 1
        %v1359 = vrot.slane %v1155, 1
        %v1360 = vsel %vm1303, %v1358, %v1359
        %v1361 = vsel %vm1303, %v1359, %v1304
        %v1362 = vrot.slane %v1160, 1
        %v1363 = vrot.slane %v1165, 1
        %v1364 = vsel %vm1303, %v1362, %v1363
        %v1365 = vsel %vm1303, %v1363, %v1304
        %v1368 = vrot.slane %v1170, 7
        %v1369 = vsel %vm1209, %v1210, %v1368
        %v1370 = vrot.slane %v1175, 7
        %v1371 = vsel %vm1209, %v1368, %v1370
        %v1372 = vrot.slane %v1170, 1
        %v1373 = vrot.slane %v1175, 1
        %v1374 = vsel %vm1303, %v1372, %v1373
        %v1375 = vsel %vm1303, %v1373, %v1304
        %1376 = vrot.lane.b32.xlu0 0.0, 32
        %v1377 = vpop.permute.xlu0 %1376
        %1378 = vrot.lane.b32.xlu0 %v1020, 32
        %v1379 = vpop.permute.xlu0 %1378
        %1380 = vrot.lane.b32.xlu0 %v1025, 32
        %v1381 = vpop.permute.xlu0 %1380
        %1382 = vrot.lane.b32.xlu0 %v1030, 32
        %v1383 = vpop.permute.xlu0 %1382
        %1384 = vrot.lane.b32.xlu0 %v1035, 32
        %v1385 = vpop.permute.xlu0 %1384
        %1386 = vrot.lane.b32.xlu0 %v1040, 32
        %v1387 = vpop.permute.xlu0 %1386
        %1388 = vrot.lane.b32.xlu0 %v1045, 32
        %v1389 = vpop.permute.xlu0 %1388
        %1390 = vrot.lane.b32.xlu0 %v1050, 32
        %v1391 = vpop.permute.xlu0 %1390
        %1392 = vrot.lane.b32.xlu0 %v1055, 32
        %v1393 = vpop.permute.xlu0 %1392
        %1394 = vrot.lane.b32.xlu0 %v1060, 32
        %v1395 = vpop.permute.xlu0 %1394
        %1396 = vrot.lane.b32.xlu0 %v1065, 32
        %v1397 = vpop.permute.xlu0 %1396
        %1398 = vrot.lane.b32.xlu0 %v1070, 32
        %v1399 = vpop.permute.xlu0 %1398
        %1400 = vrot.lane.b32.xlu0 %v1075, 32
        %v1401 = vpop.permute.xlu0 %1400
        %1402 = vrot.lane.b32.xlu0 %v1080, 32
        %v1403 = vpop.permute.xlu0 %1402
        %1404 = vrot.lane.b32.xlu0 %v1085, 32
        %v1405 = vpop.permute.xlu0 %1404
        %1406 = vrot.lane.b32.xlu0 %v1090, 32
        %v1407 = vpop.permute.xlu0 %1406
        %1408 = vrot.lane.b32.xlu0 %v1095, 32
        %v1409 = vpop.permute.xlu0 %1408
        %1410 = vrot.lane.b32.xlu0 %v1100, 32
        %v1411 = vpop.permute.xlu0 %1410
        %1412 = vrot.lane.b32.xlu0 %v1105, 32
        %v1413 = vpop.permute.xlu0 %1412
        %1414 = vrot.lane.b32.xlu0 %v1110, 32
        %v1415 = vpop.permute.xlu0 %1414
        %1416 = vrot.lane.b32.xlu0 %v1115, 32
        %v1417 = vpop.permute.xlu0 %1416
        %1418 = vrot.lane.b32.xlu0 %v1120, 32
        %v1419 = vpop.permute.xlu0 %1418
        %1420 = vrot.lane.b32.xlu0 %v1125, 32
        %v1421 = vpop.permute.xlu0 %1420
        %1422 = vrot.lane.b32.xlu0 %v1130, 32
        %v1423 = vpop.permute.xlu0 %1422
        %1424 = vrot.lane.b32.xlu0 %v1135, 32
        %v1425 = vpop.permute.xlu0 %1424
        %1426 = vrot.lane.b32.xlu0 %v1140, 32
        %v1427 = vpop.permute.xlu0 %1426
        %1428 = vrot.lane.b32.xlu0 %v1145, 32
        %v1429 = vpop.permute.xlu0 %1428
        %1430 = vrot.lane.b32.xlu0 %v1150, 32
        %v1431 = vpop.permute.xlu0 %1430
        %1432 = vrot.lane.b32.xlu0 %v1155, 32
        %v1433 = vpop.permute.xlu0 %1432
        %1434 = vrot.lane.b32.xlu0 %v1160, 32
        %v1435 = vpop.permute.xlu0 %1434
        %1436 = vrot.lane.b32.xlu0 %v1165, 32
        %v1437 = vpop.permute.xlu0 %1436
        %1469 = vrot.lane.b32.xlu0 %v1305, 64
        %v1470 = vpop.permute.xlu0 %1469
        %1471 = vrot.lane.b32.xlu0 %v1308, 64
        %v1472 = vpop.permute.xlu0 %1471
        %1473 = vrot.lane.b32.xlu0 %v1309, 64
        %v1474 = vpop.permute.xlu0 %1473
        %1475 = vrot.lane.b32.xlu0 %v1312, 64
        %v1476 = vpop.permute.xlu0 %1475
        %1477 = vrot.lane.b32.xlu0 %v1313, 64
        %v1478 = vpop.permute.xlu0 %1477
        %1479 = vrot.lane.b32.xlu0 %v1316, 64
        %v1480 = vpop.permute.xlu0 %1479
        %1481 = vrot.lane.b32.xlu0 %v1317, 64
        %v1482 = vpop.permute.xlu0 %1481
        %1483 = vrot.lane.b32.xlu0 %v1320, 64
        %v1484 = vpop.permute.xlu0 %1483
        %1485 = vrot.lane.b32.xlu0 %v1321, 64
        %v1486 = vpop.permute.xlu0 %1485
        %1487 = vrot.lane.b32.xlu0 %v1324, 64
        %v1488 = vpop.permute.xlu0 %1487
        %1489 = vrot.lane.b32.xlu0 %v1325, 64
        %v1490 = vpop.permute.xlu0 %1489
        %1491 = vrot.lane.b32.xlu0 %v1328, 64
        %v1492 = vpop.permute.xlu0 %1491
        %1493 = vrot.lane.b32.xlu0 %v1329, 64
        %v1494 = vpop.permute.xlu0 %1493
        %1495 = vrot.lane.b32.xlu0 %v1332, 64
        %v1496 = vpop.permute.xlu0 %1495
        %1497 = vrot.lane.b32.xlu0 %v1333, 64
        %v1498 = vpop.permute.xlu0 %1497
        %1499 = vrot.lane.b32.xlu0 %v1336, 64
        %v1500 = vpop.permute.xlu0 %1499
        %1501 = vrot.lane.b32.xlu0 %v1337, 64
        %v1502 = vpop.permute.xlu0 %1501
        %1503 = vrot.lane.b32.xlu0 %v1340, 64
        %v1504 = vpop.permute.xlu0 %1503
        %1505 = vrot.lane.b32.xlu0 %v1341, 64
        %v1506 = vpop.permute.xlu0 %1505
        %1507 = vrot.lane.b32.xlu0 %v1344, 64
        %v1508 = vpop.permute.xlu0 %1507
        %1509 = vrot.lane.b32.xlu0 %v1345, 64
        %v1510 = vpop.permute.xlu0 %1509
        %1511 = vrot.lane.b32.xlu0 %v1348, 64
        %v1512 = vpop.permute.xlu0 %1511
        %1513 = vrot.lane.b32.xlu0 %v1349, 64
        %v1514 = vpop.permute.xlu0 %1513
        %1515 = vrot.lane.b32.xlu0 %v1352, 64
        %v1516 = vpop.permute.xlu0 %1515
        %1517 = vrot.lane.b32.xlu0 %v1353, 64
        %v1518 = vpop.permute.xlu0 %1517
        %1519 = vrot.lane.b32.xlu0 %v1356, 64
        %v1520 = vpop.permute.xlu0 %1519
        %1521 = vrot.lane.b32.xlu0 %v1357, 64
        %v1522 = vpop.permute.xlu0 %1521
        %1523 = vrot.lane.b32.xlu0 %v1360, 64
        %v1524 = vpop.permute.xlu0 %1523
        %1525 = vrot.lane.b32.xlu0 %v1361, 64
        %v1526 = vpop.permute.xlu0 %1525
        %1527 = vrot.lane.b32.xlu0 %v1364, 64
        %v1528 = vpop.permute.xlu0 %1527
        %1529 = vrot.lane.b32.xlu0 %v1365, 64
        %v1530 = vpop.permute.xlu0 %1529
        %1562 = vrot.lane.b32.xlu0 %v1213, 96
        %v1563 = vpop.permute.xlu0 %1562
        %1564 = vrot.lane.b32.xlu0 %v1215, 96
        %v1565 = vpop.permute.xlu0 %1564
        %1566 = vrot.lane.b32.xlu0 %v1217, 96
        %v1567 = vpop.permute.xlu0 %1566
        %1568 = vrot.lane.b32.xlu0 %v1219, 96
        %v1569 = vpop.permute.xlu0 %1568
        %1570 = vrot.lane.b32.xlu0 %v1221, 96
        %v1571 = vpop.permute.xlu0 %1570
        %1572 = vrot.lane.b32.xlu0 %v1223, 96
        %v1573 = vpop.permute.xlu0 %1572
        %1574 = vrot.lane.b32.xlu0 %v1225, 96
        %v1575 = vpop.permute.xlu0 %1574
        %1576 = vrot.lane.b32.xlu0 %v1227, 96
        %v1577 = vpop.permute.xlu0 %1576
        %1578 = vrot.lane.b32.xlu0 %v1229, 96
        %v1579 = vpop.permute.xlu0 %1578
        %1580 = vrot.lane.b32.xlu0 %v1231, 96
        %v1581 = vpop.permute.xlu0 %1580
        %1582 = vrot.lane.b32.xlu0 %v1233, 96
        %v1583 = vpop.permute.xlu0 %1582
        %1584 = vrot.lane.b32.xlu0 %v1235, 96
        %v1585 = vpop.permute.xlu0 %1584
        %1586 = vrot.lane.b32.xlu0 %v1237, 96
        %v1587 = vpop.permute.xlu0 %1586
        %1588 = vrot.lane.b32.xlu0 %v1239, 96
        %v1589 = vpop.permute.xlu0 %1588
        %1590 = vrot.lane.b32.xlu0 %v1241, 96
        %v1591 = vpop.permute.xlu0 %1590
        %1592 = vrot.lane.b32.xlu0 %v1243, 96
        %v1593 = vpop.permute.xlu0 %1592
        %1594 = vrot.lane.b32.xlu0 %v1245, 96
        %v1595 = vpop.permute.xlu0 %1594
        %1596 = vrot.lane.b32.xlu0 %v1247, 96
        %v1597 = vpop.permute.xlu0 %1596
        %1598 = vrot.lane.b32.xlu0 %v1249, 96
        %v1599 = vpop.permute.xlu0 %1598
        %1600 = vrot.lane.b32.xlu0 %v1251, 96
        %v1601 = vpop.permute.xlu0 %1600
        %1602 = vrot.lane.b32.xlu0 %v1253, 96
        %v1603 = vpop.permute.xlu0 %1602
        %1604 = vrot.lane.b32.xlu0 %v1255, 96
        %v1605 = vpop.permute.xlu0 %1604
        %1606 = vrot.lane.b32.xlu0 %v1257, 96
        %v1607 = vpop.permute.xlu0 %1606
        %1608 = vrot.lane.b32.xlu0 %v1259, 96
        %v1609 = vpop.permute.xlu0 %1608
        %1610 = vrot.lane.b32.xlu0 %v1261, 96
        %v1611 = vpop.permute.xlu0 %1610
        %1612 = vrot.lane.b32.xlu0 %v1263, 96
        %v1613 = vpop.permute.xlu0 %1612
        %1614 = vrot.lane.b32.xlu0 %v1265, 96
        %v1615 = vpop.permute.xlu0 %1614
        %1616 = vrot.lane.b32.xlu0 %v1267, 96
        %v1617 = vpop.permute.xlu0 %1616
        %1618 = vrot.lane.b32.xlu0 %v1269, 96
        %v1619 = vpop.permute.xlu0 %1618
        %1620 = vrot.lane.b32.xlu0 %v1271, 96
        %v1621 = vpop.permute.xlu0 %1620
        %1622 = vrot.lane.b32.xlu0 %v1369, 96
        %v1623 = vpop.permute.xlu0 %1622
        %1624 = vrot.lane.b32.xlu0 %v1371, 96
        %v1625 = vpop.permute.xlu0 %1624
        %1658 = vrot.lane.b32.xlu0 %v1308, 32
        %v1659 = vpop.permute.xlu0 %1658
        %1660 = vrot.lane.b32.xlu0 %v1309, 32
        %v1661 = vpop.permute.xlu0 %1660
        %1662 = vrot.lane.b32.xlu0 %v1312, 32
        %v1663 = vpop.permute.xlu0 %1662
        %1664 = vrot.lane.b32.xlu0 %v1313, 32
        %v1665 = vpop.permute.xlu0 %1664
        %1666 = vrot.lane.b32.xlu0 %v1316, 32
        %v1667 = vpop.permute.xlu0 %1666
        %1668 = vrot.lane.b32.xlu0 %v1317, 32
        %v1669 = vpop.permute.xlu0 %1668
        %1670 = vrot.lane.b32.xlu0 %v1320, 32
        %v1671 = vpop.permute.xlu0 %1670
        %1672 = vrot.lane.b32.xlu0 %v1321, 32
        %v1673 = vpop.permute.xlu0 %1672
        %1674 = vrot.lane.b32.xlu0 %v1324, 32
        %v1675 = vpop.permute.xlu0 %1674
        %1676 = vrot.lane.b32.xlu0 %v1325, 32
        %v1677 = vpop.permute.xlu0 %1676
        %1678 = vrot.lane.b32.xlu0 %v1328, 32
        %v1679 = vpop.permute.xlu0 %1678
        %1680 = vrot.lane.b32.xlu0 %v1329, 32
        %v1681 = vpop.permute.xlu0 %1680
        %1682 = vrot.lane.b32.xlu0 %v1332, 32
        %v1683 = vpop.permute.xlu0 %1682
        %1684 = vrot.lane.b32.xlu0 %v1333, 32
        %v1685 = vpop.permute.xlu0 %1684
        %1686 = vrot.lane.b32.xlu0 %v1336, 32
        %v1687 = vpop.permute.xlu0 %1686
        %1688 = vrot.lane.b32.xlu0 %v1337, 32
        %v1689 = vpop.permute.xlu0 %1688
        %1690 = vrot.lane.b32.xlu0 %v1340, 32
        %v1691 = vpop.permute.xlu0 %1690
        %1692 = vrot.lane.b32.xlu0 %v1341, 32
        %v1693 = vpop.permute.xlu0 %1692
        %1694 = vrot.lane.b32.xlu0 %v1344, 32
        %v1695 = vpop.permute.xlu0 %1694
        %1696 = vrot.lane.b32.xlu0 %v1345, 32
        %v1697 = vpop.permute.xlu0 %1696
        %1698 = vrot.lane.b32.xlu0 %v1348, 32
        %v1699 = vpop.permute.xlu0 %1698
        %1700 = vrot.lane.b32.xlu0 %v1349, 32
        %v1701 = vpop.permute.xlu0 %1700
        %1702 = vrot.lane.b32.xlu0 %v1352, 32
        %v1703 = vpop.permute.xlu0 %1702
        %1704 = vrot.lane.b32.xlu0 %v1353, 32
        %v1705 = vpop.permute.xlu0 %1704
        %1706 = vrot.lane.b32.xlu0 %v1356, 32
        %v1707 = vpop.permute.xlu0 %1706
        %1708 = vrot.lane.b32.xlu0 %v1357, 32
        %v1709 = vpop.permute.xlu0 %1708
        %1710 = vrot.lane.b32.xlu0 %v1360, 32
        %v1711 = vpop.permute.xlu0 %1710
        %1712 = vrot.lane.b32.xlu0 %v1361, 32
        %v1713 = vpop.permute.xlu0 %1712
        %1714 = vrot.lane.b32.xlu0 %v1364, 32
        %v1715 = vpop.permute.xlu0 %1714
        %1716 = vrot.lane.b32.xlu0 %v1365, 32
        %v1717 = vpop.permute.xlu0 %1716
        %1718 = vrot.lane.b32.xlu0 %v1374, 32
        %v1719 = vpop.permute.xlu0 %1718
        %1720 = vrot.lane.b32.xlu0 %v1375, 32
        %v1721 = vpop.permute.xlu0 %1720
        %1754 = vrot.lane.b32.xlu0 %v1217, 64
        %v1755 = vpop.permute.xlu0 %1754
        %1756 = vrot.lane.b32.xlu0 %v1219, 64
        %v1757 = vpop.permute.xlu0 %1756
        %1758 = vrot.lane.b32.xlu0 %v1221, 64
        %v1759 = vpop.permute.xlu0 %1758
        %1760 = vrot.lane.b32.xlu0 %v1223, 64
        %v1761 = vpop.permute.xlu0 %1760
        %1762 = vrot.lane.b32.xlu0 %v1225, 64
        %v1763 = vpop.permute.xlu0 %1762
        %1764 = vrot.lane.b32.xlu0 %v1227, 64
        %v1765 = vpop.permute.xlu0 %1764
        %1766 = vrot.lane.b32.xlu0 %v1229, 64
        %v1767 = vpop.permute.xlu0 %1766
        %1768 = vrot.lane.b32.xlu0 %v1231, 64
        %v1769 = vpop.permute.xlu0 %1768
        %1770 = vrot.lane.b32.xlu0 %v1233, 64
        %v1771 = vpop.permute.xlu0 %1770
        %1772 = vrot.lane.b32.xlu0 %v1235, 64
        %v1773 = vpop.permute.xlu0 %1772
        %1774 = vrot.lane.b32.xlu0 %v1237, 64
        %v1775 = vpop.permute.xlu0 %1774
        %1776 = vrot.lane.b32.xlu0 %v1239, 64
        %v1777 = vpop.permute.xlu0 %1776
        %1778 = vrot.lane.b32.xlu0 %v1241, 64
        %v1779 = vpop.permute.xlu0 %1778
        %1780 = vrot.lane.b32.xlu0 %v1243, 64
        %v1781 = vpop.permute.xlu0 %1780
        %1782 = vrot.lane.b32.xlu0 %v1245, 64
        %v1783 = vpop.permute.xlu0 %1782
        %1784 = vrot.lane.b32.xlu0 %v1247, 64
        %v1785 = vpop.permute.xlu0 %1784
        %1786 = vrot.lane.b32.xlu0 %v1249, 64
        %v1787 = vpop.permute.xlu0 %1786
        %1788 = vrot.lane.b32.xlu0 %v1251, 64
        %v1789 = vpop.permute.xlu0 %1788
        %1790 = vrot.lane.b32.xlu0 %v1253, 64
        %v1791 = vpop.permute.xlu0 %1790
        %1792 = vrot.lane.b32.xlu0 %v1255, 64
        %v1793 = vpop.permute.xlu0 %1792
        %1794 = vrot.lane.b32.xlu0 %v1257, 64
        %v1795 = vpop.permute.xlu0 %1794
        %1796 = vrot.lane.b32.xlu0 %v1259, 64
        %v1797 = vpop.permute.xlu0 %1796
        %1798 = vrot.lane.b32.xlu0 %v1261, 64
        %v1799 = vpop.permute.xlu0 %1798
        %1800 = vrot.lane.b32.xlu0 %v1263, 64
        %v1801 = vpop.permute.xlu0 %1800
        %1802 = vrot.lane.b32.xlu0 %v1265, 64
        %v1803 = vpop.permute.xlu0 %1802
        %1804 = vrot.lane.b32.xlu0 %v1267, 64
        %v1805 = vpop.permute.xlu0 %1804
        %1806 = vrot.lane.b32.xlu0 %v1269, 64
        %v1807 = vpop.permute.xlu0 %1806
        %1808 = vrot.lane.b32.xlu0 %v1271, 64
        %v1809 = vpop.permute.xlu0 %1808
        %1810 = vrot.lane.b32.xlu0 %v1369, 64
        %v1811 = vpop.permute.xlu0 %1810
        %1812 = vrot.lane.b32.xlu0 %v1371, 64
        %v1813 = vpop.permute.xlu0 %1812
        %1814 = vrot.lane.b32.xlu0 %v1211, 64
        %v1815 = vpop.permute.xlu0 %1814
        %1847 = vrot.lane.b32.xlu0 %v1030, 96
        %v1848 = vpop.permute.xlu0 %1847
        %1849 = vrot.lane.b32.xlu0 %v1035, 96
        %v1850 = vpop.permute.xlu0 %1849
        %1851 = vrot.lane.b32.xlu0 %v1040, 96
        %v1852 = vpop.permute.xlu0 %1851
        %1853 = vrot.lane.b32.xlu0 %v1045, 96
        %v1854 = vpop.permute.xlu0 %1853
        %1855 = vrot.lane.b32.xlu0 %v1050, 96
        %v1856 = vpop.permute.xlu0 %1855
        %1857 = vrot.lane.b32.xlu0 %v1055, 96
        %v1858 = vpop.permute.xlu0 %1857
        %1859 = vrot.lane.b32.xlu0 %v1060, 96
        %v1860 = vpop.permute.xlu0 %1859
        %1861 = vrot.lane.b32.xlu0 %v1065, 96
        %v1862 = vpop.permute.xlu0 %1861
        %1863 = vrot.lane.b32.xlu0 %v1070, 96
        %v1864 = vpop.permute.xlu0 %1863
        %1865 = vrot.lane.b32.xlu0 %v1075, 96
        %v1866 = vpop.permute.xlu0 %1865
        %1867 = vrot.lane.b32.xlu0 %v1080, 96
        %v1868 = vpop.permute.xlu0 %1867
        %1869 = vrot.lane.b32.xlu0 %v1085, 96
        %v1870 = vpop.permute.xlu0 %1869
        %1871 = vrot.lane.b32.xlu0 %v1090, 96
        %v1872 = vpop.permute.xlu0 %1871
        %1873 = vrot.lane.b32.xlu0 %v1095, 96
        %v1874 = vpop.permute.xlu0 %1873
        %1875 = vrot.lane.b32.xlu0 %v1100, 96
        %v1876 = vpop.permute.xlu0 %1875
        %1877 = vrot.lane.b32.xlu0 %v1105, 96
        %v1878 = vpop.permute.xlu0 %1877
        %1879 = vrot.lane.b32.xlu0 %v1110, 96
        %v1880 = vpop.permute.xlu0 %1879
        %1881 = vrot.lane.b32.xlu0 %v1115, 96
        %v1882 = vpop.permute.xlu0 %1881
        %1883 = vrot.lane.b32.xlu0 %v1120, 96
        %v1884 = vpop.permute.xlu0 %1883
        %1885 = vrot.lane.b32.xlu0 %v1125, 96
        %v1886 = vpop.permute.xlu0 %1885
        %1887 = vrot.lane.b32.xlu0 %v1130, 96
        %v1888 = vpop.permute.xlu0 %1887
        %1889 = vrot.lane.b32.xlu0 %v1135, 96
        %v1890 = vpop.permute.xlu0 %1889
        %1891 = vrot.lane.b32.xlu0 %v1140, 96
        %v1892 = vpop.permute.xlu0 %1891
        %1893 = vrot.lane.b32.xlu0 %v1145, 96
        %v1894 = vpop.permute.xlu0 %1893
        %1895 = vrot.lane.b32.xlu0 %v1150, 96
        %v1896 = vpop.permute.xlu0 %1895
        %1897 = vrot.lane.b32.xlu0 %v1155, 96
        %v1898 = vpop.permute.xlu0 %1897
        %1899 = vrot.lane.b32.xlu0 %v1160, 96
        %v1900 = vpop.permute.xlu0 %1899
        %1901 = vrot.lane.b32.xlu0 %v1165, 96
        %v1902 = vpop.permute.xlu0 %1901
        %1903 = vrot.lane.b32.xlu0 %v1170, 96
        %v1904 = vpop.permute.xlu0 %1903
        %1905 = vrot.lane.b32.xlu0 %v1175, 96
        %v1906 = vpop.permute.xlu0 %1905
        %1907 = vrot.lane.b32.xlu0 0.0, 96
        %v1908 = vpop.permute.xlu0 %1907
        %vm1940 = vcmask 261120
        %v1941 = vsel %vm1940, %v1211, %v1377
        %v1942 = vsel %vm1940, %v1213, %v1379
        %v1943 = vsel %vm1940, %v1215, %v1381
        %v1944 = vsel %vm1940, %v1217, %v1383
        %v1945 = vsel %vm1940, %v1219, %v1385
        %v1946 = vsel %vm1940, %v1221, %v1387
        %v1947 = vsel %vm1940, %v1223, %v1389
        %v1948 = vsel %vm1940, %v1225, %v1391
        %v1949 = vsel %vm1940, %v1227, %v1393
        %v1950 = vsel %vm1940, %v1229, %v1395
        %v1951 = vsel %vm1940, %v1231, %v1397
        %v1952 = vsel %vm1940, %v1233, %v1399
        %v1953 = vsel %vm1940, %v1235, %v1401
        %v1954 = vsel %vm1940, %v1237, %v1403
        %v1955 = vsel %vm1940, %v1239, %v1405
        %v1956 = vsel %vm1940, %v1241, %v1407
        %v1957 = vsel %vm1940, %v1243, %v1409
        %v1958 = vsel %vm1940, %v1245, %v1411
        %v1959 = vsel %vm1940, %v1247, %v1413
        %v1960 = vsel %vm1940, %v1249, %v1415
        %v1961 = vsel %vm1940, %v1251, %v1417
        %v1962 = vsel %vm1940, %v1253, %v1419
        %v1963 = vsel %vm1940, %v1255, %v1421
        %v1964 = vsel %vm1940, %v1257, %v1423
        %v1965 = vsel %vm1940, %v1259, %v1425
        %v1966 = vsel %vm1940, %v1261, %v1427
        %v1967 = vsel %vm1940, %v1263, %v1429
        %v1968 = vsel %vm1940, %v1265, %v1431
        %v1969 = vsel %vm1940, %v1267, %v1433
        %v1970 = vsel %vm1940, %v1269, %v1435
        %v1971 = vsel %vm1940, %v1271, %v1437
        %vm1972 = vcmask 523264
        %v1973 = vsel %vm1972, %v1941, %v1470
        %v1974 = vsel %vm1972, %v1942, %v1472
        %v1975 = vsel %vm1972, %v1943, %v1474
        %v1976 = vsel %vm1972, %v1944, %v1476
        %v1977 = vsel %vm1972, %v1945, %v1478
        %v1978 = vsel %vm1972, %v1946, %v1480
        %v1979 = vsel %vm1972, %v1947, %v1482
        %v1980 = vsel %vm1972, %v1948, %v1484
        %v1981 = vsel %vm1972, %v1949, %v1486
        %v1982 = vsel %vm1972, %v1950, %v1488
        %v1983 = vsel %vm1972, %v1951, %v1490
        %v1984 = vsel %vm1972, %v1952, %v1492
        %v1985 = vsel %vm1972, %v1953, %v1494
        %v1986 = vsel %vm1972, %v1954, %v1496
        %v1987 = vsel %vm1972, %v1955, %v1498
        %v1988 = vsel %vm1972, %v1956, %v1500
        %v1989 = vsel %vm1972, %v1957, %v1502
        %v1990 = vsel %vm1972, %v1958, %v1504
        %v1991 = vsel %vm1972, %v1959, %v1506
        %v1992 = vsel %vm1972, %v1960, %v1508
        %v1993 = vsel %vm1972, %v1961, %v1510
        %v1994 = vsel %vm1972, %v1962, %v1512
        %v1995 = vsel %vm1972, %v1963, %v1514
        %v1996 = vsel %vm1972, %v1964, %v1516
        %v1997 = vsel %vm1972, %v1965, %v1518
        %v1998 = vsel %vm1972, %v1966, %v1520
        %v1999 = vsel %vm1972, %v1967, %v1522
        %v2000 = vsel %vm1972, %v1968, %v1524
        %v2001 = vsel %vm1972, %v1969, %v1526
        %v2002 = vsel %vm1972, %v1970, %v1528
        %v2003 = vsel %vm1972, %v1971, %v1530
        %vm2004 = vcmask 785408
        %v2005 = vsel %vm2004, %v1973, %v1563
        %v2006 = vsel %vm2004, %v1973, %v1565
        %v2007 = vsel %vm2004, %v1974, %v1567
        %v2008 = vsel %vm2004, %v1975, %v1569
        %v2009 = vsel %vm2004, %v1976, %v1571
        %v2010 = vsel %vm2004, %v1977, %v1573
        %v2011 = vsel %vm2004, %v1978, %v1575
        %v2012 = vsel %vm2004, %v1979, %v1577
        %v2013 = vsel %vm2004, %v1980, %v1579
        %v2014 = vsel %vm2004, %v1981, %v1581
        %v2015 = vsel %vm2004, %v1982, %v1583
        %v2016 = vsel %vm2004, %v1983, %v1585
        %v2017 = vsel %vm2004, %v1984, %v1587
        %v2018 = vsel %vm2004, %v1985, %v1589
        %v2019 = vsel %vm2004, %v1986, %v1591
        %v2020 = vsel %vm2004, %v1987, %v1593
        %v2021 = vsel %vm2004, %v1988, %v1595
        %v2022 = vsel %vm2004, %v1989, %v1597
        %v2023 = vsel %vm2004, %v1990, %v1599
        %v2024 = vsel %vm2004, %v1991, %v1601
        %v2025 = vsel %vm2004, %v1992, %v1603
        %v2026 = vsel %vm2004, %v1993, %v1605
        %v2027 = vsel %vm2004, %v1994, %v1607
        %v2028 = vsel %vm2004, %v1995, %v1609
        %v2029 = vsel %vm2004, %v1996, %v1611
        %v2030 = vsel %vm2004, %v1997, %v1613
        %v2031 = vsel %vm2004, %v1998, %v1615
        %v2032 = vsel %vm2004, %v1999, %v1617
        %v2033 = vsel %vm2004, %v2000, %v1619
        %v2034 = vsel %vm2004, %v2001, %v1621
        %v2035 = vsel %vm2004, %v2002, %v1623
        %v2036 = vsel %vm2004, %v2003, %v1625
        %v2037 = vsel %vm1940, %v1020, %v1659
        %v2038 = vsel %vm1940, %v1025, %v1661
        %v2039 = vsel %vm1940, %v1030, %v1663
        %v2040 = vsel %vm1940, %v1035, %v1665
        %v2041 = vsel %vm1940, %v1040, %v1667
        %v2042 = vsel %vm1940, %v1045, %v1669
        %v2043 = vsel %vm1940, %v1050, %v1671
        %v2044 = vsel %vm1940, %v1055, %v1673
        %v2045 = vsel %vm1940, %v1060, %v1675
        %v2046 = vsel %vm1940, %v1065, %v1677
        %v2047 = vsel %vm1940, %v1070, %v1679
        %v2048 = vsel %vm1940, %v1075, %v1681
        %v2049 = vsel %vm1940, %v1080, %v1683
        %v2050 = vsel %vm1940, %v1085, %v1685
        %v2051 = vsel %vm1940, %v1090, %v1687
        %v2052 = vsel %vm1940, %v1095, %v1689
        %v2053 = vsel %vm1940, %v1100, %v1691
        %v2054 = vsel %vm1940, %v1105, %v1693
        %v2055 = vsel %vm1940, %v1110, %v1695
        %v2056 = vsel %vm1940, %v1115, %v1697
        %v2057 = vsel %vm1940, %v1120, %v1699
        %v2058 = vsel %vm1940, %v1125, %v1701
        %v2059 = vsel %vm1940, %v1130, %v1703
        %v2060 = vsel %vm1940, %v1135, %v1705
        %v2061 = vsel %vm1940, %v1140, %v1707
        %v2062 = vsel %vm1940, %v1145, %v1709
        %v2063 = vsel %vm1940, %v1150, %v1711
        %v2064 = vsel %vm1940, %v1155, %v1713
        %v2065 = vsel %vm1940, %v1160, %v1715
        %v2066 = vsel %vm1940, %v1165, %v1717
        %v2067 = vsel %vm1940, %v1170, %v1719
        %v2068 = vsel %vm1940, %v1175, %v1721
        %v2069 = vsel %vm1972, %v2037, %v1755
        %v2070 = vsel %vm1972, %v2038, %v1757
        %v2071 = vsel %vm1972, %v2039, %v1759
        %v2072 = vsel %vm1972, %v2040, %v1761
        %v2073 = vsel %vm1972, %v2041, %v1763
        %v2074 = vsel %vm1972, %v2042, %v1765
        %v2075 = vsel %vm1972, %v2043, %v1767
        %v2076 = vsel %vm1972, %v2044, %v1769
        %v2077 = vsel %vm1972, %v2045, %v1771
        %v2078 = vsel %vm1972, %v2046, %v1773
        %v2079 = vsel %vm1972, %v2047, %v1775
        %v2080 = vsel %vm1972, %v2048, %v1777
        %v2081 = vsel %vm1972, %v2049, %v1779
        %v2082 = vsel %vm1972, %v2050, %v1781
        %v2083 = vsel %vm1972, %v2051, %v1783
        %v2084 = vsel %vm1972, %v2052, %v1785
        %v2085 = vsel %vm1972, %v2053, %v1787
        %v2086 = vsel %vm1972, %v2054, %v1789
        %v2087 = vsel %vm1972, %v2055, %v1791
        %v2088 = vsel %vm1972, %v2056, %v1793
        %v2089 = vsel %vm1972, %v2057, %v1795
        %v2090 = vsel %vm1972, %v2058, %v1797
        %v2091 = vsel %vm1972, %v2059, %v1799
        %v2092 = vsel %vm1972, %v2060, %v1801
        %v2093 = vsel %vm1972, %v2061, %v1803
        %v2094 = vsel %vm1972, %v2062, %v1805
        %v2095 = vsel %vm1972, %v2063, %v1807
        %v2096 = vsel %vm1972, %v2064, %v1809
        %v2097 = vsel %vm1972, %v2065, %v1811
        %v2098 = vsel %vm1972, %v2066, %v1813
        %v2099 = vsel %vm1972, %v2067, %v1815
        %v2100 = vsel %vm1972, %v2068, %v1815
        %v2101 = vsel %vm2004, %v2069, %v1848
        %v2102 = vsel %vm2004, %v2070, %v1850
        %v2103 = vsel %vm2004, %v2071, %v1852
        %v2104 = vsel %vm2004, %v2072, %v1854
        %v2105 = vsel %vm2004, %v2073, %v1856
        %v2106 = vsel %vm2004, %v2074, %v1858
        %v2107 = vsel %vm2004, %v2075, %v1860
        %v2108 = vsel %vm2004, %v2076, %v1862
        %v2109 = vsel %vm2004, %v2077, %v1864
        %v2110 = vsel %vm2004, %v2078, %v1866
        %v2111 = vsel %vm2004, %v2079, %v1868
        %v2112 = vsel %vm2004, %v2080, %v1870
        %v2113 = vsel %vm2004, %v2081, %v1872
        %v2114 = vsel %vm2004, %v2082, %v1874
        %v2115 = vsel %vm2004, %v2083, %v1876
        %v2116 = vsel %vm2004, %v2084, %v1878
        %v2117 = vsel %vm2004, %v2085, %v1880
        %v2118 = vsel %vm2004, %v2086, %v1882
        %v2119 = vsel %vm2004, %v2087, %v1884
        %v2120 = vsel %vm2004, %v2088, %v1886
        %v2121 = vsel %vm2004, %v2089, %v1888
        %v2122 = vsel %vm2004, %v2090, %v1890
        %v2123 = vsel %vm2004, %v2091, %v1892
        %v2124 = vsel %vm2004, %v2092, %v1894
        %v2125 = vsel %vm2004, %v2093, %v1896
        %v2126 = vsel %vm2004, %v2094, %v1898
        %v2127 = vsel %vm2004, %v2095, %v1900
        %v2128 = vsel %vm2004, %v2096, %v1902
        %v2129 = vsel %vm2004, %v2097, %v1904
        %v2130 = vsel %vm2004, %v2098, %v1906
        %v2131 = vsel %vm2004, %v2099, %v1908
        %v2132 = vsel %vm2004, %v2100, %v1908
        %v2133 = vld [vmem:[%s8] sm:$0xff]
        %v2134 = vld [vmem:[%s8 + $0x8] sm:$0xff]
        %v2135 = vld [vmem:[%s8 + $0x10] sm:$0xff]
        %v2136 = vld [vmem:[%s8 + $0x18] sm:$0xff]
        %v2137 = vld [vmem:[%s8 + $0x20] sm:$0xff]
        %v2138 = vld [vmem:[%s8 + $0x28] sm:$0xff]
        %v2139 = vld [vmem:[%s8 + $0x30] sm:$0xff]
        %v2140 = vld [vmem:[%s8 + $0x38] sm:$0xff]
        %v2141 = vld [vmem:[%s8 + $0x40] sm:$0xff]
        %v2142 = vld [vmem:[%s8 + $0x48] sm:$0xff]
        %v2143 = vld [vmem:[%s8 + $0x50] sm:$0xff]
        %v2144 = vld [vmem:[%s8 + $0x58] sm:$0xff]
        %v2145 = vld [vmem:[%s8 + $0x60] sm:$0xff]
        %v2146 = vld [vmem:[%s8 + $0x68] sm:$0xff]
        %v2147 = vld [vmem:[%s8 + $0x70] sm:$0xff]
        %v2148 = vld [vmem:[%s8 + $0x78] sm:$0xff]
        %v2149 = vld [vmem:[%s8 + $0x80] sm:$0xff]
        %v2150 = vld [vmem:[%s8 + $0x88] sm:$0xff]
        %v2151 = vld [vmem:[%s8 + $0x90] sm:$0xff]
        %v2152 = vld [vmem:[%s8 + $0x98] sm:$0xff]
        %v2153 = vld [vmem:[%s8 + $0xa0] sm:$0xff]
        %v2154 = vld [vmem:[%s8 + $0xa8] sm:$0xff]
        %v2155 = vld [vmem:[%s8 + $0xb0] sm:$0xff]
        %v2156 = vld [vmem:[%s8 + $0xb8] sm:$0xff]
        %v2157 = vld [vmem:[%s8 + $0xc0] sm:$0xff]
        %v2158 = vld [vmem:[%s8 + $0xc8] sm:$0xff]
        %v2159 = vld [vmem:[%s8 + $0xd0] sm:$0xff]
        %v2160 = vld [vmem:[%s8 + $0xd8] sm:$0xff]
        %v2161 = vld [vmem:[%s8 + $0xe0] sm:$0xff]
        %v2162 = vld [vmem:[%s8 + $0xe8] sm:$0xff]
        %v2163 = vld [vmem:[%s8 + $0xf0] sm:$0xff]
        %v2164 = vld [vmem:[%s8 + $0xf8] sm:$0xff]
        %v2165 = vld [vmem:[%s8 + $0x100] sm:$0xff]
        %v2166 = vld [vmem:[%s8 + $0x108] sm:$0xff]
        %v2167 = vld [vmem:[%s8 + $0x110] sm:$0xff]
        %v2168 = vld [vmem:[%s8 + $0x118] sm:$0xff]
        %v2169 = vld [vmem:[%s10] sm:$0xff]
        %v2170 = vld [vmem:[%s10 + $0x8] sm:$0xff]
        %v2171 = vld [vmem:[%s10 + $0x10] sm:$0xff]
        %v2172 = vld [vmem:[%s10 + $0x18] sm:$0xff]
        %v2173 = vsel %vm1940, %v1020, 0
        %v2175 = vsel %vm1940, %v1025, 0
        %v2177 = vsel %vm1940, %v1030, 0
        %v2179 = vsel %vm1940, %v1035, 0
        %v2181 = vsel %vm1940, %v1040, 0
        %v2183 = vsel %vm1940, %v1045, 0
        %v2185 = vsel %vm1940, %v1050, 0
        %v2187 = vsel %vm1940, %v1055, 0
        %v2189 = vsel %vm1940, %v1060, 0
        %v2191 = vsel %vm1940, %v1065, 0
        %v2193 = vsel %vm1940, %v1070, 0
        %v2195 = vsel %vm1940, %v1075, 0
        %v2197 = vsel %vm1940, %v1080, 0
        %v2199 = vsel %vm1940, %v1085, 0
        %v2201 = vsel %vm1940, %v1090, 0
        %v2203 = vsel %vm1940, %v1095, 0
        %v2205 = vsel %vm1940, %v1100, 0
        %v2207 = vsel %vm1940, %v1105, 0
        %v2209 = vsel %vm1940, %v1110, 0
        %v2211 = vsel %vm1940, %v1115, 0
        %v2213 = vsel %vm1940, %v1120, 0
        %v2215 = vsel %vm1940, %v1125, 0
        %v2217 = vsel %vm1940, %v1130, 0
        %v2219 = vsel %vm1940, %v1135, 0
        %v2221 = vsel %vm1940, %v1140, 0
        %v2223 = vsel %vm1940, %v1145, 0
        %v2225 = vsel %vm1940, %v1150, 0
        %v2227 = vsel %vm1940, %v1155, 0
        %v2229 = vsel %vm1940, %v1160, 0
        %v2231 = vsel %vm1940, %v1165, 0
        %v2233 = vsel %vm1940, %v1170, 0
        %v2235 = vsel %vm1940, %v1175, 0
        %2237 = vmatprep.subr.mxu0 0.0
        %2238 = vmatpush1.msra.mxu0 0.0
        %2239 = vmatprep.subr.mxu0 0.0
        %2240 = vmatpush1.msra.mxu0 0.0
        %2241 = vmatprep.subr.mxu0 0.0
        %2242 = vmatpush1.msra.mxu0 0.0
        %2243 = vmatprep.subr.mxu0 0.0
        %2244 = vmatpush1.msra.mxu0 0.0
        %2245 = vmatprep.subr.mxu0 0.0
        %2246 = vmatpush1.msra.mxu0 0.0
        %2247 = vmatprep.subr.mxu0 0.0
        %2248 = vmatpush1.msra.mxu0 0.0
        %2249 = vmatprep.subr.mxu0 0.0
        %2250 = vmatpush1.msra.mxu0 0.0
        %2251 = vmatprep.subr.mxu0 0.0
        %2252 = vmatpush1.msra.mxu0 0.0
        %2253 = vmatprep.subr.mxu0 0.0
        %2254 = vmatpush1.msra.mxu0 0.0
        %2255 = vmatprep.subr.mxu0 0.0
        %2256 = vmatpush1.msra.mxu0 0.0
        %2257 = vmatprep.subr.mxu0 0.0
        %2258 = vmatpush1.msra.mxu0 0.0
        %2259 = vmatprep.subr.mxu0 0.0
        %2260 = vmatpush1.msra.mxu0 0.0
        %2261 = vmatprep.subr.mxu0 0.0
        %2262 = vmatpush1.msra.mxu0 %v2172
        %2263 = vmatprep.subr.mxu0 0.0
        %2264 = vmatpush1.msra.mxu0 %v2171
        %2265 = vmatprep.subr.mxu0 0.0
        %2266 = vmatpush1.msra.mxu0 %v2170
        %2267 = vmatprep.subr.mxu0 0.0
        %2268 = vmatpush1.msra.mxu0 %v2169
        %2269 = vmatprep.subr.mxu0 0.0
        %2270 = vmatpush2.msra.mxu0 0.0
        %2271 = vmatprep.subr.mxu0 0.0
        %2272 = vmatpush2.msra.mxu0 0.0
        %2273 = vmatprep.subr.mxu0 0.0
        %2274 = vmatpush2.msra.mxu0 0.0
        %2275 = vmatprep.subr.mxu0 0.0
        %2276 = vmatpush2.msra.mxu0 0.0
        %2277 = vmatprep.subr.mxu0 0.0
        %2278 = vmatpush2.msra.mxu0 0.0
        %2279 = vmatprep.subr.mxu0 0.0
        %2280 = vmatpush2.msra.mxu0 0.0
        %2281 = vmatprep.subr.mxu0 0.0
        %2282 = vmatpush2.msra.mxu0 0.0
        %2283 = vmatprep.subr.mxu0 0.0
        %2284 = vmatpush2.msra.mxu0 0.0
        %2285 = vmatprep.subr.mxu0 0.0
        %2286 = vmatpush2.msra.mxu0 0.0
        %2287 = vmatprep.subr.mxu0 0.0
        %2288 = vmatpush2.msra.mxu0 0.0
        %2289 = vmatprep.subr.mxu0 0.0
        %2290 = vmatpush2.msra.mxu0 0.0
        %2291 = vmatprep.subr.mxu0 0.0
        %2292 = vmatpush2.msra.mxu0 0.0
        %2293 = vmatprep.subr.mxu0 0.0
        %2294 = vmatpush2.msra.mxu0 0.0
        %2295 = vmatprep.subr.mxu0 0.0
        %2296 = vmatpush2.msra.mxu0 0.0
        %2297 = vmatprep.subr.mxu0 0.0
        %2298 = vmatpush2.msra.mxu0 0.0
        %2299 = vmatprep.subr.mxu0 0.0
        %2300 = vmatpush2.msra.mxu0 0.0
        %2301 = vmatprep.mubr.f32.mxu0 0.0
        %2302 = vmatmul.mubr.f32.gmra.mxu0 %v2173
        %v2303 = vpop.f32.mrf.mxu0
        %v2304 = vadd.f32 0.0, %v2303
        %v2305 = vpop.f32.mrf.mxu0
        %2306 = vmatprep.mubr.f32.mxu0 0.0
        %2307 = vmatmul.mubr.f32.gmra.mxu0 %v2175
        %v2308 = vpop.f32.mrf.mxu0
        %v2309 = vadd.f32 0.0, %v2308
        %v2310 = vpop.f32.mrf.mxu0
        %2311 = vmatprep.mubr.f32.mxu0 0.0
        %2312 = vmatmul.mubr.f32.gmra.mxu0 %v2177
        %v2313 = vpop.f32.mrf.mxu0
        %v2314 = vadd.f32 0.0, %v2313
        %v2315 = vpop.f32.mrf.mxu0
        %2316 = vmatprep.mubr.f32.mxu0 0.0
        %2317 = vmatmul.mubr.f32.gmra.mxu0 %v2179
        %v2318 = vpop.f32.mrf.mxu0
        %v2319 = vadd.f32 0.0, %v2318
        %v2320 = vpop.f32.mrf.mxu0
        %2321 = vmatprep.mubr.f32.mxu0 0.0
        %2322 = vmatmul.mubr.f32.gmra.mxu0 %v2181
        %v2323 = vpop.f32.mrf.mxu0
        %v2324 = vadd.f32 0.0, %v2323
        %v2325 = vpop.f32.mrf.mxu0
        %2326 = vmatprep.mubr.f32.mxu0 0.0
        %2327 = vmatmul.mubr.f32.gmra.mxu0 %v2183
        %v2328 = vpop.f32.mrf.mxu0
        %v2329 = vadd.f32 0.0, %v2328
        %v2330 = vpop.f32.mrf.mxu0
        %2331 = vmatprep.mubr.f32.mxu0 0.0
        %2332 = vmatmul.mubr.f32.gmra.mxu0 %v2185
        %v2333 = vpop.f32.mrf.mxu0
        %v2334 = vadd.f32 0.0, %v2333
        %v2335 = vpop.f32.mrf.mxu0
        %2336 = vmatprep.mubr.f32.mxu0 0.0
        %2337 = vmatmul.mubr.f32.gmra.mxu0 %v2187
        %v2338 = vpop.f32.mrf.mxu0
        %v2339 = vadd.f32 0.0, %v2338
        %v2340 = vpop.f32.mrf.mxu0
        %2341 = vmatprep.mubr.f32.mxu0 0.0
        %2342 = vmatmul.mubr.f32.gmra.mxu0 %v2189
        %v2343 = vpop.f32.mrf.mxu0
        %v2344 = vadd.f32 0.0, %v2343
        %v2345 = vpop.f32.mrf.mxu0
        %2346 = vmatprep.mubr.f32.mxu0 0.0
        %2347 = vmatmul.mubr.f32.gmra.mxu0 %v2191
        %v2348 = vpop.f32.mrf.mxu0
        %v2349 = vadd.f32 0.0, %v2348
        %v2350 = vpop.f32.mrf.mxu0
        %2351 = vmatprep.mubr.f32.mxu0 0.0
        %2352 = vmatmul.mubr.f32.gmra.mxu0 %v2193
        %v2353 = vpop.f32.mrf.mxu0
        %v2354 = vadd.f32 0.0, %v2353
        %v2355 = vpop.f32.mrf.mxu0
        %2356 = vmatprep.mubr.f32.mxu0 0.0
        %2357 = vmatmul.mubr.f32.gmra.mxu0 %v2195
        %v2358 = vpop.f32.mrf.mxu0
        %v2359 = vadd.f32 0.0, %v2358
        %v2360 = vpop.f32.mrf.mxu0
        %2361 = vmatprep.mubr.f32.mxu0 0.0
        %2362 = vmatmul.mubr.f32.gmra.mxu0 %v2197
        %v2363 = vpop.f32.mrf.mxu0
        %v2364 = vadd.f32 0.0, %v2363
        %v2365 = vpop.f32.mrf.mxu0
        %2366 = vmatprep.mubr.f32.mxu0 0.0
        %2367 = vmatmul.mubr.f32.gmra.mxu0 %v2199
        %v2368 = vpop.f32.mrf.mxu0
        %v2369 = vadd.f32 0.0, %v2368
        %v2370 = vpop.f32.mrf.mxu0
        %2371 = vmatprep.mubr.f32.mxu0 0.0
        %2372 = vmatmul.mubr.f32.gmra.mxu0 %v2201
        %v2373 = vpop.f32.mrf.mxu0
        %v2374 = vadd.f32 0.0, %v2373
        %v2375 = vpop.f32.mrf.mxu0
        %2376 = vmatprep.mubr.f32.mxu0 0.0
        %2377 = vmatmul.mubr.f32.gmra.mxu0 %v2203
        %v2378 = vpop.f32.mrf.mxu0
        %v2379 = vadd.f32 0.0, %v2378
        %v2380 = vpop.f32.mrf.mxu0
        %2381 = vmatprep.mubr.f32.mxu0 0.0
        %2382 = vmatmul.mubr.f32.gmra.mxu0 %v2205
        %v2383 = vpop.f32.mrf.mxu0
        %v2384 = vadd.f32 0.0, %v2383
        %v2385 = vpop.f32.mrf.mxu0
        %2386 = vmatprep.mubr.f32.mxu0 0.0
        %2387 = vmatmul.mubr.f32.gmra.mxu0 %v2207
        %v2388 = vpop.f32.mrf.mxu0
        %v2389 = vadd.f32 0.0, %v2388
        %v2390 = vpop.f32.mrf.mxu0
        %2391 = vmatprep.mubr.f32.mxu0 0.0
        %2392 = vmatmul.mubr.f32.gmra.mxu0 %v2209
        %v2393 = vpop.f32.mrf.mxu0
        %v2394 = vadd.f32 0.0, %v2393
        %v2395 = vpop.f32.mrf.mxu0
        %2396 = vmatprep.mubr.f32.mxu0 0.0
        %2397 = vmatmul.mubr.f32.gmra.mxu0 %v2211
        %v2398 = vpop.f32.mrf.mxu0
        %v2399 = vadd.f32 0.0, %v2398
        %v2400 = vpop.f32.mrf.mxu0
        %2401 = vmatprep.mubr.f32.mxu0 0.0
        %2402 = vmatmul.mubr.f32.gmra.mxu0 %v2213
        %v2403 = vpop.f32.mrf.mxu0
        %v2404 = vadd.f32 0.0, %v2403
        %v2405 = vpop.f32.mrf.mxu0
        %2406 = vmatprep.mubr.f32.mxu0 0.0
        %2407 = vmatmul.mubr.f32.gmra.mxu0 %v2215
        %v2408 = vpop.f32.mrf.mxu0
        %v2409 = vadd.f32 0.0, %v2408
        %v2410 = vpop.f32.mrf.mxu0
        %2411 = vmatprep.mubr.f32.mxu0 0.0
        %2412 = vmatmul.mubr.f32.gmra.mxu0 %v2217
        %v2413 = vpop.f32.mrf.mxu0
        %v2414 = vadd.f32 0.0, %v2413
        %v2415 = vpop.f32.mrf.mxu0
        %2416 = vmatprep.mubr.f32.mxu0 0.0
        %2417 = vmatmul.mubr.f32.gmra.mxu0 %v2219
        %v2418 = vpop.f32.mrf.mxu0
        %v2419 = vadd.f32 0.0, %v2418
        %v2420 = vpop.f32.mrf.mxu0
        %2421 = vmatprep.mubr.f32.mxu0 0.0
        %2422 = vmatmul.mubr.f32.gmra.mxu0 %v2221
        %v2423 = vpop.f32.mrf.mxu0
        %v2424 = vadd.f32 0.0, %v2423
        %v2425 = vpop.f32.mrf.mxu0
        %2426 = vmatprep.mubr.f32.mxu0 0.0
        %2427 = vmatmul.mubr.f32.gmra.mxu0 %v2223
        %v2428 = vpop.f32.mrf.mxu0
        %v2429 = vadd.f32 0.0, %v2428
        %v2430 = vpop.f32.mrf.mxu0
        %2431 = vmatprep.mubr.f32.mxu0 0.0
        %2432 = vmatmul.mubr.f32.gmra.mxu0 %v2225
        %v2433 = vpop.f32.mrf.mxu0
        %v2434 = vadd.f32 0.0, %v2433
        %v2435 = vpop.f32.mrf.mxu0
        %2436 = vmatprep.mubr.f32.mxu0 0.0
        %2437 = vmatmul.mubr.f32.gmra.mxu0 %v2227
        %v2438 = vpop.f32.mrf.mxu0
        %v2439 = vadd.f32 0.0, %v2438
        %v2440 = vpop.f32.mrf.mxu0
        %2441 = vmatprep.mubr.f32.mxu0 0.0
        %2442 = vmatmul.mubr.f32.gmra.mxu0 %v2229
        %v2443 = vpop.f32.mrf.mxu0
        %v2444 = vadd.f32 0.0, %v2443
        %v2445 = vpop.f32.mrf.mxu0
        %2446 = vmatprep.mubr.f32.mxu0 0.0
        %2447 = vmatmul.mubr.f32.gmra.mxu0 %v2231
        %v2448 = vpop.f32.mrf.mxu0
        %v2449 = vadd.f32 0.0, %v2448
        %v2450 = vpop.f32.mrf.mxu0
        %2451 = vmatprep.mubr.f32.mxu0 0.0
        %2452 = vmatmul.mubr.f32.gmra.mxu0 %v2233
        %v2453 = vpop.f32.mrf.mxu0
        %v2454 = vadd.f32 0.0, %v2453
        %v2455 = vpop.f32.mrf.mxu0
        %2456 = vmatprep.mubr.f32.mxu0 0.0
        %2457 = vmatmul.mubr.f32.gmra.mxu0 %v2235
        %v2458 = vpop.f32.mrf.mxu0
        %v2459 = vadd.f32 0.0, %v2458
        %v2460 = vpop.f32.mrf.mxu0
        %2461 = vdwg.mxu0
        %v2462 = vsel %vm1940, %v1312, 0
        %v2464 = vsel %vm1940, %v1313, 0
        %v2466 = vsel %vm1940, %v1316, 0
        %v2468 = vsel %vm1940, %v1317, 0
        %v2470 = vsel %vm1940, %v1320, 0
        %v2472 = vsel %vm1940, %v1321, 0
        %v2474 = vsel %vm1940, %v1324, 0
        %v2476 = vsel %vm1940, %v1325, 0
        %v2478 = vsel %vm1940, %v1328, 0
        %v2480 = vsel %vm1940, %v1329, 0
        %v2482 = vsel %vm1940, %v1332, 0
        %v2484 = vsel %vm1940, %v1333, 0
        %v2486 = vsel %vm1940, %v1336, 0
        %v2488 = vsel %vm1940, %v1337, 0
        %v2490 = vsel %vm1940, %v1340, 0
        %v2492 = vsel %vm1940, %v1341, 0
        %v2494 = vsel %vm1940, %v1344, 0
        %v2496 = vsel %vm1940, %v1345, 0
        %v2498 = vsel %vm1940, %v1348, 0
        %v2500 = vsel %vm1940, %v1349, 0
        %v2502 = vsel %vm1940, %v1352, 0
        %v2504 = vsel %vm1940, %v1353, 0
        %v2506 = vsel %vm1940, %v1356, 0
        %v2508 = vsel %vm1940, %v1357, 0
        %v2510 = vsel %vm1940, %v1360, 0
        %v2512 = vsel %vm1940, %v1361, 0
        %v2514 = vsel %vm1940, %v1364, 0
        %v2516 = vsel %vm1940, %v1365, 0
        %v2518 = vsel %vm1940, %v1374, 0
        %v2520 = vsel %vm1940, %v1375, 0
        %v2522 = vsel %vm1940, %v1305, 0
        %2524 = vmatprep.subr.mxu0 0.0
        %2525 = vmatpush1.msra.mxu0 %v2148
        %2526 = vmatprep.subr.mxu0 0.0
        %2527 = vmatpush1.msra.mxu0 %v2147
        %2528 = vmatprep.subr.mxu0 0.0
        %2529 = vmatpush1.msra.mxu0 %v2146
        %2530 = vmatprep.subr.mxu0 0.0
        %2531 = vmatpush1.msra.mxu0 %v2145
        %2532 = vmatprep.subr.mxu0 0.0
        %2533 = vmatpush1.msra.mxu0 %v2144
        %2534 = vmatprep.subr.mxu0 0.0
        %2535 = vmatpush1.msra.mxu0 %v2143
        %2536 = vmatprep.subr.mxu0 0.0
        %2537 = vmatpush1.msra.mxu0 %v2142
        %2538 = vmatprep.subr.mxu0 0.0
        %2539 = vmatpush1.msra.mxu0 %v2141
        %2540 = vmatprep.subr.mxu0 0.0
        %2541 = vmatpush1.msra.mxu0 %v2140
        %2542 = vmatprep.subr.mxu0 0.0
        %2543 = vmatpush1.msra.mxu0 %v2139
        %2544 = vmatprep.subr.mxu0 0.0
        %2545 = vmatpush1.msra.mxu0 %v2138
        %2546 = vmatprep.subr.mxu0 0.0
        %2547 = vmatpush1.msra.mxu0 %v2137
        %2548 = vmatprep.subr.mxu0 0.0
        %2549 = vmatpush1.msra.mxu0 %v2136
        %2550 = vmatprep.subr.mxu0 0.0
        %2551 = vmatpush1.msra.mxu0 %v2135
        %2552 = vmatprep.subr.mxu0 0.0
        %2553 = vmatpush1.msra.mxu0 %v2134
        %2554 = vmatprep.subr.mxu0 0.0
        %2555 = vmatpush1.msra.mxu0 %v2133
        %2556 = vmatprep.subr.mxu0 0.0
        %2557 = vmatpush2.msra.mxu0 %v2164
        %2558 = vmatprep.subr.mxu0 0.0
        %2559 = vmatpush2.msra.mxu0 %v2163
        %2560 = vmatprep.subr.mxu0 0.0
        %2561 = vmatpush2.msra.mxu0 %v2162
        %2562 = vmatprep.subr.mxu0 0.0
        %2563 = vmatpush2.msra.mxu0 %v2161
        %2564 = vmatprep.subr.mxu0 0.0
        %2565 = vmatpush2.msra.mxu0 %v2160
        %2566 = vmatprep.subr.mxu0 0.0
        %2567 = vmatpush2.msra.mxu0 %v2159
        %2568 = vmatprep.subr.mxu0 0.0
        %2569 = vmatpush2.msra.mxu0 %v2158
        %2570 = vmatprep.subr.mxu0 0.0
        %2571 = vmatpush2.msra.mxu0 %v2157
        %2572 = vmatprep.subr.mxu0 0.0
        %2573 = vmatpush2.msra.mxu0 %v2156
        %2574 = vmatprep.subr.mxu0 0.0
        %2575 = vmatpush2.msra.mxu0 %v2155
        %2576 = vmatprep.subr.mxu0 0.0
        %2577 = vmatpush2.msra.mxu0 %v2154
        %2578 = vmatprep.subr.mxu0 0.0
        %2579 = vmatpush2.msra.mxu0 %v2153
        %2580 = vmatprep.subr.mxu0 0.0
        %2581 = vmatpush2.msra.mxu0 %v2152
        %2582 = vmatprep.subr.mxu0 0.0
        %2583 = vmatpush2.msra.mxu0 %v2151
        %2584 = vmatprep.subr.mxu0 0.0
        %2585 = vmatpush2.msra.mxu0 %v2150
        %2586 = vmatprep.subr.mxu0 0.0
        %2587 = vmatpush2.msra.mxu0 %v2149
        %2588 = vmatprep.mubr.f32.mxu0 %v2101
        %2589 = vmatmul.mubr.f32.gmra.mxu0 %v2005
        %v2590 = vpop.f32.mrf.mxu0
        %v2591 = vadd.f32 %v2304, %v2590
        %v2592 = vpop.f32.mrf.mxu0
        %2593 = vmatprep.mubr.f32.mxu0 %v2102
        %2594 = vmatmul.mubr.f32.gmra.mxu0 %v2006
        %v2595 = vpop.f32.mrf.mxu0
        %v2596 = vadd.f32 %v2309, %v2595
        %v2597 = vpop.f32.mrf.mxu0
        %2598 = vmatprep.mubr.f32.mxu0 %v2103
        %2599 = vmatmul.mubr.f32.gmra.mxu0 %v2007
        %v2600 = vpop.f32.mrf.mxu0
        %v2601 = vadd.f32 %v2314, %v2600
        %v2602 = vpop.f32.mrf.mxu0
        %2603 = vmatprep.mubr.f32.mxu0 %v2104
        %2604 = vmatmul.mubr.f32.gmra.mxu0 %v2008
        %v2605 = vpop.f32.mrf.mxu0
        %v2606 = vadd.f32 %v2319, %v2605
        %v2607 = vpop.f32.mrf.mxu0
        %2608 = vmatprep.mubr.f32.mxu0 %v2105
        %2609 = vmatmul.mubr.f32.gmra.mxu0 %v2009
        %v2610 = vpop.f32.mrf.mxu0
        %v2611 = vadd.f32 %v2324, %v2610
        %v2612 = vpop.f32.mrf.mxu0
        %2613 = vmatprep.mubr.f32.mxu0 %v2106
        %2614 = vmatmul.mubr.f32.gmra.mxu0 %v2010
        %v2615 = vpop.f32.mrf.mxu0
        %v2616 = vadd.f32 %v2329, %v2615
        %v2617 = vpop.f32.mrf.mxu0
        %2618 = vmatprep.mubr.f32.mxu0 %v2107
        %2619 = vmatmul.mubr.f32.gmra.mxu0 %v2011
        %v2620 = vpop.f32.mrf.mxu0
        %v2621 = vadd.f32 %v2334, %v2620
        %v2622 = vpop.f32.mrf.mxu0
        %2623 = vmatprep.mubr.f32.mxu0 %v2108
        %2624 = vmatmul.mubr.f32.gmra.mxu0 %v2012
        %v2625 = vpop.f32.mrf.mxu0
        %v2626 = vadd.f32 %v2339, %v2625
        %v2627 = vpop.f32.mrf.mxu0
        %2628 = vmatprep.mubr.f32.mxu0 %v2109
        %2629 = vmatmul.mubr.f32.gmra.mxu0 %v2013
        %v2630 = vpop.f32.mrf.mxu0
        %v2631 = vadd.f32 %v2344, %v2630
        %v2632 = vpop.f32.mrf.mxu0
        %2633 = vmatprep.mubr.f32.mxu0 %v2110
        %2634 = vmatmul.mubr.f32.gmra.mxu0 %v2014
        %v2635 = vpop.f32.mrf.mxu0
        %v2636 = vadd.f32 %v2349, %v2635
        %v2637 = vpop.f32.mrf.mxu0
        %2638 = vmatprep.mubr.f32.mxu0 %v2111
        %2639 = vmatmul.mubr.f32.gmra.mxu0 %v2015
        %v2640 = vpop.f32.mrf.mxu0
        %v2641 = vadd.f32 %v2354, %v2640
        %v2642 = vpop.f32.mrf.mxu0
        %2643 = vmatprep.mubr.f32.mxu0 %v2112
        %2644 = vmatmul.mubr.f32.gmra.mxu0 %v2016
        %v2645 = vpop.f32.mrf.mxu0
        %v2646 = vadd.f32 %v2359, %v2645
        %v2647 = vpop.f32.mrf.mxu0
        %2648 = vmatprep.mubr.f32.mxu0 %v2113
        %2649 = vmatmul.mubr.f32.gmra.mxu0 %v2017
        %v2650 = vpop.f32.mrf.mxu0
        %v2651 = vadd.f32 %v2364, %v2650
        %v2652 = vpop.f32.mrf.mxu0
        %2653 = vmatprep.mubr.f32.mxu0 %v2114
        %2654 = vmatmul.mubr.f32.gmra.mxu0 %v2018
        %v2655 = vpop.f32.mrf.mxu0
        %v2656 = vadd.f32 %v2369, %v2655
        %v2657 = vpop.f32.mrf.mxu0
        %2658 = vmatprep.mubr.f32.mxu0 %v2115
        %2659 = vmatmul.mubr.f32.gmra.mxu0 %v2019
        %v2660 = vpop.f32.mrf.mxu0
        %v2661 = vadd.f32 %v2374, %v2660
        %v2662 = vpop.f32.mrf.mxu0
        %2663 = vmatprep.mubr.f32.mxu0 %v2116
        %2664 = vmatmul.mubr.f32.gmra.mxu0 %v2020
        %v2665 = vpop.f32.mrf.mxu0
        %v2666 = vadd.f32 %v2379, %v2665
        %v2667 = vpop.f32.mrf.mxu0
        %2668 = vmatprep.mubr.f32.mxu0 %v2117
        %2669 = vmatmul.mubr.f32.gmra.mxu0 %v2021
        %v2670 = vpop.f32.mrf.mxu0
        %v2671 = vadd.f32 %v2384, %v2670
        %v2672 = vpop.f32.mrf.mxu0
        %2673 = vmatprep.mubr.f32.mxu0 %v2118
        %2674 = vmatmul.mubr.f32.gmra.mxu0 %v2022
        %v2675 = vpop.f32.mrf.mxu0
        %v2676 = vadd.f32 %v2389, %v2675
        %v2677 = vpop.f32.mrf.mxu0
        %2678 = vmatprep.mubr.f32.mxu0 %v2119
        %2679 = vmatmul.mubr.f32.gmra.mxu0 %v2023
        %v2680 = vpop.f32.mrf.mxu0
        %v2681 = vadd.f32 %v2394, %v2680
        %v2682 = vpop.f32.mrf.mxu0
        %2683 = vmatprep.mubr.f32.mxu0 %v2120
        %2684 = vmatmul.mubr.f32.gmra.mxu0 %v2024
        %v2685 = vpop.f32.mrf.mxu0
        %v2686 = vadd.f32 %v2399, %v2685
        %v2687 = vpop.f32.mrf.mxu0
        %2688 = vmatprep.mubr.f32.mxu0 %v2121
        %2689 = vmatmul.mubr.f32.gmra.mxu0 %v2025
        %v2690 = vpop.f32.mrf.mxu0
        %v2691 = vadd.f32 %v2404, %v2690
        %v2692 = vpop.f32.mrf.mxu0
        %2693 = vmatprep.mubr.f32.mxu0 %v2122
        %2694 = vmatmul.mubr.f32.gmra.mxu0 %v2026
        %v2695 = vpop.f32.mrf.mxu0
        %v2696 = vadd.f32 %v2409, %v2695
        %v2697 = vpop.f32.mrf.mxu0
        %2698 = vmatprep.mubr.f32.mxu0 %v2123
        %2699 = vmatmul.mubr.f32.gmra.mxu0 %v2027
        %v2700 = vpop.f32.mrf.mxu0
        %v2701 = vadd.f32 %v2414, %v2700
        %v2702 = vpop.f32.mrf.mxu0
        %2703 = vmatprep.mubr.f32.mxu0 %v2124
        %2704 = vmatmul.mubr.f32.gmra.mxu0 %v2028
        %v2705 = vpop.f32.mrf.mxu0
        %v2706 = vadd.f32 %v2419, %v2705
        %v2707 = vpop.f32.mrf.mxu0
        %2708 = vmatprep.mubr.f32.mxu0 %v2125
        %2709 = vmatmul.mubr.f32.gmra.mxu0 %v2029
        %v2710 = vpop.f32.mrf.mxu0
        %v2711 = vadd.f32 %v2424, %v2710
        %v2712 = vpop.f32.mrf.mxu0
        %2713 = vmatprep.mubr.f32.mxu0 %v2126
        %2714 = vmatmul.mubr.f32.gmra.mxu0 %v2030
        %v2715 = vpop.f32.mrf.mxu0
        %v2716 = vadd.f32 %v2429, %v2715
        %v2717 = vpop.f32.mrf.mxu0
        %2718 = vmatprep.mubr.f32.mxu0 %v2127
        %2719 = vmatmul.mubr.f32.gmra.mxu0 %v2031
        %v2720 = vpop.f32.mrf.mxu0
        %v2721 = vadd.f32 %v2434, %v2720
        %v2722 = vpop.f32.mrf.mxu0
        %2723 = vmatprep.mubr.f32.mxu0 %v2128
        %2724 = vmatmul.mubr.f32.gmra.mxu0 %v2032
        %v2725 = vpop.f32.mrf.mxu0
        %v2726 = vadd.f32 %v2439, %v2725
        %v2727 = vpop.f32.mrf.mxu0
        %2728 = vmatprep.mubr.f32.mxu0 %v2129
        %2729 = vmatmul.mubr.f32.gmra.mxu0 %v2033
        %v2730 = vpop.f32.mrf.mxu0
        %v2731 = vadd.f32 %v2444, %v2730
        %v2732 = vpop.f32.mrf.mxu0
        %2733 = vmatprep.mubr.f32.mxu0 %v2130
        %2734 = vmatmul.mubr.f32.gmra.mxu0 %v2034
        %v2735 = vpop.f32.mrf.mxu0
        %v2736 = vadd.f32 %v2449, %v2735
        %v2737 = vpop.f32.mrf.mxu0
        %2738 = vmatprep.mubr.f32.mxu0 %v2131
        %2739 = vmatmul.mubr.f32.gmra.mxu0 %v2035
        %v2740 = vpop.f32.mrf.mxu0
        %v2741 = vadd.f32 %v2454, %v2740
        %v2742 = vpop.f32.mrf.mxu0
        %2743 = vmatprep.mubr.f32.mxu0 %v2132
        %2744 = vmatmul.mubr.f32.gmra.mxu0 %v2036
        %v2745 = vpop.f32.mrf.mxu0
        %v2746 = vadd.f32 %v2459, %v2745
        %v2747 = vpop.f32.mrf.mxu0
        %2748 = vdwg.mxu0
        %2749 = vmatprep.subr.mxu0 0.0
        %2750 = vmatpush1.msra.mxu0 0.0
        %2751 = vmatprep.subr.mxu0 0.0
        %2752 = vmatpush1.msra.mxu0 0.0
        %2753 = vmatprep.subr.mxu0 0.0
        %2754 = vmatpush1.msra.mxu0 0.0
        %2755 = vmatprep.subr.mxu0 0.0
        %2756 = vmatpush1.msra.mxu0 0.0
        %2757 = vmatprep.subr.mxu0 0.0
        %2758 = vmatpush1.msra.mxu0 0.0
        %2759 = vmatprep.subr.mxu0 0.0
        %2760 = vmatpush1.msra.mxu0 0.0
        %2761 = vmatprep.subr.mxu0 0.0
        %2762 = vmatpush1.msra.mxu0 0.0
        %2763 = vmatprep.subr.mxu0 0.0
        %2764 = vmatpush1.msra.mxu0 0.0
        %2765 = vmatprep.subr.mxu0 0.0
        %2766 = vmatpush1.msra.mxu0 0.0
        %2767 = vmatprep.subr.mxu0 0.0
        %2768 = vmatpush1.msra.mxu0 0.0
        %2769 = vmatprep.subr.mxu0 0.0
        %2770 = vmatpush1.msra.mxu0 0.0
        %2771 = vmatprep.subr.mxu0 0.0
        %2772 = vmatpush1.msra.mxu0 0.0
        %2773 = vmatprep.subr.mxu0 0.0
        %2774 = vmatpush1.msra.mxu0 %v2168
        %2775 = vmatprep.subr.mxu0 0.0
        %2776 = vmatpush1.msra.mxu0 %v2167
        %2777 = vmatprep.subr.mxu0 0.0
        %2778 = vmatpush1.msra.mxu0 %v2166
        %2779 = vmatprep.subr.mxu0 0.0
        %2780 = vmatpush1.msra.mxu0 %v2165
        %2781 = vmatprep.subr.mxu0 0.0
        %2782 = vmatpush2.msra.mxu0 0.0
        %2783 = vmatprep.subr.mxu0 0.0
        %2784 = vmatpush2.msra.mxu0 0.0
        %2785 = vmatprep.subr.mxu0 0.0
        %2786 = vmatpush2.msra.mxu0 0.0
        %2787 = vmatprep.subr.mxu0 0.0
        %2788 = vmatpush2.msra.mxu0 0.0
        %2789 = vmatprep.subr.mxu0 0.0
        %2790 = vmatpush2.msra.mxu0 0.0
        %2791 = vmatprep.subr.mxu0 0.0
        %2792 = vmatpush2.msra.mxu0 0.0
        %2793 = vmatprep.subr.mxu0 0.0
        %2794 = vmatpush2.msra.mxu0 0.0
        %2795 = vmatprep.subr.mxu0 0.0
        %2796 = vmatpush2.msra.mxu0 0.0
        %2797 = vmatprep.subr.mxu0 0.0
        %2798 = vmatpush2.msra.mxu0 0.0
        %2799 = vmatprep.subr.mxu0 0.0
        %2800 = vmatpush2.msra.mxu0 0.0
        %2801 = vmatprep.subr.mxu0 0.0
        %2802 = vmatpush2.msra.mxu0 0.0
        %2803 = vmatprep.subr.mxu0 0.0
        %2804 = vmatpush2.msra.mxu0 0.0
        %2805 = vmatprep.subr.mxu0 0.0
        %2806 = vmatpush2.msra.mxu0 0.0
        %2807 = vmatprep.subr.mxu0 0.0
        %2808 = vmatpush2.msra.mxu0 0.0
        %2809 = vmatprep.subr.mxu0 0.0
        %2810 = vmatpush2.msra.mxu0 0.0
        %2811 = vmatprep.subr.mxu0 0.0
        %2812 = vmatpush2.msra.mxu0 0.0
        %2813 = vmatprep.mubr.f32.mxu0 0.0
        %2814 = vmatmul.mubr.f32.gmra.mxu0 %v2462
        %v2815 = vpop.f32.mrf.mxu0
        %v2816 = vadd.f32 %v2591, %v2815
        %v2817 = vpop.f32.mrf.mxu0
        %2818 = vmatprep.mubr.f32.mxu0 0.0
        %2819 = vmatmul.mubr.f32.gmra.mxu0 %v2464
        %v2820 = vpop.f32.mrf.mxu0
        %v2821 = vadd.f32 %v2596, %v2820
        %v2822 = vpop.f32.mrf.mxu0
        %2823 = vmatprep.mubr.f32.mxu0 0.0
        %2824 = vmatmul.mubr.f32.gmra.mxu0 %v2466
        %v2825 = vpop.f32.mrf.mxu0
        %v2826 = vadd.f32 %v2601, %v2825
        %v2827 = vpop.f32.mrf.mxu0
        %2828 = vmatprep.mubr.f32.mxu0 0.0
        %2829 = vmatmul.mubr.f32.gmra.mxu0 %v2468
        %v2830 = vpop.f32.mrf.mxu0
        %v2831 = vadd.f32 %v2606, %v2830
        %v2832 = vpop.f32.mrf.mxu0
        %2833 = vmatprep.mubr.f32.mxu0 0.0
        %2834 = vmatmul.mubr.f32.gmra.mxu0 %v2470
        %v2835 = vpop.f32.mrf.mxu0
        %v2836 = vadd.f32 %v2611, %v2835
        %v2837 = vpop.f32.mrf.mxu0
        %2838 = vmatprep.mubr.f32.mxu0 0.0
        %2839 = vmatmul.mubr.f32.gmra.mxu0 %v2472
        %v2840 = vpop.f32.mrf.mxu0
        %v2841 = vadd.f32 %v2616, %v2840
        %v2842 = vpop.f32.mrf.mxu0
        %2843 = vmatprep.mubr.f32.mxu0 0.0
        %2844 = vmatmul.mubr.f32.gmra.mxu0 %v2474
        %v2845 = vpop.f32.mrf.mxu0
        %v2846 = vadd.f32 %v2621, %v2845
        %v2847 = vpop.f32.mrf.mxu0
        %2848 = vmatprep.mubr.f32.mxu0 0.0
        %2849 = vmatmul.mubr.f32.gmra.mxu0 %v2476
        %v2850 = vpop.f32.mrf.mxu0
        %v2851 = vadd.f32 %v2626, %v2850
        %v2852 = vpop.f32.mrf.mxu0
        %2853 = vmatprep.mubr.f32.mxu0 0.0
        %2854 = vmatmul.mubr.f32.gmra.mxu0 %v2478
        %v2855 = vpop.f32.mrf.mxu0
        %v2856 = vadd.f32 %v2631, %v2855
        %v2857 = vpop.f32.mrf.mxu0
        %2858 = vmatprep.mubr.f32.mxu0 0.0
        %2859 = vmatmul.mubr.f32.gmra.mxu0 %v2480
        %v2860 = vpop.f32.mrf.mxu0
        %v2861 = vadd.f32 %v2636, %v2860
        %v2862 = vpop.f32.mrf.mxu0
        %2863 = vmatprep.mubr.f32.mxu0 0.0
        %2864 = vmatmul.mubr.f32.gmra.mxu0 %v2482
        %v2865 = vpop.f32.mrf.mxu0
        %v2866 = vadd.f32 %v2641, %v2865
        %v2867 = vpop.f32.mrf.mxu0
        %2868 = vmatprep.mubr.f32.mxu0 0.0
        %2869 = vmatmul.mubr.f32.gmra.mxu0 %v2484
        %v2870 = vpop.f32.mrf.mxu0
        %v2871 = vadd.f32 %v2646, %v2870
        %v2872 = vpop.f32.mrf.mxu0
        %2873 = vmatprep.mubr.f32.mxu0 0.0
        %2874 = vmatmul.mubr.f32.gmra.mxu0 %v2486
        %v2875 = vpop.f32.mrf.mxu0
        %v2876 = vadd.f32 %v2651, %v2875
        %v2877 = vpop.f32.mrf.mxu0
        %2878 = vmatprep.mubr.f32.mxu0 0.0
        %2879 = vmatmul.mubr.f32.gmra.mxu0 %v2488
        %v2880 = vpop.f32.mrf.mxu0
        %v2881 = vadd.f32 %v2656, %v2880
        %v2882 = vpop.f32.mrf.mxu0
        %2883 = vmatprep.mubr.f32.mxu0 0.0
        %2884 = vmatmul.mubr.f32.gmra.mxu0 %v2490
        %v2885 = vpop.f32.mrf.mxu0
        %v2886 = vadd.f32 %v2661, %v2885
        %v2887 = vpop.f32.mrf.mxu0
        %2888 = vmatprep.mubr.f32.mxu0 0.0
        %2889 = vmatmul.mubr.f32.gmra.mxu0 %v2492
        %v2890 = vpop.f32.mrf.mxu0
        %v2891 = vadd.f32 %v2666, %v2890
        %v2892 = vpop.f32.mrf.mxu0
        %2893 = vmatprep.mubr.f32.mxu0 0.0
        %2894 = vmatmul.mubr.f32.gmra.mxu0 %v2494
        %v2895 = vpop.f32.mrf.mxu0
        %v2896 = vadd.f32 %v2671, %v2895
        %v2897 = vpop.f32.mrf.mxu0
        %2898 = vmatprep.mubr.f32.mxu0 0.0
        %2899 = vmatmul.mubr.f32.gmra.mxu0 %v2496
        %v2900 = vpop.f32.mrf.mxu0
        %v2901 = vadd.f32 %v2676, %v2900
        %v2902 = vpop.f32.mrf.mxu0
        %2903 = vmatprep.mubr.f32.mxu0 0.0
        %2904 = vmatmul.mubr.f32.gmra.mxu0 %v2498
        %v2905 = vpop.f32.mrf.mxu0
        %v2906 = vadd.f32 %v2681, %v2905
        %v2907 = vpop.f32.mrf.mxu0
        %2908 = vmatprep.mubr.f32.mxu0 0.0
        %2909 = vmatmul.mubr.f32.gmra.mxu0 %v2500
        %v2910 = vpop.f32.mrf.mxu0
        %v2911 = vadd.f32 %v2686, %v2910
        %v2912 = vpop.f32.mrf.mxu0
        %2913 = vmatprep.mubr.f32.mxu0 0.0
        %2914 = vmatmul.mubr.f32.gmra.mxu0 %v2502
        %v2915 = vpop.f32.mrf.mxu0
        %v2916 = vadd.f32 %v2691, %v2915
        %v2917 = vpop.f32.mrf.mxu0
        %2918 = vmatprep.mubr.f32.mxu0 0.0
        %2919 = vmatmul.mubr.f32.gmra.mxu0 %v2504
        %v2920 = vpop.f32.mrf.mxu0
        %v2921 = vadd.f32 %v2696, %v2920
        %v2922 = vpop.f32.mrf.mxu0
        %2923 = vmatprep.mubr.f32.mxu0 0.0
        %2924 = vmatmul.mubr.f32.gmra.mxu0 %v2506
        %v2925 = vpop.f32.mrf.mxu0
        %v2926 = vadd.f32 %v2701, %v2925
        %v2927 = vpop.f32.mrf.mxu0
        %2928 = vmatprep.mubr.f32.mxu0 0.0
        %2929 = vmatmul.mubr.f32.gmra.mxu0 %v2508
        %v2930 = vpop.f32.mrf.mxu0
        %v2931 = vadd.f32 %v2706, %v2930
        %v2932 = vpop.f32.mrf.mxu0
        %2933 = vmatprep.mubr.f32.mxu0 0.0
        %2934 = vmatmul.mubr.f32.gmra.mxu0 %v2510
        %v2935 = vpop.f32.mrf.mxu0
        %v2936 = vadd.f32 %v2711, %v2935
        %v2937 = vpop.f32.mrf.mxu0
        %2938 = vmatprep.mubr.f32.mxu0 0.0
        %2939 = vmatmul.mubr.f32.gmra.mxu0 %v2512
        %v2940 = vpop.f32.mrf.mxu0
        %v2941 = vadd.f32 %v2716, %v2940
        %v2942 = vpop.f32.mrf.mxu0
        %2943 = vmatprep.mubr.f32.mxu0 0.0
        %2944 = vmatmul.mubr.f32.gmra.mxu0 %v2514
        %v2945 = vpop.f32.mrf.mxu0
        %v2946 = vadd.f32 %v2721, %v2945
        %v2947 = vpop.f32.mrf.mxu0
        %2948 = vmatprep.mubr.f32.mxu0 0.0
        %2949 = vmatmul.mubr.f32.gmra.mxu0 %v2516
        %v2950 = vpop.f32.mrf.mxu0
        %v2951 = vadd.f32 %v2726, %v2950
        %v2952 = vpop.f32.mrf.mxu0
        %2953 = vmatprep.mubr.f32.mxu0 0.0
        %2954 = vmatmul.mubr.f32.gmra.mxu0 %v2518
        %v2955 = vpop.f32.mrf.mxu0
        %v2956 = vadd.f32 %v2731, %v2955
        %v2957 = vpop.f32.mrf.mxu0
        %2958 = vmatprep.mubr.f32.mxu0 0.0
        %2959 = vmatmul.mubr.f32.gmra.mxu0 %v2520
        %v2960 = vpop.f32.mrf.mxu0
        %v2961 = vadd.f32 %v2736, %v2960
        %v2962 = vpop.f32.mrf.mxu0
        %2963 = vmatprep.mubr.f32.mxu0 0.0
        %2964 = vmatmul.mubr.f32.gmra.mxu0 %v2522
        %v2965 = vpop.f32.mrf.mxu0
        %v2966 = vadd.f32 %v2741, %v2965
        %v2967 = vpop.f32.mrf.mxu0
        %2968 = vmatprep.mubr.f32.mxu0 0.0
        %2969 = vmatmul.mubr.f32.gmra.mxu0 %v2522
        %v2970 = vpop.f32.mrf.mxu0
        %v2971 = vadd.f32 %v2746, %v2970
        %v2972 = vpop.f32.mrf.mxu0
        %2973 = vdwg.mxu0
        %v2974 = vld [vmem:[%s9] sm:$0x1]
        %v2976 = vlaneseq
        %v2977 = vshrl.u32 %v2976, 7
        %v2978 = vsub.s32 0, %v2977
        %v2979 = vrot.slane %v2974, %v2978
        %v2981 = vadd.f32 %v2816, %v2979
        %v2982 = vadd.f32 %v2821, %v2979
        %v2983 = vadd.f32 %v2826, %v2979
        %v2984 = vadd.f32 %v2831, %v2979
        %v2985 = vadd.f32 %v2836, %v2979
        %v2986 = vadd.f32 %v2841, %v2979
        %v2987 = vadd.f32 %v2846, %v2979
        %v2988 = vadd.f32 %v2851, %v2979
        %v2989 = vadd.f32 %v2856, %v2979
        %v2990 = vadd.f32 %v2861, %v2979
        %v2991 = vadd.f32 %v2866, %v2979
        %v2992 = vadd.f32 %v2871, %v2979
        %v2993 = vadd.f32 %v2876, %v2979
        %v2994 = vadd.f32 %v2881, %v2979
        %v2995 = vadd.f32 %v2886, %v2979
        %v2996 = vadd.f32 %v2891, %v2979
        %v2997 = vadd.f32 %v2896, %v2979
        %v2998 = vadd.f32 %v2901, %v2979
        %v2999 = vadd.f32 %v2906, %v2979
        %v3000 = vadd.f32 %v2911, %v2979
        %v3001 = vadd.f32 %v2916, %v2979
        %v3002 = vadd.f32 %v2921, %v2979
        %v3003 = vadd.f32 %v2926, %v2979
        %v3004 = vadd.f32 %v2931, %v2979
        %v3005 = vadd.f32 %v2936, %v2979
        %v3006 = vadd.f32 %v2941, %v2979
        %v3007 = vadd.f32 %v2946, %v2979
        %v3008 = vadd.f32 %v2951, %v2979
        %v3009 = vadd.f32 %v2956, %v2979
        %v3010 = vadd.f32 %v2961, %v2979
        %v3011 = vadd.f32 %v2966, %v2979
        %v3012 = vadd.f32 %v2971, %v2979
        %v3013 = vld [vmem:[%s11] sm:$0x1]
        %v3015 = vlaneseq
        %v3016 = vshrl.u32 %v3015, 7
        %v3017 = vsub.s32 0, %v3016
        %v3018 = vrot.slane %v3013, %v3017
        %v3020 = vadd.f32 %v2981, %v3018
        %v3021 = vadd.f32 %v2982, %v3018
        %v3022 = vadd.f32 %v2983, %v3018
        %v3023 = vadd.f32 %v2984, %v3018
        %v3024 = vadd.f32 %v2985, %v3018
        %v3025 = vadd.f32 %v2986, %v3018
        %v3026 = vadd.f32 %v2987, %v3018
        %v3027 = vadd.f32 %v2988, %v3018
        %v3028 = vadd.f32 %v2989, %v3018
        %v3029 = vadd.f32 %v2990, %v3018
        %v3030 = vadd.f32 %v2991, %v3018
        %v3031 = vadd.f32 %v2992, %v3018
        %v3032 = vadd.f32 %v2993, %v3018
        %v3033 = vadd.f32 %v2994, %v3018
        %v3034 = vadd.f32 %v2995, %v3018
        %v3035 = vadd.f32 %v2996, %v3018
        %v3036 = vadd.f32 %v2997, %v3018
        %v3037 = vadd.f32 %v2998, %v3018
        %v3038 = vadd.f32 %v2999, %v3018
        %v3039 = vadd.f32 %v3000, %v3018
        %v3040 = vadd.f32 %v3001, %v3018
        %v3041 = vadd.f32 %v3002, %v3018
        %v3042 = vadd.f32 %v3003, %v3018
        %v3043 = vadd.f32 %v3004, %v3018
        %v3044 = vadd.f32 %v3005, %v3018
        %v3045 = vadd.f32 %v3006, %v3018
        %v3046 = vadd.f32 %v3007, %v3018
        %v3047 = vadd.f32 %v3008, %v3018
        %v3048 = vadd.f32 %v3009, %v3018
        %v3049 = vadd.f32 %v3010, %v3018
        %v3050 = vadd.f32 %v3011, %v3018
        %v3051 = vadd.f32 %v3012, %v3018
        %v3052 = vmax.f32 %v3020, 0.0
        %v3053 = vmax.f32 %v3021, 0.0
        %v3054 = vmax.f32 %v3022, 0.0
        %v3055 = vmax.f32 %v3023, 0.0
        %v3056 = vmax.f32 %v3024, 0.0
        %v3057 = vmax.f32 %v3025, 0.0
        %v3058 = vmax.f32 %v3026, 0.0
        %v3059 = vmax.f32 %v3027, 0.0
        %v3060 = vmax.f32 %v3028, 0.0
        %v3061 = vmax.f32 %v3029, 0.0
        %v3062 = vmax.f32 %v3030, 0.0
        %v3063 = vmax.f32 %v3031, 0.0
        %v3064 = vmax.f32 %v3032, 0.0
        %v3065 = vmax.f32 %v3033, 0.0
        %v3066 = vmax.f32 %v3034, 0.0
        %v3067 = vmax.f32 %v3035, 0.0
        %v3068 = vmax.f32 %v3036, 0.0
        %v3069 = vmax.f32 %v3037, 0.0
        %v3070 = vmax.f32 %v3038, 0.0
        %v3071 = vmax.f32 %v3039, 0.0
        %v3072 = vmax.f32 %v3040, 0.0
        %v3073 = vmax.f32 %v3041, 0.0
        %v3074 = vmax.f32 %v3042, 0.0
        %v3075 = vmax.f32 %v3043, 0.0
        %v3076 = vmax.f32 %v3044, 0.0
        %v3077 = vmax.f32 %v3045, 0.0
        %v3078 = vmax.f32 %v3046, 0.0
        %v3079 = vmax.f32 %v3047, 0.0
        %v3080 = vmax.f32 %v3048, 0.0
        %v3081 = vmax.f32 %v3049, 0.0
        %v3082 = vmax.f32 %v3050, 0.0
        %v3083 = vmax.f32 %v3051, 0.0
        %3084 = vmatprep.subr.mxu0 0.0
        %3085 = vmatpush1.msra.mxu0 %v3067
        %3086 = vmatprep.subr.mxu0 0.0
        %3087 = vmatpush1.msra.mxu0 %v3066
        %3088 = vmatprep.subr.mxu0 0.0
        %3089 = vmatpush1.msra.mxu0 %v3065
        %3090 = vmatprep.subr.mxu0 0.0
        %3091 = vmatpush1.msra.mxu0 %v3064
        %3092 = vmatprep.subr.mxu0 0.0
        %3093 = vmatpush1.msra.mxu0 %v3063
        %3094 = vmatprep.subr.mxu0 0.0
        %3095 = vmatpush1.msra.mxu0 %v3062
        %3096 = vmatprep.subr.mxu0 0.0
        %3097 = vmatpush1.msra.mxu0 %v3061
        %3098 = vmatprep.subr.mxu0 0.0
        %3099 = vmatpush1.msra.mxu0 %v3060
        %3100 = vmatprep.subr.mxu0 0.0
        %3101 = vmatpush1.msra.mxu0 %v3059
        %3102 = vmatprep.subr.mxu0 0.0
        %3103 = vmatpush1.msra.mxu0 %v3058
        %3104 = vmatprep.subr.mxu0 0.0
        %3105 = vmatpush1.msra.mxu0 %v3057
        %3106 = vmatprep.subr.mxu0 0.0
        %3107 = vmatpush1.msra.mxu0 %v3056
        %3108 = vmatprep.subr.mxu0 0.0
        %3109 = vmatpush1.msra.mxu0 %v3055
        %3110 = vmatprep.subr.mxu0 0.0
        %3111 = vmatpush1.msra.mxu0 %v3054
        %3112 = vmatprep.subr.mxu0 0.0
        %3113 = vmatpush1.msra.mxu0 %v3053
        %3114 = vmatprep.subr.mxu0 0.0
        %3115 = vmatpush1.msra.mxu0 %v3052
        %3116 = vmatprep.subr.mxu0 0.0
        %3117 = vmatpush2.msra.mxu0 %v3083
        %3118 = vmatprep.subr.mxu0 0.0
        %3119 = vmatpush2.msra.mxu0 %v3082
        %3120 = vmatprep.subr.mxu0 0.0
        %3121 = vmatpush2.msra.mxu0 %v3081
        %3122 = vmatprep.subr.mxu0 0.0
        %3123 = vmatpush2.msra.mxu0 %v3080
        %3124 = vmatprep.subr.mxu0 0.0
        %3125 = vmatpush2.msra.mxu0 %v3079
        %3126 = vmatprep.subr.mxu0 0.0
        %3127 = vmatpush2.msra.mxu0 %v3078
        %3128 = vmatprep.subr.mxu0 0.0
        %3129 = vmatpush2.msra.mxu0 %v3077
        %3130 = vmatprep.subr.mxu0 0.0
        %3131 = vmatpush2.msra.mxu0 %v3076
        %3132 = vmatprep.subr.mxu0 0.0
        %3133 = vmatpush2.msra.mxu0 %v3075
        %3134 = vmatprep.subr.mxu0 0.0
        %3135 = vmatpush2.msra.mxu0 %v3074
        %3136 = vmatprep.subr.mxu0 0.0
        %3137 = vmatpush2.msra.mxu0 %v3073
        %3138 = vmatprep.subr.mxu0 0.0
        %3139 = vmatpush2.msra.mxu0 %v3072
        %3140 = vmatprep.subr.mxu0 0.0
        %3141 = vmatpush2.msra.mxu0 %v3071
        %3142 = vmatprep.subr.mxu0 0.0
        %3143 = vmatpush2.msra.mxu0 %v3070
        %3144 = vmatprep.subr.mxu0 0.0
        %3145 = vmatpush2.msra.mxu0 %v3069
        %3146 = vmatprep.subr.mxu0 0.0
        %3147 = vmatpush2.msra.mxu0 %v3068
        %3148 = vmatprep.mubr.f32.mxu0 %v853
        %3149 = vmatmul.mubr.f32.gmra.mxu0 %v852
        %v3150 = vpop.f32.mrf.mxu0
        %v3151 = vadd.f32 0.0, %v3150
        %v3152 = vpop.f32.mrf.mxu0
        %3153 = vdwg.mxu0
        %v3154 = vld [vmem:[%s12] sm:$0xff]
        %v3155 = vld [vmem:[%s12 + $0x8] sm:$0xff]
        %v3156 = vld [vmem:[%s12 + $0x10] sm:$0xff]
        %v3157 = vld [vmem:[%s12 + $0x18] sm:$0xff]
        %v3159 = vsel %vm1940, %v3151, 0
        %3161 = vmatprep.subr.mxu0 0.0
        %3162 = vmatpush1.msra.mxu0 0.0
        %3163 = vmatprep.subr.mxu0 0.0
        %3164 = vmatpush1.msra.mxu0 0.0
        %3165 = vmatprep.subr.mxu0 0.0
        %3166 = vmatpush1.msra.mxu0 0.0
        %3167 = vmatprep.subr.mxu0 0.0
        %3168 = vmatpush1.msra.mxu0 0.0
        %3169 = vmatprep.subr.mxu0 0.0
        %3170 = vmatpush1.msra.mxu0 0.0
        %3171 = vmatprep.subr.mxu0 0.0
        %3172 = vmatpush1.msra.mxu0 0.0
        %3173 = vmatprep.subr.mxu0 0.0
        %3174 = vmatpush1.msra.mxu0 0.0
        %3175 = vmatprep.subr.mxu0 0.0
        %3176 = vmatpush1.msra.mxu0 0.0
        %3177 = vmatprep.subr.mxu0 0.0
        %3178 = vmatpush1.msra.mxu0 0.0
        %3179 = vmatprep.subr.mxu0 0.0
        %3180 = vmatpush1.msra.mxu0 0.0
        %3181 = vmatprep.subr.mxu0 0.0
        %3182 = vmatpush1.msra.mxu0 0.0
        %3183 = vmatprep.subr.mxu0 0.0
        %3184 = vmatpush1.msra.mxu0 0.0
        %3185 = vmatprep.subr.mxu0 0.0
        %3186 = vmatpush1.msra.mxu0 %v3157
        %3187 = vmatprep.subr.mxu0 0.0
        %3188 = vmatpush1.msra.mxu0 %v3156
        %3189 = vmatprep.subr.mxu0 0.0
        %3190 = vmatpush1.msra.mxu0 %v3155
        %3191 = vmatprep.subr.mxu0 0.0
        %3192 = vmatpush1.msra.mxu0 %v3154
        %3193 = vmatprep.subr.mxu0 0.0
        %3194 = vmatpush2.msra.mxu0 0.0
        %3195 = vmatprep.subr.mxu0 0.0
        %3196 = vmatpush2.msra.mxu0 0.0
        %3197 = vmatprep.subr.mxu0 0.0
        %3198 = vmatpush2.msra.mxu0 0.0
        %3199 = vmatprep.subr.mxu0 0.0
        %3200 = vmatpush2.msra.mxu0 0.0
        %3201 = vmatprep.subr.mxu0 0.0
        %3202 = vmatpush2.msra.mxu0 0.0
        %3203 = vmatprep.subr.mxu0 0.0
        %3204 = vmatpush2.msra.mxu0 0.0
        %3205 = vmatprep.subr.mxu0 0.0
        %3206 = vmatpush2.msra.mxu0 0.0
        %3207 = vmatprep.subr.mxu0 0.0
        %3208 = vmatpush2.msra.mxu0 0.0
        %3209 = vmatprep.subr.mxu0 0.0
        %3210 = vmatpush2.msra.mxu0 0.0
        %3211 = vmatprep.subr.mxu0 0.0
        %3212 = vmatpush2.msra.mxu0 0.0
        %3213 = vmatprep.subr.mxu0 0.0
        %3214 = vmatpush2.msra.mxu0 0.0
        %3215 = vmatprep.subr.mxu0 0.0
        %3216 = vmatpush2.msra.mxu0 0.0
        %3217 = vmatprep.subr.mxu0 0.0
        %3218 = vmatpush2.msra.mxu0 0.0
        %3219 = vmatprep.subr.mxu0 0.0
        %3220 = vmatpush2.msra.mxu0 0.0
        %3221 = vmatprep.subr.mxu0 0.0
        %3222 = vmatpush2.msra.mxu0 0.0
        %3223 = vmatprep.subr.mxu0 0.0
        %3224 = vmatpush2.msra.mxu0 0.0
        %3225 = vmatprep.mubr.f32.mxu0 0.0
        %3226 = vmatmul.mubr.f32.gmra.mxu0 %v3159
        %v3227 = vpop.f32.mrf.mxu0
        %v3228 = vadd.f32 0.0, %v3227
        %v3229 = vpop.f32.mrf.mxu0
        %3230 = vdwg.mxu0
        %v3231 = vadd.f32 %v852, %v853
        %3232 = vadd.xlane.f32.xlu0 %v3231
        %v3233 = vpop.xlane.xlu0 %3232
        %vm3234 = vcmp.eq.f32.partialorder %v3233, 0.0
        %v3235 = vsel %vm3234, 1.0, %v3233
        %v3236 = vrcp.pop %v3235
        %v3237 = vmul.f32 %v3228, %v3236
        %v3238 = vld [vmem:[%s4] sm:$0xff]
        %v3239 = vld [vmem:[%s4 + $0x8] sm:$0xff]
        %v3240 = vld [vmem:[%s4 + $0x10] sm:$0xff]
        %v3241 = vld [vmem:[%s4 + $0x18] sm:$0xff]
        %v3242 = vld [vmem:[%s5] sm:$0x1]
        %v3244 = vsel %vm1940, %v3237, 0
        %3246 = vmatprep.subr.mxu0 0.0
        %3247 = vmatpush1.msra.mxu0 0.0
        %3248 = vmatprep.subr.mxu0 0.0
        %3249 = vmatpush1.msra.mxu0 0.0
        %3250 = vmatprep.subr.mxu0 0.0
        %3251 = vmatpush1.msra.mxu0 0.0
        %3252 = vmatprep.subr.mxu0 0.0
        %3253 = vmatpush1.msra.mxu0 0.0
        %3254 = vmatprep.subr.mxu0 0.0
        %3255 = vmatpush1.msra.mxu0 0.0
        %3256 = vmatprep.subr.mxu0 0.0
        %3257 = vmatpush1.msra.mxu0 0.0
        %3258 = vmatprep.subr.mxu0 0.0
        %3259 = vmatpush1.msra.mxu0 0.0
        %3260 = vmatprep.subr.mxu0 0.0
        %3261 = vmatpush1.msra.mxu0 0.0
        %3262 = vmatprep.subr.mxu0 0.0
        %3263 = vmatpush1.msra.mxu0 0.0
        %3264 = vmatprep.subr.mxu0 0.0
        %3265 = vmatpush1.msra.mxu0 0.0
        %3266 = vmatprep.subr.mxu0 0.0
        %3267 = vmatpush1.msra.mxu0 0.0
        %3268 = vmatprep.subr.mxu0 0.0
        %3269 = vmatpush1.msra.mxu0 0.0
        %3270 = vmatprep.subr.mxu0 0.0
        %3271 = vmatpush1.msra.mxu0 %v3241
        %3272 = vmatprep.subr.mxu0 0.0
        %3273 = vmatpush1.msra.mxu0 %v3240
        %3274 = vmatprep.subr.mxu0 0.0
        %3275 = vmatpush1.msra.mxu0 %v3239
        %3276 = vmatprep.subr.mxu0 0.0
        %3277 = vmatpush1.msra.mxu0 %v3238
        %3278 = vmatprep.subr.mxu0 0.0
        %3279 = vmatpush2.msra.mxu0 0.0
        %3280 = vmatprep.subr.mxu0 0.0
        %3281 = vmatpush2.msra.mxu0 0.0
        %3282 = vmatprep.subr.mxu0 0.0
        %3283 = vmatpush2.msra.mxu0 0.0
        %3284 = vmatprep.subr.mxu0 0.0
        %3285 = vmatpush2.msra.mxu0 0.0
        %3286 = vmatprep.subr.mxu0 0.0
        %3287 = vmatpush2.msra.mxu0 0.0
        %3288 = vmatprep.subr.mxu0 0.0
        %3289 = vmatpush2.msra.mxu0 0.0
        %3290 = vmatprep.subr.mxu0 0.0
        %3291 = vmatpush2.msra.mxu0 0.0
        %3292 = vmatprep.subr.mxu0 0.0
        %3293 = vmatpush2.msra.mxu0 0.0
        %3294 = vmatprep.subr.mxu0 0.0
        %3295 = vmatpush2.msra.mxu0 0.0
        %3296 = vmatprep.subr.mxu0 0.0
        %3297 = vmatpush2.msra.mxu0 0.0
        %3298 = vmatprep.subr.mxu0 0.0
        %3299 = vmatpush2.msra.mxu0 0.0
        %3300 = vmatprep.subr.mxu0 0.0
        %3301 = vmatpush2.msra.mxu0 0.0
        %3302 = vmatprep.subr.mxu0 0.0
        %3303 = vmatpush2.msra.mxu0 0.0
        %3304 = vmatprep.subr.mxu0 0.0
        %3305 = vmatpush2.msra.mxu0 0.0
        %3306 = vmatprep.subr.mxu0 0.0
        %3307 = vmatpush2.msra.mxu0 0.0
        %3308 = vmatprep.subr.mxu0 0.0
        %3309 = vmatpush2.msra.mxu0 0.0
        %3310 = vmatprep.mubr.f32.mxu0 0.0
        %3311 = vmatmul.mubr.f32.gmra.mxu0 %v3244
        %v3312 = vpop.f32.mrf.mxu0
        %v3313 = vadd.f32 0.0, %v3312
        %v3314 = vpop.f32.mrf.mxu0
        %3315 = vdwg.mxu0
        %3317 = vrot.lane.b32.xlu0 %v3313, 96
        %v3318 = vpop.permute.xlu0 %3317
        %3320 = vrot.lane.b32.xlu0 %v3313, 64
        %v3321 = vpop.permute.xlu0 %3320
        %v3324 = vlaneseq
        %v3325 = vshrl.u32 %v3324, 7
        %v3326 = vsub.s32 0, %v3325
        %v3327 = vrot.slane %v3242, %v3326
        %vm3329 = vcmask 195584
        %v3331 = vsel %vm3329, %v854, 0
        %3333 = vmatprep.subr.mxu0 0.0
        %3334 = vmatpush1.msra.mxu0 0.0
        %3335 = vmatprep.subr.mxu0 0.0
        %3336 = vmatpush1.msra.mxu0 0.0
        %3337 = vmatprep.subr.mxu0 0.0
        %3338 = vmatpush1.msra.mxu0 0.0
        %3339 = vmatprep.subr.mxu0 0.0
        %3340 = vmatpush1.msra.mxu0 0.0
        %3341 = vmatprep.subr.mxu0 0.0
        %3342 = vmatpush1.msra.mxu0 0.0
        %3343 = vmatprep.subr.mxu0 0.0
        %3344 = vmatpush1.msra.mxu0 0.0
        %3345 = vmatprep.subr.mxu0 0.0
        %3346 = vmatpush1.msra.mxu0 0.0
        %3347 = vmatprep.subr.mxu0 0.0
        %3348 = vmatpush1.msra.mxu0 0.0
        %3349 = vmatprep.subr.mxu0 0.0
        %3350 = vmatpush1.msra.mxu0 0.0
        %3351 = vmatprep.subr.mxu0 0.0
        %3352 = vmatpush1.msra.mxu0 0.0
        %3353 = vmatprep.subr.mxu0 0.0
        %3354 = vmatpush1.msra.mxu0 0.0
        %3355 = vmatprep.subr.mxu0 0.0
        %3356 = vmatpush1.msra.mxu0 0.0
        %3357 = vmatprep.subr.mxu0 0.0
        %3358 = vmatpush1.msra.mxu0 0.0
        %3359 = vmatprep.subr.mxu0 0.0
        %3360 = vmatpush1.msra.mxu0 %v3321
        %3361 = vmatprep.subr.mxu0 0.0
        %3362 = vmatpush1.msra.mxu0 %v3318
        %3363 = vmatprep.subr.mxu0 0.0
        %3364 = vmatpush1.msra.mxu0 %v3313
        %3365 = vmatprep.subr.mxu0 0.0
        %3366 = vmatpush2.msra.mxu0 0.0
        %3367 = vmatprep.subr.mxu0 0.0
        %3368 = vmatpush2.msra.mxu0 0.0
        %3369 = vmatprep.subr.mxu0 0.0
        %3370 = vmatpush2.msra.mxu0 0.0
        %3371 = vmatprep.subr.mxu0 0.0
        %3372 = vmatpush2.msra.mxu0 0.0
        %3373 = vmatprep.subr.mxu0 0.0
        %3374 = vmatpush2.msra.mxu0 0.0
        %3375 = vmatprep.subr.mxu0 0.0
        %3376 = vmatpush2.msra.mxu0 0.0
        %3377 = vmatprep.subr.mxu0 0.0
        %3378 = vmatpush2.msra.mxu0 0.0
        %3379 = vmatprep.subr.mxu0 0.0
        %3380 = vmatpush2.msra.mxu0 0.0
        %3381 = vmatprep.subr.mxu0 0.0
        %3382 = vmatpush2.msra.mxu0 0.0
        %3383 = vmatprep.subr.mxu0 0.0
        %3384 = vmatpush2.msra.mxu0 0.0
        %3385 = vmatprep.subr.mxu0 0.0
        %3386 = vmatpush2.msra.mxu0 0.0
        %3387 = vmatprep.subr.mxu0 0.0
        %3388 = vmatpush2.msra.mxu0 0.0
        %3389 = vmatprep.subr.mxu0 0.0
        %3390 = vmatpush2.msra.mxu0 0.0
        %3391 = vmatprep.subr.mxu0 0.0
        %3392 = vmatpush2.msra.mxu0 0.0
        %3393 = vmatprep.subr.mxu0 0.0
        %3394 = vmatpush2.msra.mxu0 0.0
        %3395 = vmatprep.subr.mxu0 0.0
        %3396 = vmatpush2.msra.mxu0 0.0
        %3397 = vmatprep.mubr.f32.mxu0 0.0
        %3398 = vmatmul.mubr.f32.gmra.mxu0 %v3331
        %v3399 = vpop.f32.mrf.mxu0
        %v3400 = vadd.f32 %v3327, %v3399
        %v3401 = vpop.f32.mrf.mxu0
        %3402 = vdwg.mxu0
        %v3403 = vmax.f32 %v3400, 0.0
        %v3404 = vld [vmem:[%s6] sm:$0xff]
        %v3405 = vld [vmem:[%s6 + $0x8] sm:$0xff]
        %v3406 = vld [vmem:[%s6 + $0x10] sm:$0xff]
        %v3407 = vld [vmem:[%s6 + $0x18] sm:$0xff]
        %v3408 = vld [vmem:[%s7] sm:$0x1]
        %v3410 = vsel %vm1940, %v3403, 0
        %3412 = vmatprep.subr.mxu0 0.0
        %3413 = vmatpush1.msra.mxu0 0.0
        %3414 = vmatprep.subr.mxu0 0.0
        %3415 = vmatpush1.msra.mxu0 0.0
        %3416 = vmatprep.subr.mxu0 0.0
        %3417 = vmatpush1.msra.mxu0 0.0
        %3418 = vmatprep.subr.mxu0 0.0
        %3419 = vmatpush1.msra.mxu0 0.0
        %3420 = vmatprep.subr.mxu0 0.0
        %3421 = vmatpush1.msra.mxu0 0.0
        %3422 = vmatprep.subr.mxu0 0.0
        %3423 = vmatpush1.msra.mxu0 0.0
        %3424 = vmatprep.subr.mxu0 0.0
        %3425 = vmatpush1.msra.mxu0 0.0
        %3426 = vmatprep.subr.mxu0 0.0
        %3427 = vmatpush1.msra.mxu0 0.0
        %3428 = vmatprep.subr.mxu0 0.0
        %3429 = vmatpush1.msra.mxu0 0.0
        %3430 = vmatprep.subr.mxu0 0.0
        %3431 = vmatpush1.msra.mxu0 0.0
        %3432 = vmatprep.subr.mxu0 0.0
        %3433 = vmatpush1.msra.mxu0 0.0
        %3434 = vmatprep.subr.mxu0 0.0
        %3435 = vmatpush1.msra.mxu0 0.0
        %3436 = vmatprep.subr.mxu0 0.0
        %3437 = vmatpush1.msra.mxu0 %v3407
        %3438 = vmatprep.subr.mxu0 0.0
        %3439 = vmatpush1.msra.mxu0 %v3406
        %3440 = vmatprep.subr.mxu0 0.0
        %3441 = vmatpush1.msra.mxu0 %v3405
        %3442 = vmatprep.subr.mxu0 0.0
        %3443 = vmatpush1.msra.mxu0 %v3404
        %3444 = vmatprep.subr.mxu0 0.0
        %3445 = vmatpush2.msra.mxu0 0.0
        %3446 = vmatprep.subr.mxu0 0.0
        %3447 = vmatpush2.msra.mxu0 0.0
        %3448 = vmatprep.subr.mxu0 0.0
        %3449 = vmatpush2.msra.mxu0 0.0
        %3450 = vmatprep.subr.mxu0 0.0
        %3451 = vmatpush2.msra.mxu0 0.0
        %3452 = vmatprep.subr.mxu0 0.0
        %3453 = vmatpush2.msra.mxu0 0.0
        %3454 = vmatprep.subr.mxu0 0.0
        %3455 = vmatpush2.msra.mxu0 0.0
        %3456 = vmatprep.subr.mxu0 0.0
        %3457 = vmatpush2.msra.mxu0 0.0
        %3458 = vmatprep.subr.mxu0 0.0
        %3459 = vmatpush2.msra.mxu0 0.0
        %3460 = vmatprep.subr.mxu0 0.0
        %3461 = vmatpush2.msra.mxu0 0.0
        %3462 = vmatprep.subr.mxu0 0.0
        %3463 = vmatpush2.msra.mxu0 0.0
        %3464 = vmatprep.subr.mxu0 0.0
        %3465 = vmatpush2.msra.mxu0 0.0
        %3466 = vmatprep.subr.mxu0 0.0
        %3467 = vmatpush2.msra.mxu0 0.0
        %3468 = vmatprep.subr.mxu0 0.0
        %3469 = vmatpush2.msra.mxu0 0.0
        %3470 = vmatprep.subr.mxu0 0.0
        %3471 = vmatpush2.msra.mxu0 0.0
        %3472 = vmatprep.subr.mxu0 0.0
        %3473 = vmatpush2.msra.mxu0 0.0
        %3474 = vmatprep.subr.mxu0 0.0
        %3475 = vmatpush2.msra.mxu0 0.0
        %3476 = vmatprep.mubr.f32.mxu0 0.0
        %3477 = vmatmul.mubr.f32.gmra.mxu0 %v3410
        %v3478 = vpop.f32.mrf.mxu0
        %v3479 = vadd.f32 0.0, %v3478
        %v3480 = vpop.f32.mrf.mxu0
        %3481 = vdwg.mxu0
        %3483 = vrot.lane.b32.xlu0 %v3479, 96
        %v3484 = vpop.permute.xlu0 %3483
        %3486 = vrot.lane.b32.xlu0 %v3479, 64
        %v3487 = vpop.permute.xlu0 %3486
        %v3490 = vlaneseq
        %v3491 = vshrl.u32 %v3490, 7
        %v3492 = vsub.s32 0, %v3491
        %v3493 = vrot.slane %v3408, %v3492
        %3495 = vmatprep.subr.mxu0 0.0
        %3496 = vmatpush1.msra.mxu0 0.0
        %3497 = vmatprep.subr.mxu0 0.0
        %3498 = vmatpush1.msra.mxu0 0.0
        %3499 = vmatprep.subr.mxu0 0.0
        %3500 = vmatpush1.msra.mxu0 0.0
        %3501 = vmatprep.subr.mxu0 0.0
        %3502 = vmatpush1.msra.mxu0 0.0
        %3503 = vmatprep.subr.mxu0 0.0
        %3504 = vmatpush1.msra.mxu0 0.0
        %3505 = vmatprep.subr.mxu0 0.0
        %3506 = vmatpush1.msra.mxu0 0.0
        %3507 = vmatprep.subr.mxu0 0.0
        %3508 = vmatpush1.msra.mxu0 0.0
        %3509 = vmatprep.subr.mxu0 0.0
        %3510 = vmatpush1.msra.mxu0 0.0
        %3511 = vmatprep.subr.mxu0 0.0
        %3512 = vmatpush1.msra.mxu0 0.0
        %3513 = vmatprep.subr.mxu0 0.0
        %3514 = vmatpush1.msra.mxu0 0.0
        %3515 = vmatprep.subr.mxu0 0.0
        %3516 = vmatpush1.msra.mxu0 0.0
        %3517 = vmatprep.subr.mxu0 0.0
        %3518 = vmatpush1.msra.mxu0 0.0
        %3519 = vmatprep.subr.mxu0 0.0
        %3520 = vmatpush1.msra.mxu0 0.0
        %3521 = vmatprep.subr.mxu0 0.0
        %3522 = vmatpush1.msra.mxu0 %v3487
        %3523 = vmatprep.subr.mxu0 0.0
        %3524 = vmatpush1.msra.mxu0 %v3484
        %3525 = vmatprep.subr.mxu0 0.0
        %3526 = vmatpush1.msra.mxu0 %v3479
        %3527 = vmatprep.subr.mxu0 0.0
        %3528 = vmatpush2.msra.mxu0 0.0
        %3529 = vmatprep.subr.mxu0 0.0
        %3530 = vmatpush2.msra.mxu0 0.0
        %3531 = vmatprep.subr.mxu0 0.0
        %3532 = vmatpush2.msra.mxu0 0.0
        %3533 = vmatprep.subr.mxu0 0.0
        %3534 = vmatpush2.msra.mxu0 0.0
        %3535 = vmatprep.subr.mxu0 0.0
        %3536 = vmatpush2.msra.mxu0 0.0
        %3537 = vmatprep.subr.mxu0 0.0
        %3538 = vmatpush2.msra.mxu0 0.0
        %3539 = vmatprep.subr.mxu0 0.0
        %3540 = vmatpush2.msra.mxu0 0.0
        %3541 = vmatprep.subr.mxu0 0.0
        %3542 = vmatpush2.msra.mxu0 0.0
        %3543 = vmatprep.subr.mxu0 0.0
        %3544 = vmatpush2.msra.mxu0 0.0
        %3545 = vmatprep.subr.mxu0 0.0
        %3546 = vmatpush2.msra.mxu0 0.0
        %3547 = vmatprep.subr.mxu0 0.0
        %3548 = vmatpush2.msra.mxu0 0.0
        %3549 = vmatprep.subr.mxu0 0.0
        %3550 = vmatpush2.msra.mxu0 0.0
        %3551 = vmatprep.subr.mxu0 0.0
        %3552 = vmatpush2.msra.mxu0 0.0
        %3553 = vmatprep.subr.mxu0 0.0
        %3554 = vmatpush2.msra.mxu0 0.0
        %3555 = vmatprep.subr.mxu0 0.0
        %3556 = vmatpush2.msra.mxu0 0.0
        %3557 = vmatprep.subr.mxu0 0.0
        %3558 = vmatpush2.msra.mxu0 0.0
        %3559 = vmatprep.mubr.f32.mxu0 0.0
        %3560 = vmatmul.mubr.f32.gmra.mxu0 %v3331
        %v3561 = vpop.f32.mrf.mxu0
        %v3562 = vadd.f32 %v3493, %v3561
        %v3563 = vpop.f32.mrf.mxu0
        %3564 = vdwg.mxu0
        %v3565 = vmax.f32 %v3562, 0.0
        %3566 = vmatprep.subr.mxu0 0.0
        %3567 = vmatpush1.msra.mxu0 0.0
        %3568 = vmatprep.subr.mxu0 0.0
        %3569 = vmatpush1.msra.mxu0 0.0
        %3570 = vmatprep.subr.mxu0 0.0
        %3571 = vmatpush1.msra.mxu0 0.0
        %3572 = vmatprep.subr.mxu0 0.0
        %3573 = vmatpush1.msra.mxu0 0.0
        %3574 = vmatprep.subr.mxu0 0.0
        %3575 = vmatpush1.msra.mxu0 0.0
        %3576 = vmatprep.subr.mxu0 0.0
        %3577 = vmatpush1.msra.mxu0 0.0
        %3578 = vmatprep.subr.mxu0 0.0
        %3579 = vmatpush1.msra.mxu0 0.0
        %3580 = vmatprep.subr.mxu0 0.0
        %3581 = vmatpush1.msra.mxu0 0.0
        %3582 = vmatprep.subr.mxu0 0.0
        %3583 = vmatpush1.msra.mxu0 0.0
        %3584 = vmatprep.subr.mxu0 0.0
        %3585 = vmatpush1.msra.mxu0 0.0
        %3586 = vmatprep.subr.mxu0 0.0
        %3587 = vmatpush1.msra.mxu0 0.0
        %3588 = vmatprep.subr.mxu0 0.0
        %3589 = vmatpush1.msra.mxu0 0.0
        %3590 = vmatprep.subr.mxu0 0.0
        %3591 = vmatpush1.msra.mxu0 0.0
        %3592 = vmatprep.subr.mxu0 0.0
        %3593 = vmatpush1.msra.mxu0 0.0
        %3594 = vmatprep.subr.mxu0 0.0
        %3595 = vmatpush1.msra.mxu0 0.0
        %3596 = vmatprep.subr.mxu0 0.0
        %3597 = vmatpush1.msra.mxu0 %v3565
        %3598 = vmatprep.subr.mxu0 0.0
        %3599 = vmatpush2.msra.mxu0 0.0
        %3600 = vmatprep.subr.mxu0 0.0
        %3601 = vmatpush2.msra.mxu0 0.0
        %3602 = vmatprep.subr.mxu0 0.0
        %3603 = vmatpush2.msra.mxu0 0.0
        %3604 = vmatprep.subr.mxu0 0.0
        %3605 = vmatpush2.msra.mxu0 0.0
        %3606 = vmatprep.subr.mxu0 0.0
        %3607 = vmatpush2.msra.mxu0 0.0
        %3608 = vmatprep.subr.mxu0 0.0
        %3609 = vmatpush2.msra.mxu0 0.0
        %3610 = vmatprep.subr.mxu0 0.0
        %3611 = vmatpush2.msra.mxu0 0.0
        %3612 = vmatprep.subr.mxu0 0.0
        %3613 = vmatpush2.msra.mxu0 0.0
        %3614 = vmatprep.subr.mxu0 0.0
        %3615 = vmatpush2.msra.mxu0 0.0
        %3616 = vmatprep.subr.mxu0 0.0
        %3617 = vmatpush2.msra.mxu0 0.0
        %3618 = vmatprep.subr.mxu0 0.0
        %3619 = vmatpush2.msra.mxu0 0.0
        %3620 = vmatprep.subr.mxu0 0.0
        %3621 = vmatpush2.msra.mxu0 0.0
        %3622 = vmatprep.subr.mxu0 0.0
        %3623 = vmatpush2.msra.mxu0 0.0
        %3624 = vmatprep.subr.mxu0 0.0
        %3625 = vmatpush2.msra.mxu0 0.0
        %3626 = vmatprep.subr.mxu0 0.0
        %3627 = vmatpush2.msra.mxu0 0.0
        %3628 = vmatprep.subr.mxu0 0.0
        %3629 = vmatpush2.msra.mxu0 0.0
        %3630 = vmatprep.mubr.f32.mxu0 0.0
        %3631 = vmatmul.mubr.f32.gmra.mxu0 %v858
        %v3632 = vpop.f32.mrf.mxu0
        %v3633 = vadd.f32 0.0, %v3632
        %v3634 = vpop.f32.mrf.mxu0
        %3635 = vmatprep.mubr.f32.mxu0 0.0
        %3636 = vmatmul.mubr.f32.gmra.mxu0 %v861
        %v3637 = vpop.f32.mrf.mxu0
        %v3638 = vadd.f32 0.0, %v3637
        %v3639 = vpop.f32.mrf.mxu0
        %3640 = vmatprep.mubr.f32.mxu0 0.0
        %3641 = vmatmul.mubr.f32.gmra.mxu0 %v864
        %v3642 = vpop.f32.mrf.mxu0
        %v3643 = vadd.f32 0.0, %v3642
        %v3644 = vpop.f32.mrf.mxu0
        %3645 = vmatprep.mubr.f32.mxu0 0.0
        %3646 = vmatmul.mubr.f32.gmra.mxu0 %v867
        %v3647 = vpop.f32.mrf.mxu0
        %v3648 = vadd.f32 0.0, %v3647
        %v3649 = vpop.f32.mrf.mxu0
        %3650 = vmatprep.mubr.f32.mxu0 0.0
        %3651 = vmatmul.mubr.f32.gmra.mxu0 %v870
        %v3652 = vpop.f32.mrf.mxu0
        %v3653 = vadd.f32 0.0, %v3652
        %v3654 = vpop.f32.mrf.mxu0
        %3655 = vmatprep.mubr.f32.mxu0 0.0
        %3656 = vmatmul.mubr.f32.gmra.mxu0 %v873
        %v3657 = vpop.f32.mrf.mxu0
        %v3658 = vadd.f32 0.0, %v3657
        %v3659 = vpop.f32.mrf.mxu0
        %3660 = vmatprep.mubr.f32.mxu0 0.0
        %3661 = vmatmul.mubr.f32.gmra.mxu0 %v876
        %v3662 = vpop.f32.mrf.mxu0
        %v3663 = vadd.f32 0.0, %v3662
        %v3664 = vpop.f32.mrf.mxu0
        %3665 = vmatprep.mubr.f32.mxu0 0.0
        %3666 = vmatmul.mubr.f32.gmra.mxu0 %v879
        %v3667 = vpop.f32.mrf.mxu0
        %v3668 = vadd.f32 0.0, %v3667
        %v3669 = vpop.f32.mrf.mxu0
        %3670 = vmatprep.mubr.f32.mxu0 0.0
        %3671 = vmatmul.mubr.f32.gmra.mxu0 %v882
        %v3672 = vpop.f32.mrf.mxu0
        %v3673 = vadd.f32 0.0, %v3672
        %v3674 = vpop.f32.mrf.mxu0
        %3675 = vmatprep.mubr.f32.mxu0 0.0
        %3676 = vmatmul.mubr.f32.gmra.mxu0 %v885
        %v3677 = vpop.f32.mrf.mxu0
        %v3678 = vadd.f32 0.0, %v3677
        %v3679 = vpop.f32.mrf.mxu0
        %3680 = vmatprep.mubr.f32.mxu0 0.0
        %3681 = vmatmul.mubr.f32.gmra.mxu0 %v888
        %v3682 = vpop.f32.mrf.mxu0
        %v3683 = vadd.f32 0.0, %v3682
        %v3684 = vpop.f32.mrf.mxu0
        %3685 = vmatprep.mubr.f32.mxu0 0.0
        %3686 = vmatmul.mubr.f32.gmra.mxu0 %v891
        %v3687 = vpop.f32.mrf.mxu0
        %v3688 = vadd.f32 0.0, %v3687
        %v3689 = vpop.f32.mrf.mxu0
        %3690 = vmatprep.mubr.f32.mxu0 0.0
        %3691 = vmatmul.mubr.f32.gmra.mxu0 %v894
        %v3692 = vpop.f32.mrf.mxu0
        %v3693 = vadd.f32 0.0, %v3692
        %v3694 = vpop.f32.mrf.mxu0
        %3695 = vmatprep.mubr.f32.mxu0 0.0
        %3696 = vmatmul.mubr.f32.gmra.mxu0 %v897
        %v3697 = vpop.f32.mrf.mxu0
        %v3698 = vadd.f32 0.0, %v3697
        %v3699 = vpop.f32.mrf.mxu0
        %3700 = vmatprep.mubr.f32.mxu0 0.0
        %3701 = vmatmul.mubr.f32.gmra.mxu0 %v900
        %v3702 = vpop.f32.mrf.mxu0
        %v3703 = vadd.f32 0.0, %v3702
        %v3704 = vpop.f32.mrf.mxu0
        %3705 = vmatprep.mubr.f32.mxu0 0.0
        %3706 = vmatmul.mubr.f32.gmra.mxu0 %v903
        %v3707 = vpop.f32.mrf.mxu0
        %v3708 = vadd.f32 0.0, %v3707
        %v3709 = vpop.f32.mrf.mxu0
        %3710 = vmatprep.mubr.f32.mxu0 0.0
        %3711 = vmatmul.mubr.f32.gmra.mxu0 %v906
        %v3712 = vpop.f32.mrf.mxu0
        %v3713 = vadd.f32 0.0, %v3712
        %v3714 = vpop.f32.mrf.mxu0
        %3715 = vmatprep.mubr.f32.mxu0 0.0
        %3716 = vmatmul.mubr.f32.gmra.mxu0 %v909
        %v3717 = vpop.f32.mrf.mxu0
        %v3718 = vadd.f32 0.0, %v3717
        %v3719 = vpop.f32.mrf.mxu0
        %3720 = vmatprep.mubr.f32.mxu0 0.0
        %3721 = vmatmul.mubr.f32.gmra.mxu0 %v912
        %v3722 = vpop.f32.mrf.mxu0
        %v3723 = vadd.f32 0.0, %v3722
        %v3724 = vpop.f32.mrf.mxu0
        %3725 = vmatprep.mubr.f32.mxu0 0.0
        %3726 = vmatmul.mubr.f32.gmra.mxu0 %v915
        %v3727 = vpop.f32.mrf.mxu0
        %v3728 = vadd.f32 0.0, %v3727
        %v3729 = vpop.f32.mrf.mxu0
        %3730 = vmatprep.mubr.f32.mxu0 0.0
        %3731 = vmatmul.mubr.f32.gmra.mxu0 %v918
        %v3732 = vpop.f32.mrf.mxu0
        %v3733 = vadd.f32 0.0, %v3732
        %v3734 = vpop.f32.mrf.mxu0
        %3735 = vmatprep.mubr.f32.mxu0 0.0
        %3736 = vmatmul.mubr.f32.gmra.mxu0 %v921
        %v3737 = vpop.f32.mrf.mxu0
        %v3738 = vadd.f32 0.0, %v3737
        %v3739 = vpop.f32.mrf.mxu0
        %3740 = vmatprep.mubr.f32.mxu0 0.0
        %3741 = vmatmul.mubr.f32.gmra.mxu0 %v924
        %v3742 = vpop.f32.mrf.mxu0
        %v3743 = vadd.f32 0.0, %v3742
        %v3744 = vpop.f32.mrf.mxu0
        %3745 = vmatprep.mubr.f32.mxu0 0.0
        %3746 = vmatmul.mubr.f32.gmra.mxu0 %v927
        %v3747 = vpop.f32.mrf.mxu0
        %v3748 = vadd.f32 0.0, %v3747
        %v3749 = vpop.f32.mrf.mxu0
        %3750 = vmatprep.mubr.f32.mxu0 0.0
        %3751 = vmatmul.mubr.f32.gmra.mxu0 %v930
        %v3752 = vpop.f32.mrf.mxu0
        %v3753 = vadd.f32 0.0, %v3752
        %v3754 = vpop.f32.mrf.mxu0
        %3755 = vmatprep.mubr.f32.mxu0 0.0
        %3756 = vmatmul.mubr.f32.gmra.mxu0 %v933
        %v3757 = vpop.f32.mrf.mxu0
        %v3758 = vadd.f32 0.0, %v3757
        %v3759 = vpop.f32.mrf.mxu0
        %3760 = vmatprep.mubr.f32.mxu0 0.0
        %3761 = vmatmul.mubr.f32.gmra.mxu0 %v936
        %v3762 = vpop.f32.mrf.mxu0
        %v3763 = vadd.f32 0.0, %v3762
        %v3764 = vpop.f32.mrf.mxu0
        %3765 = vmatprep.mubr.f32.mxu0 0.0
        %3766 = vmatmul.mubr.f32.gmra.mxu0 %v939
        %v3767 = vpop.f32.mrf.mxu0
        %v3768 = vadd.f32 0.0, %v3767
        %v3769 = vpop.f32.mrf.mxu0
        %3770 = vmatprep.mubr.f32.mxu0 0.0
        %3771 = vmatmul.mubr.f32.gmra.mxu0 %v942
        %v3772 = vpop.f32.mrf.mxu0
        %v3773 = vadd.f32 0.0, %v3772
        %v3774 = vpop.f32.mrf.mxu0
        %3775 = vmatprep.mubr.f32.mxu0 0.0
        %3776 = vmatmul.mubr.f32.gmra.mxu0 %v945
        %v3777 = vpop.f32.mrf.mxu0
        %v3778 = vadd.f32 0.0, %v3777
        %v3779 = vpop.f32.mrf.mxu0
        %3780 = vmatprep.mubr.f32.mxu0 0.0
        %3781 = vmatmul.mubr.f32.gmra.mxu0 %v948
        %v3782 = vpop.f32.mrf.mxu0
        %v3783 = vadd.f32 0.0, %v3782
        %v3784 = vpop.f32.mrf.mxu0
        %3785 = vmatprep.mubr.f32.mxu0 0.0
        %3786 = vmatmul.mubr.f32.gmra.mxu0 %v951
        %v3787 = vpop.f32.mrf.mxu0
        %v3788 = vadd.f32 0.0, %v3787
        %v3789 = vpop.f32.mrf.mxu0
        %3790 = vdwg.mxu0
        %v3821 = vrot.slane %v3052, 7
        %v3822 = vsel %vm1209, %v1210, %v3821
        %v3823 = vrot.slane %v3053, 7
        %v3824 = vsel %vm1209, %v3821, %v3823
        %v3825 = vrot.slane %v3054, 7
        %v3826 = vsel %vm1209, %v1210, %v3825
        %v3827 = vrot.slane %v3055, 7
        %v3828 = vsel %vm1209, %v3825, %v3827
        %v3829 = vrot.slane %v3056, 7
        %v3830 = vsel %vm1209, %v1210, %v3829
        %v3831 = vrot.slane %v3057, 7
        %v3832 = vsel %vm1209, %v3829, %v3831
        %v3833 = vrot.slane %v3058, 7
        %v3834 = vsel %vm1209, %v1210, %v3833
        %v3835 = vrot.slane %v3059, 7
        %v3836 = vsel %vm1209, %v3833, %v3835
        %v3837 = vrot.slane %v3060, 7
        %v3838 = vsel %vm1209, %v1210, %v3837
        %v3839 = vrot.slane %v3061, 7
        %v3840 = vsel %vm1209, %v3837, %v3839
        %v3841 = vrot.slane %v3062, 7
        %v3842 = vsel %vm1209, %v1210, %v3841
        %v3843 = vrot.slane %v3063, 7
        %v3844 = vsel %vm1209, %v3841, %v3843
        %v3845 = vrot.slane %v3064, 7
        %v3846 = vsel %vm1209, %v1210, %v3845
        %v3847 = vrot.slane %v3065, 7
        %v3848 = vsel %vm1209, %v3845, %v3847
        %v3849 = vrot.slane %v3066, 7
        %v3850 = vsel %vm1209, %v1210, %v3849
        %v3851 = vrot.slane %v3067, 7
        %v3852 = vsel %vm1209, %v3849, %v3851
        %v3853 = vrot.slane %v3068, 7
        %v3854 = vsel %vm1209, %v1210, %v3853
        %v3855 = vrot.slane %v3069, 7
        %v3856 = vsel %vm1209, %v3853, %v3855
        %v3857 = vrot.slane %v3070, 7
        %v3858 = vsel %vm1209, %v1210, %v3857
        %v3859 = vrot.slane %v3071, 7
        %v3860 = vsel %vm1209, %v3857, %v3859
        %v3861 = vrot.slane %v3072, 7
        %v3862 = vsel %vm1209, %v1210, %v3861
        %v3863 = vrot.slane %v3073, 7
        %v3864 = vsel %vm1209, %v3861, %v3863
        %v3865 = vrot.slane %v3074, 7
        %v3866 = vsel %vm1209, %v1210, %v3865
        %v3867 = vrot.slane %v3075, 7
        %v3868 = vsel %vm1209, %v3865, %v3867
        %v3869 = vrot.slane %v3076, 7
        %v3870 = vsel %vm1209, %v1210, %v3869
        %v3871 = vrot.slane %v3077, 7
        %v3872 = vsel %vm1209, %v3869, %v3871
        %v3873 = vrot.slane %v3078, 7
        %v3874 = vsel %vm1209, %v1210, %v3873
        %v3875 = vrot.slane %v3079, 7
        %v3876 = vsel %vm1209, %v3873, %v3875
        %v3877 = vrot.slane %v3080, 7
        %v3878 = vsel %vm1209, %v1210, %v3877
        %v3879 = vrot.slane %v3081, 7
        %v3880 = vsel %vm1209, %v3877, %v3879
        %v3911 = vrot.slane %v3052, 1
        %v3912 = vrot.slane %v3053, 1
        %v3913 = vsel %vm1303, %v3911, %v3912
        %v3914 = vsel %vm1303, %v3912, %v1304
        %v3915 = vrot.slane %v3054, 1
        %v3916 = vrot.slane %v3055, 1
        %v3917 = vsel %vm1303, %v3915, %v3916
        %v3918 = vsel %vm1303, %v3916, %v1304
        %v3919 = vrot.slane %v3056, 1
        %v3920 = vrot.slane %v3057, 1
        %v3921 = vsel %vm1303, %v3919, %v3920
        %v3922 = vsel %vm1303, %v3920, %v1304
        %v3923 = vrot.slane %v3058, 1
        %v3924 = vrot.slane %v3059, 1
        %v3925 = vsel %vm1303, %v3923, %v3924
        %v3926 = vsel %vm1303, %v3924, %v1304
        %v3927 = vrot.slane %v3060, 1
        %v3928 = vrot.slane %v3061, 1
        %v3929 = vsel %vm1303, %v3927, %v3928
        %v3930 = vsel %vm1303, %v3928, %v1304
        %v3931 = vrot.slane %v3062, 1
        %v3932 = vrot.slane %v3063, 1
        %v3933 = vsel %vm1303, %v3931, %v3932
        %v3934 = vsel %vm1303, %v3932, %v1304
        %v3935 = vrot.slane %v3064, 1
        %v3936 = vrot.slane %v3065, 1
        %v3937 = vsel %vm1303, %v3935, %v3936
        %v3938 = vsel %vm1303, %v3936, %v1304
        %v3939 = vrot.slane %v3066, 1
        %v3940 = vrot.slane %v3067, 1
        %v3941 = vsel %vm1303, %v3939, %v3940
        %v3942 = vsel %vm1303, %v3940, %v1304
        %v3943 = vrot.slane %v3068, 1
        %v3944 = vrot.slane %v3069, 1
        %v3945 = vsel %vm1303, %v3943, %v3944
        %v3946 = vsel %vm1303, %v3944, %v1304
        %v3947 = vrot.slane %v3070, 1
        %v3948 = vrot.slane %v3071, 1
        %v3949 = vsel %vm1303, %v3947, %v3948
        %v3950 = vsel %vm1303, %v3948, %v1304
        %v3951 = vrot.slane %v3072, 1
        %v3952 = vrot.slane %v3073, 1
        %v3953 = vsel %vm1303, %v3951, %v3952
        %v3954 = vsel %vm1303, %v3952, %v1304
        %v3955 = vrot.slane %v3074, 1
        %v3956 = vrot.slane %v3075, 1
        %v3957 = vsel %vm1303, %v3955, %v3956
        %v3958 = vsel %vm1303, %v3956, %v1304
        %v3959 = vrot.slane %v3076, 1
        %v3960 = vrot.slane %v3077, 1
        %v3961 = vsel %vm1303, %v3959, %v3960
        %v3962 = vsel %vm1303, %v3960, %v1304
        %v3963 = vrot.slane %v3078, 1
        %v3964 = vrot.slane %v3079, 1
        %v3965 = vsel %vm1303, %v3963, %v3964
        %v3966 = vsel %vm1303, %v3964, %v1304
        %v3967 = vrot.slane %v3080, 1
        %v3968 = vrot.slane %v3081, 1
        %v3969 = vsel %vm1303, %v3967, %v3968
        %v3970 = vsel %vm1303, %v3968, %v1304
        %v3973 = vrot.slane %v3082, 7
        %v3974 = vsel %vm1209, %v1210, %v3973
        %v3975 = vrot.slane %v3083, 7
        %v3976 = vsel %vm1209, %v3973, %v3975
        %v3977 = vrot.slane %v3082, 1
        %v3978 = vrot.slane %v3083, 1
        %v3979 = vsel %vm1303, %v3977, %v3978
        %v3980 = vsel %vm1303, %v3978, %v1304
        %3981 = vrot.lane.b32.xlu0 %v3052, 32
        %v3982 = vpop.permute.xlu0 %3981
        %3983 = vrot.lane.b32.xlu0 %v3053, 32
        %v3984 = vpop.permute.xlu0 %3983
        %3985 = vrot.lane.b32.xlu0 %v3054, 32
        %v3986 = vpop.permute.xlu0 %3985
        %3987 = vrot.lane.b32.xlu0 %v3055, 32
        %v3988 = vpop.permute.xlu0 %3987
        %3989 = vrot.lane.b32.xlu0 %v3056, 32
        %v3990 = vpop.permute.xlu0 %3989
        %3991 = vrot.lane.b32.xlu0 %v3057, 32
        %v3992 = vpop.permute.xlu0 %3991
        %3993 = vrot.lane.b32.xlu0 %v3058, 32
        %v3994 = vpop.permute.xlu0 %3993
        %3995 = vrot.lane.b32.xlu0 %v3059, 32
        %v3996 = vpop.permute.xlu0 %3995
        %3997 = vrot.lane.b32.xlu0 %v3060, 32
        %v3998 = vpop.permute.xlu0 %3997
        %3999 = vrot.lane.b32.xlu0 %v3061, 32
        %v4000 = vpop.permute.xlu0 %3999
        %4001 = vrot.lane.b32.xlu0 %v3062, 32
        %v4002 = vpop.permute.xlu0 %4001
        %4003 = vrot.lane.b32.xlu0 %v3063, 32
        %v4004 = vpop.permute.xlu0 %4003
        %4005 = vrot.lane.b32.xlu0 %v3064, 32
        %v4006 = vpop.permute.xlu0 %4005
        %4007 = vrot.lane.b32.xlu0 %v3065, 32
        %v4008 = vpop.permute.xlu0 %4007
        %4009 = vrot.lane.b32.xlu0 %v3066, 32
        %v4010 = vpop.permute.xlu0 %4009
        %4011 = vrot.lane.b32.xlu0 %v3067, 32
        %v4012 = vpop.permute.xlu0 %4011
        %4013 = vrot.lane.b32.xlu0 %v3068, 32
        %v4014 = vpop.permute.xlu0 %4013
        %4015 = vrot.lane.b32.xlu0 %v3069, 32
        %v4016 = vpop.permute.xlu0 %4015
        %4017 = vrot.lane.b32.xlu0 %v3070, 32
        %v4018 = vpop.permute.xlu0 %4017
        %4019 = vrot.lane.b32.xlu0 %v3071, 32
        %v4020 = vpop.permute.xlu0 %4019
        %4021 = vrot.lane.b32.xlu0 %v3072, 32
        %v4022 = vpop.permute.xlu0 %4021
        %4023 = vrot.lane.b32.xlu0 %v3073, 32
        %v4024 = vpop.permute.xlu0 %4023
        %4025 = vrot.lane.b32.xlu0 %v3074, 32
        %v4026 = vpop.permute.xlu0 %4025
        %4027 = vrot.lane.b32.xlu0 %v3075, 32
        %v4028 = vpop.permute.xlu0 %4027
        %4029 = vrot.lane.b32.xlu0 %v3076, 32
        %v4030 = vpop.permute.xlu0 %4029
        %4031 = vrot.lane.b32.xlu0 %v3077, 32
        %v4032 = vpop.permute.xlu0 %4031
        %4033 = vrot.lane.b32.xlu0 %v3078, 32
        %v4034 = vpop.permute.xlu0 %4033
        %4035 = vrot.lane.b32.xlu0 %v3079, 32
        %v4036 = vpop.permute.xlu0 %4035
        %4037 = vrot.lane.b32.xlu0 %v3080, 32
        %v4038 = vpop.permute.xlu0 %4037
        %4039 = vrot.lane.b32.xlu0 %v3081, 32
        %v4040 = vpop.permute.xlu0 %4039
        %4071 = vrot.lane.b32.xlu0 %v3913, 64
        %v4072 = vpop.permute.xlu0 %4071
        %4073 = vrot.lane.b32.xlu0 %v3914, 64
        %v4074 = vpop.permute.xlu0 %4073
        %4075 = vrot.lane.b32.xlu0 %v3917, 64
        %v4076 = vpop.permute.xlu0 %4075
        %4077 = vrot.lane.b32.xlu0 %v3918, 64
        %v4078 = vpop.permute.xlu0 %4077
        %4079 = vrot.lane.b32.xlu0 %v3921, 64
        %v4080 = vpop.permute.xlu0 %4079
        %4081 = vrot.lane.b32.xlu0 %v3922, 64
        %v4082 = vpop.permute.xlu0 %4081
        %4083 = vrot.lane.b32.xlu0 %v3925, 64
        %v4084 = vpop.permute.xlu0 %4083
        %4085 = vrot.lane.b32.xlu0 %v3926, 64
        %v4086 = vpop.permute.xlu0 %4085
        %4087 = vrot.lane.b32.xlu0 %v3929, 64
        %v4088 = vpop.permute.xlu0 %4087
        %4089 = vrot.lane.b32.xlu0 %v3930, 64
        %v4090 = vpop.permute.xlu0 %4089
        %4091 = vrot.lane.b32.xlu0 %v3933, 64
        %v4092 = vpop.permute.xlu0 %4091
        %4093 = vrot.lane.b32.xlu0 %v3934, 64
        %v4094 = vpop.permute.xlu0 %4093
        %4095 = vrot.lane.b32.xlu0 %v3937, 64
        %v4096 = vpop.permute.xlu0 %4095
        %4097 = vrot.lane.b32.xlu0 %v3938, 64
        %v4098 = vpop.permute.xlu0 %4097
        %4099 = vrot.lane.b32.xlu0 %v3941, 64
        %v4100 = vpop.permute.xlu0 %4099
        %4101 = vrot.lane.b32.xlu0 %v3942, 64
        %v4102 = vpop.permute.xlu0 %4101
        %4103 = vrot.lane.b32.xlu0 %v3945, 64
        %v4104 = vpop.permute.xlu0 %4103
        %4105 = vrot.lane.b32.xlu0 %v3946, 64
        %v4106 = vpop.permute.xlu0 %4105
        %4107 = vrot.lane.b32.xlu0 %v3949, 64
        %v4108 = vpop.permute.xlu0 %4107
        %4109 = vrot.lane.b32.xlu0 %v3950, 64
        %v4110 = vpop.permute.xlu0 %4109
        %4111 = vrot.lane.b32.xlu0 %v3953, 64
        %v4112 = vpop.permute.xlu0 %4111
        %4113 = vrot.lane.b32.xlu0 %v3954, 64
        %v4114 = vpop.permute.xlu0 %4113
        %4115 = vrot.lane.b32.xlu0 %v3957, 64
        %v4116 = vpop.permute.xlu0 %4115
        %4117 = vrot.lane.b32.xlu0 %v3958, 64
        %v4118 = vpop.permute.xlu0 %4117
        %4119 = vrot.lane.b32.xlu0 %v3961, 64
        %v4120 = vpop.permute.xlu0 %4119
        %4121 = vrot.lane.b32.xlu0 %v3962, 64
        %v4122 = vpop.permute.xlu0 %4121
        %4123 = vrot.lane.b32.xlu0 %v3965, 64
        %v4124 = vpop.permute.xlu0 %4123
        %4125 = vrot.lane.b32.xlu0 %v3966, 64
        %v4126 = vpop.permute.xlu0 %4125
        %4127 = vrot.lane.b32.xlu0 %v3969, 64
        %v4128 = vpop.permute.xlu0 %4127
        %4129 = vrot.lane.b32.xlu0 %v3970, 64
        %v4130 = vpop.permute.xlu0 %4129
        %4161 = vrot.lane.b32.xlu0 %v3822, 96
        %v4162 = vpop.permute.xlu0 %4161
        %4163 = vrot.lane.b32.xlu0 %v3824, 96
        %v4164 = vpop.permute.xlu0 %4163
        %4165 = vrot.lane.b32.xlu0 %v3826, 96
        %v4166 = vpop.permute.xlu0 %4165
        %4167 = vrot.lane.b32.xlu0 %v3828, 96
        %v4168 = vpop.permute.xlu0 %4167
        %4169 = vrot.lane.b32.xlu0 %v3830, 96
        %v4170 = vpop.permute.xlu0 %4169
        %4171 = vrot.lane.b32.xlu0 %v3832, 96
        %v4172 = vpop.permute.xlu0 %4171
        %4173 = vrot.lane.b32.xlu0 %v3834, 96
        %v4174 = vpop.permute.xlu0 %4173
        %4175 = vrot.lane.b32.xlu0 %v3836, 96
        %v4176 = vpop.permute.xlu0 %4175
        %4177 = vrot.lane.b32.xlu0 %v3838, 96
        %v4178 = vpop.permute.xlu0 %4177
        %4179 = vrot.lane.b32.xlu0 %v3840, 96
        %v4180 = vpop.permute.xlu0 %4179
        %4181 = vrot.lane.b32.xlu0 %v3842, 96
        %v4182 = vpop.permute.xlu0 %4181
        %4183 = vrot.lane.b32.xlu0 %v3844, 96
        %v4184 = vpop.permute.xlu0 %4183
        %4185 = vrot.lane.b32.xlu0 %v3846, 96
        %v4186 = vpop.permute.xlu0 %4185
        %4187 = vrot.lane.b32.xlu0 %v3848, 96
        %v4188 = vpop.permute.xlu0 %4187
        %4189 = vrot.lane.b32.xlu0 %v3850, 96
        %v4190 = vpop.permute.xlu0 %4189
        %4191 = vrot.lane.b32.xlu0 %v3852, 96
        %v4192 = vpop.permute.xlu0 %4191
        %4193 = vrot.lane.b32.xlu0 %v3854, 96
        %v4194 = vpop.permute.xlu0 %4193
        %4195 = vrot.lane.b32.xlu0 %v3856, 96
        %v4196 = vpop.permute.xlu0 %4195
        %4197 = vrot.lane.b32.xlu0 %v3858, 96
        %v4198 = vpop.permute.xlu0 %4197
        %4199 = vrot.lane.b32.xlu0 %v3860, 96
        %v4200 = vpop.permute.xlu0 %4199
        %4201 = vrot.lane.b32.xlu0 %v3862, 96
        %v4202 = vpop.permute.xlu0 %4201
        %4203 = vrot.lane.b32.xlu0 %v3864, 96
        %v4204 = vpop.permute.xlu0 %4203
        %4205 = vrot.lane.b32.xlu0 %v3866, 96
        %v4206 = vpop.permute.xlu0 %4205
        %4207 = vrot.lane.b32.xlu0 %v3868, 96
        %v4208 = vpop.permute.xlu0 %4207
        %4209 = vrot.lane.b32.xlu0 %v3870, 96
        %v4210 = vpop.permute.xlu0 %4209
        %4211 = vrot.lane.b32.xlu0 %v3872, 96
        %v4212 = vpop.permute.xlu0 %4211
        %4213 = vrot.lane.b32.xlu0 %v3874, 96
        %v4214 = vpop.permute.xlu0 %4213
        %4215 = vrot.lane.b32.xlu0 %v3876, 96
        %v4216 = vpop.permute.xlu0 %4215
        %4217 = vrot.lane.b32.xlu0 %v3878, 96
        %v4218 = vpop.permute.xlu0 %4217
        %4219 = vrot.lane.b32.xlu0 %v3880, 96
        %v4220 = vpop.permute.xlu0 %4219
        %4221 = vrot.lane.b32.xlu0 %v3974, 96
        %v4222 = vpop.permute.xlu0 %4221
        %4223 = vrot.lane.b32.xlu0 %v3976, 96
        %v4224 = vpop.permute.xlu0 %4223
        %4257 = vrot.lane.b32.xlu0 %v3913, 32
        %v4258 = vpop.permute.xlu0 %4257
        %4259 = vrot.lane.b32.xlu0 %v3914, 32
        %v4260 = vpop.permute.xlu0 %4259
        %4261 = vrot.lane.b32.xlu0 %v3917, 32
        %v4262 = vpop.permute.xlu0 %4261
        %4263 = vrot.lane.b32.xlu0 %v3918, 32
        %v4264 = vpop.permute.xlu0 %4263
        %4265 = vrot.lane.b32.xlu0 %v3921, 32
        %v4266 = vpop.permute.xlu0 %4265
        %4267 = vrot.lane.b32.xlu0 %v3922, 32
        %v4268 = vpop.permute.xlu0 %4267
        %4269 = vrot.lane.b32.xlu0 %v3925, 32
        %v4270 = vpop.permute.xlu0 %4269
        %4271 = vrot.lane.b32.xlu0 %v3926, 32
        %v4272 = vpop.permute.xlu0 %4271
        %4273 = vrot.lane.b32.xlu0 %v3929, 32
        %v4274 = vpop.permute.xlu0 %4273
        %4275 = vrot.lane.b32.xlu0 %v3930, 32
        %v4276 = vpop.permute.xlu0 %4275
        %4277 = vrot.lane.b32.xlu0 %v3933, 32
        %v4278 = vpop.permute.xlu0 %4277
        %4279 = vrot.lane.b32.xlu0 %v3934, 32
        %v4280 = vpop.permute.xlu0 %4279
        %4281 = vrot.lane.b32.xlu0 %v3937, 32
        %v4282 = vpop.permute.xlu0 %4281
        %4283 = vrot.lane.b32.xlu0 %v3938, 32
        %v4284 = vpop.permute.xlu0 %4283
        %4285 = vrot.lane.b32.xlu0 %v3941, 32
        %v4286 = vpop.permute.xlu0 %4285
        %4287 = vrot.lane.b32.xlu0 %v3942, 32
        %v4288 = vpop.permute.xlu0 %4287
        %4289 = vrot.lane.b32.xlu0 %v3945, 32
        %v4290 = vpop.permute.xlu0 %4289
        %4291 = vrot.lane.b32.xlu0 %v3946, 32
        %v4292 = vpop.permute.xlu0 %4291
        %4293 = vrot.lane.b32.xlu0 %v3949, 32
        %v4294 = vpop.permute.xlu0 %4293
        %4295 = vrot.lane.b32.xlu0 %v3950, 32
        %v4296 = vpop.permute.xlu0 %4295
        %4297 = vrot.lane.b32.xlu0 %v3953, 32
        %v4298 = vpop.permute.xlu0 %4297
        %4299 = vrot.lane.b32.xlu0 %v3954, 32
        %v4300 = vpop.permute.xlu0 %4299
        %4301 = vrot.lane.b32.xlu0 %v3957, 32
        %v4302 = vpop.permute.xlu0 %4301
        %4303 = vrot.lane.b32.xlu0 %v3958, 32
        %v4304 = vpop.permute.xlu0 %4303
        %4305 = vrot.lane.b32.xlu0 %v3961, 32
        %v4306 = vpop.permute.xlu0 %4305
        %4307 = vrot.lane.b32.xlu0 %v3962, 32
        %v4308 = vpop.permute.xlu0 %4307
        %4309 = vrot.lane.b32.xlu0 %v3965, 32
        %v4310 = vpop.permute.xlu0 %4309
        %4311 = vrot.lane.b32.xlu0 %v3966, 32
        %v4312 = vpop.permute.xlu0 %4311
        %4313 = vrot.lane.b32.xlu0 %v3969, 32
        %v4314 = vpop.permute.xlu0 %4313
        %4315 = vrot.lane.b32.xlu0 %v3970, 32
        %v4316 = vpop.permute.xlu0 %4315
        %4317 = vrot.lane.b32.xlu0 %v3979, 32
        %v4318 = vpop.permute.xlu0 %4317
        %4319 = vrot.lane.b32.xlu0 %v3980, 32
        %v4320 = vpop.permute.xlu0 %4319
        %4353 = vrot.lane.b32.xlu0 %v3826, 64
        %v4354 = vpop.permute.xlu0 %4353
        %4355 = vrot.lane.b32.xlu0 %v3828, 64
        %v4356 = vpop.permute.xlu0 %4355
        %4357 = vrot.lane.b32.xlu0 %v3830, 64
        %v4358 = vpop.permute.xlu0 %4357
        %4359 = vrot.lane.b32.xlu0 %v3832, 64
        %v4360 = vpop.permute.xlu0 %4359
        %4361 = vrot.lane.b32.xlu0 %v3834, 64
        %v4362 = vpop.permute.xlu0 %4361
        %4363 = vrot.lane.b32.xlu0 %v3836, 64
        %v4364 = vpop.permute.xlu0 %4363
        %4365 = vrot.lane.b32.xlu0 %v3838, 64
        %v4366 = vpop.permute.xlu0 %4365
        %4367 = vrot.lane.b32.xlu0 %v3840, 64
        %v4368 = vpop.permute.xlu0 %4367
        %4369 = vrot.lane.b32.xlu0 %v3842, 64
        %v4370 = vpop.permute.xlu0 %4369
        %4371 = vrot.lane.b32.xlu0 %v3844, 64
        %v4372 = vpop.permute.xlu0 %4371
        %4373 = vrot.lane.b32.xlu0 %v3846, 64
        %v4374 = vpop.permute.xlu0 %4373
        %4375 = vrot.lane.b32.xlu0 %v3848, 64
        %v4376 = vpop.permute.xlu0 %4375
        %4377 = vrot.lane.b32.xlu0 %v3850, 64
        %v4378 = vpop.permute.xlu0 %4377
        %4379 = vrot.lane.b32.xlu0 %v3852, 64
        %v4380 = vpop.permute.xlu0 %4379
        %4381 = vrot.lane.b32.xlu0 %v3854, 64
        %v4382 = vpop.permute.xlu0 %4381
        %4383 = vrot.lane.b32.xlu0 %v3856, 64
        %v4384 = vpop.permute.xlu0 %4383
        %4385 = vrot.lane.b32.xlu0 %v3858, 64
        %v4386 = vpop.permute.xlu0 %4385
        %4387 = vrot.lane.b32.xlu0 %v3860, 64
        %v4388 = vpop.permute.xlu0 %4387
        %4389 = vrot.lane.b32.xlu0 %v3862, 64
        %v4390 = vpop.permute.xlu0 %4389
        %4391 = vrot.lane.b32.xlu0 %v3864, 64
        %v4392 = vpop.permute.xlu0 %4391
        %4393 = vrot.lane.b32.xlu0 %v3866, 64
        %v4394 = vpop.permute.xlu0 %4393
        %4395 = vrot.lane.b32.xlu0 %v3868, 64
        %v4396 = vpop.permute.xlu0 %4395
        %4397 = vrot.lane.b32.xlu0 %v3870, 64
        %v4398 = vpop.permute.xlu0 %4397
        %4399 = vrot.lane.b32.xlu0 %v3872, 64
        %v4400 = vpop.permute.xlu0 %4399
        %4401 = vrot.lane.b32.xlu0 %v3874, 64
        %v4402 = vpop.permute.xlu0 %4401
        %4403 = vrot.lane.b32.xlu0 %v3876, 64
        %v4404 = vpop.permute.xlu0 %4403
        %4405 = vrot.lane.b32.xlu0 %v3878, 64
        %v4406 = vpop.permute.xlu0 %4405
        %4407 = vrot.lane.b32.xlu0 %v3880, 64
        %v4408 = vpop.permute.xlu0 %4407
        %4409 = vrot.lane.b32.xlu0 %v3974, 64
        %v4410 = vpop.permute.xlu0 %4409
        %4411 = vrot.lane.b32.xlu0 %v3976, 64
        %v4412 = vpop.permute.xlu0 %4411
        %4443 = vrot.lane.b32.xlu0 %v3054, 96
        %v4444 = vpop.permute.xlu0 %4443
        %4445 = vrot.lane.b32.xlu0 %v3055, 96
        %v4446 = vpop.permute.xlu0 %4445
        %4447 = vrot.lane.b32.xlu0 %v3056, 96
        %v4448 = vpop.permute.xlu0 %4447
        %4449 = vrot.lane.b32.xlu0 %v3057, 96
        %v4450 = vpop.permute.xlu0 %4449
        %4451 = vrot.lane.b32.xlu0 %v3058, 96
        %v4452 = vpop.permute.xlu0 %4451
        %4453 = vrot.lane.b32.xlu0 %v3059, 96
        %v4454 = vpop.permute.xlu0 %4453
        %4455 = vrot.lane.b32.xlu0 %v3060, 96
        %v4456 = vpop.permute.xlu0 %4455
        %4457 = vrot.lane.b32.xlu0 %v3061, 96
        %v4458 = vpop.permute.xlu0 %4457
        %4459 = vrot.lane.b32.xlu0 %v3062, 96
        %v4460 = vpop.permute.xlu0 %4459
        %4461 = vrot.lane.b32.xlu0 %v3063, 96
        %v4462 = vpop.permute.xlu0 %4461
        %4463 = vrot.lane.b32.xlu0 %v3064, 96
        %v4464 = vpop.permute.xlu0 %4463
        %4465 = vrot.lane.b32.xlu0 %v3065, 96
        %v4466 = vpop.permute.xlu0 %4465
        %4467 = vrot.lane.b32.xlu0 %v3066, 96
        %v4468 = vpop.permute.xlu0 %4467
        %4469 = vrot.lane.b32.xlu0 %v3067, 96
        %v4470 = vpop.permute.xlu0 %4469
        %4471 = vrot.lane.b32.xlu0 %v3068, 96
        %v4472 = vpop.permute.xlu0 %4471
        %4473 = vrot.lane.b32.xlu0 %v3069, 96
        %v4474 = vpop.permute.xlu0 %4473
        %4475 = vrot.lane.b32.xlu0 %v3070, 96
        %v4476 = vpop.permute.xlu0 %4475
        %4477 = vrot.lane.b32.xlu0 %v3071, 96
        %v4478 = vpop.permute.xlu0 %4477
        %4479 = vrot.lane.b32.xlu0 %v3072, 96
        %v4480 = vpop.permute.xlu0 %4479
        %4481 = vrot.lane.b32.xlu0 %v3073, 96
        %v4482 = vpop.permute.xlu0 %4481
        %4483 = vrot.lane.b32.xlu0 %v3074, 96
        %v4484 = vpop.permute.xlu0 %4483
        %4485 = vrot.lane.b32.xlu0 %v3075, 96
        %v4486 = vpop.permute.xlu0 %4485
        %4487 = vrot.lane.b32.xlu0 %v3076, 96
        %v4488 = vpop.permute.xlu0 %4487
        %4489 = vrot.lane.b32.xlu0 %v3077, 96
        %v4490 = vpop.permute.xlu0 %4489
        %4491 = vrot.lane.b32.xlu0 %v3078, 96
        %v4492 = vpop.permute.xlu0 %4491
        %4493 = vrot.lane.b32.xlu0 %v3079, 96
        %v4494 = vpop.permute.xlu0 %4493
        %4495 = vrot.lane.b32.xlu0 %v3080, 96
        %v4496 = vpop.permute.xlu0 %4495
        %4497 = vrot.lane.b32.xlu0 %v3081, 96
        %v4498 = vpop.permute.xlu0 %4497
        %4499 = vrot.lane.b32.xlu0 %v3082, 96
        %v4500 = vpop.permute.xlu0 %4499
        %4501 = vrot.lane.b32.xlu0 %v3083, 96
        %v4502 = vpop.permute.xlu0 %4501
        %v4533 = vsel %vm1940, %v3822, %v3982
        %v4534 = vsel %vm1940, %v3824, %v3984
        %v4535 = vsel %vm1940, %v3826, %v3986
        %v4536 = vsel %vm1940, %v3828, %v3988
        %v4537 = vsel %vm1940, %v3830, %v3990
        %v4538 = vsel %vm1940, %v3832, %v3992
        %v4539 = vsel %vm1940, %v3834, %v3994
        %v4540 = vsel %vm1940, %v3836, %v3996
        %v4541 = vsel %vm1940, %v3838, %v3998
        %v4542 = vsel %vm1940, %v3840, %v4000
        %v4543 = vsel %vm1940, %v3842, %v4002
        %v4544 = vsel %vm1940, %v3844, %v4004
        %v4545 = vsel %vm1940, %v3846, %v4006
        %v4546 = vsel %vm1940, %v3848, %v4008
        %v4547 = vsel %vm1940, %v3850, %v4010
        %v4548 = vsel %vm1940, %v3852, %v4012
        %v4549 = vsel %vm1940, %v3854, %v4014
        %v4550 = vsel %vm1940, %v3856, %v4016
        %v4551 = vsel %vm1940, %v3858, %v4018
        %v4552 = vsel %vm1940, %v3860, %v4020
        %v4553 = vsel %vm1940, %v3862, %v4022
        %v4554 = vsel %vm1940, %v3864, %v4024
        %v4555 = vsel %vm1940, %v3866, %v4026
        %v4556 = vsel %vm1940, %v3868, %v4028
        %v4557 = vsel %vm1940, %v3870, %v4030
        %v4558 = vsel %vm1940, %v3872, %v4032
        %v4559 = vsel %vm1940, %v3874, %v4034
        %v4560 = vsel %vm1940, %v3876, %v4036
        %v4561 = vsel %vm1940, %v3878, %v4038
        %v4562 = vsel %vm1940, %v3880, %v4040
        %v4563 = vsel %vm1972, %v4533, %v4072
        %v4564 = vsel %vm1972, %v4534, %v4074
        %v4565 = vsel %vm1972, %v4535, %v4076
        %v4566 = vsel %vm1972, %v4536, %v4078
        %v4567 = vsel %vm1972, %v4537, %v4080
        %v4568 = vsel %vm1972, %v4538, %v4082
        %v4569 = vsel %vm1972, %v4539, %v4084
        %v4570 = vsel %vm1972, %v4540, %v4086
        %v4571 = vsel %vm1972, %v4541, %v4088
        %v4572 = vsel %vm1972, %v4542, %v4090
        %v4573 = vsel %vm1972, %v4543, %v4092
        %v4574 = vsel %vm1972, %v4544, %v4094
        %v4575 = vsel %vm1972, %v4545, %v4096
        %v4576 = vsel %vm1972, %v4546, %v4098
        %v4577 = vsel %vm1972, %v4547, %v4100
        %v4578 = vsel %vm1972, %v4548, %v4102
        %v4579 = vsel %vm1972, %v4549, %v4104
        %v4580 = vsel %vm1972, %v4550, %v4106
        %v4581 = vsel %vm1972, %v4551, %v4108
        %v4582 = vsel %vm1972, %v4552, %v4110
        %v4583 = vsel %vm1972, %v4553, %v4112
        %v4584 = vsel %vm1972, %v4554, %v4114
        %v4585 = vsel %vm1972, %v4555, %v4116
        %v4586 = vsel %vm1972, %v4556, %v4118
        %v4587 = vsel %vm1972, %v4557, %v4120
        %v4588 = vsel %vm1972, %v4558, %v4122
        %v4589 = vsel %vm1972, %v4559, %v4124
        %v4590 = vsel %vm1972, %v4560, %v4126
        %v4591 = vsel %vm1972, %v4561, %v4128
        %v4592 = vsel %vm1972, %v4562, %v4130
        %v4593 = vsel %vm2004, %v1973, %v4162
        %v4594 = vsel %vm2004, %v1973, %v4164
        %v4595 = vsel %vm2004, %v4563, %v4166
        %v4596 = vsel %vm2004, %v4564, %v4168
        %v4597 = vsel %vm2004, %v4565, %v4170
        %v4598 = vsel %vm2004, %v4566, %v4172
        %v4599 = vsel %vm2004, %v4567, %v4174
        %v4600 = vsel %vm2004, %v4568, %v4176
        %v4601 = vsel %vm2004, %v4569, %v4178
        %v4602 = vsel %vm2004, %v4570, %v4180
        %v4603 = vsel %vm2004, %v4571, %v4182
        %v4604 = vsel %vm2004, %v4572, %v4184
        %v4605 = vsel %vm2004, %v4573, %v4186
        %v4606 = vsel %vm2004, %v4574, %v4188
        %v4607 = vsel %vm2004, %v4575, %v4190
        %v4608 = vsel %vm2004, %v4576, %v4192
        %v4609 = vsel %vm2004, %v4577, %v4194
        %v4610 = vsel %vm2004, %v4578, %v4196
        %v4611 = vsel %vm2004, %v4579, %v4198
        %v4612 = vsel %vm2004, %v4580, %v4200
        %v4613 = vsel %vm2004, %v4581, %v4202
        %v4614 = vsel %vm2004, %v4582, %v4204
        %v4615 = vsel %vm2004, %v4583, %v4206
        %v4616 = vsel %vm2004, %v4584, %v4208
        %v4617 = vsel %vm2004, %v4585, %v4210
        %v4618 = vsel %vm2004, %v4586, %v4212
        %v4619 = vsel %vm2004, %v4587, %v4214
        %v4620 = vsel %vm2004, %v4588, %v4216
        %v4621 = vsel %vm2004, %v4589, %v4218
        %v4622 = vsel %vm2004, %v4590, %v4220
        %v4623 = vsel %vm2004, %v4591, %v4222
        %v4624 = vsel %vm2004, %v4592, %v4224
        %v4625 = vsel %vm1940, %v3052, %v4258
        %v4626 = vsel %vm1940, %v3053, %v4260
        %v4627 = vsel %vm1940, %v3054, %v4262
        %v4628 = vsel %vm1940, %v3055, %v4264
        %v4629 = vsel %vm1940, %v3056, %v4266
        %v4630 = vsel %vm1940, %v3057, %v4268
        %v4631 = vsel %vm1940, %v3058, %v4270
        %v4632 = vsel %vm1940, %v3059, %v4272
        %v4633 = vsel %vm1940, %v3060, %v4274
        %v4634 = vsel %vm1940, %v3061, %v4276
        %v4635 = vsel %vm1940, %v3062, %v4278
        %v4636 = vsel %vm1940, %v3063, %v4280
        %v4637 = vsel %vm1940, %v3064, %v4282
        %v4638 = vsel %vm1940, %v3065, %v4284
        %v4639 = vsel %vm1940, %v3066, %v4286
        %v4640 = vsel %vm1940, %v3067, %v4288
        %v4641 = vsel %vm1940, %v3068, %v4290
        %v4642 = vsel %vm1940, %v3069, %v4292
        %v4643 = vsel %vm1940, %v3070, %v4294
        %v4644 = vsel %vm1940, %v3071, %v4296
        %v4645 = vsel %vm1940, %v3072, %v4298
        %v4646 = vsel %vm1940, %v3073, %v4300
        %v4647 = vsel %vm1940, %v3074, %v4302
        %v4648 = vsel %vm1940, %v3075, %v4304
        %v4649 = vsel %vm1940, %v3076, %v4306
        %v4650 = vsel %vm1940, %v3077, %v4308
        %v4651 = vsel %vm1940, %v3078, %v4310
        %v4652 = vsel %vm1940, %v3079, %v4312
        %v4653 = vsel %vm1940, %v3080, %v4314
        %v4654 = vsel %vm1940, %v3081, %v4316
        %v4655 = vsel %vm1940, %v3082, %v4318
        %v4656 = vsel %vm1940, %v3083, %v4320
        %v4657 = vsel %vm1972, %v4625, %v4354
        %v4658 = vsel %vm1972, %v4626, %v4356
        %v4659 = vsel %vm1972, %v4627, %v4358
        %v4660 = vsel %vm1972, %v4628, %v4360
        %v4661 = vsel %vm1972, %v4629, %v4362
        %v4662 = vsel %vm1972, %v4630, %v4364
        %v4663 = vsel %vm1972, %v4631, %v4366
        %v4664 = vsel %vm1972, %v4632, %v4368
        %v4665 = vsel %vm1972, %v4633, %v4370
        %v4666 = vsel %vm1972, %v4634, %v4372
        %v4667 = vsel %vm1972, %v4635, %v4374
        %v4668 = vsel %vm1972, %v4636, %v4376
        %v4669 = vsel %vm1972, %v4637, %v4378
        %v4670 = vsel %vm1972, %v4638, %v4380
        %v4671 = vsel %vm1972, %v4639, %v4382
        %v4672 = vsel %vm1972, %v4640, %v4384
        %v4673 = vsel %vm1972, %v4641, %v4386
        %v4674 = vsel %vm1972, %v4642, %v4388
        %v4675 = vsel %vm1972, %v4643, %v4390
        %v4676 = vsel %vm1972, %v4644, %v4392
        %v4677 = vsel %vm1972, %v4645, %v4394
        %v4678 = vsel %vm1972, %v4646, %v4396
        %v4679 = vsel %vm1972, %v4647, %v4398
        %v4680 = vsel %vm1972, %v4648, %v4400
        %v4681 = vsel %vm1972, %v4649, %v4402
        %v4682 = vsel %vm1972, %v4650, %v4404
        %v4683 = vsel %vm1972, %v4651, %v4406
        %v4684 = vsel %vm1972, %v4652, %v4408
        %v4685 = vsel %vm1972, %v4653, %v4410
        %v4686 = vsel %vm1972, %v4654, %v4412
        %v4687 = vsel %vm1972, %v4655, %v1815
        %v4688 = vsel %vm1972, %v4656, %v1815
        %v4689 = vsel %vm2004, %v4657, %v4444
        %v4690 = vsel %vm2004, %v4658, %v4446
        %v4691 = vsel %vm2004, %v4659, %v4448
        %v4692 = vsel %vm2004, %v4660, %v4450
        %v4693 = vsel %vm2004, %v4661, %v4452
        %v4694 = vsel %vm2004, %v4662, %v4454
        %v4695 = vsel %vm2004, %v4663, %v4456
        %v4696 = vsel %vm2004, %v4664, %v4458
        %v4697 = vsel %vm2004, %v4665, %v4460
        %v4698 = vsel %vm2004, %v4666, %v4462
        %v4699 = vsel %vm2004, %v4667, %v4464
        %v4700 = vsel %vm2004, %v4668, %v4466
        %v4701 = vsel %vm2004, %v4669, %v4468
        %v4702 = vsel %vm2004, %v4670, %v4470
        %v4703 = vsel %vm2004, %v4671, %v4472
        %v4704 = vsel %vm2004, %v4672, %v4474
        %v4705 = vsel %vm2004, %v4673, %v4476
        %v4706 = vsel %vm2004, %v4674, %v4478
        %v4707 = vsel %vm2004, %v4675, %v4480
        %v4708 = vsel %vm2004, %v4676, %v4482
        %v4709 = vsel %vm2004, %v4677, %v4484
        %v4710 = vsel %vm2004, %v4678, %v4486
        %v4711 = vsel %vm2004, %v4679, %v4488
        %v4712 = vsel %vm2004, %v4680, %v4490
        %v4713 = vsel %vm2004, %v4681, %v4492
        %v4714 = vsel %vm2004, %v4682, %v4494
        %v4715 = vsel %vm2004, %v4683, %v4496
        %v4716 = vsel %vm2004, %v4684, %v4498
        %v4717 = vsel %vm2004, %v4685, %v4500
        %v4718 = vsel %vm2004, %v4686, %v4502
        %v4719 = vsel %vm2004, %v4687, %v1908
        %v4720 = vsel %vm2004, %v4688, %v1908
        %v4721 = vld [vmem:[%s13] sm:$0xff]
        %v4722 = vld [vmem:[%s13 + $0x8] sm:$0xff]
        %v4723 = vld [vmem:[%s13 + $0x10] sm:$0xff]
        %v4724 = vld [vmem:[%s13 + $0x18] sm:$0xff]
        %v4725 = vld [vmem:[%s13 + $0x20] sm:$0xff]
        %v4726 = vld [vmem:[%s13 + $0x28] sm:$0xff]
        %v4727 = vld [vmem:[%s13 + $0x30] sm:$0xff]
        %v4728 = vld [vmem:[%s13 + $0x38] sm:$0xff]
        %v4729 = vld [vmem:[%s13 + $0x40] sm:$0xff]
        %v4730 = vld [vmem:[%s13 + $0x48] sm:$0xff]
        %v4731 = vld [vmem:[%s13 + $0x50] sm:$0xff]
        %v4732 = vld [vmem:[%s13 + $0x58] sm:$0xff]
        %v4733 = vld [vmem:[%s13 + $0x60] sm:$0xff]
        %v4734 = vld [vmem:[%s13 + $0x68] sm:$0xff]
        %v4735 = vld [vmem:[%s13 + $0x70] sm:$0xff]
        %v4736 = vld [vmem:[%s13 + $0x78] sm:$0xff]
        %v4737 = vld [vmem:[%s13 + $0x80] sm:$0xff]
        %v4738 = vld [vmem:[%s13 + $0x88] sm:$0xff]
        %v4739 = vld [vmem:[%s13 + $0x90] sm:$0xff]
        %v4740 = vld [vmem:[%s13 + $0x98] sm:$0xff]
        %v4741 = vld [vmem:[%s13 + $0xa0] sm:$0xff]
        %v4742 = vld [vmem:[%s13 + $0xa8] sm:$0xff]
        %v4743 = vld [vmem:[%s13 + $0xb0] sm:$0xff]
        %v4744 = vld [vmem:[%s13 + $0xb8] sm:$0xff]
        %v4745 = vld [vmem:[%s13 + $0xc0] sm:$0xff]
        %v4746 = vld [vmem:[%s13 + $0xc8] sm:$0xff]
        %v4747 = vld [vmem:[%s13 + $0xd0] sm:$0xff]
        %v4748 = vld [vmem:[%s13 + $0xd8] sm:$0xff]
        %v4749 = vld [vmem:[%s13 + $0xe0] sm:$0xff]
        %v4750 = vld [vmem:[%s13 + $0xe8] sm:$0xff]
        %v4751 = vld [vmem:[%s13 + $0xf0] sm:$0xff]
        %v4752 = vld [vmem:[%s13 + $0xf8] sm:$0xff]
        %v4753 = vld [vmem:[%s13 + $0x100] sm:$0xff]
        %v4754 = vld [vmem:[%s13 + $0x108] sm:$0xff]
        %v4755 = vld [vmem:[%s13 + $0x110] sm:$0xff]
        %v4756 = vld [vmem:[%s13 + $0x118] sm:$0xff]
        %v4757 = vld [vmem:[%s15] sm:$0xff]
        %v4758 = vld [vmem:[%s15 + $0x8] sm:$0xff]
        %v4759 = vld [vmem:[%s15 + $0x10] sm:$0xff]
        %v4760 = vld [vmem:[%s15 + $0x18] sm:$0xff]
        %v4762 = vsel %vm1940, %v3633, 0
        %v4765 = vsel %vm1940, %v3638, 0
        %v4768 = vsel %vm1940, %v3643, 0
        %v4771 = vsel %vm1940, %v3648, 0
        %v4774 = vsel %vm1940, %v3653, 0
        %v4777 = vsel %vm1940, %v3658, 0
        %v4780 = vsel %vm1940, %v3663, 0
        %v4783 = vsel %vm1940, %v3668, 0
        %v4786 = vsel %vm1940, %v3673, 0
        %v4789 = vsel %vm1940, %v3678, 0
        %v4792 = vsel %vm1940, %v3683, 0
        %v4795 = vsel %vm1940, %v3688, 0
        %v4798 = vsel %vm1940, %v3693, 0
        %v4801 = vsel %vm1940, %v3698, 0
        %v4804 = vsel %vm1940, %v3703, 0
        %v4807 = vsel %vm1940, %v3708, 0
        %v4810 = vsel %vm1940, %v3713, 0
        %v4813 = vsel %vm1940, %v3718, 0
        %v4816 = vsel %vm1940, %v3723, 0
        %v4819 = vsel %vm1940, %v3728, 0
        %v4822 = vsel %vm1940, %v3733, 0
        %v4825 = vsel %vm1940, %v3738, 0
        %v4828 = vsel %vm1940, %v3743, 0
        %v4831 = vsel %vm1940, %v3748, 0
        %v4834 = vsel %vm1940, %v3753, 0
        %v4837 = vsel %vm1940, %v3758, 0
        %v4840 = vsel %vm1940, %v3763, 0
        %v4843 = vsel %vm1940, %v3768, 0
        %v4846 = vsel %vm1940, %v3773, 0
        %v4849 = vsel %vm1940, %v3778, 0
        %v4852 = vsel %vm1940, %v3783, 0
        %v4855 = vsel %vm1940, %v3788, 0
        %4857 = vmatprep.subr.mxu0 0.0
        %4858 = vmatpush1.msra.mxu0 0.0
        %4859 = vmatprep.subr.mxu0 0.0
        %4860 = vmatpush1.msra.mxu0 0.0
        %4861 = vmatprep.subr.mxu0 0.0
        %4862 = vmatpush1.msra.mxu0 0.0
        %4863 = vmatprep.subr.mxu0 0.0
        %4864 = vmatpush1.msra.mxu0 0.0
        %4865 = vmatprep.subr.mxu0 0.0
        %4866 = vmatpush1.msra.mxu0 0.0
        %4867 = vmatprep.subr.mxu0 0.0
        %4868 = vmatpush1.msra.mxu0 0.0
        %4869 = vmatprep.subr.mxu0 0.0
        %4870 = vmatpush1.msra.mxu0 0.0
        %4871 = vmatprep.subr.mxu0 0.0
        %4872 = vmatpush1.msra.mxu0 0.0
        %4873 = vmatprep.subr.mxu0 0.0
        %4874 = vmatpush1.msra.mxu0 0.0
        %4875 = vmatprep.subr.mxu0 0.0
        %4876 = vmatpush1.msra.mxu0 0.0
        %4877 = vmatprep.subr.mxu0 0.0
        %4878 = vmatpush1.msra.mxu0 0.0
        %4879 = vmatprep.subr.mxu0 0.0
        %4880 = vmatpush1.msra.mxu0 0.0
        %4881 = vmatprep.subr.mxu0 0.0
        %4882 = vmatpush1.msra.mxu0 %v4760
        %4883 = vmatprep.subr.mxu0 0.0
        %4884 = vmatpush1.msra.mxu0 %v4759
        %4885 = vmatprep.subr.mxu0 0.0
        %4886 = vmatpush1.msra.mxu0 %v4758
        %4887 = vmatprep.subr.mxu0 0.0
        %4888 = vmatpush1.msra.mxu0 %v4757
        %4889 = vmatprep.subr.mxu0 0.0
        %4890 = vmatpush2.msra.mxu0 0.0
        %4891 = vmatprep.subr.mxu0 0.0
        %4892 = vmatpush2.msra.mxu0 0.0
        %4893 = vmatprep.subr.mxu0 0.0
        %4894 = vmatpush2.msra.mxu0 0.0
        %4895 = vmatprep.subr.mxu0 0.0
        %4896 = vmatpush2.msra.mxu0 0.0
        %4897 = vmatprep.subr.mxu0 0.0
        %4898 = vmatpush2.msra.mxu0 0.0
        %4899 = vmatprep.subr.mxu0 0.0
        %4900 = vmatpush2.msra.mxu0 0.0
        %4901 = vmatprep.subr.mxu0 0.0
        %4902 = vmatpush2.msra.mxu0 0.0
        %4903 = vmatprep.subr.mxu0 0.0
        %4904 = vmatpush2.msra.mxu0 0.0
        %4905 = vmatprep.subr.mxu0 0.0
        %4906 = vmatpush2.msra.mxu0 0.0
        %4907 = vmatprep.subr.mxu0 0.0
        %4908 = vmatpush2.msra.mxu0 0.0
        %4909 = vmatprep.subr.mxu0 0.0
        %4910 = vmatpush2.msra.mxu0 0.0
        %4911 = vmatprep.subr.mxu0 0.0
        %4912 = vmatpush2.msra.mxu0 0.0
        %4913 = vmatprep.subr.mxu0 0.0
        %4914 = vmatpush2.msra.mxu0 0.0
        %4915 = vmatprep.subr.mxu0 0.0
        %4916 = vmatpush2.msra.mxu0 0.0
        %4917 = vmatprep.subr.mxu0 0.0
        %4918 = vmatpush2.msra.mxu0 0.0
        %4919 = vmatprep.subr.mxu0 0.0
        %4920 = vmatpush2.msra.mxu0 0.0
        %4921 = vmatprep.mubr.f32.mxu0 0.0
        %4922 = vmatmul.mubr.f32.gmra.mxu0 %v4762
        %v4923 = vpop.f32.mrf.mxu0
        %v4924 = vadd.f32 0.0, %v4923
        %v4925 = vpop.f32.mrf.mxu0
        %4926 = vmatprep.mubr.f32.mxu0 0.0
        %4927 = vmatmul.mubr.f32.gmra.mxu0 %v4765
        %v4928 = vpop.f32.mrf.mxu0
        %v4929 = vadd.f32 0.0, %v4928
        %v4930 = vpop.f32.mrf.mxu0
        %4931 = vmatprep.mubr.f32.mxu0 0.0
        %4932 = vmatmul.mubr.f32.gmra.mxu0 %v4768
        %v4933 = vpop.f32.mrf.mxu0
        %v4934 = vadd.f32 0.0, %v4933
        %v4935 = vpop.f32.mrf.mxu0
        %4936 = vmatprep.mubr.f32.mxu0 0.0
        %4937 = vmatmul.mubr.f32.gmra.mxu0 %v4771
        %v4938 = vpop.f32.mrf.mxu0
        %v4939 = vadd.f32 0.0, %v4938
        %v4940 = vpop.f32.mrf.mxu0
        %4941 = vmatprep.mubr.f32.mxu0 0.0
        %4942 = vmatmul.mubr.f32.gmra.mxu0 %v4774
        %v4943 = vpop.f32.mrf.mxu0
        %v4944 = vadd.f32 0.0, %v4943
        %v4945 = vpop.f32.mrf.mxu0
        %4946 = vmatprep.mubr.f32.mxu0 0.0
        %4947 = vmatmul.mubr.f32.gmra.mxu0 %v4777
        %v4948 = vpop.f32.mrf.mxu0
        %v4949 = vadd.f32 0.0, %v4948
        %v4950 = vpop.f32.mrf.mxu0
        %4951 = vmatprep.mubr.f32.mxu0 0.0
        %4952 = vmatmul.mubr.f32.gmra.mxu0 %v4780
        %v4953 = vpop.f32.mrf.mxu0
        %v4954 = vadd.f32 0.0, %v4953
        %v4955 = vpop.f32.mrf.mxu0
        %4956 = vmatprep.mubr.f32.mxu0 0.0
        %4957 = vmatmul.mubr.f32.gmra.mxu0 %v4783
        %v4958 = vpop.f32.mrf.mxu0
        %v4959 = vadd.f32 0.0, %v4958
        %v4960 = vpop.f32.mrf.mxu0
        %4961 = vmatprep.mubr.f32.mxu0 0.0
        %4962 = vmatmul.mubr.f32.gmra.mxu0 %v4786
        %v4963 = vpop.f32.mrf.mxu0
        %v4964 = vadd.f32 0.0, %v4963
        %v4965 = vpop.f32.mrf.mxu0
        %4966 = vmatprep.mubr.f32.mxu0 0.0
        %4967 = vmatmul.mubr.f32.gmra.mxu0 %v4789
        %v4968 = vpop.f32.mrf.mxu0
        %v4969 = vadd.f32 0.0, %v4968
        %v4970 = vpop.f32.mrf.mxu0
        %4971 = vmatprep.mubr.f32.mxu0 0.0
        %4972 = vmatmul.mubr.f32.gmra.mxu0 %v4792
        %v4973 = vpop.f32.mrf.mxu0
        %v4974 = vadd.f32 0.0, %v4973
        %v4975 = vpop.f32.mrf.mxu0
        %4976 = vmatprep.mubr.f32.mxu0 0.0
        %4977 = vmatmul.mubr.f32.gmra.mxu0 %v4795
        %v4978 = vpop.f32.mrf.mxu0
        %v4979 = vadd.f32 0.0, %v4978
        %v4980 = vpop.f32.mrf.mxu0
        %4981 = vmatprep.mubr.f32.mxu0 0.0
        %4982 = vmatmul.mubr.f32.gmra.mxu0 %v4798
        %v4983 = vpop.f32.mrf.mxu0
        %v4984 = vadd.f32 0.0, %v4983
        %v4985 = vpop.f32.mrf.mxu0
        %4986 = vmatprep.mubr.f32.mxu0 0.0
        %4987 = vmatmul.mubr.f32.gmra.mxu0 %v4801
        %v4988 = vpop.f32.mrf.mxu0
        %v4989 = vadd.f32 0.0, %v4988
        %v4990 = vpop.f32.mrf.mxu0
        %4991 = vmatprep.mubr.f32.mxu0 0.0
        %4992 = vmatmul.mubr.f32.gmra.mxu0 %v4804
        %v4993 = vpop.f32.mrf.mxu0
        %v4994 = vadd.f32 0.0, %v4993
        %v4995 = vpop.f32.mrf.mxu0
        %4996 = vmatprep.mubr.f32.mxu0 0.0
        %4997 = vmatmul.mubr.f32.gmra.mxu0 %v4807
        %v4998 = vpop.f32.mrf.mxu0
        %v4999 = vadd.f32 0.0, %v4998
        %v5000 = vpop.f32.mrf.mxu0
        %5001 = vmatprep.mubr.f32.mxu0 0.0
        %5002 = vmatmul.mubr.f32.gmra.mxu0 %v4810
        %v5003 = vpop.f32.mrf.mxu0
        %v5004 = vadd.f32 0.0, %v5003
        %v5005 = vpop.f32.mrf.mxu0
        %5006 = vmatprep.mubr.f32.mxu0 0.0
        %5007 = vmatmul.mubr.f32.gmra.mxu0 %v4813
        %v5008 = vpop.f32.mrf.mxu0
        %v5009 = vadd.f32 0.0, %v5008
        %v5010 = vpop.f32.mrf.mxu0
        %5011 = vmatprep.mubr.f32.mxu0 0.0
        %5012 = vmatmul.mubr.f32.gmra.mxu0 %v4816
        %v5013 = vpop.f32.mrf.mxu0
        %v5014 = vadd.f32 0.0, %v5013
        %v5015 = vpop.f32.mrf.mxu0
        %5016 = vmatprep.mubr.f32.mxu0 0.0
        %5017 = vmatmul.mubr.f32.gmra.mxu0 %v4819
        %v5018 = vpop.f32.mrf.mxu0
        %v5019 = vadd.f32 0.0, %v5018
        %v5020 = vpop.f32.mrf.mxu0
        %5021 = vmatprep.mubr.f32.mxu0 0.0
        %5022 = vmatmul.mubr.f32.gmra.mxu0 %v4822
        %v5023 = vpop.f32.mrf.mxu0
        %v5024 = vadd.f32 0.0, %v5023
        %v5025 = vpop.f32.mrf.mxu0
        %5026 = vmatprep.mubr.f32.mxu0 0.0
        %5027 = vmatmul.mubr.f32.gmra.mxu0 %v4825
        %v5028 = vpop.f32.mrf.mxu0
        %v5029 = vadd.f32 0.0, %v5028
        %v5030 = vpop.f32.mrf.mxu0
        %5031 = vmatprep.mubr.f32.mxu0 0.0
        %5032 = vmatmul.mubr.f32.gmra.mxu0 %v4828
        %v5033 = vpop.f32.mrf.mxu0
        %v5034 = vadd.f32 0.0, %v5033
        %v5035 = vpop.f32.mrf.mxu0
        %5036 = vmatprep.mubr.f32.mxu0 0.0
        %5037 = vmatmul.mubr.f32.gmra.mxu0 %v4831
        %v5038 = vpop.f32.mrf.mxu0
        %v5039 = vadd.f32 0.0, %v5038
        %v5040 = vpop.f32.mrf.mxu0
        %5041 = vmatprep.mubr.f32.mxu0 0.0
        %5042 = vmatmul.mubr.f32.gmra.mxu0 %v4834
        %v5043 = vpop.f32.mrf.mxu0
        %v5044 = vadd.f32 0.0, %v5043
        %v5045 = vpop.f32.mrf.mxu0
        %5046 = vmatprep.mubr.f32.mxu0 0.0
        %5047 = vmatmul.mubr.f32.gmra.mxu0 %v4837
        %v5048 = vpop.f32.mrf.mxu0
        %v5049 = vadd.f32 0.0, %v5048
        %v5050 = vpop.f32.mrf.mxu0
        %5051 = vmatprep.mubr.f32.mxu0 0.0
        %5052 = vmatmul.mubr.f32.gmra.mxu0 %v4840
        %v5053 = vpop.f32.mrf.mxu0
        %v5054 = vadd.f32 0.0, %v5053
        %v5055 = vpop.f32.mrf.mxu0
        %5056 = vmatprep.mubr.f32.mxu0 0.0
        %5057 = vmatmul.mubr.f32.gmra.mxu0 %v4843
        %v5058 = vpop.f32.mrf.mxu0
        %v5059 = vadd.f32 0.0, %v5058
        %v5060 = vpop.f32.mrf.mxu0
        %5061 = vmatprep.mubr.f32.mxu0 0.0
        %5062 = vmatmul.mubr.f32.gmra.mxu0 %v4846
        %v5063 = vpop.f32.mrf.mxu0
        %v5064 = vadd.f32 0.0, %v5063
        %v5065 = vpop.f32.mrf.mxu0
        %5066 = vmatprep.mubr.f32.mxu0 0.0
        %5067 = vmatmul.mubr.f32.gmra.mxu0 %v4849
        %v5068 = vpop.f32.mrf.mxu0
        %v5069 = vadd.f32 0.0, %v5068
        %v5070 = vpop.f32.mrf.mxu0
        %5071 = vmatprep.mubr.f32.mxu0 0.0
        %5072 = vmatmul.mubr.f32.gmra.mxu0 %v4852
        %v5073 = vpop.f32.mrf.mxu0
        %v5074 = vadd.f32 0.0, %v5073
        %v5075 = vpop.f32.mrf.mxu0
        %5076 = vmatprep.mubr.f32.mxu0 0.0
        %5077 = vmatmul.mubr.f32.gmra.mxu0 %v4855
        %v5078 = vpop.f32.mrf.mxu0
        %v5079 = vadd.f32 0.0, %v5078
        %v5080 = vpop.f32.mrf.mxu0
        %5081 = vdwg.mxu0
        %v5082 = vsel %vm1940, %v3917, 0
        %v5084 = vsel %vm1940, %v3918, 0
        %v5086 = vsel %vm1940, %v3921, 0
        %v5088 = vsel %vm1940, %v3922, 0
        %v5090 = vsel %vm1940, %v3925, 0
        %v5092 = vsel %vm1940, %v3926, 0
        %v5094 = vsel %vm1940, %v3929, 0
        %v5096 = vsel %vm1940, %v3930, 0
        %v5098 = vsel %vm1940, %v3933, 0
        %v5100 = vsel %vm1940, %v3934, 0
        %v5102 = vsel %vm1940, %v3937, 0
        %v5104 = vsel %vm1940, %v3938, 0
        %v5106 = vsel %vm1940, %v3941, 0
        %v5108 = vsel %vm1940, %v3942, 0
        %v5110 = vsel %vm1940, %v3945, 0
        %v5112 = vsel %vm1940, %v3946, 0
        %v5114 = vsel %vm1940, %v3949, 0
        %v5116 = vsel %vm1940, %v3950, 0
        %v5118 = vsel %vm1940, %v3953, 0
        %v5120 = vsel %vm1940, %v3954, 0
        %v5122 = vsel %vm1940, %v3957, 0
        %v5124 = vsel %vm1940, %v3958, 0
        %v5126 = vsel %vm1940, %v3961, 0
        %v5128 = vsel %vm1940, %v3962, 0
        %v5130 = vsel %vm1940, %v3965, 0
        %v5132 = vsel %vm1940, %v3966, 0
        %v5134 = vsel %vm1940, %v3969, 0
        %v5136 = vsel %vm1940, %v3970, 0
        %v5138 = vsel %vm1940, %v3979, 0
        %v5140 = vsel %vm1940, %v3980, 0
        %5142 = vmatprep.subr.mxu0 0.0
        %5143 = vmatpush1.msra.mxu0 %v4736
        %5144 = vmatprep.subr.mxu0 0.0
        %5145 = vmatpush1.msra.mxu0 %v4735
        %5146 = vmatprep.subr.mxu0 0.0
        %5147 = vmatpush1.msra.mxu0 %v4734
        %5148 = vmatprep.subr.mxu0 0.0
        %5149 = vmatpush1.msra.mxu0 %v4733
        %5150 = vmatprep.subr.mxu0 0.0
        %5151 = vmatpush1.msra.mxu0 %v4732
        %5152 = vmatprep.subr.mxu0 0.0
        %5153 = vmatpush1.msra.mxu0 %v4731
        %5154 = vmatprep.subr.mxu0 0.0
        %5155 = vmatpush1.msra.mxu0 %v4730
        %5156 = vmatprep.subr.mxu0 0.0
        %5157 = vmatpush1.msra.mxu0 %v4729
        %5158 = vmatprep.subr.mxu0 0.0
        %5159 = vmatpush1.msra.mxu0 %v4728
        %5160 = vmatprep.subr.mxu0 0.0
        %5161 = vmatpush1.msra.mxu0 %v4727
        %5162 = vmatprep.subr.mxu0 0.0
        %5163 = vmatpush1.msra.mxu0 %v4726
        %5164 = vmatprep.subr.mxu0 0.0
        %5165 = vmatpush1.msra.mxu0 %v4725
        %5166 = vmatprep.subr.mxu0 0.0
        %5167 = vmatpush1.msra.mxu0 %v4724
        %5168 = vmatprep.subr.mxu0 0.0
        %5169 = vmatpush1.msra.mxu0 %v4723
        %5170 = vmatprep.subr.mxu0 0.0
        %5171 = vmatpush1.msra.mxu0 %v4722
        %5172 = vmatprep.subr.mxu0 0.0
        %5173 = vmatpush1.msra.mxu0 %v4721
        %5174 = vmatprep.subr.mxu0 0.0
        %5175 = vmatpush2.msra.mxu0 %v4752
        %5176 = vmatprep.subr.mxu0 0.0
        %5177 = vmatpush2.msra.mxu0 %v4751
        %5178 = vmatprep.subr.mxu0 0.0
        %5179 = vmatpush2.msra.mxu0 %v4750
        %5180 = vmatprep.subr.mxu0 0.0
        %5181 = vmatpush2.msra.mxu0 %v4749
        %5182 = vmatprep.subr.mxu0 0.0
        %5183 = vmatpush2.msra.mxu0 %v4748
        %5184 = vmatprep.subr.mxu0 0.0
        %5185 = vmatpush2.msra.mxu0 %v4747
        %5186 = vmatprep.subr.mxu0 0.0
        %5187 = vmatpush2.msra.mxu0 %v4746
        %5188 = vmatprep.subr.mxu0 0.0
        %5189 = vmatpush2.msra.mxu0 %v4745
        %5190 = vmatprep.subr.mxu0 0.0
        %5191 = vmatpush2.msra.mxu0 %v4744
        %5192 = vmatprep.subr.mxu0 0.0
        %5193 = vmatpush2.msra.mxu0 %v4743
        %5194 = vmatprep.subr.mxu0 0.0
        %5195 = vmatpush2.msra.mxu0 %v4742
        %5196 = vmatprep.subr.mxu0 0.0
        %5197 = vmatpush2.msra.mxu0 %v4741
        %5198 = vmatprep.subr.mxu0 0.0
        %5199 = vmatpush2.msra.mxu0 %v4740
        %5200 = vmatprep.subr.mxu0 0.0
        %5201 = vmatpush2.msra.mxu0 %v4739
        %5202 = vmatprep.subr.mxu0 0.0
        %5203 = vmatpush2.msra.mxu0 %v4738
        %5204 = vmatprep.subr.mxu0 0.0
        %5205 = vmatpush2.msra.mxu0 %v4737
        %5206 = vmatprep.mubr.f32.mxu0 %v4689
        %5207 = vmatmul.mubr.f32.gmra.mxu0 %v4593
        %v5208 = vpop.f32.mrf.mxu0
        %v5209 = vadd.f32 %v4924, %v5208
        %v5210 = vpop.f32.mrf.mxu0
        %5211 = vmatprep.mubr.f32.mxu0 %v4690
        %5212 = vmatmul.mubr.f32.gmra.mxu0 %v4594
        %v5213 = vpop.f32.mrf.mxu0
        %v5214 = vadd.f32 %v4929, %v5213
        %v5215 = vpop.f32.mrf.mxu0
        %5216 = vmatprep.mubr.f32.mxu0 %v4691
        %5217 = vmatmul.mubr.f32.gmra.mxu0 %v4595
        %v5218 = vpop.f32.mrf.mxu0
        %v5219 = vadd.f32 %v4934, %v5218
        %v5220 = vpop.f32.mrf.mxu0
        %5221 = vmatprep.mubr.f32.mxu0 %v4692
        %5222 = vmatmul.mubr.f32.gmra.mxu0 %v4596
        %v5223 = vpop.f32.mrf.mxu0
        %v5224 = vadd.f32 %v4939, %v5223
        %v5225 = vpop.f32.mrf.mxu0
        %5226 = vmatprep.mubr.f32.mxu0 %v4693
        %5227 = vmatmul.mubr.f32.gmra.mxu0 %v4597
        %v5228 = vpop.f32.mrf.mxu0
        %v5229 = vadd.f32 %v4944, %v5228
        %v5230 = vpop.f32.mrf.mxu0
        %5231 = vmatprep.mubr.f32.mxu0 %v4694
        %5232 = vmatmul.mubr.f32.gmra.mxu0 %v4598
        %v5233 = vpop.f32.mrf.mxu0
        %v5234 = vadd.f32 %v4949, %v5233
        %v5235 = vpop.f32.mrf.mxu0
        %5236 = vmatprep.mubr.f32.mxu0 %v4695
        %5237 = vmatmul.mubr.f32.gmra.mxu0 %v4599
        %v5238 = vpop.f32.mrf.mxu0
        %v5239 = vadd.f32 %v4954, %v5238
        %v5240 = vpop.f32.mrf.mxu0
        %5241 = vmatprep.mubr.f32.mxu0 %v4696
        %5242 = vmatmul.mubr.f32.gmra.mxu0 %v4600
        %v5243 = vpop.f32.mrf.mxu0
        %v5244 = vadd.f32 %v4959, %v5243
        %v5245 = vpop.f32.mrf.mxu0
        %5246 = vmatprep.mubr.f32.mxu0 %v4697
        %5247 = vmatmul.mubr.f32.gmra.mxu0 %v4601
        %v5248 = vpop.f32.mrf.mxu0
        %v5249 = vadd.f32 %v4964, %v5248
        %v5250 = vpop.f32.mrf.mxu0
        %5251 = vmatprep.mubr.f32.mxu0 %v4698
        %5252 = vmatmul.mubr.f32.gmra.mxu0 %v4602
        %v5253 = vpop.f32.mrf.mxu0
        %v5254 = vadd.f32 %v4969, %v5253
        %v5255 = vpop.f32.mrf.mxu0
        %5256 = vmatprep.mubr.f32.mxu0 %v4699
        %5257 = vmatmul.mubr.f32.gmra.mxu0 %v4603
        %v5258 = vpop.f32.mrf.mxu0
        %v5259 = vadd.f32 %v4974, %v5258
        %v5260 = vpop.f32.mrf.mxu0
        %5261 = vmatprep.mubr.f32.mxu0 %v4700
        %5262 = vmatmul.mubr.f32.gmra.mxu0 %v4604
        %v5263 = vpop.f32.mrf.mxu0
        %v5264 = vadd.f32 %v4979, %v5263
        %v5265 = vpop.f32.mrf.mxu0
        %5266 = vmatprep.mubr.f32.mxu0 %v4701
        %5267 = vmatmul.mubr.f32.gmra.mxu0 %v4605
        %v5268 = vpop.f32.mrf.mxu0
        %v5269 = vadd.f32 %v4984, %v5268
        %v5270 = vpop.f32.mrf.mxu0
        %5271 = vmatprep.mubr.f32.mxu0 %v4702
        %5272 = vmatmul.mubr.f32.gmra.mxu0 %v4606
        %v5273 = vpop.f32.mrf.mxu0
        %v5274 = vadd.f32 %v4989, %v5273
        %v5275 = vpop.f32.mrf.mxu0
        %5276 = vmatprep.mubr.f32.mxu0 %v4703
        %5277 = vmatmul.mubr.f32.gmra.mxu0 %v4607
        %v5278 = vpop.f32.mrf.mxu0
        %v5279 = vadd.f32 %v4994, %v5278
        %v5280 = vpop.f32.mrf.mxu0
        %5281 = vmatprep.mubr.f32.mxu0 %v4704
        %5282 = vmatmul.mubr.f32.gmra.mxu0 %v4608
        %v5283 = vpop.f32.mrf.mxu0
        %v5284 = vadd.f32 %v4999, %v5283
        %v5285 = vpop.f32.mrf.mxu0
        %5286 = vmatprep.mubr.f32.mxu0 %v4705
        %5287 = vmatmul.mubr.f32.gmra.mxu0 %v4609
        %v5288 = vpop.f32.mrf.mxu0
        %v5289 = vadd.f32 %v5004, %v5288
        %v5290 = vpop.f32.mrf.mxu0
        %5291 = vmatprep.mubr.f32.mxu0 %v4706
        %5292 = vmatmul.mubr.f32.gmra.mxu0 %v4610
        %v5293 = vpop.f32.mrf.mxu0
        %v5294 = vadd.f32 %v5009, %v5293
        %v5295 = vpop.f32.mrf.mxu0
        %5296 = vmatprep.mubr.f32.mxu0 %v4707
        %5297 = vmatmul.mubr.f32.gmra.mxu0 %v4611
        %v5298 = vpop.f32.mrf.mxu0
        %v5299 = vadd.f32 %v5014, %v5298
        %v5300 = vpop.f32.mrf.mxu0
        %5301 = vmatprep.mubr.f32.mxu0 %v4708
        %5302 = vmatmul.mubr.f32.gmra.mxu0 %v4612
        %v5303 = vpop.f32.mrf.mxu0
        %v5304 = vadd.f32 %v5019, %v5303
        %v5305 = vpop.f32.mrf.mxu0
        %5306 = vmatprep.mubr.f32.mxu0 %v4709
        %5307 = vmatmul.mubr.f32.gmra.mxu0 %v4613
        %v5308 = vpop.f32.mrf.mxu0
        %v5309 = vadd.f32 %v5024, %v5308
        %v5310 = vpop.f32.mrf.mxu0
        %5311 = vmatprep.mubr.f32.mxu0 %v4710
        %5312 = vmatmul.mubr.f32.gmra.mxu0 %v4614
        %v5313 = vpop.f32.mrf.mxu0
        %v5314 = vadd.f32 %v5029, %v5313
        %v5315 = vpop.f32.mrf.mxu0
        %5316 = vmatprep.mubr.f32.mxu0 %v4711
        %5317 = vmatmul.mubr.f32.gmra.mxu0 %v4615
        %v5318 = vpop.f32.mrf.mxu0
        %v5319 = vadd.f32 %v5034, %v5318
        %v5320 = vpop.f32.mrf.mxu0
        %5321 = vmatprep.mubr.f32.mxu0 %v4712
        %5322 = vmatmul.mubr.f32.gmra.mxu0 %v4616
        %v5323 = vpop.f32.mrf.mxu0
        %v5324 = vadd.f32 %v5039, %v5323
        %v5325 = vpop.f32.mrf.mxu0
        %5326 = vmatprep.mubr.f32.mxu0 %v4713
        %5327 = vmatmul.mubr.f32.gmra.mxu0 %v4617
        %v5328 = vpop.f32.mrf.mxu0
        %v5329 = vadd.f32 %v5044, %v5328
        %v5330 = vpop.f32.mrf.mxu0
        %5331 = vmatprep.mubr.f32.mxu0 %v4714
        %5332 = vmatmul.mubr.f32.gmra.mxu0 %v4618
        %v5333 = vpop.f32.mrf.mxu0
        %v5334 = vadd.f32 %v5049, %v5333
        %v5335 = vpop.f32.mrf.mxu0
        %5336 = vmatprep.mubr.f32.mxu0 %v4715
        %5337 = vmatmul.mubr.f32.gmra.mxu0 %v4619
        %v5338 = vpop.f32.mrf.mxu0
        %v5339 = vadd.f32 %v5054, %v5338
        %v5340 = vpop.f32.mrf.mxu0
        %5341 = vmatprep.mubr.f32.mxu0 %v4716
        %5342 = vmatmul.mubr.f32.gmra.mxu0 %v4620
        %v5343 = vpop.f32.mrf.mxu0
        %v5344 = vadd.f32 %v5059, %v5343
        %v5345 = vpop.f32.mrf.mxu0
        %5346 = vmatprep.mubr.f32.mxu0 %v4717
        %5347 = vmatmul.mubr.f32.gmra.mxu0 %v4621
        %v5348 = vpop.f32.mrf.mxu0
        %v5349 = vadd.f32 %v5064, %v5348
        %v5350 = vpop.f32.mrf.mxu0
        %5351 = vmatprep.mubr.f32.mxu0 %v4718
        %5352 = vmatmul.mubr.f32.gmra.mxu0 %v4622
        %v5353 = vpop.f32.mrf.mxu0
        %v5354 = vadd.f32 %v5069, %v5353
        %v5355 = vpop.f32.mrf.mxu0
        %5356 = vmatprep.mubr.f32.mxu0 %v4719
        %5357 = vmatmul.mubr.f32.gmra.mxu0 %v4623
        %v5358 = vpop.f32.mrf.mxu0
        %v5359 = vadd.f32 %v5074, %v5358
        %v5360 = vpop.f32.mrf.mxu0
        %5361 = vmatprep.mubr.f32.mxu0 %v4720
        %5362 = vmatmul.mubr.f32.gmra.mxu0 %v4624
        %v5363 = vpop.f32.mrf.mxu0
        %v5364 = vadd.f32 %v5079, %v5363
        %v5365 = vpop.f32.mrf.mxu0
        %5366 = vdwg.mxu0
        %5367 = vmatprep.subr.mxu0 0.0
        %5368 = vmatpush1.msra.mxu0 0.0
        %5369 = vmatprep.subr.mxu0 0.0
        %5370 = vmatpush1.msra.mxu0 0.0
        %5371 = vmatprep.subr.mxu0 0.0
        %5372 = vmatpush1.msra.mxu0 0.0
        %5373 = vmatprep.subr.mxu0 0.0
        %5374 = vmatpush1.msra.mxu0 0.0
        %5375 = vmatprep.subr.mxu0 0.0
        %5376 = vmatpush1.msra.mxu0 0.0
        %5377 = vmatprep.subr.mxu0 0.0
        %5378 = vmatpush1.msra.mxu0 0.0
        %5379 = vmatprep.subr.mxu0 0.0
        %5380 = vmatpush1.msra.mxu0 0.0
        %5381 = vmatprep.subr.mxu0 0.0
        %5382 = vmatpush1.msra.mxu0 0.0
        %5383 = vmatprep.subr.mxu0 0.0
        %5384 = vmatpush1.msra.mxu0 0.0
        %5385 = vmatprep.subr.mxu0 0.0
        %5386 = vmatpush1.msra.mxu0 0.0
        %5387 = vmatprep.subr.mxu0 0.0
        %5388 = vmatpush1.msra.mxu0 0.0
        %5389 = vmatprep.subr.mxu0 0.0
        %5390 = vmatpush1.msra.mxu0 0.0
        %5391 = vmatprep.subr.mxu0 0.0
        %5392 = vmatpush1.msra.mxu0 %v4756
        %5393 = vmatprep.subr.mxu0 0.0
        %5394 = vmatpush1.msra.mxu0 %v4755
        %5395 = vmatprep.subr.mxu0 0.0
        %5396 = vmatpush1.msra.mxu0 %v4754
        %5397 = vmatprep.subr.mxu0 0.0
        %5398 = vmatpush1.msra.mxu0 %v4753
        %5399 = vmatprep.subr.mxu0 0.0
        %5400 = vmatpush2.msra.mxu0 0.0
        %5401 = vmatprep.subr.mxu0 0.0
        %5402 = vmatpush2.msra.mxu0 0.0
        %5403 = vmatprep.subr.mxu0 0.0
        %5404 = vmatpush2.msra.mxu0 0.0
        %5405 = vmatprep.subr.mxu0 0.0
        %5406 = vmatpush2.msra.mxu0 0.0
        %5407 = vmatprep.subr.mxu0 0.0
        %5408 = vmatpush2.msra.mxu0 0.0
        %5409 = vmatprep.subr.mxu0 0.0
        %5410 = vmatpush2.msra.mxu0 0.0
        %5411 = vmatprep.subr.mxu0 0.0
        %5412 = vmatpush2.msra.mxu0 0.0
        %5413 = vmatprep.subr.mxu0 0.0
        %5414 = vmatpush2.msra.mxu0 0.0
        %5415 = vmatprep.subr.mxu0 0.0
        %5416 = vmatpush2.msra.mxu0 0.0
        %5417 = vmatprep.subr.mxu0 0.0
        %5418 = vmatpush2.msra.mxu0 0.0
        %5419 = vmatprep.subr.mxu0 0.0
        %5420 = vmatpush2.msra.mxu0 0.0
        %5421 = vmatprep.subr.mxu0 0.0
        %5422 = vmatpush2.msra.mxu0 0.0
        %5423 = vmatprep.subr.mxu0 0.0
        %5424 = vmatpush2.msra.mxu0 0.0
        %5425 = vmatprep.subr.mxu0 0.0
        %5426 = vmatpush2.msra.mxu0 0.0
        %5427 = vmatprep.subr.mxu0 0.0
        %5428 = vmatpush2.msra.mxu0 0.0
        %5429 = vmatprep.subr.mxu0 0.0
        %5430 = vmatpush2.msra.mxu0 0.0
        %5431 = vmatprep.mubr.f32.mxu0 0.0
        %5432 = vmatmul.mubr.f32.gmra.mxu0 %v5082
        %v5433 = vpop.f32.mrf.mxu0
        %v5434 = vadd.f32 %v5209, %v5433
        %v5435 = vpop.f32.mrf.mxu0
        %5436 = vmatprep.mubr.f32.mxu0 0.0
        %5437 = vmatmul.mubr.f32.gmra.mxu0 %v5084
        %v5438 = vpop.f32.mrf.mxu0
        %v5439 = vadd.f32 %v5214, %v5438
        %v5440 = vpop.f32.mrf.mxu0
        %5441 = vmatprep.mubr.f32.mxu0 0.0
        %5442 = vmatmul.mubr.f32.gmra.mxu0 %v5086
        %v5443 = vpop.f32.mrf.mxu0
        %v5444 = vadd.f32 %v5219, %v5443
        %v5445 = vpop.f32.mrf.mxu0
        %5446 = vmatprep.mubr.f32.mxu0 0.0
        %5447 = vmatmul.mubr.f32.gmra.mxu0 %v5088
        %v5448 = vpop.f32.mrf.mxu0
        %v5449 = vadd.f32 %v5224, %v5448
        %v5450 = vpop.f32.mrf.mxu0
        %5451 = vmatprep.mubr.f32.mxu0 0.0
        %5452 = vmatmul.mubr.f32.gmra.mxu0 %v5090
        %v5453 = vpop.f32.mrf.mxu0
        %v5454 = vadd.f32 %v5229, %v5453
        %v5455 = vpop.f32.mrf.mxu0
        %5456 = vmatprep.mubr.f32.mxu0 0.0
        %5457 = vmatmul.mubr.f32.gmra.mxu0 %v5092
        %v5458 = vpop.f32.mrf.mxu0
        %v5459 = vadd.f32 %v5234, %v5458
        %v5460 = vpop.f32.mrf.mxu0
        %5461 = vmatprep.mubr.f32.mxu0 0.0
        %5462 = vmatmul.mubr.f32.gmra.mxu0 %v5094
        %v5463 = vpop.f32.mrf.mxu0
        %v5464 = vadd.f32 %v5239, %v5463
        %v5465 = vpop.f32.mrf.mxu0
        %5466 = vmatprep.mubr.f32.mxu0 0.0
        %5467 = vmatmul.mubr.f32.gmra.mxu0 %v5096
        %v5468 = vpop.f32.mrf.mxu0
        %v5469 = vadd.f32 %v5244, %v5468
        %v5470 = vpop.f32.mrf.mxu0
        %5471 = vmatprep.mubr.f32.mxu0 0.0
        %5472 = vmatmul.mubr.f32.gmra.mxu0 %v5098
        %v5473 = vpop.f32.mrf.mxu0
        %v5474 = vadd.f32 %v5249, %v5473
        %v5475 = vpop.f32.mrf.mxu0
        %5476 = vmatprep.mubr.f32.mxu0 0.0
        %5477 = vmatmul.mubr.f32.gmra.mxu0 %v5100
        %v5478 = vpop.f32.mrf.mxu0
        %v5479 = vadd.f32 %v5254, %v5478
        %v5480 = vpop.f32.mrf.mxu0
        %5481 = vmatprep.mubr.f32.mxu0 0.0
        %5482 = vmatmul.mubr.f32.gmra.mxu0 %v5102
        %v5483 = vpop.f32.mrf.mxu0
        %v5484 = vadd.f32 %v5259, %v5483
        %v5485 = vpop.f32.mrf.mxu0
        %5486 = vmatprep.mubr.f32.mxu0 0.0
        %5487 = vmatmul.mubr.f32.gmra.mxu0 %v5104
        %v5488 = vpop.f32.mrf.mxu0
        %v5489 = vadd.f32 %v5264, %v5488
        %v5490 = vpop.f32.mrf.mxu0
        %5491 = vmatprep.mubr.f32.mxu0 0.0
        %5492 = vmatmul.mubr.f32.gmra.mxu0 %v5106
        %v5493 = vpop.f32.mrf.mxu0
        %v5494 = vadd.f32 %v5269, %v5493
        %v5495 = vpop.f32.mrf.mxu0
        %5496 = vmatprep.mubr.f32.mxu0 0.0
        %5497 = vmatmul.mubr.f32.gmra.mxu0 %v5108
        %v5498 = vpop.f32.mrf.mxu0
        %v5499 = vadd.f32 %v5274, %v5498
        %v5500 = vpop.f32.mrf.mxu0
        %5501 = vmatprep.mubr.f32.mxu0 0.0
        %5502 = vmatmul.mubr.f32.gmra.mxu0 %v5110
        %v5503 = vpop.f32.mrf.mxu0
        %v5504 = vadd.f32 %v5279, %v5503
        %v5505 = vpop.f32.mrf.mxu0
        %5506 = vmatprep.mubr.f32.mxu0 0.0
        %5507 = vmatmul.mubr.f32.gmra.mxu0 %v5112
        %v5508 = vpop.f32.mrf.mxu0
        %v5509 = vadd.f32 %v5284, %v5508
        %v5510 = vpop.f32.mrf.mxu0
        %5511 = vmatprep.mubr.f32.mxu0 0.0
        %5512 = vmatmul.mubr.f32.gmra.mxu0 %v5114
        %v5513 = vpop.f32.mrf.mxu0
        %v5514 = vadd.f32 %v5289, %v5513
        %v5515 = vpop.f32.mrf.mxu0
        %5516 = vmatprep.mubr.f32.mxu0 0.0
        %5517 = vmatmul.mubr.f32.gmra.mxu0 %v5116
        %v5518 = vpop.f32.mrf.mxu0
        %v5519 = vadd.f32 %v5294, %v5518
        %v5520 = vpop.f32.mrf.mxu0
        %5521 = vmatprep.mubr.f32.mxu0 0.0
        %5522 = vmatmul.mubr.f32.gmra.mxu0 %v5118
        %v5523 = vpop.f32.mrf.mxu0
        %v5524 = vadd.f32 %v5299, %v5523
        %v5525 = vpop.f32.mrf.mxu0
        %5526 = vmatprep.mubr.f32.mxu0 0.0
        %5527 = vmatmul.mubr.f32.gmra.mxu0 %v5120
        %v5528 = vpop.f32.mrf.mxu0
        %v5529 = vadd.f32 %v5304, %v5528
        %v5530 = vpop.f32.mrf.mxu0
        %5531 = vmatprep.mubr.f32.mxu0 0.0
        %5532 = vmatmul.mubr.f32.gmra.mxu0 %v5122
        %v5533 = vpop.f32.mrf.mxu0
        %v5534 = vadd.f32 %v5309, %v5533
        %v5535 = vpop.f32.mrf.mxu0
        %5536 = vmatprep.mubr.f32.mxu0 0.0
        %5537 = vmatmul.mubr.f32.gmra.mxu0 %v5124
        %v5538 = vpop.f32.mrf.mxu0
        %v5539 = vadd.f32 %v5314, %v5538
        %v5540 = vpop.f32.mrf.mxu0
        %5541 = vmatprep.mubr.f32.mxu0 0.0
        %5542 = vmatmul.mubr.f32.gmra.mxu0 %v5126
        %v5543 = vpop.f32.mrf.mxu0
        %v5544 = vadd.f32 %v5319, %v5543
        %v5545 = vpop.f32.mrf.mxu0
        %5546 = vmatprep.mubr.f32.mxu0 0.0
        %5547 = vmatmul.mubr.f32.gmra.mxu0 %v5128
        %v5548 = vpop.f32.mrf.mxu0
        %v5549 = vadd.f32 %v5324, %v5548
        %v5550 = vpop.f32.mrf.mxu0
        %5551 = vmatprep.mubr.f32.mxu0 0.0
        %5552 = vmatmul.mubr.f32.gmra.mxu0 %v5130
        %v5553 = vpop.f32.mrf.mxu0
        %v5554 = vadd.f32 %v5329, %v5553
        %v5555 = vpop.f32.mrf.mxu0
        %5556 = vmatprep.mubr.f32.mxu0 0.0
        %5557 = vmatmul.mubr.f32.gmra.mxu0 %v5132
        %v5558 = vpop.f32.mrf.mxu0
        %v5559 = vadd.f32 %v5334, %v5558
        %v5560 = vpop.f32.mrf.mxu0
        %5561 = vmatprep.mubr.f32.mxu0 0.0
        %5562 = vmatmul.mubr.f32.gmra.mxu0 %v5134
        %v5563 = vpop.f32.mrf.mxu0
        %v5564 = vadd.f32 %v5339, %v5563
        %v5565 = vpop.f32.mrf.mxu0
        %5566 = vmatprep.mubr.f32.mxu0 0.0
        %5567 = vmatmul.mubr.f32.gmra.mxu0 %v5136
        %v5568 = vpop.f32.mrf.mxu0
        %v5569 = vadd.f32 %v5344, %v5568
        %v5570 = vpop.f32.mrf.mxu0
        %5571 = vmatprep.mubr.f32.mxu0 0.0
        %5572 = vmatmul.mubr.f32.gmra.mxu0 %v5138
        %v5573 = vpop.f32.mrf.mxu0
        %v5574 = vadd.f32 %v5349, %v5573
        %v5575 = vpop.f32.mrf.mxu0
        %5576 = vmatprep.mubr.f32.mxu0 0.0
        %5577 = vmatmul.mubr.f32.gmra.mxu0 %v5140
        %v5578 = vpop.f32.mrf.mxu0
        %v5579 = vadd.f32 %v5354, %v5578
        %v5580 = vpop.f32.mrf.mxu0
        %5581 = vmatprep.mubr.f32.mxu0 0.0
        %5582 = vmatmul.mubr.f32.gmra.mxu0 %v2522
        %v5583 = vpop.f32.mrf.mxu0
        %v5584 = vadd.f32 %v5359, %v5583
        %v5585 = vpop.f32.mrf.mxu0
        %5586 = vmatprep.mubr.f32.mxu0 0.0
        %5587 = vmatmul.mubr.f32.gmra.mxu0 %v2522
        %v5588 = vpop.f32.mrf.mxu0
        %v5589 = vadd.f32 %v5364, %v5588
        %v5590 = vpop.f32.mrf.mxu0
        %5591 = vdwg.mxu0
        %v5592 = vld [vmem:[%s14] sm:$0x1]
        %v5594 = vlaneseq
        %v5595 = vshrl.u32 %v5594, 7
        %v5596 = vsub.s32 0, %v5595
        %v5597 = vrot.slane %v5592, %v5596
        %v5599 = vadd.f32 %v5434, %v5597
        %v5600 = vadd.f32 %v5439, %v5597
        %v5601 = vadd.f32 %v5444, %v5597
        %v5602 = vadd.f32 %v5449, %v5597
        %v5603 = vadd.f32 %v5454, %v5597
        %v5604 = vadd.f32 %v5459, %v5597
        %v5605 = vadd.f32 %v5464, %v5597
        %v5606 = vadd.f32 %v5469, %v5597
        %v5607 = vadd.f32 %v5474, %v5597
        %v5608 = vadd.f32 %v5479, %v5597
        %v5609 = vadd.f32 %v5484, %v5597
        %v5610 = vadd.f32 %v5489, %v5597
        %v5611 = vadd.f32 %v5494, %v5597
        %v5612 = vadd.f32 %v5499, %v5597
        %v5613 = vadd.f32 %v5504, %v5597
        %v5614 = vadd.f32 %v5509, %v5597
        %v5615 = vadd.f32 %v5514, %v5597
        %v5616 = vadd.f32 %v5519, %v5597
        %v5617 = vadd.f32 %v5524, %v5597
        %v5618 = vadd.f32 %v5529, %v5597
        %v5619 = vadd.f32 %v5534, %v5597
        %v5620 = vadd.f32 %v5539, %v5597
        %v5621 = vadd.f32 %v5544, %v5597
        %v5622 = vadd.f32 %v5549, %v5597
        %v5623 = vadd.f32 %v5554, %v5597
        %v5624 = vadd.f32 %v5559, %v5597
        %v5625 = vadd.f32 %v5564, %v5597
        %v5626 = vadd.f32 %v5569, %v5597
        %v5627 = vadd.f32 %v5574, %v5597
        %v5628 = vadd.f32 %v5579, %v5597
        %v5629 = vadd.f32 %v5584, %v5597
        %v5630 = vadd.f32 %v5589, %v5597
        %v5631 = vld [vmem:[%s16] sm:$0x1]
        %v5633 = vlaneseq
        %v5634 = vshrl.u32 %v5633, 7
        %v5635 = vsub.s32 0, %v5634
        %v5636 = vrot.slane %v5631, %v5635
        %v5638 = vadd.f32 %v5599, %v5636
        %v5639 = vadd.f32 %v5600, %v5636
        %v5640 = vadd.f32 %v5601, %v5636
        %v5641 = vadd.f32 %v5602, %v5636
        %v5642 = vadd.f32 %v5603, %v5636
        %v5643 = vadd.f32 %v5604, %v5636
        %v5644 = vadd.f32 %v5605, %v5636
        %v5645 = vadd.f32 %v5606, %v5636
        %v5646 = vadd.f32 %v5607, %v5636
        %v5647 = vadd.f32 %v5608, %v5636
        %v5648 = vadd.f32 %v5609, %v5636
        %v5649 = vadd.f32 %v5610, %v5636
        %v5650 = vadd.f32 %v5611, %v5636
        %v5651 = vadd.f32 %v5612, %v5636
        %v5652 = vadd.f32 %v5613, %v5636
        %v5653 = vadd.f32 %v5614, %v5636
        %v5654 = vadd.f32 %v5615, %v5636
        %v5655 = vadd.f32 %v5616, %v5636
        %v5656 = vadd.f32 %v5617, %v5636
        %v5657 = vadd.f32 %v5618, %v5636
        %v5658 = vadd.f32 %v5619, %v5636
        %v5659 = vadd.f32 %v5620, %v5636
        %v5660 = vadd.f32 %v5621, %v5636
        %v5661 = vadd.f32 %v5622, %v5636
        %v5662 = vadd.f32 %v5623, %v5636
        %v5663 = vadd.f32 %v5624, %v5636
        %v5664 = vadd.f32 %v5625, %v5636
        %v5665 = vadd.f32 %v5626, %v5636
        %v5666 = vadd.f32 %v5627, %v5636
        %v5667 = vadd.f32 %v5628, %v5636
        %v5668 = vadd.f32 %v5629, %v5636
        %v5669 = vadd.f32 %v5630, %v5636
        %v5670 = vmax.f32 %v5638, 0.0
        %v5671 = vmax.f32 %v5639, 0.0
        %v5672 = vmax.f32 %v5640, 0.0
        %v5673 = vmax.f32 %v5641, 0.0
        %v5674 = vmax.f32 %v5642, 0.0
        %v5675 = vmax.f32 %v5643, 0.0
        %v5676 = vmax.f32 %v5644, 0.0
        %v5677 = vmax.f32 %v5645, 0.0
        %v5678 = vmax.f32 %v5646, 0.0
        %v5679 = vmax.f32 %v5647, 0.0
        %v5680 = vmax.f32 %v5648, 0.0
        %v5681 = vmax.f32 %v5649, 0.0
        %v5682 = vmax.f32 %v5650, 0.0
        %v5683 = vmax.f32 %v5651, 0.0
        %v5684 = vmax.f32 %v5652, 0.0
        %v5685 = vmax.f32 %v5653, 0.0
        %v5686 = vmax.f32 %v5654, 0.0
        %v5687 = vmax.f32 %v5655, 0.0
        %v5688 = vmax.f32 %v5656, 0.0
        %v5689 = vmax.f32 %v5657, 0.0
        %v5690 = vmax.f32 %v5658, 0.0
        %v5691 = vmax.f32 %v5659, 0.0
        %v5692 = vmax.f32 %v5660, 0.0
        %v5693 = vmax.f32 %v5661, 0.0
        %v5694 = vmax.f32 %v5662, 0.0
        %v5695 = vmax.f32 %v5663, 0.0
        %v5696 = vmax.f32 %v5664, 0.0
        %v5697 = vmax.f32 %v5665, 0.0
        %v5698 = vmax.f32 %v5666, 0.0
        %v5699 = vmax.f32 %v5667, 0.0
        %v5700 = vmax.f32 %v5668, 0.0
        %v5701 = vmax.f32 %v5669, 0.0
        %vm5702 = vcmask 130048
        %v5703 = vsel %vm5702, %v5670, -inf
        %v5704 = vsel %vm5702, %v5671, -inf
        %v5705 = vsel %vm5702, %v5672, -inf
        %v5706 = vsel %vm5702, %v5673, -inf
        %v5707 = vsel %vm5702, %v5674, -inf
        %v5708 = vmax.f32 %v5703, %v5707
        %v5709 = vsel %vm5702, %v5675, -inf
        %v5710 = vmax.f32 %v5704, %v5709
        %v5711 = vsel %vm5702, %v5676, -inf
        %v5712 = vmax.f32 %v5705, %v5711
        %v5713 = vsel %vm5702, %v5677, -inf
        %v5714 = vmax.f32 %v5706, %v5713
        %v5715 = vsel %vm5702, %v5678, -inf
        %v5716 = vmax.f32 %v5708, %v5715
        %v5717 = vsel %vm5702, %v5679, -inf
        %v5718 = vmax.f32 %v5710, %v5717
        %v5719 = vsel %vm5702, %v5680, -inf
        %v5720 = vmax.f32 %v5712, %v5719
        %v5721 = vsel %vm5702, %v5681, -inf
        %v5722 = vmax.f32 %v5714, %v5721
        %v5723 = vsel %vm5702, %v5682, -inf
        %v5724 = vmax.f32 %v5716, %v5723
        %v5725 = vsel %vm5702, %v5683, -inf
        %v5726 = vmax.f32 %v5718, %v5725
        %v5727 = vsel %vm5702, %v5684, -inf
        %v5728 = vmax.f32 %v5720, %v5727
        %v5729 = vsel %vm5702, %v5685, -inf
        %v5730 = vmax.f32 %v5722, %v5729
        %v5731 = vsel %vm5702, %v5686, -inf
        %v5732 = vmax.f32 %v5724, %v5731
        %v5733 = vsel %vm5702, %v5687, -inf
        %v5734 = vmax.f32 %v5726, %v5733
        %v5735 = vsel %vm5702, %v5688, -inf
        %v5736 = vmax.f32 %v5728, %v5735
        %v5737 = vsel %vm5702, %v5689, -inf
        %v5738 = vmax.f32 %v5730, %v5737
        %v5739 = vsel %vm5702, %v5690, -inf
        %v5740 = vmax.f32 %v5732, %v5739
        %v5741 = vsel %vm5702, %v5691, -inf
        %v5742 = vmax.f32 %v5734, %v5741
        %v5743 = vsel %vm5702, %v5692, -inf
        %v5744 = vmax.f32 %v5736, %v5743
        %v5745 = vsel %vm5702, %v5693, -inf
        %v5746 = vmax.f32 %v5738, %v5745
        %v5747 = vsel %vm5702, %v5694, -inf
        %v5748 = vmax.f32 %v5740, %v5747
        %v5749 = vsel %vm5702, %v5695, -inf
        %v5750 = vmax.f32 %v5742, %v5749
        %v5751 = vsel %vm5702, %v5696, -inf
        %v5752 = vmax.f32 %v5744, %v5751
        %v5753 = vsel %vm5702, %v5697, -inf
        %v5754 = vmax.f32 %v5746, %v5753
        %v5755 = vsel %vm5702, %v5698, -inf
        %v5756 = vmax.f32 %v5748, %v5755
        %v5757 = vsel %vm5702, %v5699, -inf
        %v5758 = vmax.f32 %v5750, %v5757
        %v5759 = vsel %vm5702, %v5700, -inf
        %v5760 = vmax.f32 %v5752, %v5759
        %v5761 = vsel %vm5702, %v5701, -inf
        %v5762 = vmax.f32 %v5754, %v5761
        %v5763 = vmax.f32 %v5756, %v5758
        %v5764 = vmax.f32 %v5760, %v5762
        %v5765 = vmax.f32 %v5763, %v5764
        %v5766 = vrot.slane %v5765, 4
        %v5767 = vmax.f32 %v5765, %v5766
        %v5768 = vrot.slane %v5767, 2
        %v5769 = vmax.f32 %v5767, %v5768
        %v5770 = vrot.slane %v5769, 1
        %v5771 = vmax.f32 %v5769, %v5770
        %v5772 = vld [vmem:[%s17] sm:$0xff]
        %v5773 = vld [vmem:[%s17 + $0x8] sm:$0xff]
        %v5774 = vld [vmem:[%s18] sm:$0x1]
        %v5776 = vsel %vm5702, %v5771, 0
        %5778 = vmatprep.subr.mxu0 0.0
        %5779 = vmatpush1.msra.mxu0 0.0
        %5780 = vmatprep.subr.mxu0 0.0
        %5781 = vmatpush1.msra.mxu0 0.0
        %5782 = vmatprep.subr.mxu0 0.0
        %5783 = vmatpush1.msra.mxu0 0.0
        %5784 = vmatprep.subr.mxu0 0.0
        %5785 = vmatpush1.msra.mxu0 0.0
        %5786 = vmatprep.subr.mxu0 0.0
        %5787 = vmatpush1.msra.mxu0 0.0
        %5788 = vmatprep.subr.mxu0 0.0
        %5789 = vmatpush1.msra.mxu0 0.0
        %5790 = vmatprep.subr.mxu0 0.0
        %5791 = vmatpush1.msra.mxu0 0.0
        %5792 = vmatprep.subr.mxu0 0.0
        %5793 = vmatpush1.msra.mxu0 0.0
        %5794 = vmatprep.subr.mxu0 0.0
        %5795 = vmatpush1.msra.mxu0 0.0
        %5796 = vmatprep.subr.mxu0 0.0
        %5797 = vmatpush1.msra.mxu0 0.0
        %5798 = vmatprep.subr.mxu0 0.0
        %5799 = vmatpush1.msra.mxu0 0.0
        %5800 = vmatprep.subr.mxu0 0.0
        %5801 = vmatpush1.msra.mxu0 0.0
        %5802 = vmatprep.subr.mxu0 0.0
        %5803 = vmatpush1.msra.mxu0 0.0
        %5804 = vmatprep.subr.mxu0 0.0
        %5805 = vmatpush1.msra.mxu0 0.0
        %5806 = vmatprep.subr.mxu0 0.0
        %5807 = vmatpush1.msra.mxu0 %v5773
        %5808 = vmatprep.subr.mxu0 0.0
        %5809 = vmatpush1.msra.mxu0 %v5772
        %5810 = vmatprep.subr.mxu0 0.0
        %5811 = vmatpush2.msra.mxu0 0.0
        %5812 = vmatprep.subr.mxu0 0.0
        %5813 = vmatpush2.msra.mxu0 0.0
        %5814 = vmatprep.subr.mxu0 0.0
        %5815 = vmatpush2.msra.mxu0 0.0
        %5816 = vmatprep.subr.mxu0 0.0
        %5817 = vmatpush2.msra.mxu0 0.0
        %5818 = vmatprep.subr.mxu0 0.0
        %5819 = vmatpush2.msra.mxu0 0.0
        %5820 = vmatprep.subr.mxu0 0.0
        %5821 = vmatpush2.msra.mxu0 0.0
        %5822 = vmatprep.subr.mxu0 0.0
        %5823 = vmatpush2.msra.mxu0 0.0
        %5824 = vmatprep.subr.mxu0 0.0
        %5825 = vmatpush2.msra.mxu0 0.0
        %5826 = vmatprep.subr.mxu0 0.0
        %5827 = vmatpush2.msra.mxu0 0.0
        %5828 = vmatprep.subr.mxu0 0.0
        %5829 = vmatpush2.msra.mxu0 0.0
        %5830 = vmatprep.subr.mxu0 0.0
        %5831 = vmatpush2.msra.mxu0 0.0
        %5832 = vmatprep.subr.mxu0 0.0
        %5833 = vmatpush2.msra.mxu0 0.0
        %5834 = vmatprep.subr.mxu0 0.0
        %5835 = vmatpush2.msra.mxu0 0.0
        %5836 = vmatprep.subr.mxu0 0.0
        %5837 = vmatpush2.msra.mxu0 0.0
        %5838 = vmatprep.subr.mxu0 0.0
        %5839 = vmatpush2.msra.mxu0 0.0
        %5840 = vmatprep.subr.mxu0 0.0
        %5841 = vmatpush2.msra.mxu0 0.0
        %5842 = vmatprep.mubr.f32.mxu0 0.0
        %5843 = vmatmul.mubr.f32.gmra.mxu0 %v5776
        %v5844 = vpop.f32.mrf.mxu0
        %v5845 = vadd.f32 %v5774, %v5844
        %v5846 = vpop.f32.mrf.mxu0
        %5847 = vdwg.mxu0
        %v5848 = vmax.f32 %v5845, 0.0
        %v5849 = vld [vmem:[%s19] sm:$0xff]
        %v5850 = vld [vmem:[%s19 + $0x8] sm:$0xff]
        %v5851 = vld [vmem:[%s19 + $0x10] sm:$0xff]
        %v5852 = vld [vmem:[%s19 + $0x18] sm:$0xff]
        %v5853 = vld [vmem:[%s20] sm:$0x1]
        %v5855 = vsel %vm1940, %v5848, 0
        %5857 = vmatprep.subr.mxu0 0.0
        %5858 = vmatpush1.msra.mxu0 0.0
        %5859 = vmatprep.subr.mxu0 0.0
        %5860 = vmatpush1.msra.mxu0 0.0
        %5861 = vmatprep.subr.mxu0 0.0
        %5862 = vmatpush1.msra.mxu0 0.0
        %5863 = vmatprep.subr.mxu0 0.0
        %5864 = vmatpush1.msra.mxu0 0.0
        %5865 = vmatprep.subr.mxu0 0.0
        %5866 = vmatpush1.msra.mxu0 0.0
        %5867 = vmatprep.subr.mxu0 0.0
        %5868 = vmatpush1.msra.mxu0 0.0
        %5869 = vmatprep.subr.mxu0 0.0
        %5870 = vmatpush1.msra.mxu0 0.0
        %5871 = vmatprep.subr.mxu0 0.0
        %5872 = vmatpush1.msra.mxu0 0.0
        %5873 = vmatprep.subr.mxu0 0.0
        %5874 = vmatpush1.msra.mxu0 0.0
        %5875 = vmatprep.subr.mxu0 0.0
        %5876 = vmatpush1.msra.mxu0 0.0
        %5877 = vmatprep.subr.mxu0 0.0
        %5878 = vmatpush1.msra.mxu0 0.0
        %5879 = vmatprep.subr.mxu0 0.0
        %5880 = vmatpush1.msra.mxu0 0.0
        %5881 = vmatprep.subr.mxu0 0.0
        %5882 = vmatpush1.msra.mxu0 %v5852
        %5883 = vmatprep.subr.mxu0 0.0
        %5884 = vmatpush1.msra.mxu0 %v5851
        %5885 = vmatprep.subr.mxu0 0.0
        %5886 = vmatpush1.msra.mxu0 %v5850
        %5887 = vmatprep.subr.mxu0 0.0
        %5888 = vmatpush1.msra.mxu0 %v5849
        %5889 = vmatprep.subr.mxu0 0.0
        %5890 = vmatpush2.msra.mxu0 0.0
        %5891 = vmatprep.subr.mxu0 0.0
        %5892 = vmatpush2.msra.mxu0 0.0
        %5893 = vmatprep.subr.mxu0 0.0
        %5894 = vmatpush2.msra.mxu0 0.0
        %5895 = vmatprep.subr.mxu0 0.0
        %5896 = vmatpush2.msra.mxu0 0.0
        %5897 = vmatprep.subr.mxu0 0.0
        %5898 = vmatpush2.msra.mxu0 0.0
        %5899 = vmatprep.subr.mxu0 0.0
        %5900 = vmatpush2.msra.mxu0 0.0
        %5901 = vmatprep.subr.mxu0 0.0
        %5902 = vmatpush2.msra.mxu0 0.0
        %5903 = vmatprep.subr.mxu0 0.0
        %5904 = vmatpush2.msra.mxu0 0.0
        %5905 = vmatprep.subr.mxu0 0.0
        %5906 = vmatpush2.msra.mxu0 0.0
        %5907 = vmatprep.subr.mxu0 0.0
        %5908 = vmatpush2.msra.mxu0 0.0
        %5909 = vmatprep.subr.mxu0 0.0
        %5910 = vmatpush2.msra.mxu0 0.0
        %5911 = vmatprep.subr.mxu0 0.0
        %5912 = vmatpush2.msra.mxu0 0.0
        %5913 = vmatprep.subr.mxu0 0.0
        %5914 = vmatpush2.msra.mxu0 0.0
        %5915 = vmatprep.subr.mxu0 0.0
        %5916 = vmatpush2.msra.mxu0 0.0
        %5917 = vmatprep.subr.mxu0 0.0
        %5918 = vmatpush2.msra.mxu0 0.0
        %5919 = vmatprep.subr.mxu0 0.0
        %5920 = vmatpush2.msra.mxu0 0.0
        %5921 = vmatprep.mubr.f32.mxu0 0.0
        %5922 = vmatmul.mubr.f32.gmra.mxu0 %v5855
        %v5923 = vpop.f32.mrf.mxu0
        %v5924 = vadd.f32 %v5853, %v5923
        %v5925 = vpop.f32.mrf.mxu0
        %5926 = vdwg.mxu0
        %vm5927 = vcmask 32768
        %5928 = vst.msk [vmem:[%s801] sm:$0x1] %vm5927, %v5924
        %v5929 = vld [vmem:[%s21] sm:$0xff]
        %v5930 = vld [vmem:[%s21 + $0x8] sm:$0xff]
        %v5931 = vld [vmem:[%s22] sm:$0x1]
        %5932 = vmatprep.subr.mxu0 0.0
        %5933 = vmatpush1.msra.mxu0 0.0
        %5934 = vmatprep.subr.mxu0 0.0
        %5935 = vmatpush1.msra.mxu0 0.0
        %5936 = vmatprep.subr.mxu0 0.0
        %5937 = vmatpush1.msra.mxu0 0.0
        %5938 = vmatprep.subr.mxu0 0.0
        %5939 = vmatpush1.msra.mxu0 0.0
        %5940 = vmatprep.subr.mxu0 0.0
        %5941 = vmatpush1.msra.mxu0 0.0
        %5942 = vmatprep.subr.mxu0 0.0
        %5943 = vmatpush1.msra.mxu0 0.0
        %5944 = vmatprep.subr.mxu0 0.0
        %5945 = vmatpush1.msra.mxu0 0.0
        %5946 = vmatprep.subr.mxu0 0.0
        %5947 = vmatpush1.msra.mxu0 0.0
        %5948 = vmatprep.subr.mxu0 0.0
        %5949 = vmatpush1.msra.mxu0 0.0
        %5950 = vmatprep.subr.mxu0 0.0
        %5951 = vmatpush1.msra.mxu0 0.0
        %5952 = vmatprep.subr.mxu0 0.0
        %5953 = vmatpush1.msra.mxu0 0.0
        %5954 = vmatprep.subr.mxu0 0.0
        %5955 = vmatpush1.msra.mxu0 0.0
        %5956 = vmatprep.subr.mxu0 0.0
        %5957 = vmatpush1.msra.mxu0 0.0
        %5958 = vmatprep.subr.mxu0 0.0
        %5959 = vmatpush1.msra.mxu0 0.0
        %5960 = vmatprep.subr.mxu0 0.0
        %5961 = vmatpush1.msra.mxu0 %v5930
        %5962 = vmatprep.subr.mxu0 0.0
        %5963 = vmatpush1.msra.mxu0 %v5929
        %5964 = vmatprep.subr.mxu0 0.0
        %5965 = vmatpush2.msra.mxu0 0.0
        %5966 = vmatprep.subr.mxu0 0.0
        %5967 = vmatpush2.msra.mxu0 0.0
        %5968 = vmatprep.subr.mxu0 0.0
        %5969 = vmatpush2.msra.mxu0 0.0
        %5970 = vmatprep.subr.mxu0 0.0
        %5971 = vmatpush2.msra.mxu0 0.0
        %5972 = vmatprep.subr.mxu0 0.0
        %5973 = vmatpush2.msra.mxu0 0.0
        %5974 = vmatprep.subr.mxu0 0.0
        %5975 = vmatpush2.msra.mxu0 0.0
        %5976 = vmatprep.subr.mxu0 0.0
        %5977 = vmatpush2.msra.mxu0 0.0
        %5978 = vmatprep.subr.mxu0 0.0
        %5979 = vmatpush2.msra.mxu0 0.0
        %5980 = vmatprep.subr.mxu0 0.0
        %5981 = vmatpush2.msra.mxu0 0.0
        %5982 = vmatprep.subr.mxu0 0.0
        %5983 = vmatpush2.msra.mxu0 0.0
        %5984 = vmatprep.subr.mxu0 0.0
        %5985 = vmatpush2.msra.mxu0 0.0
        %5986 = vmatprep.subr.mxu0 0.0
        %5987 = vmatpush2.msra.mxu0 0.0
        %5988 = vmatprep.subr.mxu0 0.0
        %5989 = vmatpush2.msra.mxu0 0.0
        %5990 = vmatprep.subr.mxu0 0.0
        %5991 = vmatpush2.msra.mxu0 0.0
        %5992 = vmatprep.subr.mxu0 0.0
        %5993 = vmatpush2.msra.mxu0 0.0
        %5994 = vmatprep.subr.mxu0 0.0
        %5995 = vmatpush2.msra.mxu0 0.0
        %5996 = vmatprep.mubr.f32.mxu0 0.0
        %5997 = vmatmul.mubr.f32.gmra.mxu0 %v5776
        %v5998 = vpop.f32.mrf.mxu0
        %v5999 = vadd.f32 %v5931, %v5998
        %v6000 = vpop.f32.mrf.mxu0
        %6001 = vdwg.mxu0
        %v6002 = vmax.f32 %v5999, 0.0
        %v6003 = vld [vmem:[%s23] sm:$0xff]
        %v6004 = vld [vmem:[%s23 + $0x8] sm:$0xff]
        %v6005 = vld [vmem:[%s23 + $0x10] sm:$0xff]
        %v6006 = vld [vmem:[%s23 + $0x18] sm:$0xff]
        %v6007 = vld [vmem:[#allocation2] sm:$0x1]
        %v6009 = vsel %vm1940, %v6002, 0
        %6011 = vmatprep.subr.mxu0 0.0
        %6012 = vmatpush1.msra.mxu0 0.0
        %6013 = vmatprep.subr.mxu0 0.0
        %6014 = vmatpush1.msra.mxu0 0.0
        %6015 = vmatprep.subr.mxu0 0.0
        %6016 = vmatpush1.msra.mxu0 0.0
        %6017 = vmatprep.subr.mxu0 0.0
        %6018 = vmatpush1.msra.mxu0 0.0
        %6019 = vmatprep.subr.mxu0 0.0
        %6020 = vmatpush1.msra.mxu0 0.0
        %6021 = vmatprep.subr.mxu0 0.0
        %6022 = vmatpush1.msra.mxu0 0.0
        %6023 = vmatprep.subr.mxu0 0.0
        %6024 = vmatpush1.msra.mxu0 0.0
        %6025 = vmatprep.subr.mxu0 0.0
        %6026 = vmatpush1.msra.mxu0 0.0
        %6027 = vmatprep.subr.mxu0 0.0
        %6028 = vmatpush1.msra.mxu0 0.0
        %6029 = vmatprep.subr.mxu0 0.0
        %6030 = vmatpush1.msra.mxu0 0.0
        %6031 = vmatprep.subr.mxu0 0.0
        %6032 = vmatpush1.msra.mxu0 0.0
        %6033 = vmatprep.subr.mxu0 0.0
        %6034 = vmatpush1.msra.mxu0 0.0
        %6035 = vmatprep.subr.mxu0 0.0
        %6036 = vmatpush1.msra.mxu0 %v6006
        %6037 = vmatprep.subr.mxu0 0.0
        %6038 = vmatpush1.msra.mxu0 %v6005
        %6039 = vmatprep.subr.mxu0 0.0
        %6040 = vmatpush1.msra.mxu0 %v6004
        %6041 = vmatprep.subr.mxu0 0.0
        %6042 = vmatpush1.msra.mxu0 %v6003
        %6043 = vmatprep.subr.mxu0 0.0
        %6044 = vmatpush2.msra.mxu0 0.0
        %6045 = vmatprep.subr.mxu0 0.0
        %6046 = vmatpush2.msra.mxu0 0.0
        %6047 = vmatprep.subr.mxu0 0.0
        %6048 = vmatpush2.msra.mxu0 0.0
        %6049 = vmatprep.subr.mxu0 0.0
        %6050 = vmatpush2.msra.mxu0 0.0
        %6051 = vmatprep.subr.mxu0 0.0
        %6052 = vmatpush2.msra.mxu0 0.0
        %6053 = vmatprep.subr.mxu0 0.0
        %6054 = vmatpush2.msra.mxu0 0.0
        %6055 = vmatprep.subr.mxu0 0.0
        %6056 = vmatpush2.msra.mxu0 0.0
        %6057 = vmatprep.subr.mxu0 0.0
        %6058 = vmatpush2.msra.mxu0 0.0
        %6059 = vmatprep.subr.mxu0 0.0
        %6060 = vmatpush2.msra.mxu0 0.0
        %6061 = vmatprep.subr.mxu0 0.0
        %6062 = vmatpush2.msra.mxu0 0.0
        %6063 = vmatprep.subr.mxu0 0.0
        %6064 = vmatpush2.msra.mxu0 0.0
        %6065 = vmatprep.subr.mxu0 0.0
        %6066 = vmatpush2.msra.mxu0 0.0
        %6067 = vmatprep.subr.mxu0 0.0
        %6068 = vmatpush2.msra.mxu0 0.0
        %6069 = vmatprep.subr.mxu0 0.0
        %6070 = vmatpush2.msra.mxu0 0.0
        %6071 = vmatprep.subr.mxu0 0.0
        %6072 = vmatpush2.msra.mxu0 0.0
        %6073 = vmatprep.subr.mxu0 0.0
        %6074 = vmatpush2.msra.mxu0 0.0
        %6075 = vmatprep.mubr.f32.mxu0 0.0
        %6076 = vmatmul.mubr.f32.gmra.mxu0 %v6009
        %v6077 = vpop.f32.mrf.mxu0
        %v6078 = vadd.f32 %v6007, %v6077
        %v6079 = vpop.f32.mrf.mxu0
        %6080 = vdwg.mxu0
        %vm6081 = vcmask 0
        %6082 = vst.msk [vmem:[%s819] sm:$0x1] %vm6081, %v6078
        %s6083 = sand.u32 %s586, 1
        %s6084 = scalar_lea.sflag [#allocation4], %s6083
        %s6085 = sand.u32 %s586, 1
        %s6086 = scalar_lea.vmem [#allocation3], %s6085
        %p6087 = scmp.lt.s32.totalorder %s43, 1
        %s6088 = scalar_select %p6087, %s43, 1
        %s6089 = scalar_lea.vmem %s26, %s6088
        // Predicated region
        $region121: #{graph_a2c_forward.3} parent=119 // pred_check
          %p6090 = pneg %p596
        $region122: #{graph_a2c_forward.3} parent=119 // pred_check_branch
          %6092 = sbr.rel (%p6090) target = $region124
        $region123: #{graph_a2c_forward.3} parent=119 // pred_region
          %s6094 = ssub.s32 16, 16
          %6095 = vsyncadd %s6084, %s6094
          %s6096 = smul.addr %s43, 16
          %s6097 = scalar_lea.hbm %s25, %s6096
          %s6099 = sshll.u32 %s6086, 4
          %s6100 = int_to_ptr.vmem [resolvable:$true] %s6099
          %6102 = dma.vmem_to_hbm [thread:$0]  %s6100, 16, %s6097, %s6084
        $region124: #{graph_a2c_forward.3} parent=119 // pred_fallthru
          _
        // Predicated region
        $region125: #{graph_a2c_forward.3} parent=119 // pred_check
          %p6103 = pneg %p622
        $region126: #{graph_a2c_forward.3} parent=119 // pred_check_branch
          %6105 = sbr.rel (%p6103) target = $region128
        $region127: #{graph_a2c_forward.3} parent=119 // pred_region
          _
        $region128: #{graph_a2c_forward.3} parent=119 // pred_fallthru
          _
      $region120: #{graph_a2c_forward.3} parent=5 // pred_fallthru
        _
      %p6106 = scmp.le.s32.totalorder 2, %s38
      // Predicated region
      $region129: #{graph_a2c_forward.3} parent=5 // pred_check
        %p6107 = pneg %p6106
      $region130: #{graph_a2c_forward.3} parent=5 // pred_check_branch
        %6109 = sbr.rel (%p6107) target = $region132
      $region131: #{graph_a2c_forward.3} parent=5 // pred_region
        %s6110 = ssub.s32 %s38, 2
        // Predicated region
        $region133: #{graph_a2c_forward.3} parent=131 // pred_check
          %p6111 = pneg %p602
        $region134: #{graph_a2c_forward.3} parent=131 // pred_check_branch
          %6113 = sbr.rel (%p6111) target = $region136
        $region135: #{graph_a2c_forward.3} parent=131 // pred_region
          %s6114 = sand.u32 %s587, 1
          %s6115 = scalar_lea.sflag [#allocation4], %s6114
          %s6116 = sand.u32 %s587, 1
          %s6117 = scalar_lea.vmem [#allocation3], %s6116
          %6118 = dma.done %s6115, 16
        $region136: #{graph_a2c_forward.3} parent=131 // pred_fallthru
          _
        // Predicated region
        $region137: #{graph_a2c_forward.3} parent=131 // pred_check
          %p6119 = pneg %p628
        $region138: #{graph_a2c_forward.3} parent=131 // pred_check_branch
          %6121 = sbr.rel (%p6119) target = $region140
        $region139: #{graph_a2c_forward.3} parent=131 // pred_region
          %p6122 = scmp.lt.s32.totalorder %s44, 1
          %s6123 = scalar_select %p6122, %s44, 1
          %s6124 = scalar_lea.vmem %s26, %s6123
        $region140: #{graph_a2c_forward.3} parent=131 // pred_fallthru
          _
      $region132: #{graph_a2c_forward.3} parent=5 // pred_fallthru
        _
    $region6: #{graph_a2c_forward.3} parent=1 // loop_footer
      %s42 = sadd.s32 1, %s38
    $region7: #{graph_a2c_forward.3} parent=1 // loop_footer_branch
      %37 = sbr.rel target = $region3
    $region8: #{graph_a2c_forward.3} parent=1 // loop_exit
      _
    %6125 = vsyncpa [#allocation4], 1
    %s6126 = scalar_lea.sflag [#allocation4], 1
    %6127 = vsyncpa %s6126, 1

</llo_original>
